<compile_context>
chip_gen: v7x
topology: tpu7x:2x2x1
jax: 0.10.0
libtpu: 0.0.40
codegen_flags: <defaults>
</compile_context>

<pallas_src>
import functools

import jax
import jax.numpy as jnp
from jax.experimental import pallas as pl
from jax.experimental.pallas import tpu as pltpu

# Sizes fixed by the PyTorch module
NZ = 100      # latent dim
NGF = 64      # generator base width
NC = 3        # image channels
K = 4         # ConvTranspose2d kernel size
EPS = 1e-5    # BatchNorm eps

_OUT_CHANNELS = [NGF * 8, NGF * 4, NGF * 2, NGF, NC]


def _pick_tile(n, candidates):
    for c in candidates:
        if n % c == 0:
            return c
    return candidates[-1]


# ----------------------------- Pallas kernels -----------------------------

def _gemm_kernel(x_ref, w_ref, *refs, act, emit_stats):
    """Tiled MXU GEMM (bf16 operands, f32 accumulation) with a fused epilogue:
    optional tanh and optional per-tile partial BatchNorm statistics."""
    if emit_stats:
        y_ref, stats_ref, acc_ref = refs
    else:
        y_ref, acc_ref = refs

    k = pl.program_id(3)

    @pl.when(k == 0)
    def _():
        acc_ref[...] = jnp.zeros_like(acc_ref)

    acc_ref[...] += jnp.dot(x_ref[0], w_ref[0],
                            preferred_element_type=jnp.float32)

    @pl.when(k == pl.num_programs(3) - 1)
    def _():
        acc = acc_ref[...]
        if act == "tanh":
            acc = jnp.tanh(acc)
        y_ref[0] = acc
        if emit_stats:
            # Partial per-column stats while the accumulator is still in VMEM.
            ssum = jnp.sum(acc, axis=0, keepdims=True)        # (1, tn)
            ssq = jnp.sum(acc * acc, axis=0, keepdims=True)   # (1, tn)
            row = jax.lax.broadcasted_iota(jnp.int32, (8, acc.shape[1]), 0)
            stats_ref[0] = jnp.where(row == 0, ssum,
                                     jnp.where(row == 1, ssq, 0.0))


def fused_gemm(patches, wmats, *, act="none", emit_stats=False):
    """Batched (over P phases) GEMM: (P, M, K) @ (P, K, N) -> (P, M, N) f32.

    Operands are fed to the MXU in bf16; accumulation is f32.  When
    `emit_stats` is set, per-(phase, row-tile) partial column sums and
    sums-of-squares are written from the GEMM epilogue and reduced here
    (tiny), avoiding a second HBM pass over y for BatchNorm statistics.
    """
    P, M, Kd = patches.shape
    Pw, Kw, Ncol = wmats.shape
    assert P == Pw and Kd == Kw
    assert Kd % 128 == 0 and Ncol % 128 == 0

    tm = _pick_tile(M, (512, 256, 128, 64, 32, 16))
    Mp = pl.cdiv(M, tm) * tm
    if Mp != M:                           # only the tiny first layer (M = batch)
        patches = jnp.pad(patches, ((0, 0), (0, Mp - M), (0, 0)))
    tk = _pick_tile(Kd, (512, 256, 128))
    tn = _pick_tile(Ncol, (512, 256, 128))
    nmt = Mp // tm
    grid = (P, nmt, Ncol // tn, Kd // tk)

    out_shape = [jax.ShapeDtypeStruct((P, Mp, Ncol), jnp.float32)]
    out_specs = [pl.BlockSpec((1, tm, tn), lambda p, i, j, k: (p, i, j))]
    if emit_stats:
        # row 0 = partial sum, row 1 = partial sum of squares, rows 2-7 zero.
        out_shape.append(jax.ShapeDtypeStruct((P, nmt * 8, Ncol), jnp.float32))
        out_specs.append(pl.BlockSpec((1, 8, tn), lambda p, i, j, k: (p, i, j)))

    res = pl.pallas_call(
        functools.partial(_gemm_kernel, act=act, emit_stats=emit_stats),
        out_shape=tuple(out_shape),
        grid_spec=pltpu.PrefetchScalarGridSpec(
            num_scalar_prefetch=0,
            grid=grid,
            in_specs=[
                pl.BlockSpec((1, tm, tk), lambda p, i, j, k: (p, i, k)),
                pl.BlockSpec((1, tk, tn), lambda p, i, j, k: (p, k, j)),
            ],
            out_specs=tuple(out_specs),
            scratch_shapes=[pltpu.VMEM((tm, tn), jnp.float32)]),
        compiler_params=pltpu.CompilerParams(
            dimension_semantics=("parallel", "parallel", "parallel",
                                 "arbitrary")),
    )(patches.astype(jnp.bfloat16), wmats.astype(jnp.bfloat16))

    if emit_stats:
        y, stats = res
        st = stats.reshape(P, nmt, 8, Ncol)
        ssum = jnp.sum(st[:, :, 0, :], axis=(0, 1))
        ssq = jnp.sum(st[:, :, 1, :], axis=(0, 1))
        return y, ssum, ssq
    (y,) = res
    return y


def _scale_shift_act_kernel(y_ref, scale_ref, shift_ref, o_ref, *, act):
    v = y_ref[...] * scale_ref[...] + shift_ref[...]
    if act == "relu":
        v = jnp.maximum(v, 0.0)
    elif act == "tanh":
        v = jnp.tanh(v)
    o_ref[...] = v


def scale_shift_act(y, scale, shift, act):
    """Fused per-channel (y * scale + shift) + activation.  The channel (lane)
    dim is always a multiple of 128, so stores are lane-dense."""
    R, C = y.shape
    assert C % 128 == 0
    tr = _pick_tile(R, (1024, 512, 256, 128, 64, 32, 16, 8))
    Rp = pl.cdiv(R, tr) * tr
    if Rp != R:
        y = jnp.pad(y, ((0, Rp - R), (0, 0)))
    out = pl.pallas_call(
        functools.partial(_scale_shift_act_kernel, act=act),
        out_shape=jax.ShapeDtypeStruct((Rp, C), jnp.float32),
        grid_spec=pltpu.PrefetchScalarGridSpec(
            num_scalar_prefetch=0,
            grid=(Rp // tr,),
            in_specs=[pl.BlockSpec((tr, C), lambda i: (i, 0)),
                      pl.BlockSpec((1, C), lambda i: (0, 0)),
                      pl.BlockSpec((1, C), lambda i: (0, 0))],
            out_specs=pl.BlockSpec((tr, C), lambda i: (i, 0))),
        compiler_params=pltpu.CompilerParams(
            dimension_semantics=("parallel",)),
    )(y.astype(jnp.float32),
      scale.reshape(1, C).astype(jnp.float32),
      shift.reshape(1, C).astype(jnp.float32))
    return out[:R]


# ----------------------------- plain-JAX glue -----------------------------

def _subpixel_patches(x):
    """Sub-pixel im2col for ConvTranspose2d(k=4, stride=2, pad=1).

    Output y[2m+p, 2n+q] only touches 2x2 kernel taps of matching parity, so
    each of the 4 output phases is a dense 2x2 convolution over the (1-padded,
    undilated) input: no structural zeros enter the GEMM.

    x: (N, H, W, Cin) -> (4, N*H*W, 4*Cin); phase order p*2+q, tap order dh*2+dw.
    """
    N, H, W, Cin = x.shape
    xp = jnp.pad(x, ((0, 0), (1, 1), (1, 1), (0, 0)))
    phases = []
    for p in (0, 1):
        for q in (0, 1):
            taps = [xp[:, p + dh:p + dh + H, q + dw:q + dw + W, :]
                    for dh in (0, 1) for dw in (0, 1)]
            phases.append(
                jnp.concatenate(taps, axis=-1).reshape(N * H * W, 4 * Cin))
    return jnp.stack(phases, axis=0)


def _bn_scale_shift(ssum, ssq, count, gamma, beta):
    mean = ssum / count
    var = jnp.maximum(ssq / count - mean * mean, 0.0)   # clamp: cancellation
    scale = gamma * jax.lax.rsqrt(var + EPS)
    return scale, beta - mean * scale


def prepare_params(params):
    """One-time weight prep (hoisted out of the forward): flip/transpose/
    reshape/pad every ConvTranspose2d weight into GEMM-ready bf16 matrices
    (one per sub-pixel phase) and pad gamma/beta to the padded channel width."""
    prep = {}
    c0 = NGF * 8
    # layer 0: 1x1 input -> direct GEMM weight (1, 128, 4*4*c0)
    w0 = params["w0"]                                    # (NZ, c0, 4, 4)
    wm0 = jnp.transpose(w0, (0, 2, 3, 1)).reshape(NZ, 16 * c0)
    wm0 = jnp.pad(wm0, ((0, 128 - NZ), (0, 0)))          # pad K: 100 -> 128
    prep["w0"] = wm0[None].astype(jnp.bfloat16)
    prep["g0"] = params["g0"].astype(jnp.float32)
    prep["b0"] = params["b0"].astype(jnp.float32)
    # layers 1-4: per-phase 2x2 sub-kernels -> (4, 4*Cin, Cout_padded)
    for li in range(1, 5):
        w = params[f"w{li}"]                             # (Cin, Cout, 4, 4)
        cout = w.shape[1]
        cp = pl.cdiv(cout, 128) * 128
        mats = []
        for p in (0, 1):
            for q in (0, 1):
                rows = [w[:, :, 3 - p - 2 * dh, 3 - q - 2 * dw]
                        for dh in (0, 1) for dw in (0, 1)]
                wm = jnp.concatenate(rows, axis=0)       # (4*Cin, Cout)
                mats.append(jnp.pad(wm, ((0, 0), (0, cp - cout))))
        prep[f"w{li}"] = jnp.stack(mats, axis=0).astype(jnp.bfloat16)
        if li < 4:
            prep[f"g{li}"] = jnp.pad(params[f"g{li}"],
                                     (0, cp - cout)).astype(jnp.float32)
            prep[f"b{li}"] = jnp.pad(params[f"b{li}"],
                                     (0, cp - cout)).astype(jnp.float32)
    return prep


def generator_forward(z, prep):
    """z: (N, NZ, 1, 1) NCHW latent -> (N, NC, 64, 64) NCHW image."""
    N = z.shape[0]
    c0 = NGF * 8

    # ---- layer 0: ConvTranspose2d(nz, ngf*8, 4, 1, 0) on a 1x1 input is a
    # plain GEMM (N, nz) @ (nz, 4*4*ngf*8); BN stats fused in the epilogue.
    z_flat = z.reshape(N, NZ).astype(jnp.bfloat16)
    x0 = jnp.zeros((1, N, 128), jnp.bfloat16).at[0, :, :NZ].set(z_flat)
    y, ssum, ssq = fused_gemm(x0, prep["w0"], emit_stats=True)
    y = y[0, :N, :].reshape(N * 16, c0)           # rows = (n, oh, ow)
    ssum = ssum.reshape(16, c0).sum(axis=0)       # columns were (oh, ow, c)
    ssq = ssq.reshape(16, c0).sum(axis=0)
    scale, shift = _bn_scale_shift(ssum, ssq, N * 16, prep["g0"], prep["b0"])
    x = scale_shift_act(y, scale, shift, "relu").reshape(N, 4, 4, c0)

    # ---- layers 1-4: stride-2 ConvTranspose2d via 4 sub-pixel phase GEMMs ---
    for li in range(1, 5):
        Nb, H, W, _ = x.shape
        c_out = _OUT_CHANNELS[li]
        patches = _subpixel_patches(x.astype(jnp.bfloat16))   # (4, M, 4*Cin)
        M = Nb * H * W
        if li < 4:
            y, ssum, ssq = fused_gemm(patches, prep[f"w{li}"], emit_stats=True)
            cp = y.shape[-1]
            scale, shift = _bn_scale_shift(ssum, ssq, 4 * M,
                                           prep[f"g{li}"], prep[f"b{li}"])
            y = scale_shift_act(y.reshape(4 * M, cp), scale, shift, "relu")
        else:
            # final layer: tanh fused into the GEMM epilogue, no BatchNorm.
            y = fused_gemm(patches, prep[f"w{li}"], act="tanh")
            cp = y.shape[-1]
            y = y.reshape(4 * M, cp)
        y = y.reshape(4, Nb, H, W, cp)[..., :c_out]
        # interleave phases: out[n, 2h+p, 2w+q, c] = y[2p+q, n, h, w, c]
        x = (y.reshape(2, 2, Nb, H, W, c_out)
              .transpose(2, 3, 0, 4, 1, 5)
              .reshape(Nb, 2 * H, 2 * W, c_out))
    return jnp.transpose(x, (0, 3, 1, 2))


_LAYER_CFG = [
    (1, 0, True),    # nz     -> ngf*8, 4x4
    (2, 1, True),    # ngf*8  -> ngf*4, 8x8
    (2, 1, True),    # ngf*4  -> ngf*2, 16x16
    (2, 1, True),    # ngf*2  -> ngf,   32x32
    (2, 1, False),   # ngf    -> nc,    64x64, tanh
]


def reference_forward(z, params):
    """Independent jnp reference: ConvTranspose2d via lax.conv_general_dilated
    (lhs dilation), same operand precision (bf16 inputs, f32 accumulation)."""
    x = jnp.transpose(z, (0, 2, 3, 1)).astype(jnp.bfloat16)
    y = None
    for i, (stride, pad, has_bn) in enumerate(_LAYER_CFG):
        w_ct = params[f"w{i}"]                               # (Cin, Cout, K, K)
        w_conv = jnp.transpose(w_ct[:, :, ::-1, ::-1], (2, 3, 0, 1))
        y = jax.lax.conv_general_dilated(
            x, w_conv.astype(jnp.bfloat16),
            window_strides=(1, 1),
            padding=[(K - 1 - pad, K - 1 - pad)] * 2,
            lhs_dilation=(stride, stride),
            dimension_numbers=("NHWC", "HWIO", "NHWC"),
            preferred_element_type=jnp.float32)
        if has_bn:
            mean = jnp.mean(y, axis=(0, 1, 2))
            var = jnp.maximum(jnp.mean(y * y, axis=(0, 1, 2)) - mean * mean, 0.0)
            scale = params[f"g{i}"] / jnp.sqrt(var + EPS)
            y = jnp.maximum(y * scale + (params[f"b{i}"] - mean * scale), 0.0)
        else:
            y = jnp.tanh(y)
        x = y.astype(jnp.bfloat16)
    return jnp.transpose(y, (0, 3, 1, 2))


def init_params(key):
    """Deterministic DCGAN-style init (weights ~ N(0, 0.02), gamma ~ N(1, 0.02))."""
    chans = [NZ, NGF * 8, NGF * 4, NGF * 2, NGF, NC]
    params = {}
    keys = jax.random.split(key, 2 * (len(chans) - 1))
    for i in range(len(chans) - 1):
        cin, cout = chans[i], chans[i + 1]
        params[f"w{i}"] = 0.02 * jax.random.normal(
            keys[2 * i], (cin, cout, K, K), jnp.float32)
        if i < len(chans) - 2:      # last ConvTranspose has no BatchNorm
            params[f"g{i}"] = 1.0 + 0.02 * jax.random.normal(
                keys[2 * i + 1], (cout,), jnp.float32)
            params[f"b{i}"] = jnp.zeros((cout,), jnp.float32)
    return params


if __name__ == "__main__":
    key = jax.random.PRNGKey(0)
    pkey, zkey = jax.random.split(key)
    params = init_params(pkey)
    prep = prepare_params(params)          # one-time weight prep (hoisted)
    z = jax.random.normal(zkey, (2, NZ, 1, 1), jnp.float32)   # (N, nz, 1, 1)

    fwd = jax.jit(generator_forward)
    out = jax.block_until_ready(fwd(z, prep))
    assert out.shape == (2, NC, 64, 64), out.shape

    ref = reference_forward(z, params)
    max_err = float(jnp.max(jnp.abs(out - ref)))
    assert jnp.allclose(out, ref, rtol=1e-2, atol=1e-2), max_err

    print("KERNEL_OK")
</pallas_src>

<mosaic_0001>
module attributes {stable_mosaic.version = 11 : i64} {
  func.func @_gemm_kernel(%arg0: i32, %arg1: i32, %arg2: i32, %arg3: i32, %arg4: memref<1x16x128xbf16, #tpu.memory_space<vmem>>, %arg5: memref<1x128x512xbf16, #tpu.memory_space<vmem>>, %arg6: memref<1x16x512xf32, #tpu.memory_space<vmem>>, %arg7: memref<1x8x512xf32, #tpu.memory_space<vmem>>, %arg8: memref<16x512xf32, #tpu.memory_space<vmem>>) attributes {dimension_semantics = [#tpu.dimension_semantics<parallel>, #tpu.dimension_semantics<parallel>, #tpu.dimension_semantics<parallel>, #tpu.dimension_semantics<arbitrary>], iteration_bounds = array<i64: 1, 1, 16, 1>, scalar_prefetch = 0 : i64, scratch_operands = 1 : i64, tpu.core_type = #tpu.core_type<tc>, window_params = [{transform_indices = @transform_0, window_bounds = array<i64: 1, 16, 128>}, {transform_indices = @transform_1, window_bounds = array<i64: 1, 128, 512>}, {transform_indices = @transform_2, window_bounds = array<i64: 1, 16, 512>}, {transform_indices = @transform_3, window_bounds = array<i64: 1, 8, 512>}]} {
    %c0_i32 = arith.constant 0 : i32
    %0 = arith.cmpi eq, %arg3, %c0_i32 : i32
    %1 = arith.extui %0 : i1 to i32
    %c0_i32_0 = arith.constant 0 : i32
    %2 = arith.cmpi ne, %1, %c0_i32_0 : i32
    scf.if %2 {
      %cst_12 = arith.constant 0.000000e+00 : f32
      %14 = vector.broadcast %cst_12 : f32 to vector<16x512xf32>
      %c0_13 = arith.constant 0 : index
      %c0_14 = arith.constant 0 : index
      %15 = vector.load %arg8[%c0_13, %c0_14] : memref<16x512xf32, #tpu.memory_space<vmem>>, vector<16x512xf32>
      tpu.vector_store %arg8[%c0_13, %c0_14], %14 {strides = array<i32>} : memref<16x512xf32, #tpu.memory_space<vmem>>, vector<16x512xf32>,
    } else {
    }
    %c0 = arith.constant 0 : index
    %c0_1 = arith.constant 0 : index
    %3 = vector.load %arg8[%c0, %c0_1] : memref<16x512xf32, #tpu.memory_space<vmem>>, vector<16x512xf32>
    %c0_2 = arith.constant 0 : index
    %c0_3 = arith.constant 0 : index
    %c0_4 = arith.constant 0 : index
    %4 = vector.load %arg4[%c0_2, %c0_3, %c0_4] : memref<1x16x128xbf16, #tpu.memory_space<vmem>>, vector<1x16x128xbf16>
    %5 = vector.shape_cast %4 : vector<1x16x128xbf16> to vector<16x128xbf16>
    %c0_5 = arith.constant 0 : index
    %c0_6 = arith.constant 0 : index
    %c0_7 = arith.constant 0 : index
    %6 = vector.load %arg5[%c0_5, %c0_6, %c0_7] : memref<1x128x512xbf16, #tpu.memory_space<vmem>>, vector<1x128x512xbf16>
    %7 = vector.shape_cast %6 : vector<1x128x512xbf16> to vector<128x512xbf16>
    %cst = arith.constant dense<0.000000e+00> : vector<16x512xf32>
    %8 = tpu.matmul %5, %7, %cst {dimension_numbers = #tpu.dot_dimension_numbers<[1], [0], [0], [1], [0, 0, 1, 1], [], []>} : vector<16x128xbf16>, vector<128x512xbf16>, vector<16x512xf32> -> vector<16x512xf32>
    %9 = arith.addf %3, %8 : vector<16x512xf32>
    %c0_8 = arith.constant 0 : index
    %c0_9 = arith.constant 0 : index
    %10 = vector.load %arg8[%c0_8, %c0_9] : memref<16x512xf32, #tpu.memory_space<vmem>>, vector<16x512xf32>
    tpu.vector_store %arg8[%c0_8, %c0_9], %9 {strides = array<i32>} : memref<16x512xf32, #tpu.memory_space<vmem>>, vector<16x512xf32>,
    %c0_i32_10 = arith.constant 0 : i32
    %11 = arith.cmpi eq, %arg3, %c0_i32_10 : i32
    %12 = arith.extui %11 : i1 to i32
    %c0_i32_11 = arith.constant 0 : i32
    %13 = arith.cmpi ne, %12, %c0_i32_11 : i32
    scf.if %13 {
      %c0_12 = arith.constant 0 : index
      %c0_13 = arith.constant 0 : index
      %14 = vector.load %arg8[%c0_12, %c0_13] : memref<16x512xf32, #tpu.memory_space<vmem>>, vector<16x512xf32>
      %c0_14 = arith.constant 0 : index
      %c0_15 = arith.constant 0 : index
      %c0_16 = arith.constant 0 : index
      %15 = vector.load %arg6[%c0_14, %c0_15, %c0_16] : memref<1x16x512xf32, #tpu.memory_space<vmem>>, vector<1x16x512xf32>
      %16 = vector.shape_cast %15 : vector<1x16x512xf32> to vector<16x512xf32>
      %17 = vector.shape_cast %14 : vector<16x512xf32> to vector<1x16x512xf32>
      tpu.vector_store %arg6[%c0_14, %c0_15, %c0_16], %17 {strides = array<i32>} : memref<1x16x512xf32, #tpu.memory_space<vmem>>, vector<1x16x512xf32>,
      %cst_17 = arith.constant dense<0.000000e+00> : vector<512xf32>
      %18 = vector.multi_reduction <add>, %14, %cst_17 [0] : vector<16x512xf32> to vector<512xf32>
      %19 = vector.shape_cast %18 : vector<512xf32> to vector<1x512xf32>
      %20 = arith.mulf %14, %14 : vector<16x512xf32>
      %cst_18 = arith.constant dense<0.000000e+00> : vector<512xf32>
      %21 = vector.multi_reduction <add>, %20, %cst_18 [0] : vector<16x512xf32> to vector<512xf32>
      %22 = vector.shape_cast %21 : vector<512xf32> to vector<1x512xf32>
      %23 = tpu.iota {dimensions = array<i32: 0>} : vector<8x512xi32>
      %c0_i32_19 = arith.constant 0 : i32
      %24 = vector.broadcast %c0_i32_19 : i32 to vector<8x512xi32>
      %25 = arith.cmpi eq, %23, %24 : vector<8x512xi32>
      %c1_i32 = arith.constant 1 : i32
      %26 = vector.broadcast %c1_i32 : i32 to vector<8x512xi32>
      %27 = arith.cmpi eq, %23, %26 : vector<8x512xi32>
      %cst_20 = arith.constant 0.000000e+00 : f32
      %28 = vector.shape_cast %22 : vector<1x512xf32> to vector<1x512xf32>
      %29 = vector.broadcast %28 : vector<1x512xf32> to vector<8x512xf32>
      %30 = vector.broadcast %cst_20 : f32 to vector<8x512xf32>
      %31 = arith.select %27, %29, %30 : vector<8x512xi1>, vector<8x512xf32>
      %32 = vector.shape_cast %19 : vector<1x512xf32> to vector<1x512xf32>
      %33 = vector.broadcast %32 : vector<1x512xf32> to vector<8x512xf32>
      %34 = arith.select %25, %33, %31 : vector<8x512xi1>, vector<8x512xf32>
      %c0_21 = arith.constant 0 : index
      %c0_22 = arith.constant 0 : index
      %c0_23 = arith.constant 0 : index
      %35 = vector.load %arg7[%c0_21, %c0_22, %c0_23] : memref<1x8x512xf32, #tpu.memory_space<vmem>>, vector<1x8x512xf32>
      %36 = vector.shape_cast %35 : vector<1x8x512xf32> to vector<8x512xf32>
      %37 = vector.shape_cast %34 : vector<8x512xf32> to vector<1x8x512xf32>
      tpu.vector_store %arg7[%c0_21, %c0_22, %c0_23], %37 {strides = array<i32>} : memref<1x8x512xf32, #tpu.memory_space<vmem>>, vector<1x8x512xf32>,
    } else {
    }
    return
  }
  func.func @transform_0(%arg0: i32, %arg1: i32, %arg2: i32, %arg3: i32) -> (i32, i32, i32) {
    %c0_i32 = arith.constant 0 : i32
    return %arg0, %arg1, %arg3 : i32, i32, i32
  }
  func.func @transform_1(%arg0: i32, %arg1: i32, %arg2: i32, %arg3: i32) -> (i32, i32, i32) {
    %c0_i32 = arith.constant 0 : i32
    return %arg0, %arg3, %arg2 : i32, i32, i32
  }
  func.func @transform_2(%arg0: i32, %arg1: i32, %arg2: i32, %arg3: i32) -> (i32, i32, i32) {
    %c0_i32 = arith.constant 0 : i32
    return %arg0, %arg1, %arg2 : i32, i32, i32
  }
  func.func @transform_3(%arg0: i32, %arg1: i32, %arg2: i32, %arg3: i32) -> (i32, i32, i32) {
    %c0_i32 = arith.constant 0 : i32
    return %arg0, %arg1, %arg2 : i32, i32, i32
  }
}

module attributes {stable_mosaic.version = 11 : i64} {
  func.func @_scale_shift_act_kernel(%arg0: i32, %arg1: memref<32x512xf32, #tpu.memory_space<vmem>>, %arg2: memref<1x512xf32, #tpu.memory_space<vmem>>, %arg3: memref<1x512xf32, #tpu.memory_space<vmem>>, %arg4: memref<32x512xf32, #tpu.memory_space<vmem>>) attributes {dimension_semantics = [#tpu.dimension_semantics<parallel>], iteration_bounds = array<i64: 1>, scalar_prefetch = 0 : i64, scratch_operands = 0 : i64, tpu.core_type = #tpu.core_type<tc>, window_params = [{transform_indices = @transform_0, window_bounds = array<i64: 32, 512>}, {pipeline_mode = #tpu.pipeline_mode<synchronous>, transform_indices = @transform_1, window_bounds = array<i64: 1, 512>}, {pipeline_mode = #tpu.pipeline_mode<synchronous>, transform_indices = @transform_2, window_bounds = array<i64: 1, 512>}, {transform_indices = @transform_3, window_bounds = array<i64: 32, 512>}]} {
    %c0 = arith.constant 0 : index
    %c0_0 = arith.constant 0 : index
    %0 = vector.load %arg1[%c0, %c0_0] : memref<32x512xf32, #tpu.memory_space<vmem>>, vector<32x512xf32>
    %c0_1 = arith.constant 0 : index
    %c0_2 = arith.constant 0 : index
    %1 = vector.load %arg2[%c0_1, %c0_2] : memref<1x512xf32, #tpu.memory_space<vmem>>, vector<1x512xf32>
    %2 = vector.broadcast %1 : vector<1x512xf32> to vector<32x512xf32>
    %3 = arith.mulf %0, %2 : vector<32x512xf32>
    %c0_3 = arith.constant 0 : index
    %c0_4 = arith.constant 0 : index
    %4 = vector.load %arg3[%c0_3, %c0_4] : memref<1x512xf32, #tpu.memory_space<vmem>>, vector<1x512xf32>
    %5 = vector.broadcast %4 : vector<1x512xf32> to vector<32x512xf32>
    %6 = arith.addf %3, %5 : vector<32x512xf32>
    %cst = arith.constant 0.000000e+00 : f32
    %7 = vector.broadcast %cst : f32 to vector<32x512xf32>
    %8 = arith.maximumf %6, %7 : vector<32x512xf32>
    %c0_5 = arith.constant 0 : index
    %c0_6 = arith.constant 0 : index
    %9 = vector.load %arg4[%c0_5, %c0_6] : memref<32x512xf32, #tpu.memory_space<vmem>>, vector<32x512xf32>
    tpu.vector_store %arg4[%c0_5, %c0_6], %8 {strides = array<i32>} : memref<32x512xf32, #tpu.memory_space<vmem>>, vector<32x512xf32>,
    return
  }
  func.func @transform_0(%arg0: i32) -> (i32, i32) {
    %c0_i32 = arith.constant 0 : i32
    %c0_i32_0 = arith.constant 0 : i32
    return %arg0, %c0_i32 : i32, i32
  }
  func.func @transform_1(%arg0: i32) -> (i32, i32) {
    %c0_i32 = arith.constant 0 : i32
    %c0_i32_0 = arith.constant 0 : i32
    %c0_i32_1 = arith.constant 0 : i32
    return %c0_i32, %c0_i32_0 : i32, i32
  }
  func.func @transform_2(%arg0: i32) -> (i32, i32) {
    %c0_i32 = arith.constant 0 : i32
    %c0_i32_0 = arith.constant 0 : i32
    %c0_i32_1 = arith.constant 0 : i32
    return %c0_i32, %c0_i32_0 : i32, i32
  }
  func.func @transform_3(%arg0: i32) -> (i32, i32) {
    %c0_i32 = arith.constant 0 : i32
    %c0_i32_0 = arith.constant 0 : i32
    return %arg0, %c0_i32 : i32, i32
  }
}

module attributes {stable_mosaic.version = 11 : i64} {
  func.func @_gemm_kernel(%arg0: i32, %arg1: i32, %arg2: i32, %arg3: i32, %arg4: memref<1x32x512xbf16, #tpu.memory_space<vmem>>, %arg5: memref<1x512x256xbf16, #tpu.memory_space<vmem>>, %arg6: memref<1x32x256xf32, #tpu.memory_space<vmem>>, %arg7: memref<1x8x256xf32, #tpu.memory_space<vmem>>, %arg8: memref<32x256xf32, #tpu.memory_space<vmem>>) attributes {dimension_semantics = [#tpu.dimension_semantics<parallel>, #tpu.dimension_semantics<parallel>, #tpu.dimension_semantics<parallel>, #tpu.dimension_semantics<arbitrary>], iteration_bounds = array<i64: 4, 1, 1, 4>, scalar_prefetch = 0 : i64, scratch_operands = 1 : i64, tpu.core_type = #tpu.core_type<tc>, window_params = [{transform_indices = @transform_0, window_bounds = array<i64: 1, 32, 512>}, {transform_indices = @transform_1, window_bounds = array<i64: 1, 512, 256>}, {transform_indices = @transform_2, window_bounds = array<i64: 1, 32, 256>}, {transform_indices = @transform_3, window_bounds = array<i64: 1, 8, 256>}]} {
    %c0_i32 = arith.constant 0 : i32
    %0 = arith.cmpi eq, %arg3, %c0_i32 : i32
    %1 = arith.extui %0 : i1 to i32
    %c0_i32_0 = arith.constant 0 : i32
    %2 = arith.cmpi ne, %1, %c0_i32_0 : i32
    scf.if %2 {
      %cst_11 = arith.constant 0.000000e+00 : f32
      %14 = vector.broadcast %cst_11 : f32 to vector<32x256xf32>
      %c0_12 = arith.constant 0 : index
      %c0_13 = arith.constant 0 : index
      %15 = vector.load %arg8[%c0_12, %c0_13] : memref<32x256xf32, #tpu.memory_space<vmem>>, vector<32x256xf32>
      tpu.vector_store %arg8[%c0_12, %c0_13], %14 {strides = array<i32>} : memref<32x256xf32, #tpu.memory_space<vmem>>, vector<32x256xf32>,
    } else {
    }
    %c0 = arith.constant 0 : index
    %c0_1 = arith.constant 0 : index
    %3 = vector.load %arg8[%c0, %c0_1] : memref<32x256xf32, #tpu.memory_space<vmem>>, vector<32x256xf32>
    %c0_2 = arith.constant 0 : index
    %c0_3 = arith.constant 0 : index
    %c0_4 = arith.constant 0 : index
    %4 = vector.load %arg4[%c0_2, %c0_3, %c0_4] : memref<1x32x512xbf16, #tpu.memory_space<vmem>>, vector<1x32x512xbf16>
    %5 = vector.shape_cast %4 : vector<1x32x512xbf16> to vector<32x512xbf16>
    %c0_5 = arith.constant 0 : index
    %c0_6 = arith.constant 0 : index
    %c0_7 = arith.constant 0 : index
    %6 = vector.load %arg5[%c0_5, %c0_6, %c0_7] : memref<1x512x256xbf16, #tpu.memory_space<vmem>>, vector<1x512x256xbf16>
    %7 = vector.shape_cast %6 : vector<1x512x256xbf16> to vector<512x256xbf16>
    %cst = arith.constant dense<0.000000e+00> : vector<32x256xf32>
    %8 = tpu.matmul %5, %7, %cst {dimension_numbers = #tpu.dot_dimension_numbers<[1], [0], [0], [1], [0, 0, 1, 1], [], []>} : vector<32x512xbf16>, vector<512x256xbf16>, vector<32x256xf32> -> vector<32x256xf32>
    %9 = arith.addf %3, %8 : vector<32x256xf32>
    %c0_8 = arith.constant 0 : index
    %c0_9 = arith.constant 0 : index
    %10 = vector.load %arg8[%c0_8, %c0_9] : memref<32x256xf32, #tpu.memory_space<vmem>>, vector<32x256xf32>
    tpu.vector_store %arg8[%c0_8, %c0_9], %9 {strides = array<i32>} : memref<32x256xf32, #tpu.memory_space<vmem>>, vector<32x256xf32>,
    %c3_i32 = arith.constant 3 : i32
    %11 = arith.cmpi eq, %arg3, %c3_i32 : i32
    %12 = arith.extui %11 : i1 to i32
    %c0_i32_10 = arith.constant 0 : i32
    %13 = arith.cmpi ne, %12, %c0_i32_10 : i32
    scf.if %13 {
      %c0_11 = arith.constant 0 : index
      %c0_12 = arith.constant 0 : index
      %14 = vector.load %arg8[%c0_11, %c0_12] : memref<32x256xf32, #tpu.memory_space<vmem>>, vector<32x256xf32>
      %c0_13 = arith.constant 0 : index
      %c0_14 = arith.constant 0 : index
      %c0_15 = arith.constant 0 : index
      %15 = vector.load %arg6[%c0_13, %c0_14, %c0_15] : memref<1x32x256xf32, #tpu.memory_space<vmem>>, vector<1x32x256xf32>
      %16 = vector.shape_cast %15 : vector<1x32x256xf32> to vector<32x256xf32>
      %17 = vector.shape_cast %14 : vector<32x256xf32> to vector<1x32x256xf32>
      tpu.vector_store %arg6[%c0_13, %c0_14, %c0_15], %17 {strides = array<i32>} : memref<1x32x256xf32, #tpu.memory_space<vmem>>, vector<1x32x256xf32>,
      %cst_16 = arith.constant dense<0.000000e+00> : vector<256xf32>
      %18 = vector.multi_reduction <add>, %14, %cst_16 [0] : vector<32x256xf32> to vector<256xf32>
      %19 = vector.shape_cast %18 : vector<256xf32> to vector<1x256xf32>
      %20 = arith.mulf %14, %14 : vector<32x256xf32>
      %cst_17 = arith.constant dense<0.000000e+00> : vector<256xf32>
      %21 = vector.multi_reduction <add>, %20, %cst_17 [0] : vector<32x256xf32> to vector<256xf32>
      %22 = vector.shape_cast %21 : vector<256xf32> to vector<1x256xf32>
      %23 = tpu.iota {dimensions = array<i32: 0>} : vector<8x256xi32>
      %c0_i32_18 = arith.constant 0 : i32
      %24 = vector.broadcast %c0_i32_18 : i32 to vector<8x256xi32>
      %25 = arith.cmpi eq, %23, %24 : vector<8x256xi32>
      %c1_i32 = arith.constant 1 : i32
      %26 = vector.broadcast %c1_i32 : i32 to vector<8x256xi32>
      %27 = arith.cmpi eq, %23, %26 : vector<8x256xi32>
      %cst_19 = arith.constant 0.000000e+00 : f32
      %28 = vector.shape_cast %22 : vector<1x256xf32> to vector<1x256xf32>
      %29 = vector.broadcast %28 : vector<1x256xf32> to vector<8x256xf32>
      %30 = vector.broadcast %cst_19 : f32 to vector<8x256xf32>
      %31 = arith.select %27, %29, %30 : vector<8x256xi1>, vector<8x256xf32>
      %32 = vector.shape_cast %19 : vector<1x256xf32> to vector<1x256xf32>
      %33 = vector.broadcast %32 : vector<1x256xf32> to vector<8x256xf32>
      %34 = arith.select %25, %33, %31 : vector<8x256xi1>, vector<8x256xf32>
      %c0_20 = arith.constant 0 : index
      %c0_21 = arith.constant 0 : index
      %c0_22 = arith.constant 0 : index
      %35 = vector.load %arg7[%c0_20, %c0_21, %c0_22] : memref<1x8x256xf32, #tpu.memory_space<vmem>>, vector<1x8x256xf32>
      %36 = vector.shape_cast %35 : vector<1x8x256xf32> to vector<8x256xf32>
      %37 = vector.shape_cast %34 : vector<8x256xf32> to vector<1x8x256xf32>
      tpu.vector_store %arg7[%c0_20, %c0_21, %c0_22], %37 {strides = array<i32>} : memref<1x8x256xf32, #tpu.memory_space<vmem>>, vector<1x8x256xf32>,
    } else {
    }
    return
  }
  func.func @transform_0(%arg0: i32, %arg1: i32, %arg2: i32, %arg3: i32) -> (i32, i32, i32) {
    %c0_i32 = arith.constant 0 : i32
    return %arg0, %arg1, %arg3 : i32, i32, i32
  }
  func.func @transform_1(%arg0: i32, %arg1: i32, %arg2: i32, %arg3: i32) -> (i32, i32, i32) {
    %c0_i32 = arith.constant 0 : i32
    return %arg0, %arg3, %arg2 : i32, i32, i32
  }
  func.func @transform_2(%arg0: i32, %arg1: i32, %arg2: i32, %arg3: i32) -> (i32, i32, i32) {
    %c0_i32 = arith.constant 0 : i32
    return %arg0, %arg1, %arg2 : i32, i32, i32
  }
  func.func @transform_3(%arg0: i32, %arg1: i32, %arg2: i32, %arg3: i32) -> (i32, i32, i32) {
    %c0_i32 = arith.constant 0 : i32
    return %arg0, %arg1, %arg2 : i32, i32, i32
  }
}

module attributes {stable_mosaic.version = 11 : i64} {
  func.func @_scale_shift_act_kernel(%arg0: i32, %arg1: memref<128x256xf32, #tpu.memory_space<vmem>>, %arg2: memref<1x256xf32, #tpu.memory_space<vmem>>, %arg3: memref<1x256xf32, #tpu.memory_space<vmem>>, %arg4: memref<128x256xf32, #tpu.memory_space<vmem>>) attributes {dimension_semantics = [#tpu.dimension_semantics<parallel>], iteration_bounds = array<i64: 1>, scalar_prefetch = 0 : i64, scratch_operands = 0 : i64, tpu.core_type = #tpu.core_type<tc>, window_params = [{transform_indices = @transform_0, window_bounds = array<i64: 128, 256>}, {pipeline_mode = #tpu.pipeline_mode<synchronous>, transform_indices = @transform_1, window_bounds = array<i64: 1, 256>}, {pipeline_mode = #tpu.pipeline_mode<synchronous>, transform_indices = @transform_2, window_bounds = array<i64: 1, 256>}, {transform_indices = @transform_3, window_bounds = array<i64: 128, 256>}]} {
    %c0 = arith.constant 0 : index
    %c0_0 = arith.constant 0 : index
    %0 = vector.load %arg1[%c0, %c0_0] : memref<128x256xf32, #tpu.memory_space<vmem>>, vector<128x256xf32>
    %c0_1 = arith.constant 0 : index
    %c0_2 = arith.constant 0 : index
    %1 = vector.load %arg2[%c0_1, %c0_2] : memref<1x256xf32, #tpu.memory_space<vmem>>, vector<1x256xf32>
    %2 = vector.broadcast %1 : vector<1x256xf32> to vector<128x256xf32>
    %3 = arith.mulf %0, %2 : vector<128x256xf32>
    %c0_3 = arith.constant 0 : index
    %c0_4 = arith.constant 0 : index
    %4 = vector.load %arg3[%c0_3, %c0_4] : memref<1x256xf32, #tpu.memory_space<vmem>>, vector<1x256xf32>
    %5 = vector.broadcast %4 : vector<1x256xf32> to vector<128x256xf32>
    %6 = arith.addf %3, %5 : vector<128x256xf32>
    %cst = arith.constant 0.000000e+00 : f32
    %7 = vector.broadcast %cst : f32 to vector<128x256xf32>
    %8 = arith.maximumf %6, %7 : vector<128x256xf32>
    %c0_5 = arith.constant 0 : index
    %c0_6 = arith.constant 0 : index
    %9 = vector.load %arg4[%c0_5, %c0_6] : memref<128x256xf32, #tpu.memory_space<vmem>>, vector<128x256xf32>
    tpu.vector_store %arg4[%c0_5, %c0_6], %8 {strides = array<i32>} : memref<128x256xf32, #tpu.memory_space<vmem>>, vector<128x256xf32>,
    return
  }
  func.func @transform_0(%arg0: i32) -> (i32, i32) {
    %c0_i32 = arith.constant 0 : i32
    %c0_i32_0 = arith.constant 0 : i32
    return %arg0, %c0_i32 : i32, i32
  }
  func.func @transform_1(%arg0: i32) -> (i32, i32) {
    %c0_i32 = arith.constant 0 : i32
    %c0_i32_0 = arith.constant 0 : i32
    %c0_i32_1 = arith.constant 0 : i32
    return %c0_i32, %c0_i32_0 : i32, i32
  }
  func.func @transform_2(%arg0: i32) -> (i32, i32) {
    %c0_i32 = arith.constant 0 : i32
    %c0_i32_0 = arith.constant 0 : i32
    %c0_i32_1 = arith.constant 0 : i32
    return %c0_i32, %c0_i32_0 : i32, i32
  }
  func.func @transform_3(%arg0: i32) -> (i32, i32) {
    %c0_i32 = arith.constant 0 : i32
    %c0_i32_0 = arith.constant 0 : i32
    return %arg0, %c0_i32 : i32, i32
  }
}

module attributes {stable_mosaic.version = 11 : i64} {
  func.func @_gemm_kernel(%arg0: i32, %arg1: i32, %arg2: i32, %arg3: i32, %arg4: memref<1x128x512xbf16, #tpu.memory_space<vmem>>, %arg5: memref<1x512x128xbf16, #tpu.memory_space<vmem>>, %arg6: memref<1x128x128xf32, #tpu.memory_space<vmem>>, %arg7: memref<1x8x128xf32, #tpu.memory_space<vmem>>, %arg8: memref<128x128xf32, #tpu.memory_space<vmem>>) attributes {dimension_semantics = [#tpu.dimension_semantics<parallel>, #tpu.dimension_semantics<parallel>, #tpu.dimension_semantics<parallel>, #tpu.dimension_semantics<arbitrary>], iteration_bounds = array<i64: 4, 1, 1, 2>, scalar_prefetch = 0 : i64, scratch_operands = 1 : i64, tpu.core_type = #tpu.core_type<tc>, window_params = [{transform_indices = @transform_0, window_bounds = array<i64: 1, 128, 512>}, {transform_indices = @transform_1, window_bounds = array<i64: 1, 512, 128>}, {transform_indices = @transform_2, window_bounds = array<i64: 1, 128, 128>}, {transform_indices = @transform_3, window_bounds = array<i64: 1, 8, 128>}]} {
    %c0_i32 = arith.constant 0 : i32
    %0 = arith.cmpi eq, %arg3, %c0_i32 : i32
    %1 = arith.extui %0 : i1 to i32
    %c0_i32_0 = arith.constant 0 : i32
    %2 = arith.cmpi ne, %1, %c0_i32_0 : i32
    scf.if %2 {
      %cst_11 = arith.constant 0.000000e+00 : f32
      %14 = vector.broadcast %cst_11 : f32 to vector<128x128xf32>
      %c0_12 = arith.constant 0 : index
      %c0_13 = arith.constant 0 : index
      %15 = vector.load %arg8[%c0_12, %c0_13] : memref<128x128xf32, #tpu.memory_space<vmem>>, vector<128x128xf32>
      tpu.vector_store %arg8[%c0_12, %c0_13], %14 {strides = array<i32>} : memref<128x128xf32, #tpu.memory_space<vmem>>, vector<128x128xf32>,
    } else {
    }
    %c0 = arith.constant 0 : index
    %c0_1 = arith.constant 0 : index
    %3 = vector.load %arg8[%c0, %c0_1] : memref<128x128xf32, #tpu.memory_space<vmem>>, vector<128x128xf32>
    %c0_2 = arith.constant 0 : index
    %c0_3 = arith.constant 0 : index
    %c0_4 = arith.constant 0 : index
    %4 = vector.load %arg4[%c0_2, %c0_3, %c0_4] : memref<1x128x512xbf16, #tpu.memory_space<vmem>>, vector<1x128x512xbf16>
    %5 = vector.shape_cast %4 : vector<1x128x512xbf16> to vector<128x512xbf16>
    %c0_5 = arith.constant 0 : index
    %c0_6 = arith.constant 0 : index
    %c0_7 = arith.constant 0 : index
    %6 = vector.load %arg5[%c0_5, %c0_6, %c0_7] : memref<1x512x128xbf16, #tpu.memory_space<vmem>>, vector<1x512x128xbf16>
    %7 = vector.shape_cast %6 : vector<1x512x128xbf16> to vector<512x128xbf16>
    %cst = arith.constant dense<0.000000e+00> : vector<128x128xf32>
    %8 = tpu.matmul %5, %7, %cst {dimension_numbers = #tpu.dot_dimension_numbers<[1], [0], [0], [1], [0, 0, 1, 1], [], []>} : vector<128x512xbf16>, vector<512x128xbf16>, vector<128x128xf32> -> vector<128x128xf32>
    %9 = arith.addf %3, %8 : vector<128x128xf32>
    %c0_8 = arith.constant 0 : index
    %c0_9 = arith.constant 0 : index
    %10 = vector.load %arg8[%c0_8, %c0_9] : memref<128x128xf32, #tpu.memory_space<vmem>>, vector<128x128xf32>
    tpu.vector_store %arg8[%c0_8, %c0_9], %9 {strides = array<i32>} : memref<128x128xf32, #tpu.memory_space<vmem>>, vector<128x128xf32>,
    %c1_i32 = arith.constant 1 : i32
    %11 = arith.cmpi eq, %arg3, %c1_i32 : i32
    %12 = arith.extui %11 : i1 to i32
    %c0_i32_10 = arith.constant 0 : i32
    %13 = arith.cmpi ne, %12, %c0_i32_10 : i32
    scf.if %13 {
      %c0_11 = arith.constant 0 : index
      %c0_12 = arith.constant 0 : index
      %14 = vector.load %arg8[%c0_11, %c0_12] : memref<128x128xf32, #tpu.memory_space<vmem>>, vector<128x128xf32>
      %c0_13 = arith.constant 0 : index
      %c0_14 = arith.constant 0 : index
      %c0_15 = arith.constant 0 : index
      %15 = vector.load %arg6[%c0_13, %c0_14, %c0_15] : memref<1x128x128xf32, #tpu.memory_space<vmem>>, vector<1x128x128xf32>
      %16 = vector.shape_cast %15 : vector<1x128x128xf32> to vector<128x128xf32>
      %17 = vector.shape_cast %14 : vector<128x128xf32> to vector<1x128x128xf32>
      tpu.vector_store %arg6[%c0_13, %c0_14, %c0_15], %17 {strides = array<i32>} : memref<1x128x128xf32, #tpu.memory_space<vmem>>, vector<1x128x128xf32>,
      %cst_16 = arith.constant dense<0.000000e+00> : vector<128xf32>
      %18 = vector.multi_reduction <add>, %14, %cst_16 [0] : vector<128x128xf32> to vector<128xf32>
      %19 = vector.shape_cast %18 : vector<128xf32> to vector<1x128xf32>
      %20 = arith.mulf %14, %14 : vector<128x128xf32>
      %cst_17 = arith.constant dense<0.000000e+00> : vector<128xf32>
      %21 = vector.multi_reduction <add>, %20, %cst_17 [0] : vector<128x128xf32> to vector<128xf32>
      %22 = vector.shape_cast %21 : vector<128xf32> to vector<1x128xf32>
      %23 = tpu.iota {dimensions = array<i32: 0>} : vector<8x128xi32>
      %c0_i32_18 = arith.constant 0 : i32
      %24 = vector.broadcast %c0_i32_18 : i32 to vector<8x128xi32>
      %25 = arith.cmpi eq, %23, %24 : vector<8x128xi32>
      %c1_i32_19 = arith.constant 1 : i32
      %26 = vector.broadcast %c1_i32_19 : i32 to vector<8x128xi32>
      %27 = arith.cmpi eq, %23, %26 : vector<8x128xi32>
      %cst_20 = arith.constant 0.000000e+00 : f32
      %28 = vector.shape_cast %22 : vector<1x128xf32> to vector<1x128xf32>
      %29 = vector.broadcast %28 : vector<1x128xf32> to vector<8x128xf32>
      %30 = vector.broadcast %cst_20 : f32 to vector<8x128xf32>
      %31 = arith.select %27, %29, %30 : vector<8x128xi1>, vector<8x128xf32>
      %32 = vector.shape_cast %19 : vector<1x128xf32> to vector<1x128xf32>
      %33 = vector.broadcast %32 : vector<1x128xf32> to vector<8x128xf32>
      %34 = arith.select %25, %33, %31 : vector<8x128xi1>, vector<8x128xf32>
      %c0_21 = arith.constant 0 : index
      %c0_22 = arith.constant 0 : index
      %c0_23 = arith.constant 0 : index
      %35 = vector.load %arg7[%c0_21, %c0_22, %c0_23] : memref<1x8x128xf32, #tpu.memory_space<vmem>>, vector<1x8x128xf32>
      %36 = vector.shape_cast %35 : vector<1x8x128xf32> to vector<8x128xf32>
      %37 = vector.shape_cast %34 : vector<8x128xf32> to vector<1x8x128xf32>
      tpu.vector_store %arg7[%c0_21, %c0_22, %c0_23], %37 {strides = array<i32>} : memref<1x8x128xf32, #tpu.memory_space<vmem>>, vector<1x8x128xf32>,
    } else {
    }
    return
  }
  func.func @transform_0(%arg0: i32, %arg1: i32, %arg2: i32, %arg3: i32) -> (i32, i32, i32) {
    %c0_i32 = arith.constant 0 : i32
    return %arg0, %arg1, %arg3 : i32, i32, i32
  }
  func.func @transform_1(%arg0: i32, %arg1: i32, %arg2: i32, %arg3: i32) -> (i32, i32, i32) {
    %c0_i32 = arith.constant 0 : i32
    return %arg0, %arg3, %arg2 : i32, i32, i32
  }
  func.func @transform_2(%arg0: i32, %arg1: i32, %arg2: i32, %arg3: i32) -> (i32, i32, i32) {
    %c0_i32 = arith.constant 0 : i32
    return %arg0, %arg1, %arg2 : i32, i32, i32
  }
  func.func @transform_3(%arg0: i32, %arg1: i32, %arg2: i32, %arg3: i32) -> (i32, i32, i32) {
    %c0_i32 = arith.constant 0 : i32
    return %arg0, %arg1, %arg2 : i32, i32, i32
  }
}

module attributes {stable_mosaic.version = 11 : i64} {
  func.func @_scale_shift_act_kernel(%arg0: i32, %arg1: memref<512x128xf32, #tpu.memory_space<vmem>>, %arg2: memref<1x128xf32, #tpu.memory_space<vmem>>, %arg3: memref<1x128xf32, #tpu.memory_space<vmem>>, %arg4: memref<512x128xf32, #tpu.memory_space<vmem>>) attributes {dimension_semantics = [#tpu.dimension_semantics<parallel>], iteration_bounds = array<i64: 1>, scalar_prefetch = 0 : i64, scratch_operands = 0 : i64, tpu.core_type = #tpu.core_type<tc>, window_params = [{transform_indices = @transform_0, window_bounds = array<i64: 512, 128>}, {pipeline_mode = #tpu.pipeline_mode<synchronous>, transform_indices = @transform_1, window_bounds = array<i64: 1, 128>}, {pipeline_mode = #tpu.pipeline_mode<synchronous>, transform_indices = @transform_2, window_bounds = array<i64: 1, 128>}, {transform_indices = @transform_3, window_bounds = array<i64: 512, 128>}]} {
    %c0 = arith.constant 0 : index
    %c0_0 = arith.constant 0 : index
    %0 = vector.load %arg1[%c0, %c0_0] : memref<512x128xf32, #tpu.memory_space<vmem>>, vector<512x128xf32>
    %c0_1 = arith.constant 0 : index
    %c0_2 = arith.constant 0 : index
    %1 = vector.load %arg2[%c0_1, %c0_2] : memref<1x128xf32, #tpu.memory_space<vmem>>, vector<1x128xf32>
    %2 = vector.broadcast %1 : vector<1x128xf32> to vector<512x128xf32>
    %3 = arith.mulf %0, %2 : vector<512x128xf32>
    %c0_3 = arith.constant 0 : index
    %c0_4 = arith.constant 0 : index
    %4 = vector.load %arg3[%c0_3, %c0_4] : memref<1x128xf32, #tpu.memory_space<vmem>>, vector<1x128xf32>
    %5 = vector.broadcast %4 : vector<1x128xf32> to vector<512x128xf32>
    %6 = arith.addf %3, %5 : vector<512x128xf32>
    %cst = arith.constant 0.000000e+00 : f32
    %7 = vector.broadcast %cst : f32 to vector<512x128xf32>
    %8 = arith.maximumf %6, %7 : vector<512x128xf32>
    %c0_5 = arith.constant 0 : index
    %c0_6 = arith.constant 0 : index
    %9 = vector.load %arg4[%c0_5, %c0_6] : memref<512x128xf32, #tpu.memory_space<vmem>>, vector<512x128xf32>
    tpu.vector_store %arg4[%c0_5, %c0_6], %8 {strides = array<i32>} : memref<512x128xf32, #tpu.memory_space<vmem>>, vector<512x128xf32>,
    return
  }
  func.func @transform_0(%arg0: i32) -> (i32, i32) {
    %c0_i32 = arith.constant 0 : i32
    %c0_i32_0 = arith.constant 0 : i32
    return %arg0, %c0_i32 : i32, i32
  }
  func.func @transform_1(%arg0: i32) -> (i32, i32) {
    %c0_i32 = arith.constant 0 : i32
    %c0_i32_0 = arith.constant 0 : i32
    %c0_i32_1 = arith.constant 0 : i32
    return %c0_i32, %c0_i32_0 : i32, i32
  }
  func.func @transform_2(%arg0: i32) -> (i32, i32) {
    %c0_i32 = arith.constant 0 : i32
    %c0_i32_0 = arith.constant 0 : i32
    %c0_i32_1 = arith.constant 0 : i32
    return %c0_i32, %c0_i32_0 : i32, i32
  }
  func.func @transform_3(%arg0: i32) -> (i32, i32) {
    %c0_i32 = arith.constant 0 : i32
    %c0_i32_0 = arith.constant 0 : i32
    return %arg0, %c0_i32 : i32, i32
  }
}

module attributes {stable_mosaic.version = 11 : i64} {
  func.func @_gemm_kernel(%arg0: i32, %arg1: i32, %arg2: i32, %arg3: i32, %arg4: memref<1x512x512xbf16, #tpu.memory_space<vmem>>, %arg5: memref<1x512x128xbf16, #tpu.memory_space<vmem>>, %arg6: memref<1x512x128xf32, #tpu.memory_space<vmem>>, %arg7: memref<1x8x128xf32, #tpu.memory_space<vmem>>, %arg8: memref<512x128xf32, #tpu.memory_space<vmem>>) attributes {dimension_semantics = [#tpu.dimension_semantics<parallel>, #tpu.dimension_semantics<parallel>, #tpu.dimension_semantics<parallel>, #tpu.dimension_semantics<arbitrary>], iteration_bounds = array<i64: 4, 1, 1, 1>, scalar_prefetch = 0 : i64, scratch_operands = 1 : i64, tpu.core_type = #tpu.core_type<tc>, window_params = [{transform_indices = @transform_0, window_bounds = array<i64: 1, 512, 512>}, {transform_indices = @transform_1, window_bounds = array<i64: 1, 512, 128>}, {transform_indices = @transform_2, window_bounds = array<i64: 1, 512, 128>}, {transform_indices = @transform_3, window_bounds = array<i64: 1, 8, 128>}]} {
    %c0_i32 = arith.constant 0 : i32
    %0 = arith.cmpi eq, %arg3, %c0_i32 : i32
    %1 = arith.extui %0 : i1 to i32
    %c0_i32_0 = arith.constant 0 : i32
    %2 = arith.cmpi ne, %1, %c0_i32_0 : i32
    scf.if %2 {
      %cst_12 = arith.constant 0.000000e+00 : f32
      %14 = vector.broadcast %cst_12 : f32 to vector<512x128xf32>
      %c0_13 = arith.constant 0 : index
      %c0_14 = arith.constant 0 : index
      %15 = vector.load %arg8[%c0_13, %c0_14] : memref<512x128xf32, #tpu.memory_space<vmem>>, vector<512x128xf32>
      tpu.vector_store %arg8[%c0_13, %c0_14], %14 {strides = array<i32>} : memref<512x128xf32, #tpu.memory_space<vmem>>, vector<512x128xf32>,
    } else {
    }
    %c0 = arith.constant 0 : index
    %c0_1 = arith.constant 0 : index
    %3 = vector.load %arg8[%c0, %c0_1] : memref<512x128xf32, #tpu.memory_space<vmem>>, vector<512x128xf32>
    %c0_2 = arith.constant 0 : index
    %c0_3 = arith.constant 0 : index
    %c0_4 = arith.constant 0 : index
    %4 = vector.load %arg4[%c0_2, %c0_3, %c0_4] : memref<1x512x512xbf16, #tpu.memory_space<vmem>>, vector<1x512x512xbf16>
    %5 = vector.shape_cast %4 : vector<1x512x512xbf16> to vector<512x512xbf16>
    %c0_5 = arith.constant 0 : index
    %c0_6 = arith.constant 0 : index
    %c0_7 = arith.constant 0 : index
    %6 = vector.load %arg5[%c0_5, %c0_6, %c0_7] : memref<1x512x128xbf16, #tpu.memory_space<vmem>>, vector<1x512x128xbf16>
    %7 = vector.shape_cast %6 : vector<1x512x128xbf16> to vector<512x128xbf16>
    %cst = arith.constant dense<0.000000e+00> : vector<512x128xf32>
    %8 = tpu.matmul %5, %7, %cst {dimension_numbers = #tpu.dot_dimension_numbers<[1], [0], [0], [1], [0, 0, 1, 1], [], []>} : vector<512x512xbf16>, vector<512x128xbf16>, vector<512x128xf32> -> vector<512x128xf32>
    %9 = arith.addf %3, %8 : vector<512x128xf32>
    %c0_8 = arith.constant 0 : index
    %c0_9 = arith.constant 0 : index
    %10 = vector.load %arg8[%c0_8, %c0_9] : memref<512x128xf32, #tpu.memory_space<vmem>>, vector<512x128xf32>
    tpu.vector_store %arg8[%c0_8, %c0_9], %9 {strides = array<i32>} : memref<512x128xf32, #tpu.memory_space<vmem>>, vector<512x128xf32>,
    %c0_i32_10 = arith.constant 0 : i32
    %11 = arith.cmpi eq, %arg3, %c0_i32_10 : i32
    %12 = arith.extui %11 : i1 to i32
    %c0_i32_11 = arith.constant 0 : i32
    %13 = arith.cmpi ne, %12, %c0_i32_11 : i32
    scf.if %13 {
      %c0_12 = arith.constant 0 : index
      %c0_13 = arith.constant 0 : index
      %14 = vector.load %arg8[%c0_12, %c0_13] : memref<512x128xf32, #tpu.memory_space<vmem>>, vector<512x128xf32>
      %c0_14 = arith.constant 0 : index
      %c0_15 = arith.constant 0 : index
      %c0_16 = arith.constant 0 : index
      %15 = vector.load %arg6[%c0_14, %c0_15, %c0_16] : memref<1x512x128xf32, #tpu.memory_space<vmem>>, vector<1x512x128xf32>
      %16 = vector.shape_cast %15 : vector<1x512x128xf32> to vector<512x128xf32>
      %17 = vector.shape_cast %14 : vector<512x128xf32> to vector<1x512x128xf32>
      tpu.vector_store %arg6[%c0_14, %c0_15, %c0_16], %17 {strides = array<i32>} : memref<1x512x128xf32, #tpu.memory_space<vmem>>, vector<1x512x128xf32>,
      %cst_17 = arith.constant dense<0.000000e+00> : vector<128xf32>
      %18 = vector.multi_reduction <add>, %14, %cst_17 [0] : vector<512x128xf32> to vector<128xf32>
      %19 = vector.shape_cast %18 : vector<128xf32> to vector<1x128xf32>
      %20 = arith.mulf %14, %14 : vector<512x128xf32>
      %cst_18 = arith.constant dense<0.000000e+00> : vector<128xf32>
      %21 = vector.multi_reduction <add>, %20, %cst_18 [0] : vector<512x128xf32> to vector<128xf32>
      %22 = vector.shape_cast %21 : vector<128xf32> to vector<1x128xf32>
      %23 = tpu.iota {dimensions = array<i32: 0>} : vector<8x128xi32>
      %c0_i32_19 = arith.constant 0 : i32
      %24 = vector.broadcast %c0_i32_19 : i32 to vector<8x128xi32>
      %25 = arith.cmpi eq, %23, %24 : vector<8x128xi32>
      %c1_i32 = arith.constant 1 : i32
      %26 = vector.broadcast %c1_i32 : i32 to vector<8x128xi32>
      %27 = arith.cmpi eq, %23, %26 : vector<8x128xi32>
      %cst_20 = arith.constant 0.000000e+00 : f32
      %28 = vector.shape_cast %22 : vector<1x128xf32> to vector<1x128xf32>
      %29 = vector.broadcast %28 : vector<1x128xf32> to vector<8x128xf32>
      %30 = vector.broadcast %cst_20 : f32 to vector<8x128xf32>
      %31 = arith.select %27, %29, %30 : vector<8x128xi1>, vector<8x128xf32>
      %32 = vector.shape_cast %19 : vector<1x128xf32> to vector<1x128xf32>
      %33 = vector.broadcast %32 : vector<1x128xf32> to vector<8x128xf32>
      %34 = arith.select %25, %33, %31 : vector<8x128xi1>, vector<8x128xf32>
      %c0_21 = arith.constant 0 : index
      %c0_22 = arith.constant 0 : index
      %c0_23 = arith.constant 0 : index
      %35 = vector.load %arg7[%c0_21, %c0_22, %c0_23] : memref<1x8x128xf32, #tpu.memory_space<vmem>>, vector<1x8x128xf32>
      %36 = vector.shape_cast %35 : vector<1x8x128xf32> to vector<8x128xf32>
      %37 = vector.shape_cast %34 : vector<8x128xf32> to vector<1x8x128xf32>
      tpu.vector_store %arg7[%c0_21, %c0_22, %c0_23], %37 {strides = array<i32>} : memref<1x8x128xf32, #tpu.memory_space<vmem>>, vector<1x8x128xf32>,
    } else {
    }
    return
  }
  func.func @transform_0(%arg0: i32, %arg1: i32, %arg2: i32, %arg3: i32) -> (i32, i32, i32) {
    %c0_i32 = arith.constant 0 : i32
    return %arg0, %arg1, %arg3 : i32, i32, i32
  }
  func.func @transform_1(%arg0: i32, %arg1: i32, %arg2: i32, %arg3: i32) -> (i32, i32, i32) {
    %c0_i32 = arith.constant 0 : i32
    return %arg0, %arg3, %arg2 : i32, i32, i32
  }
  func.func @transform_2(%arg0: i32, %arg1: i32, %arg2: i32, %arg3: i32) -> (i32, i32, i32) {
    %c0_i32 = arith.constant 0 : i32
    return %arg0, %arg1, %arg2 : i32, i32, i32
  }
  func.func @transform_3(%arg0: i32, %arg1: i32, %arg2: i32, %arg3: i32) -> (i32, i32, i32) {
    %c0_i32 = arith.constant 0 : i32
    return %arg0, %arg1, %arg2 : i32, i32, i32
  }
}

module attributes {stable_mosaic.version = 11 : i64} {
  func.func @_scale_shift_act_kernel(%arg0: i32, %arg1: memref<1024x128xf32, #tpu.memory_space<vmem>>, %arg2: memref<1x128xf32, #tpu.memory_space<vmem>>, %arg3: memref<1x128xf32, #tpu.memory_space<vmem>>, %arg4: memref<1024x128xf32, #tpu.memory_space<vmem>>) attributes {dimension_semantics = [#tpu.dimension_semantics<parallel>], iteration_bounds = array<i64: 2>, scalar_prefetch = 0 : i64, scratch_operands = 0 : i64, tpu.core_type = #tpu.core_type<tc>, window_params = [{transform_indices = @transform_0, window_bounds = array<i64: 1024, 128>}, {pipeline_mode = #tpu.pipeline_mode<synchronous>, transform_indices = @transform_1, window_bounds = array<i64: 1, 128>}, {pipeline_mode = #tpu.pipeline_mode<synchronous>, transform_indices = @transform_2, window_bounds = array<i64: 1, 128>}, {transform_indices = @transform_3, window_bounds = array<i64: 1024, 128>}]} {
    %c0 = arith.constant 0 : index
    %c0_0 = arith.constant 0 : index
    %0 = vector.load %arg1[%c0, %c0_0] : memref<1024x128xf32, #tpu.memory_space<vmem>>, vector<1024x128xf32>
    %c0_1 = arith.constant 0 : index
    %c0_2 = arith.constant 0 : index
    %1 = vector.load %arg2[%c0_1, %c0_2] : memref<1x128xf32, #tpu.memory_space<vmem>>, vector<1x128xf32>
    %2 = vector.broadcast %1 : vector<1x128xf32> to vector<1024x128xf32>
    %3 = arith.mulf %0, %2 : vector<1024x128xf32>
    %c0_3 = arith.constant 0 : index
    %c0_4 = arith.constant 0 : index
    %4 = vector.load %arg3[%c0_3, %c0_4] : memref<1x128xf32, #tpu.memory_space<vmem>>, vector<1x128xf32>
    %5 = vector.broadcast %4 : vector<1x128xf32> to vector<1024x128xf32>
    %6 = arith.addf %3, %5 : vector<1024x128xf32>
    %cst = arith.constant 0.000000e+00 : f32
    %7 = vector.broadcast %cst : f32 to vector<1024x128xf32>
    %8 = arith.maximumf %6, %7 : vector<1024x128xf32>
    %c0_5 = arith.constant 0 : index
    %c0_6 = arith.constant 0 : index
    %9 = vector.load %arg4[%c0_5, %c0_6] : memref<1024x128xf32, #tpu.memory_space<vmem>>, vector<1024x128xf32>
    tpu.vector_store %arg4[%c0_5, %c0_6], %8 {strides = array<i32>} : memref<1024x128xf32, #tpu.memory_space<vmem>>, vector<1024x128xf32>,
    return
  }
  func.func @transform_0(%arg0: i32) -> (i32, i32) {
    %c0_i32 = arith.constant 0 : i32
    %c0_i32_0 = arith.constant 0 : i32
    return %arg0, %c0_i32 : i32, i32
  }
  func.func @transform_1(%arg0: i32) -> (i32, i32) {
    %c0_i32 = arith.constant 0 : i32
    %c0_i32_0 = arith.constant 0 : i32
    %c0_i32_1 = arith.constant 0 : i32
    return %c0_i32, %c0_i32_0 : i32, i32
  }
  func.func @transform_2(%arg0: i32) -> (i32, i32) {
    %c0_i32 = arith.constant 0 : i32
    %c0_i32_0 = arith.constant 0 : i32
    %c0_i32_1 = arith.constant 0 : i32
    return %c0_i32, %c0_i32_0 : i32, i32
  }
  func.func @transform_3(%arg0: i32) -> (i32, i32) {
    %c0_i32 = arith.constant 0 : i32
    %c0_i32_0 = arith.constant 0 : i32
    return %arg0, %c0_i32 : i32, i32
  }
}

module attributes {stable_mosaic.version = 11 : i64} {
  func.func @_gemm_kernel(%arg0: i32, %arg1: i32, %arg2: i32, %arg3: i32, %arg4: memref<1x512x256xbf16, #tpu.memory_space<vmem>>, %arg5: memref<1x256x128xbf16, #tpu.memory_space<vmem>>, %arg6: memref<1x512x128xf32, #tpu.memory_space<vmem>>, %arg7: memref<512x128xf32, #tpu.memory_space<vmem>>) attributes {dimension_semantics = [#tpu.dimension_semantics<parallel>, #tpu.dimension_semantics<parallel>, #tpu.dimension_semantics<parallel>, #tpu.dimension_semantics<arbitrary>], iteration_bounds = array<i64: 4, 4, 1, 1>, scalar_prefetch = 0 : i64, scratch_operands = 1 : i64, tpu.core_type = #tpu.core_type<tc>, window_params = [{transform_indices = @transform_0, window_bounds = array<i64: 1, 512, 256>}, {transform_indices = @transform_1, window_bounds = array<i64: 1, 256, 128>}, {transform_indices = @transform_2, window_bounds = array<i64: 1, 512, 128>}]} {
    %c0_i32 = arith.constant 0 : i32
    %0 = arith.cmpi eq, %arg3, %c0_i32 : i32
    %1 = arith.extui %0 : i1 to i32
    %c0_i32_0 = arith.constant 0 : i32
    %2 = arith.cmpi ne, %1, %c0_i32_0 : i32
    scf.if %2 {
      %cst_12 = arith.constant 0.000000e+00 : f32
      %14 = vector.broadcast %cst_12 : f32 to vector<512x128xf32>
      %c0_13 = arith.constant 0 : index
      %c0_14 = arith.constant 0 : index
      %15 = vector.load %arg7[%c0_13, %c0_14] : memref<512x128xf32, #tpu.memory_space<vmem>>, vector<512x128xf32>
      tpu.vector_store %arg7[%c0_13, %c0_14], %14 {strides = array<i32>} : memref<512x128xf32, #tpu.memory_space<vmem>>, vector<512x128xf32>,
    } else {
    }
    %c0 = arith.constant 0 : index
    %c0_1 = arith.constant 0 : index
    %3 = vector.load %arg7[%c0, %c0_1] : memref<512x128xf32, #tpu.memory_space<vmem>>, vector<512x128xf32>
    %c0_2 = arith.constant 0 : index
    %c0_3 = arith.constant 0 : index
    %c0_4 = arith.constant 0 : index
    %4 = vector.load %arg4[%c0_2, %c0_3, %c0_4] : memref<1x512x256xbf16, #tpu.memory_space<vmem>>, vector<1x512x256xbf16>
    %5 = vector.shape_cast %4 : vector<1x512x256xbf16> to vector<512x256xbf16>
    %c0_5 = arith.constant 0 : index
    %c0_6 = arith.constant 0 : index
    %c0_7 = arith.constant 0 : index
    %6 = vector.load %arg5[%c0_5, %c0_6, %c0_7] : memref<1x256x128xbf16, #tpu.memory_space<vmem>>, vector<1x256x128xbf16>
    %7 = vector.shape_cast %6 : vector<1x256x128xbf16> to vector<256x128xbf16>
    %cst = arith.constant dense<0.000000e+00> : vector<512x128xf32>
    %8 = tpu.matmul %5, %7, %cst {dimension_numbers = #tpu.dot_dimension_numbers<[1], [0], [0], [1], [0, 0, 1, 1], [], []>} : vector<512x256xbf16>, vector<256x128xbf16>, vector<512x128xf32> -> vector<512x128xf32>
    %9 = arith.addf %3, %8 : vector<512x128xf32>
    %c0_8 = arith.constant 0 : index
    %c0_9 = arith.constant 0 : index
    %10 = vector.load %arg7[%c0_8, %c0_9] : memref<512x128xf32, #tpu.memory_space<vmem>>, vector<512x128xf32>
    tpu.vector_store %arg7[%c0_8, %c0_9], %9 {strides = array<i32>} : memref<512x128xf32, #tpu.memory_space<vmem>>, vector<512x128xf32>,
    %c0_i32_10 = arith.constant 0 : i32
    %11 = arith.cmpi eq, %arg3, %c0_i32_10 : i32
    %12 = arith.extui %11 : i1 to i32
    %c0_i32_11 = arith.constant 0 : i32
    %13 = arith.cmpi ne, %12, %c0_i32_11 : i32
    scf.if %13 {
      %c0_12 = arith.constant 0 : index
      %c0_13 = arith.constant 0 : index
      %14 = vector.load %arg7[%c0_12, %c0_13] : memref<512x128xf32, #tpu.memory_space<vmem>>, vector<512x128xf32>
      %15 = math.tanh %14 : vector<512x128xf32>
      %c0_14 = arith.constant 0 : index
      %c0_15 = arith.constant 0 : index
      %c0_16 = arith.constant 0 : index
      %16 = vector.load %arg6[%c0_14, %c0_15, %c0_16] : memref<1x512x128xf32, #tpu.memory_space<vmem>>, vector<1x512x128xf32>
      %17 = vector.shape_cast %16 : vector<1x512x128xf32> to vector<512x128xf32>
      %18 = vector.shape_cast %15 : vector<512x128xf32> to vector<1x512x128xf32>
      tpu.vector_store %arg6[%c0_14, %c0_15, %c0_16], %18 {strides = array<i32>} : memref<1x512x128xf32, #tpu.memory_space<vmem>>, vector<1x512x128xf32>,
    } else {
    }
    return
  }
  func.func @transform_0(%arg0: i32, %arg1: i32, %arg2: i32, %arg3: i32) -> (i32, i32, i32) {
    %c0_i32 = arith.constant 0 : i32
    return %arg0, %arg1, %arg3 : i32, i32, i32
  }
  func.func @transform_1(%arg0: i32, %arg1: i32, %arg2: i32, %arg3: i32) -> (i32, i32, i32) {
    %c0_i32 = arith.constant 0 : i32
    return %arg0, %arg3, %arg2 : i32, i32, i32
  }
  func.func @transform_2(%arg0: i32, %arg1: i32, %arg2: i32, %arg3: i32) -> (i32, i32, i32) {
    %c0_i32 = arith.constant 0 : i32
    return %arg0, %arg1, %arg2 : i32, i32, i32
  }
}

</mosaic_0001>

<llo_original>
// kernel: squeeze.11
$region0: #{squeeze.11}
  %s0 = inlined_call_operand.vmem [shape: f32[1,2,8192], index: 0, kind: input, shape index: {}]
  %s1 = inlined_call_operand.vmem [shape: f32[32,512], index: 1, kind: output, shape index: {}]
  $region1: #{squeeze.11} parent=0
    #allocation0 [shape = 'u8[262144]{0}', space=vmem, size = 0x40000, scoped, tag = 'scoped mem for input reshape']
    %s3 = sshllo.u32 0, 2
    %s4 = smul.addr 2, 63
    %s5 = scalar_lea.vmem %s0, %s4
    %v6 = vld [vmem:[%s5] sm:%s3]
    %s7 = scalar_lea.vmem [#allocation0], 504
    %8 = vst [vmem:[%s7] sm:%s3] %v6
    %s9 = smul.addr 2, 62
    %s10 = scalar_lea.vmem %s0, %s9
    %v11 = vld [vmem:[%s10] sm:%s3]
    %s12 = scalar_lea.vmem [#allocation0], 496
    %13 = vst [vmem:[%s12] sm:%s3] %v11
    %s14 = smul.addr 2, 61
    %s15 = scalar_lea.vmem %s0, %s14
    %v16 = vld [vmem:[%s15] sm:%s3]
    %s17 = scalar_lea.vmem [#allocation0], 488
    %18 = vst [vmem:[%s17] sm:%s3] %v16
    %s19 = smul.addr 2, 60
    %s20 = scalar_lea.vmem %s0, %s19
    %v21 = vld [vmem:[%s20] sm:%s3]
    %s22 = scalar_lea.vmem [#allocation0], 480
    %23 = vst [vmem:[%s22] sm:%s3] %v21
    %s24 = smul.addr 2, 59
    %s25 = scalar_lea.vmem %s0, %s24
    %v26 = vld [vmem:[%s25] sm:%s3]
    %s27 = scalar_lea.vmem [#allocation0], 472
    %28 = vst [vmem:[%s27] sm:%s3] %v26
    %s29 = smul.addr 2, 58
    %s30 = scalar_lea.vmem %s0, %s29
    %v31 = vld [vmem:[%s30] sm:%s3]
    %s32 = scalar_lea.vmem [#allocation0], 464
    %33 = vst [vmem:[%s32] sm:%s3] %v31
    %s34 = smul.addr 2, 57
    %s35 = scalar_lea.vmem %s0, %s34
    %v36 = vld [vmem:[%s35] sm:%s3]
    %s37 = scalar_lea.vmem [#allocation0], 456
    %38 = vst [vmem:[%s37] sm:%s3] %v36
    %s39 = smul.addr 2, 56
    %s40 = scalar_lea.vmem %s0, %s39
    %v41 = vld [vmem:[%s40] sm:%s3]
    %s42 = scalar_lea.vmem [#allocation0], 448
    %43 = vst [vmem:[%s42] sm:%s3] %v41
    %s44 = smul.addr 2, 55
    %s45 = scalar_lea.vmem %s0, %s44
    %v46 = vld [vmem:[%s45] sm:%s3]
    %s47 = scalar_lea.vmem [#allocation0], 440
    %48 = vst [vmem:[%s47] sm:%s3] %v46
    %s49 = smul.addr 2, 54
    %s50 = scalar_lea.vmem %s0, %s49
    %v51 = vld [vmem:[%s50] sm:%s3]
    %s52 = scalar_lea.vmem [#allocation0], 432
    %53 = vst [vmem:[%s52] sm:%s3] %v51
    %s54 = smul.addr 2, 53
    %s55 = scalar_lea.vmem %s0, %s54
    %v56 = vld [vmem:[%s55] sm:%s3]
    %s57 = scalar_lea.vmem [#allocation0], 424
    %58 = vst [vmem:[%s57] sm:%s3] %v56
    %s59 = smul.addr 2, 52
    %s60 = scalar_lea.vmem %s0, %s59
    %v61 = vld [vmem:[%s60] sm:%s3]
    %s62 = scalar_lea.vmem [#allocation0], 416
    %63 = vst [vmem:[%s62] sm:%s3] %v61
    %s64 = smul.addr 2, 51
    %s65 = scalar_lea.vmem %s0, %s64
    %v66 = vld [vmem:[%s65] sm:%s3]
    %s67 = scalar_lea.vmem [#allocation0], 408
    %68 = vst [vmem:[%s67] sm:%s3] %v66
    %s69 = smul.addr 2, 50
    %s70 = scalar_lea.vmem %s0, %s69
    %v71 = vld [vmem:[%s70] sm:%s3]
    %s72 = scalar_lea.vmem [#allocation0], 400
    %73 = vst [vmem:[%s72] sm:%s3] %v71
    %s74 = smul.addr 2, 49
    %s75 = scalar_lea.vmem %s0, %s74
    %v76 = vld [vmem:[%s75] sm:%s3]
    %s77 = scalar_lea.vmem [#allocation0], 392
    %78 = vst [vmem:[%s77] sm:%s3] %v76
    %s79 = smul.addr 2, 48
    %s80 = scalar_lea.vmem %s0, %s79
    %v81 = vld [vmem:[%s80] sm:%s3]
    %s82 = scalar_lea.vmem [#allocation0], 384
    %83 = vst [vmem:[%s82] sm:%s3] %v81
    %s84 = smul.addr 2, 47
    %s85 = scalar_lea.vmem %s0, %s84
    %v86 = vld [vmem:[%s85] sm:%s3]
    %s87 = scalar_lea.vmem [#allocation0], 376
    %88 = vst [vmem:[%s87] sm:%s3] %v86
    %s89 = smul.addr 2, 46
    %s90 = scalar_lea.vmem %s0, %s89
    %v91 = vld [vmem:[%s90] sm:%s3]
    %s92 = scalar_lea.vmem [#allocation0], 368
    %93 = vst [vmem:[%s92] sm:%s3] %v91
    %s94 = smul.addr 2, 45
    %s95 = scalar_lea.vmem %s0, %s94
    %v96 = vld [vmem:[%s95] sm:%s3]
    %s97 = scalar_lea.vmem [#allocation0], 360
    %98 = vst [vmem:[%s97] sm:%s3] %v96
    %s99 = smul.addr 2, 44
    %s100 = scalar_lea.vmem %s0, %s99
    %v101 = vld [vmem:[%s100] sm:%s3]
    %s102 = scalar_lea.vmem [#allocation0], 352
    %103 = vst [vmem:[%s102] sm:%s3] %v101
    %s104 = smul.addr 2, 43
    %s105 = scalar_lea.vmem %s0, %s104
    %v106 = vld [vmem:[%s105] sm:%s3]
    %s107 = scalar_lea.vmem [#allocation0], 344
    %108 = vst [vmem:[%s107] sm:%s3] %v106
    %s109 = smul.addr 2, 42
    %s110 = scalar_lea.vmem %s0, %s109
    %v111 = vld [vmem:[%s110] sm:%s3]
    %s112 = scalar_lea.vmem [#allocation0], 336
    %113 = vst [vmem:[%s112] sm:%s3] %v111
    %s114 = smul.addr 2, 41
    %s115 = scalar_lea.vmem %s0, %s114
    %v116 = vld [vmem:[%s115] sm:%s3]
    %s117 = scalar_lea.vmem [#allocation0], 328
    %118 = vst [vmem:[%s117] sm:%s3] %v116
    %s119 = smul.addr 2, 40
    %s120 = scalar_lea.vmem %s0, %s119
    %v121 = vld [vmem:[%s120] sm:%s3]
    %s122 = scalar_lea.vmem [#allocation0], 320
    %123 = vst [vmem:[%s122] sm:%s3] %v121
    %s124 = smul.addr 2, 39
    %s125 = scalar_lea.vmem %s0, %s124
    %v126 = vld [vmem:[%s125] sm:%s3]
    %s127 = scalar_lea.vmem [#allocation0], 312
    %128 = vst [vmem:[%s127] sm:%s3] %v126
    %s129 = smul.addr 2, 38
    %s130 = scalar_lea.vmem %s0, %s129
    %v131 = vld [vmem:[%s130] sm:%s3]
    %s132 = scalar_lea.vmem [#allocation0], 304
    %133 = vst [vmem:[%s132] sm:%s3] %v131
    %s134 = smul.addr 2, 37
    %s135 = scalar_lea.vmem %s0, %s134
    %v136 = vld [vmem:[%s135] sm:%s3]
    %s137 = scalar_lea.vmem [#allocation0], 296
    %138 = vst [vmem:[%s137] sm:%s3] %v136
    %s139 = smul.addr 2, 36
    %s140 = scalar_lea.vmem %s0, %s139
    %v141 = vld [vmem:[%s140] sm:%s3]
    %s142 = scalar_lea.vmem [#allocation0], 288
    %143 = vst [vmem:[%s142] sm:%s3] %v141
    %s144 = smul.addr 2, 35
    %s145 = scalar_lea.vmem %s0, %s144
    %v146 = vld [vmem:[%s145] sm:%s3]
    %s147 = scalar_lea.vmem [#allocation0], 280
    %148 = vst [vmem:[%s147] sm:%s3] %v146
    %s149 = smul.addr 2, 34
    %s150 = scalar_lea.vmem %s0, %s149
    %v151 = vld [vmem:[%s150] sm:%s3]
    %s152 = scalar_lea.vmem [#allocation0], 272
    %153 = vst [vmem:[%s152] sm:%s3] %v151
    %s154 = smul.addr 2, 33
    %s155 = scalar_lea.vmem %s0, %s154
    %v156 = vld [vmem:[%s155] sm:%s3]
    %s157 = scalar_lea.vmem [#allocation0], 264
    %158 = vst [vmem:[%s157] sm:%s3] %v156
    %s159 = smul.addr 2, 32
    %s160 = scalar_lea.vmem %s0, %s159
    %v161 = vld [vmem:[%s160] sm:%s3]
    %s162 = scalar_lea.vmem [#allocation0], 256
    %163 = vst [vmem:[%s162] sm:%s3] %v161
    %s164 = smul.addr 2, 31
    %s165 = scalar_lea.vmem %s0, %s164
    %v166 = vld [vmem:[%s165] sm:%s3]
    %s167 = scalar_lea.vmem [#allocation0], 248
    %168 = vst [vmem:[%s167] sm:%s3] %v166
    %s169 = smul.addr 2, 30
    %s170 = scalar_lea.vmem %s0, %s169
    %v171 = vld [vmem:[%s170] sm:%s3]
    %s172 = scalar_lea.vmem [#allocation0], 240
    %173 = vst [vmem:[%s172] sm:%s3] %v171
    %s174 = smul.addr 2, 29
    %s175 = scalar_lea.vmem %s0, %s174
    %v176 = vld [vmem:[%s175] sm:%s3]
    %s177 = scalar_lea.vmem [#allocation0], 232
    %178 = vst [vmem:[%s177] sm:%s3] %v176
    %s179 = smul.addr 2, 28
    %s180 = scalar_lea.vmem %s0, %s179
    %v181 = vld [vmem:[%s180] sm:%s3]
    %s182 = scalar_lea.vmem [#allocation0], 224
    %183 = vst [vmem:[%s182] sm:%s3] %v181
    %s184 = smul.addr 2, 27
    %s185 = scalar_lea.vmem %s0, %s184
    %v186 = vld [vmem:[%s185] sm:%s3]
    %s187 = scalar_lea.vmem [#allocation0], 216
    %188 = vst [vmem:[%s187] sm:%s3] %v186
    %s189 = smul.addr 2, 26
    %s190 = scalar_lea.vmem %s0, %s189
    %v191 = vld [vmem:[%s190] sm:%s3]
    %s192 = scalar_lea.vmem [#allocation0], 208
    %193 = vst [vmem:[%s192] sm:%s3] %v191
    %s194 = smul.addr 2, 25
    %s195 = scalar_lea.vmem %s0, %s194
    %v196 = vld [vmem:[%s195] sm:%s3]
    %s197 = scalar_lea.vmem [#allocation0], 200
    %198 = vst [vmem:[%s197] sm:%s3] %v196
    %s199 = smul.addr 2, 24
    %s200 = scalar_lea.vmem %s0, %s199
    %v201 = vld [vmem:[%s200] sm:%s3]
    %s202 = scalar_lea.vmem [#allocation0], 192
    %203 = vst [vmem:[%s202] sm:%s3] %v201
    %s204 = smul.addr 2, 23
    %s205 = scalar_lea.vmem %s0, %s204
    %v206 = vld [vmem:[%s205] sm:%s3]
    %s207 = scalar_lea.vmem [#allocation0], 184
    %208 = vst [vmem:[%s207] sm:%s3] %v206
    %s209 = smul.addr 2, 22
    %s210 = scalar_lea.vmem %s0, %s209
    %v211 = vld [vmem:[%s210] sm:%s3]
    %s212 = scalar_lea.vmem [#allocation0], 176
    %213 = vst [vmem:[%s212] sm:%s3] %v211
    %s214 = smul.addr 2, 21
    %s215 = scalar_lea.vmem %s0, %s214
    %v216 = vld [vmem:[%s215] sm:%s3]
    %s217 = scalar_lea.vmem [#allocation0], 168
    %218 = vst [vmem:[%s217] sm:%s3] %v216
    %s219 = smul.addr 2, 20
    %s220 = scalar_lea.vmem %s0, %s219
    %v221 = vld [vmem:[%s220] sm:%s3]
    %s222 = scalar_lea.vmem [#allocation0], 160
    %223 = vst [vmem:[%s222] sm:%s3] %v221
    %s224 = smul.addr 2, 19
    %s225 = scalar_lea.vmem %s0, %s224
    %v226 = vld [vmem:[%s225] sm:%s3]
    %s227 = scalar_lea.vmem [#allocation0], 152
    %228 = vst [vmem:[%s227] sm:%s3] %v226
    %s229 = smul.addr 2, 18
    %s230 = scalar_lea.vmem %s0, %s229
    %v231 = vld [vmem:[%s230] sm:%s3]
    %s232 = scalar_lea.vmem [#allocation0], 144
    %233 = vst [vmem:[%s232] sm:%s3] %v231
    %s234 = smul.addr 2, 17
    %s235 = scalar_lea.vmem %s0, %s234
    %v236 = vld [vmem:[%s235] sm:%s3]
    %s237 = scalar_lea.vmem [#allocation0], 136
    %238 = vst [vmem:[%s237] sm:%s3] %v236
    %s239 = smul.addr 2, 16
    %s240 = scalar_lea.vmem %s0, %s239
    %v241 = vld [vmem:[%s240] sm:%s3]
    %s242 = scalar_lea.vmem [#allocation0], 128
    %243 = vst [vmem:[%s242] sm:%s3] %v241
    %s244 = smul.addr 2, 15
    %s245 = scalar_lea.vmem %s0, %s244
    %v246 = vld [vmem:[%s245] sm:%s3]
    %s247 = scalar_lea.vmem [#allocation0], 120
    %248 = vst [vmem:[%s247] sm:%s3] %v246
    %s249 = smul.addr 2, 14
    %s250 = scalar_lea.vmem %s0, %s249
    %v251 = vld [vmem:[%s250] sm:%s3]
    %s252 = scalar_lea.vmem [#allocation0], 112
    %253 = vst [vmem:[%s252] sm:%s3] %v251
    %s254 = smul.addr 2, 13
    %s255 = scalar_lea.vmem %s0, %s254
    %v256 = vld [vmem:[%s255] sm:%s3]
    %s257 = scalar_lea.vmem [#allocation0], 104
    %258 = vst [vmem:[%s257] sm:%s3] %v256
    %s259 = smul.addr 2, 12
    %s260 = scalar_lea.vmem %s0, %s259
    %v261 = vld [vmem:[%s260] sm:%s3]
    %s262 = scalar_lea.vmem [#allocation0], 96
    %263 = vst [vmem:[%s262] sm:%s3] %v261
    %s264 = smul.addr 2, 11
    %s265 = scalar_lea.vmem %s0, %s264
    %v266 = vld [vmem:[%s265] sm:%s3]
    %s267 = scalar_lea.vmem [#allocation0], 88
    %268 = vst [vmem:[%s267] sm:%s3] %v266
    %s269 = smul.addr 2, 10
    %s270 = scalar_lea.vmem %s0, %s269
    %v271 = vld [vmem:[%s270] sm:%s3]
    %s272 = scalar_lea.vmem [#allocation0], 80
    %273 = vst [vmem:[%s272] sm:%s3] %v271
    %s274 = smul.addr 2, 9
    %s275 = scalar_lea.vmem %s0, %s274
    %v276 = vld [vmem:[%s275] sm:%s3]
    %s277 = scalar_lea.vmem [#allocation0], 72
    %278 = vst [vmem:[%s277] sm:%s3] %v276
    %s279 = smul.addr 2, 8
    %s280 = scalar_lea.vmem %s0, %s279
    %v281 = vld [vmem:[%s280] sm:%s3]
    %s282 = scalar_lea.vmem [#allocation0], 64
    %283 = vst [vmem:[%s282] sm:%s3] %v281
    %s284 = smul.addr 2, 7
    %s285 = scalar_lea.vmem %s0, %s284
    %v286 = vld [vmem:[%s285] sm:%s3]
    %s287 = scalar_lea.vmem [#allocation0], 56
    %288 = vst [vmem:[%s287] sm:%s3] %v286
    %s289 = smul.addr 2, 6
    %s290 = scalar_lea.vmem %s0, %s289
    %v291 = vld [vmem:[%s290] sm:%s3]
    %s292 = scalar_lea.vmem [#allocation0], 48
    %293 = vst [vmem:[%s292] sm:%s3] %v291
    %s294 = smul.addr 2, 5
    %s295 = scalar_lea.vmem %s0, %s294
    %v296 = vld [vmem:[%s295] sm:%s3]
    %s297 = scalar_lea.vmem [#allocation0], 40
    %298 = vst [vmem:[%s297] sm:%s3] %v296
    %s299 = smul.addr 2, 4
    %s300 = scalar_lea.vmem %s0, %s299
    %v301 = vld [vmem:[%s300] sm:%s3]
    %s302 = scalar_lea.vmem [#allocation0], 32
    %303 = vst [vmem:[%s302] sm:%s3] %v301
    %s304 = smul.addr 2, 3
    %s305 = scalar_lea.vmem %s0, %s304
    %v306 = vld [vmem:[%s305] sm:%s3]
    %s307 = scalar_lea.vmem [#allocation0], 24
    %308 = vst [vmem:[%s307] sm:%s3] %v306
    %s309 = smul.addr 2, 2
    %s310 = scalar_lea.vmem %s0, %s309
    %v311 = vld [vmem:[%s310] sm:%s3]
    %s312 = scalar_lea.vmem [#allocation0], 16
    %313 = vst [vmem:[%s312] sm:%s3] %v311
    %s314 = scalar_lea.vmem %s0, 2
    %v315 = vld [vmem:[%s314] sm:%s3]
    %s316 = scalar_lea.vmem [#allocation0], 8
    %317 = vst [vmem:[%s316] sm:%s3] %v315
    %v318 = vld [vmem:[%s0] sm:%s3]
    %319 = vst [vmem:[#allocation0] sm:%s3] %v318
    %v320 = vld [vmem:[#allocation0] sm:$0x3]
    %321 = vst [vmem:[%s1] sm:$0x1] %v320
    %s322 = scalar_lea.vmem %s1, 63
    %323 = vst [vmem:[%s322] sm:$0x2] %v320
    %s324 = scalar_lea.vmem [#allocation0], 8
    %v325 = vld [vmem:[%s324] sm:$0x3]
    %s326 = scalar_lea.vmem %s1, 8
    %327 = vst [vmem:[%s326] sm:$0x1] %v325
    %s328 = scalar_lea.vmem %s1, 71
    %329 = vst [vmem:[%s328] sm:$0x2] %v325
    %s330 = scalar_lea.vmem [#allocation0], 16
    %v331 = vld [vmem:[%s330] sm:$0x3]
    %s332 = scalar_lea.vmem %s1, 16
    %333 = vst [vmem:[%s332] sm:$0x1] %v331
    %s334 = scalar_lea.vmem %s1, 79
    %335 = vst [vmem:[%s334] sm:$0x2] %v331
    %s336 = scalar_lea.vmem [#allocation0], 24
    %v337 = vld [vmem:[%s336] sm:$0x3]
    %s338 = scalar_lea.vmem %s1, 24
    %339 = vst [vmem:[%s338] sm:$0x1] %v337
    %s340 = scalar_lea.vmem %s1, 87
    %341 = vst [vmem:[%s340] sm:$0x2] %v337
    %s342 = scalar_lea.vmem [#allocation0], 32
    %v343 = vld [vmem:[%s342] sm:$0x3]
    %s344 = scalar_lea.vmem %s1, 1
    %345 = vst [vmem:[%s344] sm:$0x1] %v343
    %s346 = scalar_lea.vmem %s1, 64
    %347 = vst [vmem:[%s346] sm:$0x2] %v343
    %s348 = scalar_lea.vmem [#allocation0], 40
    %v349 = vld [vmem:[%s348] sm:$0x3]
    %s350 = scalar_lea.vmem %s1, 9
    %351 = vst [vmem:[%s350] sm:$0x1] %v349
    %s352 = scalar_lea.vmem %s1, 72
    %353 = vst [vmem:[%s352] sm:$0x2] %v349
    %s354 = scalar_lea.vmem [#allocation0], 48
    %v355 = vld [vmem:[%s354] sm:$0x3]
    %s356 = scalar_lea.vmem %s1, 17
    %357 = vst [vmem:[%s356] sm:$0x1] %v355
    %s358 = scalar_lea.vmem %s1, 80
    %359 = vst [vmem:[%s358] sm:$0x2] %v355
    %s360 = scalar_lea.vmem [#allocation0], 56
    %v361 = vld [vmem:[%s360] sm:$0x3]
    %s362 = scalar_lea.vmem %s1, 25
    %363 = vst [vmem:[%s362] sm:$0x1] %v361
    %s364 = scalar_lea.vmem %s1, 88
    %365 = vst [vmem:[%s364] sm:$0x2] %v361
    %s366 = scalar_lea.vmem [#allocation0], 64
    %v367 = vld [vmem:[%s366] sm:$0x3]
    %s368 = scalar_lea.vmem %s1, 2
    %369 = vst [vmem:[%s368] sm:$0x1] %v367
    %s370 = scalar_lea.vmem %s1, 65
    %371 = vst [vmem:[%s370] sm:$0x2] %v367
    %s372 = scalar_lea.vmem [#allocation0], 72
    %v373 = vld [vmem:[%s372] sm:$0x3]
    %s374 = scalar_lea.vmem %s1, 10
    %375 = vst [vmem:[%s374] sm:$0x1] %v373
    %s376 = scalar_lea.vmem %s1, 73
    %377 = vst [vmem:[%s376] sm:$0x2] %v373
    %s378 = scalar_lea.vmem [#allocation0], 80
    %v379 = vld [vmem:[%s378] sm:$0x3]
    %s380 = scalar_lea.vmem %s1, 18
    %381 = vst [vmem:[%s380] sm:$0x1] %v379
    %s382 = scalar_lea.vmem %s1, 81
    %383 = vst [vmem:[%s382] sm:$0x2] %v379
    %s384 = scalar_lea.vmem [#allocation0], 88
    %v385 = vld [vmem:[%s384] sm:$0x3]
    %s386 = scalar_lea.vmem %s1, 26
    %387 = vst [vmem:[%s386] sm:$0x1] %v385
    %s388 = scalar_lea.vmem %s1, 89
    %389 = vst [vmem:[%s388] sm:$0x2] %v385
    %s390 = scalar_lea.vmem [#allocation0], 96
    %v391 = vld [vmem:[%s390] sm:$0x3]
    %s392 = scalar_lea.vmem %s1, 3
    %393 = vst [vmem:[%s392] sm:$0x1] %v391
    %s394 = scalar_lea.vmem %s1, 66
    %395 = vst [vmem:[%s394] sm:$0x2] %v391
    %s396 = scalar_lea.vmem [#allocation0], 104
    %v397 = vld [vmem:[%s396] sm:$0x3]
    %s398 = scalar_lea.vmem %s1, 11
    %399 = vst [vmem:[%s398] sm:$0x1] %v397
    %s400 = scalar_lea.vmem %s1, 74
    %401 = vst [vmem:[%s400] sm:$0x2] %v397
    %s402 = scalar_lea.vmem [#allocation0], 112
    %v403 = vld [vmem:[%s402] sm:$0x3]
    %s404 = scalar_lea.vmem %s1, 19
    %405 = vst [vmem:[%s404] sm:$0x1] %v403
    %s406 = scalar_lea.vmem %s1, 82
    %407 = vst [vmem:[%s406] sm:$0x2] %v403
    %s408 = scalar_lea.vmem [#allocation0], 120
    %v409 = vld [vmem:[%s408] sm:$0x3]
    %s410 = scalar_lea.vmem %s1, 27
    %411 = vst [vmem:[%s410] sm:$0x1] %v409
    %s412 = scalar_lea.vmem %s1, 90
    %413 = vst [vmem:[%s412] sm:$0x2] %v409
    %s414 = scalar_lea.vmem [#allocation0], 128
    %v415 = vld [vmem:[%s414] sm:$0x3]
    %s416 = scalar_lea.vmem %s1, 4
    %417 = vst [vmem:[%s416] sm:$0x1] %v415
    %s418 = scalar_lea.vmem %s1, 67
    %419 = vst [vmem:[%s418] sm:$0x2] %v415
    %s420 = scalar_lea.vmem [#allocation0], 136
    %v421 = vld [vmem:[%s420] sm:$0x3]
    %s422 = scalar_lea.vmem %s1, 12
    %423 = vst [vmem:[%s422] sm:$0x1] %v421
    %s424 = scalar_lea.vmem %s1, 75
    %425 = vst [vmem:[%s424] sm:$0x2] %v421
    %s426 = scalar_lea.vmem [#allocation0], 144
    %v427 = vld [vmem:[%s426] sm:$0x3]
    %s428 = scalar_lea.vmem %s1, 20
    %429 = vst [vmem:[%s428] sm:$0x1] %v427
    %s430 = scalar_lea.vmem %s1, 83
    %431 = vst [vmem:[%s430] sm:$0x2] %v427
    %s432 = scalar_lea.vmem [#allocation0], 152
    %v433 = vld [vmem:[%s432] sm:$0x3]
    %s434 = scalar_lea.vmem %s1, 28
    %435 = vst [vmem:[%s434] sm:$0x1] %v433
    %s436 = scalar_lea.vmem %s1, 91
    %437 = vst [vmem:[%s436] sm:$0x2] %v433
    %s438 = scalar_lea.vmem [#allocation0], 160
    %v439 = vld [vmem:[%s438] sm:$0x3]
    %s440 = scalar_lea.vmem %s1, 5
    %441 = vst [vmem:[%s440] sm:$0x1] %v439
    %s442 = scalar_lea.vmem %s1, 68
    %443 = vst [vmem:[%s442] sm:$0x2] %v439
    %s444 = scalar_lea.vmem [#allocation0], 168
    %v445 = vld [vmem:[%s444] sm:$0x3]
    %s446 = scalar_lea.vmem %s1, 13
    %447 = vst [vmem:[%s446] sm:$0x1] %v445
    %s448 = scalar_lea.vmem %s1, 76
    %449 = vst [vmem:[%s448] sm:$0x2] %v445
    %s450 = scalar_lea.vmem [#allocation0], 176
    %v451 = vld [vmem:[%s450] sm:$0x3]
    %s452 = scalar_lea.vmem %s1, 21
    %453 = vst [vmem:[%s452] sm:$0x1] %v451
    %s454 = scalar_lea.vmem %s1, 84
    %455 = vst [vmem:[%s454] sm:$0x2] %v451
    %s456 = scalar_lea.vmem [#allocation0], 184
    %v457 = vld [vmem:[%s456] sm:$0x3]
    %s458 = scalar_lea.vmem %s1, 29
    %459 = vst [vmem:[%s458] sm:$0x1] %v457
    %s460 = scalar_lea.vmem %s1, 92
    %461 = vst [vmem:[%s460] sm:$0x2] %v457
    %s462 = scalar_lea.vmem [#allocation0], 192
    %v463 = vld [vmem:[%s462] sm:$0x3]
    %s464 = scalar_lea.vmem %s1, 6
    %465 = vst [vmem:[%s464] sm:$0x1] %v463
    %s466 = scalar_lea.vmem %s1, 69
    %467 = vst [vmem:[%s466] sm:$0x2] %v463
    %s468 = scalar_lea.vmem [#allocation0], 200
    %v469 = vld [vmem:[%s468] sm:$0x3]
    %s470 = scalar_lea.vmem %s1, 14
    %471 = vst [vmem:[%s470] sm:$0x1] %v469
    %s472 = scalar_lea.vmem %s1, 77
    %473 = vst [vmem:[%s472] sm:$0x2] %v469
    %s474 = scalar_lea.vmem [#allocation0], 208
    %v475 = vld [vmem:[%s474] sm:$0x3]
    %s476 = scalar_lea.vmem %s1, 22
    %477 = vst [vmem:[%s476] sm:$0x1] %v475
    %s478 = scalar_lea.vmem %s1, 85
    %479 = vst [vmem:[%s478] sm:$0x2] %v475
    %s480 = scalar_lea.vmem [#allocation0], 216
    %v481 = vld [vmem:[%s480] sm:$0x3]
    %s482 = scalar_lea.vmem %s1, 30
    %483 = vst [vmem:[%s482] sm:$0x1] %v481
    %s484 = scalar_lea.vmem %s1, 93
    %485 = vst [vmem:[%s484] sm:$0x2] %v481
    %s486 = scalar_lea.vmem [#allocation0], 224
    %v487 = vld [vmem:[%s486] sm:$0x3]
    %s488 = scalar_lea.vmem %s1, 7
    %489 = vst [vmem:[%s488] sm:$0x1] %v487
    %s490 = scalar_lea.vmem %s1, 70
    %491 = vst [vmem:[%s490] sm:$0x2] %v487
    %s492 = scalar_lea.vmem [#allocation0], 232
    %v493 = vld [vmem:[%s492] sm:$0x3]
    %s494 = scalar_lea.vmem %s1, 15
    %495 = vst [vmem:[%s494] sm:$0x1] %v493
    %s496 = scalar_lea.vmem %s1, 78
    %497 = vst [vmem:[%s496] sm:$0x2] %v493
    %s498 = scalar_lea.vmem [#allocation0], 240
    %v499 = vld [vmem:[%s498] sm:$0x3]
    %s500 = scalar_lea.vmem %s1, 23
    %501 = vst [vmem:[%s500] sm:$0x1] %v499
    %s502 = scalar_lea.vmem %s1, 86
    %503 = vst [vmem:[%s502] sm:$0x2] %v499
    %s504 = scalar_lea.vmem [#allocation0], 248
    %v505 = vld [vmem:[%s504] sm:$0x3]
    %s506 = scalar_lea.vmem %s1, 31
    %507 = vst [vmem:[%s506] sm:$0x1] %v505
    %s508 = scalar_lea.vmem %s1, 94
    %509 = vst [vmem:[%s508] sm:$0x2] %v505
    %s510 = scalar_lea.vmem [#allocation0], 256
    %v511 = vld [vmem:[%s510] sm:$0x3]
    %s512 = scalar_lea.vmem %s1, 32
    %513 = vst [vmem:[%s512] sm:$0x1] %v511
    %s514 = scalar_lea.vmem %s1, 95
    %515 = vst [vmem:[%s514] sm:$0x2] %v511
    %s516 = scalar_lea.vmem [#allocation0], 264
    %v517 = vld [vmem:[%s516] sm:$0x3]
    %s518 = scalar_lea.vmem %s1, 40
    %519 = vst [vmem:[%s518] sm:$0x1] %v517
    %s520 = scalar_lea.vmem %s1, 103
    %521 = vst [vmem:[%s520] sm:$0x2] %v517
    %s522 = scalar_lea.vmem [#allocation0], 272
    %v523 = vld [vmem:[%s522] sm:$0x3]
    %s524 = scalar_lea.vmem %s1, 48
    %525 = vst [vmem:[%s524] sm:$0x1] %v523
    %s526 = scalar_lea.vmem %s1, 111
    %527 = vst [vmem:[%s526] sm:$0x2] %v523
    %s528 = scalar_lea.vmem [#allocation0], 280
    %v529 = vld [vmem:[%s528] sm:$0x3]
    %s530 = scalar_lea.vmem %s1, 56
    %531 = vst [vmem:[%s530] sm:$0x1] %v529
    %s532 = scalar_lea.vmem %s1, 119
    %533 = vst [vmem:[%s532] sm:$0x2] %v529
    %s534 = scalar_lea.vmem [#allocation0], 288
    %v535 = vld [vmem:[%s534] sm:$0x3]
    %s536 = scalar_lea.vmem %s1, 33
    %537 = vst [vmem:[%s536] sm:$0x1] %v535
    %s538 = scalar_lea.vmem %s1, 96
    %539 = vst [vmem:[%s538] sm:$0x2] %v535
    %s540 = scalar_lea.vmem [#allocation0], 296
    %v541 = vld [vmem:[%s540] sm:$0x3]
    %s542 = scalar_lea.vmem %s1, 41
    %543 = vst [vmem:[%s542] sm:$0x1] %v541
    %s544 = scalar_lea.vmem %s1, 104
    %545 = vst [vmem:[%s544] sm:$0x2] %v541
    %s546 = scalar_lea.vmem [#allocation0], 304
    %v547 = vld [vmem:[%s546] sm:$0x3]
    %s548 = scalar_lea.vmem %s1, 49
    %549 = vst [vmem:[%s548] sm:$0x1] %v547
    %s550 = scalar_lea.vmem %s1, 112
    %551 = vst [vmem:[%s550] sm:$0x2] %v547
    %s552 = scalar_lea.vmem [#allocation0], 312
    %v553 = vld [vmem:[%s552] sm:$0x3]
    %s554 = scalar_lea.vmem %s1, 57
    %555 = vst [vmem:[%s554] sm:$0x1] %v553
    %s556 = scalar_lea.vmem %s1, 120
    %557 = vst [vmem:[%s556] sm:$0x2] %v553
    %s558 = scalar_lea.vmem [#allocation0], 320
    %v559 = vld [vmem:[%s558] sm:$0x3]
    %s560 = scalar_lea.vmem %s1, 34
    %561 = vst [vmem:[%s560] sm:$0x1] %v559
    %s562 = scalar_lea.vmem %s1, 97
    %563 = vst [vmem:[%s562] sm:$0x2] %v559
    %s564 = scalar_lea.vmem [#allocation0], 328
    %v565 = vld [vmem:[%s564] sm:$0x3]
    %s566 = scalar_lea.vmem %s1, 42
    %567 = vst [vmem:[%s566] sm:$0x1] %v565
    %s568 = scalar_lea.vmem %s1, 105
    %569 = vst [vmem:[%s568] sm:$0x2] %v565
    %s570 = scalar_lea.vmem [#allocation0], 336
    %v571 = vld [vmem:[%s570] sm:$0x3]
    %s572 = scalar_lea.vmem %s1, 50
    %573 = vst [vmem:[%s572] sm:$0x1] %v571
    %s574 = scalar_lea.vmem %s1, 113
    %575 = vst [vmem:[%s574] sm:$0x2] %v571
    %s576 = scalar_lea.vmem [#allocation0], 344
    %v577 = vld [vmem:[%s576] sm:$0x3]
    %s578 = scalar_lea.vmem %s1, 58
    %579 = vst [vmem:[%s578] sm:$0x1] %v577
    %s580 = scalar_lea.vmem %s1, 121
    %581 = vst [vmem:[%s580] sm:$0x2] %v577
    %s582 = scalar_lea.vmem [#allocation0], 352
    %v583 = vld [vmem:[%s582] sm:$0x3]
    %s584 = scalar_lea.vmem %s1, 35
    %585 = vst [vmem:[%s584] sm:$0x1] %v583
    %s586 = scalar_lea.vmem %s1, 98
    %587 = vst [vmem:[%s586] sm:$0x2] %v583
    %s588 = scalar_lea.vmem [#allocation0], 360
    %v589 = vld [vmem:[%s588] sm:$0x3]
    %s590 = scalar_lea.vmem %s1, 43
    %591 = vst [vmem:[%s590] sm:$0x1] %v589
    %s592 = scalar_lea.vmem %s1, 106
    %593 = vst [vmem:[%s592] sm:$0x2] %v589
    %s594 = scalar_lea.vmem [#allocation0], 368
    %v595 = vld [vmem:[%s594] sm:$0x3]
    %s596 = scalar_lea.vmem %s1, 51
    %597 = vst [vmem:[%s596] sm:$0x1] %v595
    %s598 = scalar_lea.vmem %s1, 114
    %599 = vst [vmem:[%s598] sm:$0x2] %v595
    %s600 = scalar_lea.vmem [#allocation0], 376
    %v601 = vld [vmem:[%s600] sm:$0x3]
    %s602 = scalar_lea.vmem %s1, 59
    %603 = vst [vmem:[%s602] sm:$0x1] %v601
    %s604 = scalar_lea.vmem %s1, 122
    %605 = vst [vmem:[%s604] sm:$0x2] %v601
    %s606 = scalar_lea.vmem [#allocation0], 384
    %v607 = vld [vmem:[%s606] sm:$0x3]
    %s608 = scalar_lea.vmem %s1, 36
    %609 = vst [vmem:[%s608] sm:$0x1] %v607
    %s610 = scalar_lea.vmem %s1, 99
    %611 = vst [vmem:[%s610] sm:$0x2] %v607
    %s612 = scalar_lea.vmem [#allocation0], 392
    %v613 = vld [vmem:[%s612] sm:$0x3]
    %s614 = scalar_lea.vmem %s1, 44
    %615 = vst [vmem:[%s614] sm:$0x1] %v613
    %s616 = scalar_lea.vmem %s1, 107
    %617 = vst [vmem:[%s616] sm:$0x2] %v613
    %s618 = scalar_lea.vmem [#allocation0], 400
    %v619 = vld [vmem:[%s618] sm:$0x3]
    %s620 = scalar_lea.vmem %s1, 52
    %621 = vst [vmem:[%s620] sm:$0x1] %v619
    %s622 = scalar_lea.vmem %s1, 115
    %623 = vst [vmem:[%s622] sm:$0x2] %v619
    %s624 = scalar_lea.vmem [#allocation0], 408
    %v625 = vld [vmem:[%s624] sm:$0x3]
    %s626 = scalar_lea.vmem %s1, 60
    %627 = vst [vmem:[%s626] sm:$0x1] %v625
    %s628 = scalar_lea.vmem %s1, 123
    %629 = vst [vmem:[%s628] sm:$0x2] %v625
    %s630 = scalar_lea.vmem [#allocation0], 416
    %v631 = vld [vmem:[%s630] sm:$0x3]
    %s632 = scalar_lea.vmem %s1, 37
    %633 = vst [vmem:[%s632] sm:$0x1] %v631
    %s634 = scalar_lea.vmem %s1, 100
    %635 = vst [vmem:[%s634] sm:$0x2] %v631
    %s636 = scalar_lea.vmem [#allocation0], 424
    %v637 = vld [vmem:[%s636] sm:$0x3]
    %s638 = scalar_lea.vmem %s1, 45
    %639 = vst [vmem:[%s638] sm:$0x1] %v637
    %s640 = scalar_lea.vmem %s1, 108
    %641 = vst [vmem:[%s640] sm:$0x2] %v637
    %s642 = scalar_lea.vmem [#allocation0], 432
    %v643 = vld [vmem:[%s642] sm:$0x3]
    %s644 = scalar_lea.vmem %s1, 53
    %645 = vst [vmem:[%s644] sm:$0x1] %v643
    %s646 = scalar_lea.vmem %s1, 116
    %647 = vst [vmem:[%s646] sm:$0x2] %v643
    %s648 = scalar_lea.vmem [#allocation0], 440
    %v649 = vld [vmem:[%s648] sm:$0x3]
    %s650 = scalar_lea.vmem %s1, 61
    %651 = vst [vmem:[%s650] sm:$0x1] %v649
    %s652 = scalar_lea.vmem %s1, 124
    %653 = vst [vmem:[%s652] sm:$0x2] %v649
    %s654 = scalar_lea.vmem [#allocation0], 448
    %v655 = vld [vmem:[%s654] sm:$0x3]
    %s656 = scalar_lea.vmem %s1, 38
    %657 = vst [vmem:[%s656] sm:$0x1] %v655
    %s658 = scalar_lea.vmem %s1, 101
    %659 = vst [vmem:[%s658] sm:$0x2] %v655
    %s660 = scalar_lea.vmem [#allocation0], 456
    %v661 = vld [vmem:[%s660] sm:$0x3]
    %s662 = scalar_lea.vmem %s1, 46
    %663 = vst [vmem:[%s662] sm:$0x1] %v661
    %s664 = scalar_lea.vmem %s1, 109
    %665 = vst [vmem:[%s664] sm:$0x2] %v661
    %s666 = scalar_lea.vmem [#allocation0], 464
    %v667 = vld [vmem:[%s666] sm:$0x3]
    %s668 = scalar_lea.vmem %s1, 54
    %669 = vst [vmem:[%s668] sm:$0x1] %v667
    %s670 = scalar_lea.vmem %s1, 117
    %671 = vst [vmem:[%s670] sm:$0x2] %v667
    %s672 = scalar_lea.vmem [#allocation0], 472
    %v673 = vld [vmem:[%s672] sm:$0x3]
    %s674 = scalar_lea.vmem %s1, 62
    %675 = vst [vmem:[%s674] sm:$0x1] %v673
    %s676 = scalar_lea.vmem %s1, 125
    %677 = vst [vmem:[%s676] sm:$0x2] %v673
    %s678 = scalar_lea.vmem [#allocation0], 480
    %v679 = vld [vmem:[%s678] sm:$0x3]
    %s680 = scalar_lea.vmem %s1, 39
    %681 = vst [vmem:[%s680] sm:$0x1] %v679
    %s682 = scalar_lea.vmem %s1, 102
    %683 = vst [vmem:[%s682] sm:$0x2] %v679
    %s684 = scalar_lea.vmem [#allocation0], 488
    %v685 = vld [vmem:[%s684] sm:$0x3]
    %s686 = scalar_lea.vmem %s1, 47
    %687 = vst [vmem:[%s686] sm:$0x1] %v685
    %s688 = scalar_lea.vmem %s1, 110
    %689 = vst [vmem:[%s688] sm:$0x2] %v685
    %s690 = scalar_lea.vmem [#allocation0], 496
    %v691 = vld [vmem:[%s690] sm:$0x3]
    %s692 = scalar_lea.vmem %s1, 55
    %693 = vst [vmem:[%s692] sm:$0x1] %v691
    %s694 = scalar_lea.vmem %s1, 118
    %695 = vst [vmem:[%s694] sm:$0x2] %v691
    %s696 = scalar_lea.vmem [#allocation0], 504
    %v697 = vld [vmem:[%s696] sm:$0x3]
    %s698 = scalar_lea.vmem %s1, 63
    %699 = vst [vmem:[%s698] sm:$0x1] %v697
    %s700 = scalar_lea.vmem %s1, 126
    %701 = vst [vmem:[%s700] sm:$0x2] %v697

// kernel: generator_forward.10
$region0: #{generator_forward.10}
  #allocation0 [shape = 'u32[]', space=smem, size = 0x4, offset = 0x4, fixed_abs, tag = 'smem constant byte address 0x4 - core index']
  #allocation1 [shape = 'u32[144,128]{1,0:T(1,128)}', space=vmem, size = 0x12000, scoped, tag = 'internal scratch']
  %s0 = inlined_call_operand.vmem [shape: f32[32,512], index: 0, kind: input, shape index: {}]
  %s1 = inlined_call_operand.vmem [shape: f32[1,512], index: 1, kind: input, shape index: {}]
  %s2 = inlined_call_operand.vmem [shape: f32[1,512], index: 2, kind: input, shape index: {}]
  %s3 = inlined_call_operand.vmem [shape: f32[32,512], index: 3, kind: output, shape index: {}]
  %s4 = sld [smem:[#allocation0]]
  $region22: #{generator_forward.10} parent=0
    _
  %s6 = ssub.s32 1, %s4
  %s7 = scalar_select 0, %s6, %s4
  // Predicated region
  $region2: #{generator_forward.10} parent=0 // pred_check
    _
  $region3: #{generator_forward.10} parent=0 // pred_check_branch
    %9 = sbr.rel (0) target = $region5
  $region4: #{generator_forward.10} parent=0 // pred_region
    _
  $region5: #{generator_forward.10} parent=0 // pred_fallthru
    _
  // Predicated region
  $region6: #{generator_forward.10} parent=0 // pred_check
    _
  $region7: #{generator_forward.10} parent=0 // pred_check_branch
    %11 = sbr.rel (0) target = $region9
  $region8: #{generator_forward.10} parent=0 // pred_region
    _
  $region9: #{generator_forward.10} parent=0 // pred_fallthru
    _
  // Predicated region
  $region10: #{generator_forward.10} parent=0 // pred_check
    _
  $region11: #{generator_forward.10} parent=0 // pred_check_branch
    %13 = sbr.rel (0) target = $region13
  $region12: #{generator_forward.10} parent=0 // pred_region
    _
  $region13: #{generator_forward.10} parent=0 // pred_fallthru
    _
  %v14 = vld [vmem:[%s0] sm:$0xff]
  %v15 = vld [vmem:[%s0 + $0x8] sm:$0xff]
  %v16 = vld [vmem:[%s0 + $0x10] sm:$0xff]
  %v17 = vld [vmem:[%s0 + $0x18] sm:$0xff]
  %v18 = vld [vmem:[%s0 + $0x20] sm:$0xff]
  %v19 = vld [vmem:[%s0 + $0x28] sm:$0xff]
  %v20 = vld [vmem:[%s0 + $0x30] sm:$0xff]
  %v21 = vld [vmem:[%s0 + $0x38] sm:$0xff]
  %v22 = vld [vmem:[%s0 + $0x40] sm:$0xff]
  %v23 = vld [vmem:[%s0 + $0x48] sm:$0xff]
  %v24 = vld [vmem:[%s0 + $0x50] sm:$0xff]
  %v25 = vld [vmem:[%s0 + $0x58] sm:$0xff]
  %v26 = vld [vmem:[%s0 + $0x60] sm:$0xff]
  %v27 = vld [vmem:[%s0 + $0x68] sm:$0xff]
  %v28 = vld [vmem:[%s0 + $0x70] sm:$0xff]
  %v29 = vld [vmem:[%s0 + $0x78] sm:$0xff]
  %v30 = vld [vmem:[%s1] sm:$0xf]
  %v32 = vlaneseq
  %v33 = vshrl.u32 %v32, 7
  %v34 = vsub.s32 0, %v33
  %v35 = vrot.slane %v30, %v34
  %v36 = vlaneseq
  %v37 = vshrl.u32 %v36, 7
  %v38 = vsub.s32 1, %v37
  %v39 = vrot.slane %v30, %v38
  %v40 = vlaneseq
  %v41 = vshrl.u32 %v40, 7
  %v42 = vsub.s32 2, %v41
  %v43 = vrot.slane %v30, %v42
  %v44 = vlaneseq
  %v45 = vshrl.u32 %v44, 7
  %v46 = vsub.s32 3, %v45
  %v47 = vrot.slane %v30, %v46
  %v52 = vmul.f32 %v14, %v35
  %v53 = vmul.f32 %v15, %v39
  %v54 = vmul.f32 %v16, %v43
  %v55 = vmul.f32 %v17, %v47
  %v56 = vmul.f32 %v18, %v35
  %v57 = vmul.f32 %v19, %v39
  %v58 = vmul.f32 %v20, %v43
  %v59 = vmul.f32 %v21, %v47
  %v60 = vmul.f32 %v22, %v35
  %v61 = vmul.f32 %v23, %v39
  %v62 = vmul.f32 %v24, %v43
  %v63 = vmul.f32 %v25, %v47
  %v64 = vmul.f32 %v26, %v35
  %v65 = vmul.f32 %v27, %v39
  %v66 = vmul.f32 %v28, %v43
  %v67 = vmul.f32 %v29, %v47
  %v68 = vld [vmem:[%s2] sm:$0xf]
  %v70 = vlaneseq
  %v71 = vshrl.u32 %v70, 7
  %v72 = vsub.s32 0, %v71
  %v73 = vrot.slane %v68, %v72
  %v74 = vlaneseq
  %v75 = vshrl.u32 %v74, 7
  %v76 = vsub.s32 1, %v75
  %v77 = vrot.slane %v68, %v76
  %v78 = vlaneseq
  %v79 = vshrl.u32 %v78, 7
  %v80 = vsub.s32 2, %v79
  %v81 = vrot.slane %v68, %v80
  %v82 = vlaneseq
  %v83 = vshrl.u32 %v82, 7
  %v84 = vsub.s32 3, %v83
  %v85 = vrot.slane %v68, %v84
  %v90 = vadd.f32 %v52, %v73
  %v91 = vadd.f32 %v53, %v77
  %v92 = vadd.f32 %v54, %v81
  %v93 = vadd.f32 %v55, %v85
  %v94 = vadd.f32 %v56, %v73
  %v95 = vadd.f32 %v57, %v77
  %v96 = vadd.f32 %v58, %v81
  %v97 = vadd.f32 %v59, %v85
  %v98 = vadd.f32 %v60, %v73
  %v99 = vadd.f32 %v61, %v77
  %v100 = vadd.f32 %v62, %v81
  %v101 = vadd.f32 %v63, %v85
  %v102 = vadd.f32 %v64, %v73
  %v103 = vadd.f32 %v65, %v77
  %v104 = vadd.f32 %v66, %v81
  %v105 = vadd.f32 %v67, %v85
  %v106 = vmax.f32 %v90, 0.0
  %v107 = vmax.f32 %v91, 0.0
  %v108 = vmax.f32 %v92, 0.0
  %v109 = vmax.f32 %v93, 0.0
  %v110 = vmax.f32 %v94, 0.0
  %v111 = vmax.f32 %v95, 0.0
  %v112 = vmax.f32 %v96, 0.0
  %v113 = vmax.f32 %v97, 0.0
  %v114 = vmax.f32 %v98, 0.0
  %v115 = vmax.f32 %v99, 0.0
  %v116 = vmax.f32 %v100, 0.0
  %v117 = vmax.f32 %v101, 0.0
  %v118 = vmax.f32 %v102, 0.0
  %v119 = vmax.f32 %v103, 0.0
  %v120 = vmax.f32 %v104, 0.0
  %v121 = vmax.f32 %v105, 0.0
  %122 = vst [vmem:[%s3] sm:$0xff] %v106
  %123 = vst [vmem:[%s3 + $0x8] sm:$0xff] %v107
  %124 = vst [vmem:[%s3 + $0x10] sm:$0xff] %v108
  %125 = vst [vmem:[%s3 + $0x18] sm:$0xff] %v109
  %126 = vst [vmem:[%s3 + $0x20] sm:$0xff] %v110
  %127 = vst [vmem:[%s3 + $0x28] sm:$0xff] %v111
  %128 = vst [vmem:[%s3 + $0x30] sm:$0xff] %v112
  %129 = vst [vmem:[%s3 + $0x38] sm:$0xff] %v113
  %130 = vst [vmem:[%s3 + $0x40] sm:$0xff] %v114
  %131 = vst [vmem:[%s3 + $0x48] sm:$0xff] %v115
  %132 = vst [vmem:[%s3 + $0x50] sm:$0xff] %v116
  %133 = vst [vmem:[%s3 + $0x58] sm:$0xff] %v117
  %134 = vst [vmem:[%s3 + $0x60] sm:$0xff] %v118
  %135 = vst [vmem:[%s3 + $0x68] sm:$0xff] %v119
  %136 = vst [vmem:[%s3 + $0x70] sm:$0xff] %v120
  %137 = vst [vmem:[%s3 + $0x78] sm:$0xff] %v121
  // Predicated region
  $region14: #{generator_forward.10} parent=0 // pred_check
    _
  $region15: #{generator_forward.10} parent=0 // pred_check_branch
    %139 = sbr.rel (0) target = $region17
  $region16: #{generator_forward.10} parent=0 // pred_region
    _
  $region17: #{generator_forward.10} parent=0 // pred_fallthru
    _
  // Predicated region
  $region18: #{generator_forward.10} parent=0 // pred_check
    _
  $region19: #{generator_forward.10} parent=0 // pred_check_branch
    %141 = sbr.rel (0) target = $region21
  $region20: #{generator_forward.10} parent=0 // pred_region
    _
  $region21: #{generator_forward.10} parent=0 // pred_fallthru
    _

// kernel: generator_forward.9
$region0: #{generator_forward.9}
  #allocation0 [shape = 'u32[]', space=smem, size = 0x4, offset = 0x4, fixed_abs, tag = 'smem constant byte address 0x4 - core index']
  #allocation1 [shape = 'u32[144,128]{1,0:T(1,128)}', space=vmem, size = 0x12000, scoped, tag = 'internal scratch']
  #allocation2 [shape = 'f32[16,512]{1,0:T(8,128)}', space=vmem, size = 0x8000, scoped, tag = 'scratch operand']
  %s0 = inlined_call_operand.vmem [shape: bf16[1,16,128], index: 0, kind: input, shape index: {}]
  %s1 = inlined_call_operand.hbm [shape: bf16[1,128,8192], index: 1, kind: input, shape index: {}]
  %s2 = inlined_call_operand.vmem [shape: f32[1,16,8192], index: 2, kind: output, shape index: {0}]
  %s3 = inlined_call_operand.vmem [shape: f32[1,8,8192], index: 3, kind: output, shape index: {1}]
  %4 = xla_tuple %s2, %s3
  %s5 = sld [smem:[#allocation0]]
  $region80: #{generator_forward.9} parent=0
    _
  %s7 = ssub.s32 1, %s5
  %s8 = scalar_select 0, %s7, %s5
  $region1: #{generator_forward.9} parent=0
    #allocation3 [shape = 'u8[262144]{0}', space=vmem, size = 0x40000, scoped, tag = 'input window, operand 1']
    #allocation4 [shape = 's32[2]{0}', space=sflag, size = 0x8, scoped, tag = 'scoped memory for generator_forward.9']
    #allocation5 [shape = 'u8[65536]{0}', space=vmem, size = 0x10000, scoped, tag = 'output window, operand 0']
    %9 = vsyncpa [#allocation4], 0
    %s10 = scalar_lea.sflag [#allocation4], 1
    %11 = vsyncpa %s10, 0
    loop: start=0, step=1, limit=18
    $region2: #{generator_forward.9} parent=1 // loop_pre_header
      _
    $region3: #{generator_forward.9} parent=1 // loop_header
      %s13 = sphi 0, %s17
      %p14 = scmp.ge.s32.totalorder %s13, 18
      %s20 = sphi 0, %s46
      %s21 = sphi 0, %s42
      %s22 = sphi 0, %s38
      %s23 = sphi 0, %s34
      %s24 = sphi 0, %s20
      %s25 = sphi 0, %s21
      %s26 = sphi 0, %s22
      %s27 = sphi 0, %s23
      %s28 = sphi 0, %s24
      %s29 = sphi 0, %s25
      %s30 = sphi 0, %s26
      %s31 = sphi 0, %s27
      %s53 = sphi 0, %s55
      %s56 = sphi 0, %s53
      %s57 = sphi 0, %s56
      %s73 = sphi 0, %s57
      %s83 = sphi 0, %s85
      %s86 = sphi 0, %s83
      %s87 = sphi 0, %s86
      %s103 = sphi 0, %s87
      %s113 = sphi 0, %s115
      %s116 = sphi 0, %s113
      %s117 = sphi 0, %s116
      %s133 = sphi 0, %s117
      %s143 = sphi 0, %s145
      %s146 = sphi 0, %s143
      %s147 = sphi 0, %s146
      %s163 = sphi 0, %s147
    $region4: #{generator_forward.9} parent=1 // loop_header_branch
      %16 = sbr.rel (%p14) target = $region8
    $region5: #{generator_forward.9} parent=1 // loop_body
      %s18 = ssub.s32 %s13, 1
      %s19 = ssub.s32 %s13, 2
      %s32 = sadd.s32 1, %s23
      %p33 = scmp.ge.s32.totalorder %s32, 1
      %s34 = scalar_select %p33, 0, %s32
      %s35 = sadd.s32 1, %s22
      %s36 = scalar_select %p33, %s35, %s22
      %p37 = scmp.ge.s32.totalorder %s36, 16
      %s38 = scalar_select %p37, 0, %s36
      %s39 = sadd.s32 1, %s21
      %s40 = scalar_select %p37, %s39, %s21
      %p41 = scmp.ge.s32.totalorder %s40, 1
      %s42 = scalar_select %p41, 0, %s40
      %s43 = sadd.s32 1, %s20
      %s44 = scalar_select %p41, %s43, %s20
      %p45 = scmp.ge.s32.totalorder %s44, 1
      %s46 = scalar_select %p45, 0, %s44
      %s47 = ssub.s32 %s20, %s46
      %s48 = ssub.s32 %s21, %s42
      %s49 = sor.u32 %s47, %s48
      %s50 = ssub.s32 %s23, %s34
      %s51 = sor.u32 %s49, %s50
      %p52 = scmp.eq.s32.totalorder %s51, 0
      %s54 = sadd.s32 %s53, 1
      %s55 = scalar_select %p52, %s53, %s54
      %p58 = pneg %p52
      %p59 = scmp.eq.s32.totalorder %s13, 15
      %p60 = por %p58, %p59
      %p61 = scmp.ne.s32.totalorder %s53, %s56
      %p62 = scmp.eq.s32.totalorder %s13, 0
      %p63 = por %p61, %p62
      %p64 = scmp.ne.s32.totalorder %s53, %s56
      %p65 = scmp.eq.s32.totalorder %s18, 15
      %p66 = por %p64, %p65
      %p67 = scmp.ne.s32.totalorder %s56, %s57
      %p68 = scmp.eq.s32.totalorder %s18, 0
      %p69 = por %p67, %p68
      %p70 = scmp.ne.s32.totalorder %s56, %s57
      %p71 = scmp.eq.s32.totalorder %s19, 15
      %p72 = por %p70, %p71
      %p74 = scmp.ne.s32.totalorder %s57, %s73
      %p75 = scmp.eq.s32.totalorder %s19, 0
      %p76 = por %p74, %p75
      %s77 = ssub.s32 %s20, %s46
      %s78 = ssub.s32 %s23, %s34
      %s79 = sor.u32 %s77, %s78
      %s80 = ssub.s32 %s22, %s38
      %s81 = sor.u32 %s79, %s80
      %p82 = scmp.eq.s32.totalorder %s81, 0
      %s84 = sadd.s32 %s83, 1
      %s85 = scalar_select %p82, %s83, %s84
      %p88 = pneg %p82
      %p89 = scmp.eq.s32.totalorder %s13, 15
      %p90 = por %p88, %p89
      %p91 = scmp.ne.s32.totalorder %s83, %s86
      %p92 = scmp.eq.s32.totalorder %s13, 0
      %p93 = por %p91, %p92
      %p94 = scmp.ne.s32.totalorder %s83, %s86
      %p95 = scmp.eq.s32.totalorder %s18, 15
      %p96 = por %p94, %p95
      %p97 = scmp.ne.s32.totalorder %s86, %s87
      %p98 = scmp.eq.s32.totalorder %s18, 0
      %p99 = por %p97, %p98
      %p100 = scmp.ne.s32.totalorder %s86, %s87
      %p101 = scmp.eq.s32.totalorder %s19, 15
      %p102 = por %p100, %p101
      %p104 = scmp.ne.s32.totalorder %s87, %s103
      %p105 = scmp.eq.s32.totalorder %s19, 0
      %p106 = por %p104, %p105
      %s107 = ssub.s32 %s20, %s46
      %s108 = ssub.s32 %s21, %s42
      %s109 = sor.u32 %s107, %s108
      %s110 = ssub.s32 %s22, %s38
      %s111 = sor.u32 %s109, %s110
      %p112 = scmp.eq.s32.totalorder %s111, 0
      %s114 = sadd.s32 %s113, 1
      %s115 = scalar_select %p112, %s113, %s114
      %p118 = pneg %p112
      %p119 = scmp.eq.s32.totalorder %s13, 15
      %p120 = por %p118, %p119
      %p121 = scmp.ne.s32.totalorder %s113, %s116
      %p122 = scmp.eq.s32.totalorder %s13, 0
      %p123 = por %p121, %p122
      %p124 = scmp.ne.s32.totalorder %s113, %s116
      %p125 = scmp.eq.s32.totalorder %s18, 15
      %p126 = por %p124, %p125
      %p127 = scmp.ne.s32.totalorder %s116, %s117
      %p128 = scmp.eq.s32.totalorder %s18, 0
      %p129 = por %p127, %p128
      %p130 = scmp.ne.s32.totalorder %s116, %s117
      %p131 = scmp.eq.s32.totalorder %s19, 15
      %p132 = por %p130, %p131
      %p134 = scmp.ne.s32.totalorder %s117, %s133
      %p135 = scmp.eq.s32.totalorder %s19, 0
      %p136 = por %p134, %p135
      %s137 = ssub.s32 %s20, %s46
      %s138 = ssub.s32 %s21, %s42
      %s139 = sor.u32 %s137, %s138
      %s140 = ssub.s32 %s22, %s38
      %s141 = sor.u32 %s139, %s140
      %p142 = scmp.eq.s32.totalorder %s141, 0
      %s144 = sadd.s32 %s143, 1
      %s145 = scalar_select %p142, %s143, %s144
      %p148 = pneg %p142
      %p149 = scmp.eq.s32.totalorder %s13, 15
      %p150 = por %p148, %p149
      %p151 = scmp.ne.s32.totalorder %s143, %s146
      %p152 = scmp.eq.s32.totalorder %s13, 0
      %p153 = por %p151, %p152
      %p154 = scmp.ne.s32.totalorder %s143, %s146
      %p155 = scmp.eq.s32.totalorder %s18, 15
      %p156 = por %p154, %p155
      %p157 = scmp.ne.s32.totalorder %s146, %s147
      %p158 = scmp.eq.s32.totalorder %s18, 0
      %p159 = por %p157, %p158
      %p160 = scmp.ne.s32.totalorder %s146, %s147
      %p161 = scmp.eq.s32.totalorder %s19, 15
      %p162 = por %p160, %p161
      %p164 = scmp.ne.s32.totalorder %s147, %s163
      %p165 = scmp.eq.s32.totalorder %s19, 0
      %p166 = por %p164, %p165
      %p167 = scmp.le.s32.totalorder 1, %s13
      %p168 = scmp.lt.s32.totalorder %s13, 17
      %p169 = pnand %p167, %p168
      %p170 = pneg %p169
      // Predicated region
      $region9: #{generator_forward.9} parent=5 // pred_check
        _
      $region10: #{generator_forward.9} parent=5 // pred_check_branch
        %172 = sbr.rel (%p169) target = $region12
      $region11: #{generator_forward.9} parent=5 // pred_region
        %s173 = ssub.s32 %s13, 1
        // Predicated region
        $region13: #{generator_forward.9} parent=11 // pred_check
          %p174 = pneg %p69
        $region14: #{generator_forward.9} parent=11 // pred_check_branch
          %176 = sbr.rel (%p174) target = $region16
        $region15: #{generator_forward.9} parent=11 // pred_region
          %s177 = smul.u32 2, %s25
          %p178 = scmp.lt.s32.totalorder %s24, 0
          %s179 = scalar_select %p178, %s24, 0
          %p180 = scmp.lt.s32.totalorder %s177, 1
          %s181 = scalar_select %p180, %s177, 1
          %p182 = scmp.lt.s32.totalorder %s27, 0
          %s183 = scalar_select %p182, %s27, 0
          %s184 = sadd.s32 %s183, %s181
          %s185 = smul.addr %s179, 2
          %s186 = sadd.s32 %s184, %s185
          %s187 = smul.addr %s186, 4
          %s188 = scalar_lea.vmem %s0, %s187
          %s189 = smul.u32 2, %s25
        $region16: #{generator_forward.9} parent=11 // pred_fallthru
          _
      $region12: #{generator_forward.9} parent=5 // pred_fallthru
        _
      %p190 = scmp.lt.s32.totalorder %s13, 16
      // Predicated region
      $region17: #{generator_forward.9} parent=5 // pred_check
        %p191 = pneg %p190
      $region18: #{generator_forward.9} parent=5 // pred_check_branch
        %193 = sbr.rel (%p191) target = $region20
      $region19: #{generator_forward.9} parent=5 // pred_region
        // Predicated region
        $region21: #{generator_forward.9} parent=19 // pred_check
          %p194 = pneg %p93
        $region22: #{generator_forward.9} parent=19 // pred_check_branch
          %196 = sbr.rel (%p194) target = $region24
        $region23: #{generator_forward.9} parent=19 // pred_region
          %s197 = sand.u32 %s83, 1
          %s198 = scalar_lea.sflag [#allocation4], %s197
          %s199 = sand.u32 %s83, 1
          %s200 = smul.addr %s199, 256
          %s201 = scalar_lea.vmem [#allocation3], %s200
          %s202 = smul.u32 16, %s23
          %s203 = smul.u32 4, %s22
          %s205 = ssub.s32 4096, 4096
          %206 = vsyncadd %s198, %s205
          %s207 = smul.addr %s202, 64
          %s208 = sadd.s32 %s203, %s207
          %s209 = smul.addr %s20, 1024
          %s210 = sadd.s32 %s208, %s209
          %s211 = smul.addr %s210, 64
          %s212 = scalar_lea.hbm %s1, %s211
          %s213 = sshll.u32 %s201, 4
          %s214 = int_to_ptr.vmem [resolvable:$true] %s213
          %219 = dma.hbm_to_vmem [thread:$0]  %s212, 4096, %s214, %s198, 4096, 256, 16
        $region24: #{generator_forward.9} parent=19 // pred_fallthru
          _
      $region20: #{generator_forward.9} parent=5 // pred_fallthru
        _
      %p220 = scmp.le.s32.totalorder 1, %s13
      %p221 = scmp.lt.s32.totalorder %s13, 17
      %p222 = pnand %p220, %p221
      %p223 = pneg %p222
      // Predicated region
      $region25: #{generator_forward.9} parent=5 // pred_check
        _
      $region26: #{generator_forward.9} parent=5 // pred_check_branch
        %225 = sbr.rel (%p222) target = $region28
      $region27: #{generator_forward.9} parent=5 // pred_region
        %s226 = ssub.s32 %s13, 1
        %s227 = sand.u32 %s86, 1
        %s228 = scalar_lea.sflag [#allocation4], %s227
        %s229 = sand.u32 %s86, 1
        %s230 = smul.addr %s229, 256
        %s231 = scalar_lea.vmem [#allocation3], %s230
        // Predicated region
        $region29: #{generator_forward.9} parent=27 // pred_check
          %p232 = pneg %p99
        $region30: #{generator_forward.9} parent=27 // pred_check_branch
          %234 = sbr.rel (%p232) target = $region32
        $region31: #{generator_forward.9} parent=27 // pred_region
          %235 = dma.done %s228, 4096
        $region32: #{generator_forward.9} parent=27 // pred_fallthru
          _
        %s236 = smul.u32 2, %s25
        %p237 = scmp.lt.s32.totalorder %s24, 0
        %s238 = scalar_select %p237, %s24, 0
        %p239 = scmp.lt.s32.totalorder %s236, 1
        %s240 = scalar_select %p239, %s236, 1
        %p241 = scmp.lt.s32.totalorder %s27, 0
        %s242 = scalar_select %p241, %s27, 0
        %s243 = sadd.s32 %s242, %s240
        %s244 = smul.addr %s238, 2
        %s245 = sadd.s32 %s243, %s244
        %s246 = smul.addr %s245, 4
        %s247 = scalar_lea.vmem %s0, %s246
        %p248 = pneg %p69
        %p249 = pneg %p66
        %s250 = sand.u32 %s86, 1
        %s251 = scalar_lea.sflag [#allocation4], %s250
        %s252 = sand.u32 %s86, 1
        %s253 = smul.addr %s252, 256
        %s254 = scalar_lea.vmem [#allocation3], %s253
        %p255 = pneg %p99
        %p256 = pneg %p96
        %p257 = pneg %p129
        %p258 = pneg %p126
        %s259 = sand.u32 %s116, 1
        %s260 = sand.u32 %s116, 1
        %s261 = smul.addr %s260, 64
        %s262 = scalar_lea.vmem [#allocation5], %s261
        %p263 = pneg %p159
        %p264 = pneg %p156
        %s265 = smul.u32 4, %s26
        %p266 = scmp.lt.s32.totalorder %s24, 0
        %s267 = scalar_select %p266, %s24, 0
        %p268 = scmp.lt.s32.totalorder %s25, 0
        %s269 = scalar_select %p268, %s25, 0
        %p270 = scmp.lt.s32.totalorder %s265, 63
        %s271 = scalar_select %p270, %s265, 63
        %s272 = smul.addr %s269, 64
        %s273 = sadd.s32 %s271, %s272
        %s274 = smul.addr %s267, 64
        %s275 = sadd.s32 %s273, %s274
        %s276 = smul.addr %s275, 8
        %s277 = scalar_lea.vmem %s3, %s276
        %s278 = smul.u32 2, %s25
        %p279 = scmp.lt.s32.totalorder %s24, 0
        %s280 = scalar_select %p279, %s24, 0
        %p281 = scmp.lt.s32.totalorder %s278, 1
        %s282 = scalar_select %p281, %s278, 1
        %p283 = scmp.lt.s32.totalorder %s27, 0
        %s284 = scalar_select %p283, %s27, 0
        %s285 = sadd.s32 %s284, %s282
        %s286 = smul.addr %s280, 2
        %s287 = sadd.s32 %s285, %s286
        %s288 = smul.addr %s287, 4
        %s289 = scalar_lea.vmem %s0, %s288
        %s290 = smul.u32 2, %s25
        %s291 = smul.u32 16, %s27
        %s292 = smul.u32 4, %s26
        %s293 = smul.u32 2, %s25
        %s294 = smul.u32 4, %s26
        %s295 = smul.u32 4, %s26
        %p296 = scmp.lt.s32.totalorder %s24, 0
        %s297 = scalar_select %p296, %s24, 0
        %p298 = scmp.lt.s32.totalorder %s25, 0
        %s299 = scalar_select %p298, %s25, 0
        %p300 = scmp.lt.s32.totalorder %s295, 63
        %s301 = scalar_select %p300, %s295, 63
        %s302 = smul.addr %s299, 64
        %s303 = sadd.s32 %s301, %s302
        %s304 = smul.addr %s297, 64
        %s305 = sadd.s32 %s303, %s304
        %s306 = smul.addr %s305, 8
        %s307 = scalar_lea.vmem %s3, %s306
        %s308 = smul.u32 4, %s26
        %p310 = scmp.eq.s32.totalorder %s27, 0
        // Predicated region
        $region33: #{generator_forward.9} parent=27 // pred_check
          %p311 = pneg %p310
        $region34: #{generator_forward.9} parent=27 // pred_check_branch
          %313 = sbr.rel (%p311) target = $region36
        $region35: #{generator_forward.9} parent=27 // pred_region
          %314 = vst [vmem:[#allocation2] sm:$0xff] 0.0
          %315 = vst [vmem:[#allocation2 + $0x8] sm:$0xff] 0.0
          %316 = vst [vmem:[#allocation2 + $0x10] sm:$0xff] 0.0
          %317 = vst [vmem:[#allocation2 + $0x18] sm:$0xff] 0.0
          %318 = vst [vmem:[#allocation2 + $0x20] sm:$0xff] 0.0
          %319 = vst [vmem:[#allocation2 + $0x28] sm:$0xff] 0.0
          %320 = vst [vmem:[#allocation2 + $0x30] sm:$0xff] 0.0
          %321 = vst [vmem:[#allocation2 + $0x38] sm:$0xff] 0.0
        $region36: #{generator_forward.9} parent=27 // pred_fallthru
          _
        %v322 = vld [vmem:[#allocation2] sm:$0xff]
        %v323 = vld [vmem:[#allocation2 + $0x8] sm:$0xff]
        %v324 = vld [vmem:[#allocation2 + $0x10] sm:$0xff]
        %v325 = vld [vmem:[#allocation2 + $0x18] sm:$0xff]
        %v326 = vld [vmem:[#allocation2 + $0x20] sm:$0xff]
        %v327 = vld [vmem:[#allocation2 + $0x28] sm:$0xff]
        %v328 = vld [vmem:[#allocation2 + $0x30] sm:$0xff]
        %v329 = vld [vmem:[#allocation2 + $0x38] sm:$0xff]
        %v330 = vld [vmem:[%s289] sm:$0xf]
        %v331 = vld [vmem:[%s289 + $0x4] sm:$0xf]
        %v332 = vld [vmem:[%s231] sm:$0xff]
        %v333 = vld [vmem:[%s231 + $0x8] sm:$0xff]
        %v334 = vld [vmem:[%s231 + $0x10] sm:$0xff]
        %v335 = vld [vmem:[%s231 + $0x18] sm:$0xff]
        %v336 = vld [vmem:[%s231 + $0x20] sm:$0xff]
        %v337 = vld [vmem:[%s231 + $0x28] sm:$0xff]
        %v338 = vld [vmem:[%s231 + $0x30] sm:$0xff]
        %v339 = vld [vmem:[%s231 + $0x38] sm:$0xff]
        %v340 = vld [vmem:[%s231 + $0x40] sm:$0xff]
        %v341 = vld [vmem:[%s231 + $0x48] sm:$0xff]
        %v342 = vld [vmem:[%s231 + $0x50] sm:$0xff]
        %v343 = vld [vmem:[%s231 + $0x58] sm:$0xff]
        %v344 = vld [vmem:[%s231 + $0x60] sm:$0xff]
        %v345 = vld [vmem:[%s231 + $0x68] sm:$0xff]
        %v346 = vld [vmem:[%s231 + $0x70] sm:$0xff]
        %v347 = vld [vmem:[%s231 + $0x78] sm:$0xff]
        %v348 = vld [vmem:[%s231 + $0x80] sm:$0xff]
        %v349 = vld [vmem:[%s231 + $0x88] sm:$0xff]
        %v350 = vld [vmem:[%s231 + $0x90] sm:$0xff]
        %v351 = vld [vmem:[%s231 + $0x98] sm:$0xff]
        %v352 = vld [vmem:[%s231 + $0xa0] sm:$0xff]
        %v353 = vld [vmem:[%s231 + $0xa8] sm:$0xff]
        %v354 = vld [vmem:[%s231 + $0xb0] sm:$0xff]
        %v355 = vld [vmem:[%s231 + $0xb8] sm:$0xff]
        %v356 = vld [vmem:[%s231 + $0xc0] sm:$0xff]
        %v357 = vld [vmem:[%s231 + $0xc8] sm:$0xff]
        %v358 = vld [vmem:[%s231 + $0xd0] sm:$0xff]
        %v359 = vld [vmem:[%s231 + $0xd8] sm:$0xff]
        %v360 = vld [vmem:[%s231 + $0xe0] sm:$0xff]
        %v361 = vld [vmem:[%s231 + $0xe8] sm:$0xff]
        %v362 = vld [vmem:[%s231 + $0xf0] sm:$0xff]
        %v363 = vld [vmem:[%s231 + $0xf8] sm:$0xff]
        %v366 = vunpack.c.l.b16 %v330
        %v367 = vunpack.c.l.b16 %v331
        %v368 = vpack.c.b16 %v367, %v366
        %v402 = vunpack.c.l.b16 %v332
        %v403 = vunpack.c.h.b16 %v332
        %v404 = vunpack.c.l.b16 %v333
        %v405 = vunpack.c.h.b16 %v333
        %v406 = vunpack.c.l.b16 %v334
        %v407 = vunpack.c.h.b16 %v334
        %v408 = vunpack.c.l.b16 %v335
        %v409 = vunpack.c.h.b16 %v335
        %v410 = vunpack.c.l.b16 %v336
        %v411 = vunpack.c.h.b16 %v336
        %v412 = vunpack.c.l.b16 %v337
        %v413 = vunpack.c.h.b16 %v337
        %v414 = vunpack.c.l.b16 %v338
        %v415 = vunpack.c.h.b16 %v338
        %v416 = vunpack.c.l.b16 %v339
        %v417 = vunpack.c.h.b16 %v339
        %v418 = vunpack.c.l.b16 %v340
        %v419 = vunpack.c.h.b16 %v340
        %v420 = vunpack.c.l.b16 %v341
        %v421 = vunpack.c.h.b16 %v341
        %v422 = vunpack.c.l.b16 %v342
        %v423 = vunpack.c.h.b16 %v342
        %v424 = vunpack.c.l.b16 %v343
        %v425 = vunpack.c.h.b16 %v343
        %v426 = vunpack.c.l.b16 %v344
        %v427 = vunpack.c.h.b16 %v344
        %v428 = vunpack.c.l.b16 %v345
        %v429 = vunpack.c.h.b16 %v345
        %v430 = vunpack.c.l.b16 %v346
        %v431 = vunpack.c.h.b16 %v346
        %v432 = vunpack.c.l.b16 %v347
        %v433 = vunpack.c.h.b16 %v347
        %v434 = vunpack.c.l.b16 %v348
        %v435 = vunpack.c.h.b16 %v348
        %v436 = vunpack.c.l.b16 %v349
        %v437 = vunpack.c.h.b16 %v349
        %v438 = vunpack.c.l.b16 %v350
        %v439 = vunpack.c.h.b16 %v350
        %v440 = vunpack.c.l.b16 %v351
        %v441 = vunpack.c.h.b16 %v351
        %v442 = vunpack.c.l.b16 %v352
        %v443 = vunpack.c.h.b16 %v352
        %v444 = vunpack.c.l.b16 %v353
        %v445 = vunpack.c.h.b16 %v353
        %v446 = vunpack.c.l.b16 %v354
        %v447 = vunpack.c.h.b16 %v354
        %v448 = vunpack.c.l.b16 %v355
        %v449 = vunpack.c.h.b16 %v355
        %v450 = vunpack.c.l.b16 %v356
        %v451 = vunpack.c.h.b16 %v356
        %v452 = vunpack.c.l.b16 %v357
        %v453 = vunpack.c.h.b16 %v357
        %v454 = vunpack.c.l.b16 %v358
        %v455 = vunpack.c.h.b16 %v358
        %v456 = vunpack.c.l.b16 %v359
        %v457 = vunpack.c.h.b16 %v359
        %v458 = vunpack.c.l.b16 %v360
        %v459 = vunpack.c.h.b16 %v360
        %v460 = vunpack.c.l.b16 %v361
        %v461 = vunpack.c.h.b16 %v361
        %v462 = vunpack.c.l.b16 %v362
        %v463 = vunpack.c.h.b16 %v362
        %v464 = vunpack.c.l.b16 %v363
        %v465 = vunpack.c.h.b16 %v363
        %v466 = vpack.c.b16 %v406, %v402
        %v467 = vpack.c.b16 %v407, %v403
        %v468 = vpack.c.b16 %v408, %v404
        %v469 = vpack.c.b16 %v409, %v405
        %v470 = vpack.c.b16 %v414, %v410
        %v471 = vpack.c.b16 %v415, %v411
        %v472 = vpack.c.b16 %v416, %v412
        %v473 = vpack.c.b16 %v417, %v413
        %v474 = vpack.c.b16 %v422, %v418
        %v475 = vpack.c.b16 %v423, %v419
        %v476 = vpack.c.b16 %v424, %v420
        %v477 = vpack.c.b16 %v425, %v421
        %v478 = vpack.c.b16 %v430, %v426
        %v479 = vpack.c.b16 %v431, %v427
        %v480 = vpack.c.b16 %v432, %v428
        %v481 = vpack.c.b16 %v433, %v429
        %v482 = vpack.c.b16 %v438, %v434
        %v483 = vpack.c.b16 %v439, %v435
        %v484 = vpack.c.b16 %v440, %v436
        %v485 = vpack.c.b16 %v441, %v437
        %v486 = vpack.c.b16 %v446, %v442
        %v487 = vpack.c.b16 %v447, %v443
        %v488 = vpack.c.b16 %v448, %v444
        %v489 = vpack.c.b16 %v449, %v445
        %v490 = vpack.c.b16 %v454, %v450
        %v491 = vpack.c.b16 %v455, %v451
        %v492 = vpack.c.b16 %v456, %v452
        %v493 = vpack.c.b16 %v457, %v453
        %v494 = vpack.c.b16 %v462, %v458
        %v495 = vpack.c.b16 %v463, %v459
        %v496 = vpack.c.b16 %v464, %v460
        %v497 = vpack.c.b16 %v465, %v461
        %530 = vmatprep.subr.bf16.mxu0 %v467
        %531 = vmatpush1.bf16.msra.mxu0 %v466
        %532 = vmatprep.subr.bf16.mxu0 %v471
        %533 = vmatpush1.bf16.msra.mxu0 %v470
        %534 = vmatprep.subr.bf16.mxu0 %v475
        %535 = vmatpush1.bf16.msra.mxu0 %v474
        %536 = vmatprep.subr.bf16.mxu0 %v479
        %537 = vmatpush1.bf16.msra.mxu0 %v478
        %538 = vmatprep.subr.bf16.mxu0 %v483
        %539 = vmatpush1.bf16.msra.mxu0 %v482
        %540 = vmatprep.subr.bf16.mxu0 %v487
        %541 = vmatpush1.bf16.msra.mxu0 %v486
        %542 = vmatprep.subr.bf16.mxu0 %v491
        %543 = vmatpush1.bf16.msra.mxu0 %v490
        %544 = vmatprep.subr.bf16.mxu0 %v495
        %545 = vmatpush1.bf16.msra.mxu0 %v494
        %546 = vmatprep.subr.bf16.mxu0 0
        %547 = vmatpush1.bf16.msra.mxu0 0
        %548 = vmatprep.subr.bf16.mxu0 0
        %549 = vmatpush1.bf16.msra.mxu0 0
        %550 = vmatprep.subr.bf16.mxu0 0
        %551 = vmatpush1.bf16.msra.mxu0 0
        %552 = vmatprep.subr.bf16.mxu0 0
        %553 = vmatpush1.bf16.msra.mxu0 0
        %554 = vmatprep.subr.bf16.mxu0 0
        %555 = vmatpush1.bf16.msra.mxu0 0
        %556 = vmatprep.subr.bf16.mxu0 0
        %557 = vmatpush1.bf16.msra.mxu0 0
        %558 = vmatprep.subr.bf16.mxu0 0
        %559 = vmatpush1.bf16.msra.mxu0 0
        %560 = vmatprep.subr.bf16.mxu0 0
        %561 = vmatpush1.bf16.msra.mxu0 0
        %562 = vmatprep.mubr.bf16.mxu0 0
        %563 = vmatmul.mubr.bf16.gmra.mrb[0].mxu0 %v368
        %v564 = vpop.f32.mrb[0].mxu0
        %v565 = vadd.f32 0.0, %v564
        %v566 = vpop.f32.mrb[0].mxu0
        %v567 = vadd.f32 0.0, %v566
        %v568 = vpop.f32.mrb[0].mxu0
        %v569 = vadd.f32 0.0, %v568
        %v570 = vpop.f32.mrb[0].mxu0
        %v571 = vadd.f32 0.0, %v570
        %572 = vdwg.mxu0
        %573 = vmatprep.subr.bf16.mxu0 %v469
        %574 = vmatpush1.bf16.msra.mxu0 %v468
        %575 = vmatprep.subr.bf16.mxu0 %v473
        %576 = vmatpush1.bf16.msra.mxu0 %v472
        %577 = vmatprep.subr.bf16.mxu0 %v477
        %578 = vmatpush1.bf16.msra.mxu0 %v476
        %579 = vmatprep.subr.bf16.mxu0 %v481
        %580 = vmatpush1.bf16.msra.mxu0 %v480
        %581 = vmatprep.subr.bf16.mxu0 %v485
        %582 = vmatpush1.bf16.msra.mxu0 %v484
        %583 = vmatprep.subr.bf16.mxu0 %v489
        %584 = vmatpush1.bf16.msra.mxu0 %v488
        %585 = vmatprep.subr.bf16.mxu0 %v493
        %586 = vmatpush1.bf16.msra.mxu0 %v492
        %587 = vmatprep.subr.bf16.mxu0 %v497
        %588 = vmatpush1.bf16.msra.mxu0 %v496
        %589 = vmatprep.subr.bf16.mxu0 0
        %590 = vmatpush1.bf16.msra.mxu0 0
        %591 = vmatprep.subr.bf16.mxu0 0
        %592 = vmatpush1.bf16.msra.mxu0 0
        %593 = vmatprep.subr.bf16.mxu0 0
        %594 = vmatpush1.bf16.msra.mxu0 0
        %595 = vmatprep.subr.bf16.mxu0 0
        %596 = vmatpush1.bf16.msra.mxu0 0
        %597 = vmatprep.subr.bf16.mxu0 0
        %598 = vmatpush1.bf16.msra.mxu0 0
        %599 = vmatprep.subr.bf16.mxu0 0
        %600 = vmatpush1.bf16.msra.mxu0 0
        %601 = vmatprep.subr.bf16.mxu0 0
        %602 = vmatpush1.bf16.msra.mxu0 0
        %603 = vmatprep.subr.bf16.mxu0 0
        %604 = vmatpush1.bf16.msra.mxu0 0
        %605 = vmatprep.mubr.bf16.mxu0 0
        %606 = vmatmul.mubr.bf16.gmra.mrb[0].mxu0 %v368
        %v607 = vpop.f32.mrb[0].mxu0
        %v608 = vadd.f32 0.0, %v607
        %v609 = vpop.f32.mrb[0].mxu0
        %v610 = vadd.f32 0.0, %v609
        %v611 = vpop.f32.mrb[0].mxu0
        %v612 = vadd.f32 0.0, %v611
        %v613 = vpop.f32.mrb[0].mxu0
        %v614 = vadd.f32 0.0, %v613
        %615 = vdwg.mxu0
        %v616 = vadd.f32 %v322, %v565
        %v617 = vadd.f32 %v323, %v567
        %v618 = vadd.f32 %v324, %v608
        %v619 = vadd.f32 %v325, %v610
        %v620 = vadd.f32 %v326, %v569
        %v621 = vadd.f32 %v327, %v571
        %v622 = vadd.f32 %v328, %v612
        %v623 = vadd.f32 %v329, %v614
        %624 = vst [vmem:[#allocation2] sm:$0xff] %v616
        %625 = vst [vmem:[#allocation2 + $0x8] sm:$0xff] %v617
        %626 = vst [vmem:[#allocation2 + $0x10] sm:$0xff] %v618
        %627 = vst [vmem:[#allocation2 + $0x18] sm:$0xff] %v619
        %628 = vst [vmem:[#allocation2 + $0x20] sm:$0xff] %v620
        %629 = vst [vmem:[#allocation2 + $0x28] sm:$0xff] %v621
        %630 = vst [vmem:[#allocation2 + $0x30] sm:$0xff] %v622
        %631 = vst [vmem:[#allocation2 + $0x38] sm:$0xff] %v623
        // Predicated region
        $region37: #{generator_forward.9} parent=27 // pred_check
          %p632 = pneg %p310
        $region38: #{generator_forward.9} parent=27 // pred_check_branch
          %634 = sbr.rel (%p632) target = $region40
        $region39: #{generator_forward.9} parent=27 // pred_region
          %v635 = vld [vmem:[#allocation2] sm:$0xff]
          %v636 = vld [vmem:[#allocation2 + $0x8] sm:$0xff]
          %v637 = vld [vmem:[#allocation2 + $0x10] sm:$0xff]
          %v638 = vld [vmem:[#allocation2 + $0x18] sm:$0xff]
          %v639 = vld [vmem:[#allocation2 + $0x20] sm:$0xff]
          %v640 = vld [vmem:[#allocation2 + $0x28] sm:$0xff]
          %v641 = vld [vmem:[#allocation2 + $0x30] sm:$0xff]
          %v642 = vld [vmem:[#allocation2 + $0x38] sm:$0xff]
          %643 = vst [vmem:[%s262] sm:$0xff] %v635
          %644 = vst [vmem:[%s262 + $0x8] sm:$0xff] %v636
          %645 = vst [vmem:[%s262 + $0x10] sm:$0xff] %v637
          %646 = vst [vmem:[%s262 + $0x18] sm:$0xff] %v638
          %647 = vst [vmem:[%s262 + $0x20] sm:$0xff] %v639
          %648 = vst [vmem:[%s262 + $0x28] sm:$0xff] %v640
          %649 = vst [vmem:[%s262 + $0x30] sm:$0xff] %v641
          %650 = vst [vmem:[%s262 + $0x38] sm:$0xff] %v642
          %v651 = vadd.f32 %v635, %v639
          %v652 = vrot.slane %v651, 4
          %v653 = vadd.f32 %v651, %v652
          %v654 = vrot.slane %v653, 2
          %v655 = vadd.f32 %v653, %v654
          %v656 = vrot.slane %v655, 1
          %v657 = vadd.f32 %v655, %v656
          %v658 = vadd.f32 %v636, %v640
          %v659 = vrot.slane %v658, 4
          %v660 = vadd.f32 %v658, %v659
          %v661 = vrot.slane %v660, 2
          %v662 = vadd.f32 %v660, %v661
          %v663 = vrot.slane %v662, 1
          %v664 = vadd.f32 %v662, %v663
          %v665 = vadd.f32 %v637, %v641
          %v666 = vrot.slane %v665, 4
          %v667 = vadd.f32 %v665, %v666
          %v668 = vrot.slane %v667, 2
          %v669 = vadd.f32 %v667, %v668
          %v670 = vrot.slane %v669, 1
          %v671 = vadd.f32 %v669, %v670
          %v672 = vadd.f32 %v638, %v642
          %v673 = vrot.slane %v672, 4
          %v674 = vadd.f32 %v672, %v673
          %v675 = vrot.slane %v674, 2
          %v676 = vadd.f32 %v674, %v675
          %v677 = vrot.slane %v676, 1
          %v678 = vadd.f32 %v676, %v677
          %v679 = vmul.f32 %v635, %v635
          %v680 = vmul.f32 %v636, %v636
          %v681 = vmul.f32 %v637, %v637
          %v682 = vmul.f32 %v638, %v638
          %v683 = vmul.f32 %v639, %v639
          %v684 = vmul.f32 %v640, %v640
          %v685 = vmul.f32 %v641, %v641
          %v686 = vmul.f32 %v642, %v642
          %v687 = vadd.f32 %v679, %v683
          %v688 = vrot.slane %v687, 4
          %v689 = vadd.f32 %v687, %v688
          %v690 = vrot.slane %v689, 2
          %v691 = vadd.f32 %v689, %v690
          %v692 = vrot.slane %v691, 1
          %v693 = vadd.f32 %v691, %v692
          %v694 = vadd.f32 %v680, %v684
          %v695 = vrot.slane %v694, 4
          %v696 = vadd.f32 %v694, %v695
          %v697 = vrot.slane %v696, 2
          %v698 = vadd.f32 %v696, %v697
          %v699 = vrot.slane %v698, 1
          %v700 = vadd.f32 %v698, %v699
          %v701 = vadd.f32 %v681, %v685
          %v702 = vrot.slane %v701, 4
          %v703 = vadd.f32 %v701, %v702
          %v704 = vrot.slane %v703, 2
          %v705 = vadd.f32 %v703, %v704
          %v706 = vrot.slane %v705, 1
          %v707 = vadd.f32 %v705, %v706
          %v708 = vadd.f32 %v682, %v686
          %v709 = vrot.slane %v708, 4
          %v710 = vadd.f32 %v708, %v709
          %v711 = vrot.slane %v710, 2
          %v712 = vadd.f32 %v710, %v711
          %v713 = vrot.slane %v712, 1
          %v714 = vadd.f32 %v712, %v713
          %v715 = vlaneseq
          %v716 = vshrl.u32 %v715, 7
          %vm717 = vcmp.eq.s32.totalorder %v716, 0
          %vm718 = vcmp.eq.s32.totalorder %v716, 1
          %v719 = vsel %vm718, %v693, 0.0
          %v720 = vsel %vm718, %v700, 0.0
          %v721 = vsel %vm718, %v707, 0.0
          %v722 = vsel %vm718, %v714, 0.0
          %v723 = vsel %vm717, %v657, %v719
          %v724 = vsel %vm717, %v664, %v720
          %v725 = vsel %vm717, %v671, %v721
          %v726 = vsel %vm717, %v678, %v722
          %727 = vst [vmem:[%s307] sm:$0xff] %v723
          %728 = vst [vmem:[%s307 + $0x8] sm:$0xff] %v724
          %729 = vst [vmem:[%s307 + $0x10] sm:$0xff] %v725
          %730 = vst [vmem:[%s307 + $0x18] sm:$0xff] %v726
        $region40: #{generator_forward.9} parent=27 // pred_fallthru
          _
        %s731 = sand.u32 %s116, 1
        %s732 = sand.u32 %s116, 1
        %s733 = smul.addr %s732, 64
        %s734 = scalar_lea.vmem [#allocation5], %s733
        %s735 = smul.u32 4, %s26
        %p736 = scmp.lt.s32.totalorder %s24, 0
        %s737 = scalar_select %p736, %s24, 0
        %p738 = scmp.lt.s32.totalorder %s25, 0
        %s739 = scalar_select %p738, %s25, 0
        %p740 = scmp.lt.s32.totalorder %s735, 63
        %s741 = scalar_select %p740, %s735, 63
        %s742 = smul.addr %s739, 64
        %s743 = sadd.s32 %s741, %s742
        %s744 = smul.addr %s737, 64
        %s745 = sadd.s32 %s743, %s744
        %s746 = smul.addr %s745, 8
        %s747 = scalar_lea.vmem %s3, %s746
        // Predicated region
        $region41: #{generator_forward.9} parent=27 // pred_check
          %p748 = pneg %p126
        $region42: #{generator_forward.9} parent=27 // pred_check_branch
          %750 = sbr.rel (%p748) target = $region44
        $region43: #{generator_forward.9} parent=27 // pred_region
          %s751 = smul.u32 2, %s25
          %s752 = smul.u32 4, %s26
          %s753 = smul.addr %s751, 64
          %s754 = sadd.s32 %s752, %s753
          %s755 = smul.addr %s24, 128
          %s756 = sadd.s32 %s754, %s755
          %s757 = smul.addr %s756, 8
          %s758 = scalar_lea.vmem %s2, %s757
          // Predicated region
          $region45: #{generator_forward.9} parent=43 // pred_check
            _
          $region46: #{generator_forward.9} parent=43 // pred_check_branch
            %760 = sbr.rel (0) target = $region48
          $region47: #{generator_forward.9} parent=43 // pred_region
            // Predicated region
            $region49: #{generator_forward.9} parent=47 // pred_check
              _
            $region50: #{generator_forward.9} parent=47 // pred_check_branch
              %762 = sbr.rel (0) target = $region52
            $region51: #{generator_forward.9} parent=47 // pred_region
              loop: start=0, step=1, limit=1
              $region53: #{generator_forward.9} parent=51 // loop_pre_header
                _
              $region54: #{generator_forward.9} parent=51 // loop_header
                %s764 = sphi 0, %s768
                %p765 = scmp.ge.s32.totalorder %s764, 1
                %s769 = sphi %s734, %s734
                %s770 = sphi %s758, %s758
              $region55: #{generator_forward.9} parent=51 // loop_header_branch
                %767 = sbr.rel (%p765) target = $region59
              $region56: #{generator_forward.9} parent=51 // loop_body
                %v771 = vld [vmem:[%s769] sm:$0xff]
                %772 = vst [vmem:[%s770] sm:$0xff] %v771
                %v773 = vld [vmem:[%s769 + $0x8] sm:$0xff]
                %774 = vst [vmem:[%s770 + $0x8] sm:$0xff] %v773
                %v775 = vld [vmem:[%s769 + $0x10] sm:$0xff]
                %776 = vst [vmem:[%s770 + $0x10] sm:$0xff] %v775
                %v777 = vld [vmem:[%s769 + $0x18] sm:$0xff]
                %778 = vst [vmem:[%s770 + $0x18] sm:$0xff] %v777
                %v779 = vld [vmem:[%s769 + $0x20] sm:$0xff]
                %780 = vst [vmem:[%s770 + $0x200] sm:$0xff] %v779
                %v781 = vld [vmem:[%s769 + $0x28] sm:$0xff]
                %782 = vst [vmem:[%s770 + $0x208] sm:$0xff] %v781
                %v783 = vld [vmem:[%s769 + $0x30] sm:$0xff]
                %784 = vst [vmem:[%s770 + $0x210] sm:$0xff] %v783
                %v785 = vld [vmem:[%s769 + $0x38] sm:$0xff]
                %786 = vst [vmem:[%s770 + $0x218] sm:$0xff] %v785
              $region57: #{generator_forward.9} parent=51 // loop_footer
                %s768 = sadd.s32 1, %s764
              $region58: #{generator_forward.9} parent=51 // loop_footer_branch
                %763 = sbr.rel target = $region54
              $region59: #{generator_forward.9} parent=51 // loop_exit
                _
            $region52: #{generator_forward.9} parent=47 // pred_fallthru
              _
            // Predicated region
            $region60: #{generator_forward.9} parent=47 // pred_check
              _
            $region61: #{generator_forward.9} parent=47 // pred_check_branch
              %788 = sbr.rel target = $region63
            $region62: #{generator_forward.9} parent=47 // pred_region
              _
            $region63: #{generator_forward.9} parent=47 // pred_fallthru
              _
          $region48: #{generator_forward.9} parent=43 // pred_fallthru
            _
          %789 = vnop
        $region44: #{generator_forward.9} parent=27 // pred_fallthru
          _
        // Predicated region
        $region64: #{generator_forward.9} parent=27 // pred_check
          %p790 = pneg %p156
        $region65: #{generator_forward.9} parent=27 // pred_check_branch
          %792 = sbr.rel (%p790) target = $region67
        $region66: #{generator_forward.9} parent=27 // pred_region
          %s793 = smul.u32 4, %s26
        $region67: #{generator_forward.9} parent=27 // pred_fallthru
          _
      $region28: #{generator_forward.9} parent=5 // pred_fallthru
        _
      %p794 = scmp.le.s32.totalorder 2, %s13
      // Predicated region
      $region68: #{generator_forward.9} parent=5 // pred_check
        %p795 = pneg %p794
      $region69: #{generator_forward.9} parent=5 // pred_check_branch
        %797 = sbr.rel (%p795) target = $region71
      $region70: #{generator_forward.9} parent=5 // pred_region
        %s798 = ssub.s32 %s13, 2
        // Predicated region
        $region72: #{generator_forward.9} parent=70 // pred_check
          %p799 = pneg %p132
        $region73: #{generator_forward.9} parent=70 // pred_check_branch
          %801 = sbr.rel (%p799) target = $region75
        $region74: #{generator_forward.9} parent=70 // pred_region
          %s802 = sand.u32 %s117, 1
          %s803 = sand.u32 %s117, 1
          %s804 = smul.addr %s803, 64
          %s805 = scalar_lea.vmem [#allocation5], %s804
        $region75: #{generator_forward.9} parent=70 // pred_fallthru
          _
        // Predicated region
        $region76: #{generator_forward.9} parent=70 // pred_check
          %p806 = pneg %p162
        $region77: #{generator_forward.9} parent=70 // pred_check_branch
          %808 = sbr.rel (%p806) target = $region79
        $region78: #{generator_forward.9} parent=70 // pred_region
          %s809 = smul.u32 4, %s30
          %p810 = scmp.lt.s32.totalorder %s28, 0
          %s811 = scalar_select %p810, %s28, 0
          %p812 = scmp.lt.s32.totalorder %s29, 0
          %s813 = scalar_select %p812, %s29, 0
          %p814 = scmp.lt.s32.totalorder %s809, 63
          %s815 = scalar_select %p814, %s809, 63
          %s816 = smul.addr %s813, 64
          %s817 = sadd.s32 %s815, %s816
          %s818 = smul.addr %s811, 64
          %s819 = sadd.s32 %s817, %s818
          %s820 = smul.addr %s819, 8
          %s821 = scalar_lea.vmem %s3, %s820
        $region79: #{generator_forward.9} parent=70 // pred_fallthru
          _
      $region71: #{generator_forward.9} parent=5 // pred_fallthru
        _
    $region6: #{generator_forward.9} parent=1 // loop_footer
      %s17 = sadd.s32 1, %s13
    $region7: #{generator_forward.9} parent=1 // loop_footer_branch
      %12 = sbr.rel target = $region3
    $region8: #{generator_forward.9} parent=1 // loop_exit
      _
    %822 = vsyncpa [#allocation4], 1
    %s823 = scalar_lea.sflag [#allocation4], 1
    %824 = vsyncpa %s823, 1

// kernel: generator_forward.12
$region0: #{generator_forward.12}
  #allocation0 [shape = 'u32[]', space=smem, size = 0x4, offset = 0x4, fixed_abs, tag = 'smem constant byte address 0x4 - core index']
  #allocation1 [shape = 'u32[144,128]{1,0:T(1,128)}', space=vmem, size = 0x12000, scoped, tag = 'internal scratch']
  %s0 = inlined_call_operand.vmem [shape: f32[128,256], index: 0, kind: input, shape index: {}]
  %s1 = inlined_call_operand.vmem [shape: f32[1,256], index: 1, kind: input, shape index: {}]
  %s2 = inlined_call_operand.vmem [shape: f32[1,256], index: 2, kind: input, shape index: {}]
  %s3 = inlined_call_operand.vmem [shape: f32[128,256], index: 3, kind: output, shape index: {}]
  %s4 = sld [smem:[#allocation0]]
  $region22: #{generator_forward.12} parent=0
    _
  %s6 = ssub.s32 1, %s4
  %s7 = scalar_select 0, %s6, %s4
  // Predicated region
  $region2: #{generator_forward.12} parent=0 // pred_check
    _
  $region3: #{generator_forward.12} parent=0 // pred_check_branch
    %9 = sbr.rel (0) target = $region5
  $region4: #{generator_forward.12} parent=0 // pred_region
    _
  $region5: #{generator_forward.12} parent=0 // pred_fallthru
    _
  // Predicated region
  $region6: #{generator_forward.12} parent=0 // pred_check
    _
  $region7: #{generator_forward.12} parent=0 // pred_check_branch
    %11 = sbr.rel (0) target = $region9
  $region8: #{generator_forward.12} parent=0 // pred_region
    _
  $region9: #{generator_forward.12} parent=0 // pred_fallthru
    _
  // Predicated region
  $region10: #{generator_forward.12} parent=0 // pred_check
    _
  $region11: #{generator_forward.12} parent=0 // pred_check_branch
    %13 = sbr.rel (0) target = $region13
  $region12: #{generator_forward.12} parent=0 // pred_region
    _
  $region13: #{generator_forward.12} parent=0 // pred_fallthru
    _
  %v14 = vld [vmem:[%s0] sm:$0xff]
  %v15 = vld [vmem:[%s0 + $0x8] sm:$0xff]
  %v16 = vld [vmem:[%s0 + $0x10] sm:$0xff]
  %v17 = vld [vmem:[%s0 + $0x18] sm:$0xff]
  %v18 = vld [vmem:[%s0 + $0x20] sm:$0xff]
  %v19 = vld [vmem:[%s0 + $0x28] sm:$0xff]
  %v20 = vld [vmem:[%s0 + $0x30] sm:$0xff]
  %v21 = vld [vmem:[%s0 + $0x38] sm:$0xff]
  %v22 = vld [vmem:[%s0 + $0x40] sm:$0xff]
  %v23 = vld [vmem:[%s0 + $0x48] sm:$0xff]
  %v24 = vld [vmem:[%s0 + $0x50] sm:$0xff]
  %v25 = vld [vmem:[%s0 + $0x58] sm:$0xff]
  %v26 = vld [vmem:[%s0 + $0x60] sm:$0xff]
  %v27 = vld [vmem:[%s0 + $0x68] sm:$0xff]
  %v28 = vld [vmem:[%s0 + $0x70] sm:$0xff]
  %v29 = vld [vmem:[%s0 + $0x78] sm:$0xff]
  %v30 = vld [vmem:[%s0 + $0x80] sm:$0xff]
  %v31 = vld [vmem:[%s0 + $0x88] sm:$0xff]
  %v32 = vld [vmem:[%s0 + $0x90] sm:$0xff]
  %v33 = vld [vmem:[%s0 + $0x98] sm:$0xff]
  %v34 = vld [vmem:[%s0 + $0xa0] sm:$0xff]
  %v35 = vld [vmem:[%s0 + $0xa8] sm:$0xff]
  %v36 = vld [vmem:[%s0 + $0xb0] sm:$0xff]
  %v37 = vld [vmem:[%s0 + $0xb8] sm:$0xff]
  %v38 = vld [vmem:[%s0 + $0xc0] sm:$0xff]
  %v39 = vld [vmem:[%s0 + $0xc8] sm:$0xff]
  %v40 = vld [vmem:[%s0 + $0xd0] sm:$0xff]
  %v41 = vld [vmem:[%s0 + $0xd8] sm:$0xff]
  %v42 = vld [vmem:[%s0 + $0xe0] sm:$0xff]
  %v43 = vld [vmem:[%s0 + $0xe8] sm:$0xff]
  %v44 = vld [vmem:[%s0 + $0xf0] sm:$0xff]
  %v45 = vld [vmem:[%s0 + $0xf8] sm:$0xff]
  %v46 = vld [vmem:[%s1] sm:$0x3]
  %v48 = vlaneseq
  %v49 = vshrl.u32 %v48, 7
  %v50 = vsub.s32 0, %v49
  %v51 = vrot.slane %v46, %v50
  %v52 = vlaneseq
  %v53 = vshrl.u32 %v52, 7
  %v54 = vsub.s32 1, %v53
  %v55 = vrot.slane %v46, %v54
  %v58 = vmul.f32 %v14, %v51
  %v59 = vmul.f32 %v15, %v55
  %v60 = vmul.f32 %v16, %v51
  %v61 = vmul.f32 %v17, %v55
  %v62 = vmul.f32 %v18, %v51
  %v63 = vmul.f32 %v19, %v55
  %v64 = vmul.f32 %v20, %v51
  %v65 = vmul.f32 %v21, %v55
  %v66 = vmul.f32 %v22, %v51
  %v67 = vmul.f32 %v23, %v55
  %v68 = vmul.f32 %v24, %v51
  %v69 = vmul.f32 %v25, %v55
  %v70 = vmul.f32 %v26, %v51
  %v71 = vmul.f32 %v27, %v55
  %v72 = vmul.f32 %v28, %v51
  %v73 = vmul.f32 %v29, %v55
  %v74 = vmul.f32 %v30, %v51
  %v75 = vmul.f32 %v31, %v55
  %v76 = vmul.f32 %v32, %v51
  %v77 = vmul.f32 %v33, %v55
  %v78 = vmul.f32 %v34, %v51
  %v79 = vmul.f32 %v35, %v55
  %v80 = vmul.f32 %v36, %v51
  %v81 = vmul.f32 %v37, %v55
  %v82 = vmul.f32 %v38, %v51
  %v83 = vmul.f32 %v39, %v55
  %v84 = vmul.f32 %v40, %v51
  %v85 = vmul.f32 %v41, %v55
  %v86 = vmul.f32 %v42, %v51
  %v87 = vmul.f32 %v43, %v55
  %v88 = vmul.f32 %v44, %v51
  %v89 = vmul.f32 %v45, %v55
  %v90 = vld [vmem:[%s2] sm:$0x3]
  %v92 = vlaneseq
  %v93 = vshrl.u32 %v92, 7
  %v94 = vsub.s32 0, %v93
  %v95 = vrot.slane %v90, %v94
  %v96 = vlaneseq
  %v97 = vshrl.u32 %v96, 7
  %v98 = vsub.s32 1, %v97
  %v99 = vrot.slane %v90, %v98
  %v102 = vadd.f32 %v58, %v95
  %v103 = vadd.f32 %v59, %v99
  %v104 = vadd.f32 %v60, %v95
  %v105 = vadd.f32 %v61, %v99
  %v106 = vadd.f32 %v62, %v95
  %v107 = vadd.f32 %v63, %v99
  %v108 = vadd.f32 %v64, %v95
  %v109 = vadd.f32 %v65, %v99
  %v110 = vadd.f32 %v66, %v95
  %v111 = vadd.f32 %v67, %v99
  %v112 = vadd.f32 %v68, %v95
  %v113 = vadd.f32 %v69, %v99
  %v114 = vadd.f32 %v70, %v95
  %v115 = vadd.f32 %v71, %v99
  %v116 = vadd.f32 %v72, %v95
  %v117 = vadd.f32 %v73, %v99
  %v118 = vadd.f32 %v74, %v95
  %v119 = vadd.f32 %v75, %v99
  %v120 = vadd.f32 %v76, %v95
  %v121 = vadd.f32 %v77, %v99
  %v122 = vadd.f32 %v78, %v95
  %v123 = vadd.f32 %v79, %v99
  %v124 = vadd.f32 %v80, %v95
  %v125 = vadd.f32 %v81, %v99
  %v126 = vadd.f32 %v82, %v95
  %v127 = vadd.f32 %v83, %v99
  %v128 = vadd.f32 %v84, %v95
  %v129 = vadd.f32 %v85, %v99
  %v130 = vadd.f32 %v86, %v95
  %v131 = vadd.f32 %v87, %v99
  %v132 = vadd.f32 %v88, %v95
  %v133 = vadd.f32 %v89, %v99
  %v134 = vmax.f32 %v102, 0.0
  %v135 = vmax.f32 %v103, 0.0
  %v136 = vmax.f32 %v104, 0.0
  %v137 = vmax.f32 %v105, 0.0
  %v138 = vmax.f32 %v106, 0.0
  %v139 = vmax.f32 %v107, 0.0
  %v140 = vmax.f32 %v108, 0.0
  %v141 = vmax.f32 %v109, 0.0
  %v142 = vmax.f32 %v110, 0.0
  %v143 = vmax.f32 %v111, 0.0
  %v144 = vmax.f32 %v112, 0.0
  %v145 = vmax.f32 %v113, 0.0
  %v146 = vmax.f32 %v114, 0.0
  %v147 = vmax.f32 %v115, 0.0
  %v148 = vmax.f32 %v116, 0.0
  %v149 = vmax.f32 %v117, 0.0
  %v150 = vmax.f32 %v118, 0.0
  %v151 = vmax.f32 %v119, 0.0
  %v152 = vmax.f32 %v120, 0.0
  %v153 = vmax.f32 %v121, 0.0
  %v154 = vmax.f32 %v122, 0.0
  %v155 = vmax.f32 %v123, 0.0
  %v156 = vmax.f32 %v124, 0.0
  %v157 = vmax.f32 %v125, 0.0
  %v158 = vmax.f32 %v126, 0.0
  %v159 = vmax.f32 %v127, 0.0
  %v160 = vmax.f32 %v128, 0.0
  %v161 = vmax.f32 %v129, 0.0
  %v162 = vmax.f32 %v130, 0.0
  %v163 = vmax.f32 %v131, 0.0
  %v164 = vmax.f32 %v132, 0.0
  %v165 = vmax.f32 %v133, 0.0
  %166 = vst [vmem:[%s3] sm:$0xff] %v134
  %167 = vst [vmem:[%s3 + $0x8] sm:$0xff] %v135
  %168 = vst [vmem:[%s3 + $0x10] sm:$0xff] %v136
  %169 = vst [vmem:[%s3 + $0x18] sm:$0xff] %v137
  %170 = vst [vmem:[%s3 + $0x20] sm:$0xff] %v138
  %171 = vst [vmem:[%s3 + $0x28] sm:$0xff] %v139
  %172 = vst [vmem:[%s3 + $0x30] sm:$0xff] %v140
  %173 = vst [vmem:[%s3 + $0x38] sm:$0xff] %v141
  %174 = vst [vmem:[%s3 + $0x40] sm:$0xff] %v142
  %175 = vst [vmem:[%s3 + $0x48] sm:$0xff] %v143
  %176 = vst [vmem:[%s3 + $0x50] sm:$0xff] %v144
  %177 = vst [vmem:[%s3 + $0x58] sm:$0xff] %v145
  %178 = vst [vmem:[%s3 + $0x60] sm:$0xff] %v146
  %179 = vst [vmem:[%s3 + $0x68] sm:$0xff] %v147
  %180 = vst [vmem:[%s3 + $0x70] sm:$0xff] %v148
  %181 = vst [vmem:[%s3 + $0x78] sm:$0xff] %v149
  %182 = vst [vmem:[%s3 + $0x80] sm:$0xff] %v150
  %183 = vst [vmem:[%s3 + $0x88] sm:$0xff] %v151
  %184 = vst [vmem:[%s3 + $0x90] sm:$0xff] %v152
  %185 = vst [vmem:[%s3 + $0x98] sm:$0xff] %v153
  %186 = vst [vmem:[%s3 + $0xa0] sm:$0xff] %v154
  %187 = vst [vmem:[%s3 + $0xa8] sm:$0xff] %v155
  %188 = vst [vmem:[%s3 + $0xb0] sm:$0xff] %v156
  %189 = vst [vmem:[%s3 + $0xb8] sm:$0xff] %v157
  %190 = vst [vmem:[%s3 + $0xc0] sm:$0xff] %v158
  %191 = vst [vmem:[%s3 + $0xc8] sm:$0xff] %v159
  %192 = vst [vmem:[%s3 + $0xd0] sm:$0xff] %v160
  %193 = vst [vmem:[%s3 + $0xd8] sm:$0xff] %v161
  %194 = vst [vmem:[%s3 + $0xe0] sm:$0xff] %v162
  %195 = vst [vmem:[%s3 + $0xe8] sm:$0xff] %v163
  %196 = vst [vmem:[%s3 + $0xf0] sm:$0xff] %v164
  %197 = vst [vmem:[%s3 + $0xf8] sm:$0xff] %v165
  // Predicated region
  $region14: #{generator_forward.12} parent=0 // pred_check
    _
  $region15: #{generator_forward.12} parent=0 // pred_check_branch
    %199 = sbr.rel (0) target = $region17
  $region16: #{generator_forward.12} parent=0 // pred_region
    _
  $region17: #{generator_forward.12} parent=0 // pred_fallthru
    _
  // Predicated region
  $region18: #{generator_forward.12} parent=0 // pred_check
    _
  $region19: #{generator_forward.12} parent=0 // pred_check_branch
    %201 = sbr.rel (0) target = $region21
  $region20: #{generator_forward.12} parent=0 // pred_region
    _
  $region21: #{generator_forward.12} parent=0 // pred_fallthru
    _

// kernel: generator_forward.11
$region0: #{generator_forward.11}
  #allocation0 [shape = 'u32[]', space=smem, size = 0x4, offset = 0x4, fixed_abs, tag = 'smem constant byte address 0x4 - core index']
  #allocation1 [shape = 'u32[144,128]{1,0:T(1,128)}', space=vmem, size = 0x12000, scoped, tag = 'internal scratch']
  #allocation2 [shape = 'f32[32,256]{1,0:T(8,128)}', space=vmem, size = 0x8000, scoped, tag = 'scratch operand']
  %s0 = inlined_call_operand.vmem [shape: bf16[4,32,2048], index: 0, kind: input, shape index: {}]
  %s1 = inlined_call_operand.vmem [shape: bf16[4,2048,256], index: 1, kind: input, shape index: {}]
  %s2 = inlined_call_operand.vmem [shape: f32[4,32,256], index: 2, kind: output, shape index: {0}]
  %s3 = inlined_call_operand.vmem [shape: f32[4,8,256], index: 3, kind: output, shape index: {1}]
  %4 = xla_tuple %s2, %s3
  %s5 = sld [smem:[#allocation0]]
  $region80: #{generator_forward.11} parent=0
    _
  %s7 = ssub.s32 1, %s5
  %s8 = scalar_select 0, %s7, %s5
  $region1: #{generator_forward.11} parent=0
    #allocation3 [shape = 'u8[65536]{0}', space=vmem, size = 0x10000, scoped, tag = 'input window, operand 0']
    loop: start=0, step=1, limit=18
    $region2: #{generator_forward.11} parent=1 // loop_pre_header
      _
    $region3: #{generator_forward.11} parent=1 // loop_header
      %s10 = sphi 0, %s14
      %p11 = scmp.ge.s32.totalorder %s10, 18
      %s17 = sphi 0, %s43
      %s18 = sphi 0, %s39
      %s19 = sphi 0, %s35
      %s20 = sphi 0, %s31
      %s21 = sphi 0, %s17
      %s22 = sphi 0, %s18
      %s23 = sphi 0, %s19
      %s24 = sphi 0, %s20
      %s25 = sphi 0, %s21
      %s26 = sphi 0, %s22
      %s27 = sphi 0, %s23
      %s28 = sphi 0, %s24
      %s50 = sphi 0, %s52
      %s53 = sphi 0, %s50
      %s54 = sphi 0, %s53
      %s70 = sphi 0, %s54
      %s80 = sphi 0, %s82
      %s83 = sphi 0, %s80
      %s84 = sphi 0, %s83
      %s100 = sphi 0, %s84
      %s110 = sphi 0, %s112
      %s113 = sphi 0, %s110
      %s114 = sphi 0, %s113
      %s130 = sphi 0, %s114
      %s140 = sphi 0, %s142
      %s143 = sphi 0, %s140
      %s144 = sphi 0, %s143
      %s160 = sphi 0, %s144
    $region4: #{generator_forward.11} parent=1 // loop_header_branch
      %13 = sbr.rel (%p11) target = $region8
    $region5: #{generator_forward.11} parent=1 // loop_body
      %s15 = ssub.s32 %s10, 1
      %s16 = ssub.s32 %s10, 2
      %s29 = sadd.s32 1, %s20
      %p30 = scmp.ge.s32.totalorder %s29, 4
      %s31 = scalar_select %p30, 0, %s29
      %s32 = sadd.s32 1, %s19
      %s33 = scalar_select %p30, %s32, %s19
      %p34 = scmp.ge.s32.totalorder %s33, 1
      %s35 = scalar_select %p34, 0, %s33
      %s36 = sadd.s32 1, %s18
      %s37 = scalar_select %p34, %s36, %s18
      %p38 = scmp.ge.s32.totalorder %s37, 1
      %s39 = scalar_select %p38, 0, %s37
      %s40 = sadd.s32 1, %s17
      %s41 = scalar_select %p38, %s40, %s17
      %p42 = scmp.ge.s32.totalorder %s41, 4
      %s43 = scalar_select %p42, 0, %s41
      %s44 = ssub.s32 %s17, %s43
      %s45 = ssub.s32 %s18, %s39
      %s46 = sor.u32 %s44, %s45
      %s47 = ssub.s32 %s20, %s31
      %s48 = sor.u32 %s46, %s47
      %p49 = scmp.eq.s32.totalorder %s48, 0
      %s51 = sadd.s32 %s50, 1
      %s52 = scalar_select %p49, %s50, %s51
      %p55 = pneg %p49
      %p56 = scmp.eq.s32.totalorder %s10, 15
      %p57 = por %p55, %p56
      %p58 = scmp.ne.s32.totalorder %s50, %s53
      %p59 = scmp.eq.s32.totalorder %s10, 0
      %p60 = por %p58, %p59
      %p61 = scmp.ne.s32.totalorder %s50, %s53
      %p62 = scmp.eq.s32.totalorder %s15, 15
      %p63 = por %p61, %p62
      %p64 = scmp.ne.s32.totalorder %s53, %s54
      %p65 = scmp.eq.s32.totalorder %s15, 0
      %p66 = por %p64, %p65
      %p67 = scmp.ne.s32.totalorder %s53, %s54
      %p68 = scmp.eq.s32.totalorder %s16, 15
      %p69 = por %p67, %p68
      %p71 = scmp.ne.s32.totalorder %s54, %s70
      %p72 = scmp.eq.s32.totalorder %s16, 0
      %p73 = por %p71, %p72
      %s74 = ssub.s32 %s17, %s43
      %s75 = ssub.s32 %s20, %s31
      %s76 = sor.u32 %s74, %s75
      %s77 = ssub.s32 %s19, %s35
      %s78 = sor.u32 %s76, %s77
      %p79 = scmp.eq.s32.totalorder %s78, 0
      %s81 = sadd.s32 %s80, 1
      %s82 = scalar_select %p79, %s80, %s81
      %p85 = pneg %p79
      %p86 = scmp.eq.s32.totalorder %s10, 15
      %p87 = por %p85, %p86
      %p88 = scmp.ne.s32.totalorder %s80, %s83
      %p89 = scmp.eq.s32.totalorder %s10, 0
      %p90 = por %p88, %p89
      %p91 = scmp.ne.s32.totalorder %s80, %s83
      %p92 = scmp.eq.s32.totalorder %s15, 15
      %p93 = por %p91, %p92
      %p94 = scmp.ne.s32.totalorder %s83, %s84
      %p95 = scmp.eq.s32.totalorder %s15, 0
      %p96 = por %p94, %p95
      %p97 = scmp.ne.s32.totalorder %s83, %s84
      %p98 = scmp.eq.s32.totalorder %s16, 15
      %p99 = por %p97, %p98
      %p101 = scmp.ne.s32.totalorder %s84, %s100
      %p102 = scmp.eq.s32.totalorder %s16, 0
      %p103 = por %p101, %p102
      %s104 = ssub.s32 %s17, %s43
      %s105 = ssub.s32 %s18, %s39
      %s106 = sor.u32 %s104, %s105
      %s107 = ssub.s32 %s19, %s35
      %s108 = sor.u32 %s106, %s107
      %p109 = scmp.eq.s32.totalorder %s108, 0
      %s111 = sadd.s32 %s110, 1
      %s112 = scalar_select %p109, %s110, %s111
      %p115 = pneg %p109
      %p116 = scmp.eq.s32.totalorder %s10, 15
      %p117 = por %p115, %p116
      %p118 = scmp.ne.s32.totalorder %s110, %s113
      %p119 = scmp.eq.s32.totalorder %s10, 0
      %p120 = por %p118, %p119
      %p121 = scmp.ne.s32.totalorder %s110, %s113
      %p122 = scmp.eq.s32.totalorder %s15, 15
      %p123 = por %p121, %p122
      %p124 = scmp.ne.s32.totalorder %s113, %s114
      %p125 = scmp.eq.s32.totalorder %s15, 0
      %p126 = por %p124, %p125
      %p127 = scmp.ne.s32.totalorder %s113, %s114
      %p128 = scmp.eq.s32.totalorder %s16, 15
      %p129 = por %p127, %p128
      %p131 = scmp.ne.s32.totalorder %s114, %s130
      %p132 = scmp.eq.s32.totalorder %s16, 0
      %p133 = por %p131, %p132
      %s134 = ssub.s32 %s17, %s43
      %s135 = ssub.s32 %s18, %s39
      %s136 = sor.u32 %s134, %s135
      %s137 = ssub.s32 %s19, %s35
      %s138 = sor.u32 %s136, %s137
      %p139 = scmp.eq.s32.totalorder %s138, 0
      %s141 = sadd.s32 %s140, 1
      %s142 = scalar_select %p139, %s140, %s141
      %p145 = pneg %p139
      %p146 = scmp.eq.s32.totalorder %s10, 15
      %p147 = por %p145, %p146
      %p148 = scmp.ne.s32.totalorder %s140, %s143
      %p149 = scmp.eq.s32.totalorder %s10, 0
      %p150 = por %p148, %p149
      %p151 = scmp.ne.s32.totalorder %s140, %s143
      %p152 = scmp.eq.s32.totalorder %s15, 15
      %p153 = por %p151, %p152
      %p154 = scmp.ne.s32.totalorder %s143, %s144
      %p155 = scmp.eq.s32.totalorder %s15, 0
      %p156 = por %p154, %p155
      %p157 = scmp.ne.s32.totalorder %s143, %s144
      %p158 = scmp.eq.s32.totalorder %s16, 15
      %p159 = por %p157, %p158
      %p161 = scmp.ne.s32.totalorder %s144, %s160
      %p162 = scmp.eq.s32.totalorder %s16, 0
      %p163 = por %p161, %p162
      %p164 = scmp.le.s32.totalorder 1, %s10
      %p165 = scmp.lt.s32.totalorder %s10, 17
      %p166 = pnand %p164, %p165
      %p167 = pneg %p166
      // Predicated region
      $region9: #{generator_forward.11} parent=5 // pred_check
        _
      $region10: #{generator_forward.11} parent=5 // pred_check_branch
        %169 = sbr.rel (%p166) target = $region12
      $region11: #{generator_forward.11} parent=5 // pred_region
        %s170 = ssub.s32 %s10, 1
      $region12: #{generator_forward.11} parent=5 // pred_fallthru
        _
      %p171 = scmp.lt.s32.totalorder %s10, 16
      // Predicated region
      $region13: #{generator_forward.11} parent=5 // pred_check
        %p172 = pneg %p171
      $region14: #{generator_forward.11} parent=5 // pred_check_branch
        %174 = sbr.rel (%p172) target = $region16
      $region15: #{generator_forward.11} parent=5 // pred_region
        // Predicated region
        $region17: #{generator_forward.11} parent=15 // pred_check
          %p175 = pneg %p60
        $region18: #{generator_forward.11} parent=15 // pred_check_branch
          %177 = sbr.rel (%p175) target = $region20
        $region19: #{generator_forward.11} parent=15 // pred_region
          %s178 = sand.u32 %s50, 1
          %s179 = sand.u32 %s50, 1
          %s180 = smul.addr %s179, 64
          %s181 = scalar_lea.vmem [#allocation3], %s180
          %s182 = smul.u32 4, %s18
          %s183 = smul.u32 4, %s20
          %s184 = smul.addr %s182, 16
          %s185 = sadd.s32 %s183, %s184
          %s186 = smul.addr %s17, 64
          %s187 = sadd.s32 %s185, %s186
          %s188 = smul.addr %s187, 4
          %s189 = scalar_lea.vmem %s0, %s188
          // Predicated region
          $region21: #{generator_forward.11} parent=19 // pred_check
            _
          $region22: #{generator_forward.11} parent=19 // pred_check_branch
            %191 = sbr.rel (0) target = $region24
          $region23: #{generator_forward.11} parent=19 // pred_region
            // Predicated region
            $region25: #{generator_forward.11} parent=23 // pred_check
              _
            $region26: #{generator_forward.11} parent=23 // pred_check_branch
              %193 = sbr.rel (0) target = $region28
            $region27: #{generator_forward.11} parent=23 // pred_region
              loop: start=0, step=1, limit=1
              $region29: #{generator_forward.11} parent=27 // loop_pre_header
                _
              $region30: #{generator_forward.11} parent=27 // loop_header
                %s195 = sphi 0, %s199
                %p196 = scmp.ge.s32.totalorder %s195, 1
                %s200 = sphi %s189, %s189
                %s201 = sphi %s181, %s181
              $region31: #{generator_forward.11} parent=27 // loop_header_branch
                %198 = sbr.rel (%p196) target = $region35
              $region32: #{generator_forward.11} parent=27 // loop_body
                %v202 = vld [vmem:[%s200] sm:$0xff]
                %203 = vst [vmem:[%s201] sm:$0xff] %v202
                %v204 = vld [vmem:[%s200 + $0x8] sm:$0xff]
                %205 = vst [vmem:[%s201 + $0x8] sm:$0xff] %v204
                %v206 = vld [vmem:[%s200 + $0x40] sm:$0xff]
                %207 = vst [vmem:[%s201 + $0x10] sm:$0xff] %v206
                %v208 = vld [vmem:[%s200 + $0x48] sm:$0xff]
                %209 = vst [vmem:[%s201 + $0x18] sm:$0xff] %v208
                %v210 = vld [vmem:[%s200 + $0x80] sm:$0xff]
                %211 = vst [vmem:[%s201 + $0x20] sm:$0xff] %v210
                %v212 = vld [vmem:[%s200 + $0x88] sm:$0xff]
                %213 = vst [vmem:[%s201 + $0x28] sm:$0xff] %v212
                %v214 = vld [vmem:[%s200 + $0xc0] sm:$0xff]
                %215 = vst [vmem:[%s201 + $0x30] sm:$0xff] %v214
                %v216 = vld [vmem:[%s200 + $0xc8] sm:$0xff]
                %217 = vst [vmem:[%s201 + $0x38] sm:$0xff] %v216
              $region33: #{generator_forward.11} parent=27 // loop_footer
                %s199 = sadd.s32 1, %s195
              $region34: #{generator_forward.11} parent=27 // loop_footer_branch
                %194 = sbr.rel target = $region30
              $region35: #{generator_forward.11} parent=27 // loop_exit
                _
            $region28: #{generator_forward.11} parent=23 // pred_fallthru
              _
            // Predicated region
            $region36: #{generator_forward.11} parent=23 // pred_check
              _
            $region37: #{generator_forward.11} parent=23 // pred_check_branch
              %219 = sbr.rel target = $region39
            $region38: #{generator_forward.11} parent=23 // pred_region
              _
            $region39: #{generator_forward.11} parent=23 // pred_fallthru
              _
          $region24: #{generator_forward.11} parent=19 // pred_fallthru
            _
          %220 = vnop
        $region20: #{generator_forward.11} parent=15 // pred_fallthru
          _
        // Predicated region
        $region40: #{generator_forward.11} parent=15 // pred_check
          %p221 = pneg %p90
        $region41: #{generator_forward.11} parent=15 // pred_check_branch
          %223 = sbr.rel (%p221) target = $region43
        $region42: #{generator_forward.11} parent=15 // pred_region
          %s224 = smul.u32 64, %s20
          %s225 = smul.u32 2, %s19
          %p226 = scmp.lt.s32.totalorder %s17, 3
          %s227 = scalar_select %p226, %s17, 3
          %p228 = scmp.lt.s32.totalorder %s224, 255
          %s229 = scalar_select %p228, %s224, 255
          %p230 = scmp.lt.s32.totalorder %s225, 1
          %s231 = scalar_select %p230, %s225, 1
          %s232 = smul.addr %s229, 2
          %s233 = sadd.s32 %s231, %s232
          %s234 = smul.addr %s227, 512
          %s235 = sadd.s32 %s233, %s234
          %s236 = smul.addr %s235, 4
          %s237 = scalar_lea.vmem %s1, %s236
          %s238 = smul.u32 64, %s20
          %s239 = smul.u32 2, %s19
        $region43: #{generator_forward.11} parent=15 // pred_fallthru
          _
      $region16: #{generator_forward.11} parent=5 // pred_fallthru
        _
      %p240 = scmp.le.s32.totalorder 1, %s10
      %p241 = scmp.lt.s32.totalorder %s10, 17
      %p242 = pnand %p240, %p241
      %p243 = pneg %p242
      // Predicated region
      $region44: #{generator_forward.11} parent=5 // pred_check
        _
      $region45: #{generator_forward.11} parent=5 // pred_check_branch
        %245 = sbr.rel (%p242) target = $region47
      $region46: #{generator_forward.11} parent=5 // pred_region
        %s246 = ssub.s32 %s10, 1
        %s247 = sand.u32 %s53, 1
        %s248 = sand.u32 %s53, 1
        %s249 = smul.addr %s248, 64
        %s250 = scalar_lea.vmem [#allocation3], %s249
        // Predicated region
        $region48: #{generator_forward.11} parent=46 // pred_check
          %p251 = pneg %p66
        $region49: #{generator_forward.11} parent=46 // pred_check_branch
          %253 = sbr.rel (%p251) target = $region51
        $region50: #{generator_forward.11} parent=46 // pred_region
          _
        $region51: #{generator_forward.11} parent=46 // pred_fallthru
          _
        %s254 = sand.u32 %s53, 1
        %s255 = sand.u32 %s53, 1
        %s256 = smul.addr %s255, 64
        %s257 = scalar_lea.vmem [#allocation3], %s256
        %p258 = pneg %p66
        %p259 = pneg %p63
        %s260 = smul.u32 64, %s24
        %s261 = smul.u32 2, %s23
        %p262 = scmp.lt.s32.totalorder %s21, 3
        %s263 = scalar_select %p262, %s21, 3
        %p264 = scmp.lt.s32.totalorder %s260, 255
        %s265 = scalar_select %p264, %s260, 255
        %p266 = scmp.lt.s32.totalorder %s261, 1
        %s267 = scalar_select %p266, %s261, 1
        %s268 = smul.addr %s265, 2
        %s269 = sadd.s32 %s267, %s268
        %s270 = smul.addr %s263, 512
        %s271 = sadd.s32 %s269, %s270
        %s272 = smul.addr %s271, 4
        %s273 = scalar_lea.vmem %s1, %s272
        %p274 = pneg %p96
        %p275 = pneg %p93
        %p276 = pneg %p126
        %p277 = pneg %p123
        %s278 = smul.u32 4, %s22
        %s279 = smul.u32 2, %s23
        %p280 = scmp.lt.s32.totalorder %s21, 3
        %s281 = scalar_select %p280, %s21, 3
        %p282 = scmp.lt.s32.totalorder %s278, 3
        %s283 = scalar_select %p282, %s278, 3
        %p284 = scmp.lt.s32.totalorder %s279, 1
        %s285 = scalar_select %p284, %s279, 1
        %s286 = smul.addr %s283, 2
        %s287 = sadd.s32 %s285, %s286
        %s288 = smul.addr %s281, 8
        %s289 = sadd.s32 %s287, %s288
        %s290 = smul.addr %s289, 8
        %s291 = scalar_lea.vmem %s2, %s290
        %p292 = pneg %p156
        %p293 = pneg %p153
        %s294 = smul.u32 2, %s23
        %p295 = scmp.lt.s32.totalorder %s21, 3
        %s296 = scalar_select %p295, %s21, 3
        %p297 = scmp.lt.s32.totalorder %s22, 0
        %s298 = scalar_select %p297, %s22, 0
        %p299 = scmp.lt.s32.totalorder %s294, 1
        %s300 = scalar_select %p299, %s294, 1
        %s301 = smul.addr %s298, 2
        %s302 = sadd.s32 %s300, %s301
        %s303 = smul.addr %s296, 2
        %s304 = sadd.s32 %s302, %s303
        %s305 = smul.addr %s304, 8
        %s306 = scalar_lea.vmem %s3, %s305
        %s307 = smul.u32 4, %s22
        %s308 = smul.u32 4, %s24
        %s309 = smul.u32 64, %s24
        %s310 = smul.u32 2, %s23
        %p311 = scmp.lt.s32.totalorder %s21, 3
        %s312 = scalar_select %p311, %s21, 3
        %p313 = scmp.lt.s32.totalorder %s309, 255
        %s314 = scalar_select %p313, %s309, 255
        %p315 = scmp.lt.s32.totalorder %s310, 1
        %s316 = scalar_select %p315, %s310, 1
        %s317 = smul.addr %s314, 2
        %s318 = sadd.s32 %s316, %s317
        %s319 = smul.addr %s312, 512
        %s320 = sadd.s32 %s318, %s319
        %s321 = smul.addr %s320, 4
        %s322 = scalar_lea.vmem %s1, %s321
        %s323 = smul.u32 64, %s24
        %s324 = smul.u32 2, %s23
        %s325 = smul.u32 4, %s22
        %s326 = smul.u32 2, %s23
        %p327 = scmp.lt.s32.totalorder %s21, 3
        %s328 = scalar_select %p327, %s21, 3
        %p329 = scmp.lt.s32.totalorder %s325, 3
        %s330 = scalar_select %p329, %s325, 3
        %p331 = scmp.lt.s32.totalorder %s326, 1
        %s332 = scalar_select %p331, %s326, 1
        %s333 = smul.addr %s330, 2
        %s334 = sadd.s32 %s332, %s333
        %s335 = smul.addr %s328, 8
        %s336 = sadd.s32 %s334, %s335
        %s337 = smul.addr %s336, 8
        %s338 = scalar_lea.vmem %s2, %s337
        %s339 = smul.u32 4, %s22
        %s340 = smul.u32 2, %s23
        %s341 = smul.u32 2, %s23
        %p342 = scmp.lt.s32.totalorder %s21, 3
        %s343 = scalar_select %p342, %s21, 3
        %p344 = scmp.lt.s32.totalorder %s22, 0
        %s345 = scalar_select %p344, %s22, 0
        %p346 = scmp.lt.s32.totalorder %s341, 1
        %s347 = scalar_select %p346, %s341, 1
        %s348 = smul.addr %s345, 2
        %s349 = sadd.s32 %s347, %s348
        %s350 = smul.addr %s343, 2
        %s351 = sadd.s32 %s349, %s350
        %s352 = smul.addr %s351, 8
        %s353 = scalar_lea.vmem %s3, %s352
        %s354 = smul.u32 2, %s23
        %p355 = scmp.eq.s32.totalorder %s24, 0
        // Predicated region
        $region52: #{generator_forward.11} parent=46 // pred_check
          %p356 = pneg %p355
        $region53: #{generator_forward.11} parent=46 // pred_check_branch
          %358 = sbr.rel (%p356) target = $region55
        $region54: #{generator_forward.11} parent=46 // pred_region
          %359 = vst [vmem:[#allocation2] sm:$0xff] 0.0
          %360 = vst [vmem:[#allocation2 + $0x8] sm:$0xff] 0.0
          %361 = vst [vmem:[#allocation2 + $0x10] sm:$0xff] 0.0
          %362 = vst [vmem:[#allocation2 + $0x18] sm:$0xff] 0.0
          %363 = vst [vmem:[#allocation2 + $0x20] sm:$0xff] 0.0
          %364 = vst [vmem:[#allocation2 + $0x28] sm:$0xff] 0.0
          %365 = vst [vmem:[#allocation2 + $0x30] sm:$0xff] 0.0
          %366 = vst [vmem:[#allocation2 + $0x38] sm:$0xff] 0.0
        $region55: #{generator_forward.11} parent=46 // pred_fallthru
          _
        %v367 = vld [vmem:[#allocation2] sm:$0xff]
        %v368 = vld [vmem:[#allocation2 + $0x8] sm:$0xff]
        %v369 = vld [vmem:[#allocation2 + $0x10] sm:$0xff]
        %v370 = vld [vmem:[#allocation2 + $0x18] sm:$0xff]
        %v371 = vld [vmem:[#allocation2 + $0x20] sm:$0xff]
        %v372 = vld [vmem:[#allocation2 + $0x28] sm:$0xff]
        %v373 = vld [vmem:[#allocation2 + $0x30] sm:$0xff]
        %v374 = vld [vmem:[#allocation2 + $0x38] sm:$0xff]
        %v375 = vld [vmem:[%s250] sm:$0xff]
        %v376 = vld [vmem:[%s250 + $0x8] sm:$0xff]
        %v377 = vld [vmem:[%s250 + $0x10] sm:$0xff]
        %v378 = vld [vmem:[%s250 + $0x18] sm:$0xff]
        %v379 = vld [vmem:[%s250 + $0x20] sm:$0xff]
        %v380 = vld [vmem:[%s250 + $0x28] sm:$0xff]
        %v381 = vld [vmem:[%s250 + $0x30] sm:$0xff]
        %v382 = vld [vmem:[%s250 + $0x38] sm:$0xff]
        %v383 = vld [vmem:[%s322] sm:$0xff]
        %v384 = vld [vmem:[%s322 + $0x8] sm:$0xff]
        %v385 = vld [vmem:[%s322 + $0x10] sm:$0xff]
        %v386 = vld [vmem:[%s322 + $0x18] sm:$0xff]
        %v387 = vld [vmem:[%s322 + $0x20] sm:$0xff]
        %v388 = vld [vmem:[%s322 + $0x28] sm:$0xff]
        %v389 = vld [vmem:[%s322 + $0x30] sm:$0xff]
        %v390 = vld [vmem:[%s322 + $0x38] sm:$0xff]
        %v391 = vld [vmem:[%s322 + $0x40] sm:$0xff]
        %v392 = vld [vmem:[%s322 + $0x48] sm:$0xff]
        %v393 = vld [vmem:[%s322 + $0x50] sm:$0xff]
        %v394 = vld [vmem:[%s322 + $0x58] sm:$0xff]
        %v395 = vld [vmem:[%s322 + $0x60] sm:$0xff]
        %v396 = vld [vmem:[%s322 + $0x68] sm:$0xff]
        %v397 = vld [vmem:[%s322 + $0x70] sm:$0xff]
        %v398 = vld [vmem:[%s322 + $0x78] sm:$0xff]
        %v399 = vld [vmem:[%s322 + $0x80] sm:$0xff]
        %v400 = vld [vmem:[%s322 + $0x88] sm:$0xff]
        %v401 = vld [vmem:[%s322 + $0x90] sm:$0xff]
        %v402 = vld [vmem:[%s322 + $0x98] sm:$0xff]
        %v403 = vld [vmem:[%s322 + $0xa0] sm:$0xff]
        %v404 = vld [vmem:[%s322 + $0xa8] sm:$0xff]
        %v405 = vld [vmem:[%s322 + $0xb0] sm:$0xff]
        %v406 = vld [vmem:[%s322 + $0xb8] sm:$0xff]
        %v407 = vld [vmem:[%s322 + $0xc0] sm:$0xff]
        %v408 = vld [vmem:[%s322 + $0xc8] sm:$0xff]
        %v409 = vld [vmem:[%s322 + $0xd0] sm:$0xff]
        %v410 = vld [vmem:[%s322 + $0xd8] sm:$0xff]
        %v411 = vld [vmem:[%s322 + $0xe0] sm:$0xff]
        %v412 = vld [vmem:[%s322 + $0xe8] sm:$0xff]
        %v413 = vld [vmem:[%s322 + $0xf0] sm:$0xff]
        %v414 = vld [vmem:[%s322 + $0xf8] sm:$0xff]
        %v415 = vld [vmem:[%s322 + $0x100] sm:$0xff]
        %v416 = vld [vmem:[%s322 + $0x108] sm:$0xff]
        %v417 = vld [vmem:[%s322 + $0x110] sm:$0xff]
        %v418 = vld [vmem:[%s322 + $0x118] sm:$0xff]
        %v419 = vld [vmem:[%s322 + $0x120] sm:$0xff]
        %v420 = vld [vmem:[%s322 + $0x128] sm:$0xff]
        %v421 = vld [vmem:[%s322 + $0x130] sm:$0xff]
        %v422 = vld [vmem:[%s322 + $0x138] sm:$0xff]
        %v423 = vld [vmem:[%s322 + $0x140] sm:$0xff]
        %v424 = vld [vmem:[%s322 + $0x148] sm:$0xff]
        %v425 = vld [vmem:[%s322 + $0x150] sm:$0xff]
        %v426 = vld [vmem:[%s322 + $0x158] sm:$0xff]
        %v427 = vld [vmem:[%s322 + $0x160] sm:$0xff]
        %v428 = vld [vmem:[%s322 + $0x168] sm:$0xff]
        %v429 = vld [vmem:[%s322 + $0x170] sm:$0xff]
        %v430 = vld [vmem:[%s322 + $0x178] sm:$0xff]
        %v431 = vld [vmem:[%s322 + $0x180] sm:$0xff]
        %v432 = vld [vmem:[%s322 + $0x188] sm:$0xff]
        %v433 = vld [vmem:[%s322 + $0x190] sm:$0xff]
        %v434 = vld [vmem:[%s322 + $0x198] sm:$0xff]
        %v435 = vld [vmem:[%s322 + $0x1a0] sm:$0xff]
        %v436 = vld [vmem:[%s322 + $0x1a8] sm:$0xff]
        %v437 = vld [vmem:[%s322 + $0x1b0] sm:$0xff]
        %v438 = vld [vmem:[%s322 + $0x1b8] sm:$0xff]
        %v439 = vld [vmem:[%s322 + $0x1c0] sm:$0xff]
        %v440 = vld [vmem:[%s322 + $0x1c8] sm:$0xff]
        %v441 = vld [vmem:[%s322 + $0x1d0] sm:$0xff]
        %v442 = vld [vmem:[%s322 + $0x1d8] sm:$0xff]
        %v443 = vld [vmem:[%s322 + $0x1e0] sm:$0xff]
        %v444 = vld [vmem:[%s322 + $0x1e8] sm:$0xff]
        %v445 = vld [vmem:[%s322 + $0x1f0] sm:$0xff]
        %v446 = vld [vmem:[%s322 + $0x1f8] sm:$0xff]
        %v455 = vunpack.c.l.b16 %v375
        %v456 = vunpack.c.h.b16 %v375
        %v457 = vunpack.c.l.b16 %v376
        %v458 = vunpack.c.h.b16 %v376
        %v459 = vunpack.c.l.b16 %v377
        %v460 = vunpack.c.h.b16 %v377
        %v461 = vunpack.c.l.b16 %v378
        %v462 = vunpack.c.h.b16 %v378
        %v463 = vunpack.c.l.b16 %v379
        %v464 = vunpack.c.h.b16 %v379
        %v465 = vunpack.c.l.b16 %v380
        %v466 = vunpack.c.h.b16 %v380
        %v467 = vunpack.c.l.b16 %v381
        %v468 = vunpack.c.h.b16 %v381
        %v469 = vunpack.c.l.b16 %v382
        %v470 = vunpack.c.h.b16 %v382
        %v471 = vpack.c.b16 %v459, %v455
        %v472 = vpack.c.b16 %v460, %v456
        %v473 = vpack.c.b16 %v461, %v457
        %v474 = vpack.c.b16 %v462, %v458
        %v475 = vpack.c.b16 %v467, %v463
        %v476 = vpack.c.b16 %v468, %v464
        %v477 = vpack.c.b16 %v469, %v465
        %v478 = vpack.c.b16 %v470, %v466
        %v551 = vunpack.c.l.b16 %v383
        %v552 = vunpack.c.h.b16 %v383
        %v553 = vunpack.c.l.b16 %v384
        %v554 = vunpack.c.h.b16 %v384
        %v555 = vunpack.c.l.b16 %v385
        %v556 = vunpack.c.h.b16 %v385
        %v557 = vunpack.c.l.b16 %v386
        %v558 = vunpack.c.h.b16 %v386
        %v559 = vunpack.c.l.b16 %v387
        %v560 = vunpack.c.h.b16 %v387
        %v561 = vunpack.c.l.b16 %v388
        %v562 = vunpack.c.h.b16 %v388
        %v563 = vunpack.c.l.b16 %v389
        %v564 = vunpack.c.h.b16 %v389
        %v565 = vunpack.c.l.b16 %v390
        %v566 = vunpack.c.h.b16 %v390
        %v567 = vunpack.c.l.b16 %v391
        %v568 = vunpack.c.h.b16 %v391
        %v569 = vunpack.c.l.b16 %v392
        %v570 = vunpack.c.h.b16 %v392
        %v571 = vunpack.c.l.b16 %v393
        %v572 = vunpack.c.h.b16 %v393
        %v573 = vunpack.c.l.b16 %v394
        %v574 = vunpack.c.h.b16 %v394
        %v575 = vunpack.c.l.b16 %v395
        %v576 = vunpack.c.h.b16 %v395
        %v577 = vunpack.c.l.b16 %v396
        %v578 = vunpack.c.h.b16 %v396
        %v579 = vunpack.c.l.b16 %v397
        %v580 = vunpack.c.h.b16 %v397
        %v581 = vunpack.c.l.b16 %v398
        %v582 = vunpack.c.h.b16 %v398
        %v583 = vunpack.c.l.b16 %v399
        %v584 = vunpack.c.h.b16 %v399
        %v585 = vunpack.c.l.b16 %v400
        %v586 = vunpack.c.h.b16 %v400
        %v587 = vunpack.c.l.b16 %v401
        %v588 = vunpack.c.h.b16 %v401
        %v589 = vunpack.c.l.b16 %v402
        %v590 = vunpack.c.h.b16 %v402
        %v591 = vunpack.c.l.b16 %v403
        %v592 = vunpack.c.h.b16 %v403
        %v593 = vunpack.c.l.b16 %v404
        %v594 = vunpack.c.h.b16 %v404
        %v595 = vunpack.c.l.b16 %v405
        %v596 = vunpack.c.h.b16 %v405
        %v597 = vunpack.c.l.b16 %v406
        %v598 = vunpack.c.h.b16 %v406
        %v599 = vunpack.c.l.b16 %v407
        %v600 = vunpack.c.h.b16 %v407
        %v601 = vunpack.c.l.b16 %v408
        %v602 = vunpack.c.h.b16 %v408
        %v603 = vunpack.c.l.b16 %v409
        %v604 = vunpack.c.h.b16 %v409
        %v605 = vunpack.c.l.b16 %v410
        %v606 = vunpack.c.h.b16 %v410
        %v607 = vunpack.c.l.b16 %v411
        %v608 = vunpack.c.h.b16 %v411
        %v609 = vunpack.c.l.b16 %v412
        %v610 = vunpack.c.h.b16 %v412
        %v611 = vunpack.c.l.b16 %v413
        %v612 = vunpack.c.h.b16 %v413
        %v613 = vunpack.c.l.b16 %v414
        %v614 = vunpack.c.h.b16 %v414
        %v615 = vunpack.c.l.b16 %v415
        %v616 = vunpack.c.h.b16 %v415
        %v617 = vunpack.c.l.b16 %v416
        %v618 = vunpack.c.h.b16 %v416
        %v619 = vunpack.c.l.b16 %v417
        %v620 = vunpack.c.h.b16 %v417
        %v621 = vunpack.c.l.b16 %v418
        %v622 = vunpack.c.h.b16 %v418
        %v623 = vunpack.c.l.b16 %v419
        %v624 = vunpack.c.h.b16 %v419
        %v625 = vunpack.c.l.b16 %v420
        %v626 = vunpack.c.h.b16 %v420
        %v627 = vunpack.c.l.b16 %v421
        %v628 = vunpack.c.h.b16 %v421
        %v629 = vunpack.c.l.b16 %v422
        %v630 = vunpack.c.h.b16 %v422
        %v631 = vunpack.c.l.b16 %v423
        %v632 = vunpack.c.h.b16 %v423
        %v633 = vunpack.c.l.b16 %v424
        %v634 = vunpack.c.h.b16 %v424
        %v635 = vunpack.c.l.b16 %v425
        %v636 = vunpack.c.h.b16 %v425
        %v637 = vunpack.c.l.b16 %v426
        %v638 = vunpack.c.h.b16 %v426
        %v639 = vunpack.c.l.b16 %v427
        %v640 = vunpack.c.h.b16 %v427
        %v641 = vunpack.c.l.b16 %v428
        %v642 = vunpack.c.h.b16 %v428
        %v643 = vunpack.c.l.b16 %v429
        %v644 = vunpack.c.h.b16 %v429
        %v645 = vunpack.c.l.b16 %v430
        %v646 = vunpack.c.h.b16 %v430
        %v647 = vunpack.c.l.b16 %v431
        %v648 = vunpack.c.h.b16 %v431
        %v649 = vunpack.c.l.b16 %v432
        %v650 = vunpack.c.h.b16 %v432
        %v651 = vunpack.c.l.b16 %v433
        %v652 = vunpack.c.h.b16 %v433
        %v653 = vunpack.c.l.b16 %v434
        %v654 = vunpack.c.h.b16 %v434
        %v655 = vunpack.c.l.b16 %v435
        %v656 = vunpack.c.h.b16 %v435
        %v657 = vunpack.c.l.b16 %v436
        %v658 = vunpack.c.h.b16 %v436
        %v659 = vunpack.c.l.b16 %v437
        %v660 = vunpack.c.h.b16 %v437
        %v661 = vunpack.c.l.b16 %v438
        %v662 = vunpack.c.h.b16 %v438
        %v663 = vunpack.c.l.b16 %v439
        %v664 = vunpack.c.h.b16 %v439
        %v665 = vunpack.c.l.b16 %v440
        %v666 = vunpack.c.h.b16 %v440
        %v667 = vunpack.c.l.b16 %v441
        %v668 = vunpack.c.h.b16 %v441
        %v669 = vunpack.c.l.b16 %v442
        %v670 = vunpack.c.h.b16 %v442
        %v671 = vunpack.c.l.b16 %v443
        %v672 = vunpack.c.h.b16 %v443
        %v673 = vunpack.c.l.b16 %v444
        %v674 = vunpack.c.h.b16 %v444
        %v675 = vunpack.c.l.b16 %v445
        %v676 = vunpack.c.h.b16 %v445
        %v677 = vunpack.c.l.b16 %v446
        %v678 = vunpack.c.h.b16 %v446
        %v679 = vpack.c.b16 %v553, %v551
        %v680 = vpack.c.b16 %v554, %v552
        %v681 = vpack.c.b16 %v557, %v555
        %v682 = vpack.c.b16 %v558, %v556
        %v683 = vpack.c.b16 %v561, %v559
        %v684 = vpack.c.b16 %v562, %v560
        %v685 = vpack.c.b16 %v565, %v563
        %v686 = vpack.c.b16 %v566, %v564
        %v687 = vpack.c.b16 %v569, %v567
        %v688 = vpack.c.b16 %v570, %v568
        %v689 = vpack.c.b16 %v573, %v571
        %v690 = vpack.c.b16 %v574, %v572
        %v691 = vpack.c.b16 %v577, %v575
        %v692 = vpack.c.b16 %v578, %v576
        %v693 = vpack.c.b16 %v581, %v579
        %v694 = vpack.c.b16 %v582, %v580
        %v695 = vpack.c.b16 %v585, %v583
        %v696 = vpack.c.b16 %v586, %v584
        %v697 = vpack.c.b16 %v589, %v587
        %v698 = vpack.c.b16 %v590, %v588
        %v699 = vpack.c.b16 %v593, %v591
        %v700 = vpack.c.b16 %v594, %v592
        %v701 = vpack.c.b16 %v597, %v595
        %v702 = vpack.c.b16 %v598, %v596
        %v703 = vpack.c.b16 %v601, %v599
        %v704 = vpack.c.b16 %v602, %v600
        %v705 = vpack.c.b16 %v605, %v603
        %v706 = vpack.c.b16 %v606, %v604
        %v707 = vpack.c.b16 %v609, %v607
        %v708 = vpack.c.b16 %v610, %v608
        %v709 = vpack.c.b16 %v613, %v611
        %v710 = vpack.c.b16 %v614, %v612
        %v711 = vpack.c.b16 %v617, %v615
        %v712 = vpack.c.b16 %v618, %v616
        %v713 = vpack.c.b16 %v621, %v619
        %v714 = vpack.c.b16 %v622, %v620
        %v715 = vpack.c.b16 %v625, %v623
        %v716 = vpack.c.b16 %v626, %v624
        %v717 = vpack.c.b16 %v629, %v627
        %v718 = vpack.c.b16 %v630, %v628
        %v719 = vpack.c.b16 %v633, %v631
        %v720 = vpack.c.b16 %v634, %v632
        %v721 = vpack.c.b16 %v637, %v635
        %v722 = vpack.c.b16 %v638, %v636
        %v723 = vpack.c.b16 %v641, %v639
        %v724 = vpack.c.b16 %v642, %v640
        %v725 = vpack.c.b16 %v645, %v643
        %v726 = vpack.c.b16 %v646, %v644
        %v727 = vpack.c.b16 %v649, %v647
        %v728 = vpack.c.b16 %v650, %v648
        %v729 = vpack.c.b16 %v653, %v651
        %v730 = vpack.c.b16 %v654, %v652
        %v731 = vpack.c.b16 %v657, %v655
        %v732 = vpack.c.b16 %v658, %v656
        %v733 = vpack.c.b16 %v661, %v659
        %v734 = vpack.c.b16 %v662, %v660
        %v735 = vpack.c.b16 %v665, %v663
        %v736 = vpack.c.b16 %v666, %v664
        %v737 = vpack.c.b16 %v669, %v667
        %v738 = vpack.c.b16 %v670, %v668
        %v739 = vpack.c.b16 %v673, %v671
        %v740 = vpack.c.b16 %v674, %v672
        %v741 = vpack.c.b16 %v677, %v675
        %v742 = vpack.c.b16 %v678, %v676
        %807 = vmatprep.subr.bf16.mxu0 %v680
        %808 = vmatpush1.bf16.msra.mxu0 %v679
        %809 = vmatprep.subr.bf16.mxu0 %v682
        %810 = vmatpush1.bf16.msra.mxu0 %v681
        %811 = vmatprep.subr.bf16.mxu0 %v684
        %812 = vmatpush1.bf16.msra.mxu0 %v683
        %813 = vmatprep.subr.bf16.mxu0 %v686
        %814 = vmatpush1.bf16.msra.mxu0 %v685
        %815 = vmatprep.subr.bf16.mxu0 %v688
        %816 = vmatpush1.bf16.msra.mxu0 %v687
        %817 = vmatprep.subr.bf16.mxu0 %v690
        %818 = vmatpush1.bf16.msra.mxu0 %v689
        %819 = vmatprep.subr.bf16.mxu0 %v692
        %820 = vmatpush1.bf16.msra.mxu0 %v691
        %821 = vmatprep.subr.bf16.mxu0 %v694
        %822 = vmatpush1.bf16.msra.mxu0 %v693
        %823 = vmatprep.subr.bf16.mxu0 %v696
        %824 = vmatpush1.bf16.msra.mxu0 %v695
        %825 = vmatprep.subr.bf16.mxu0 %v698
        %826 = vmatpush1.bf16.msra.mxu0 %v697
        %827 = vmatprep.subr.bf16.mxu0 %v700
        %828 = vmatpush1.bf16.msra.mxu0 %v699
        %829 = vmatprep.subr.bf16.mxu0 %v702
        %830 = vmatpush1.bf16.msra.mxu0 %v701
        %831 = vmatprep.subr.bf16.mxu0 %v704
        %832 = vmatpush1.bf16.msra.mxu0 %v703
        %833 = vmatprep.subr.bf16.mxu0 %v706
        %834 = vmatpush1.bf16.msra.mxu0 %v705
        %835 = vmatprep.subr.bf16.mxu0 %v708
        %836 = vmatpush1.bf16.msra.mxu0 %v707
        %837 = vmatprep.subr.bf16.mxu0 %v710
        %838 = vmatpush1.bf16.msra.mxu0 %v709
        %839 = vmatprep.mubr.bf16.mxu0 %v472
        %840 = vmatmul.mubr.bf16.gmra.mrb[0].mxu0 %v471
        %v841 = vpop.f32.mrb[0].mxu0
        %v842 = vadd.f32 0.0, %v841
        %v843 = vpop.f32.mrb[0].mxu0
        %v844 = vadd.f32 0.0, %v843
        %v845 = vpop.f32.mrb[0].mxu0
        %v846 = vadd.f32 0.0, %v845
        %v847 = vpop.f32.mrb[0].mxu0
        %v848 = vadd.f32 0.0, %v847
        %849 = vmatprep.mubr.bf16.mxu0 %v476
        %850 = vmatmul.mubr.bf16.gmra.mrb[0].mxu0 %v475
        %v851 = vpop.f32.mrb[0].mxu0
        %v852 = vadd.f32 0.0, %v851
        %v853 = vpop.f32.mrb[0].mxu0
        %v854 = vadd.f32 0.0, %v853
        %v855 = vpop.f32.mrb[0].mxu0
        %v856 = vadd.f32 0.0, %v855
        %v857 = vpop.f32.mrb[0].mxu0
        %v858 = vadd.f32 0.0, %v857
        %859 = vdwg.mxu0
        %860 = vmatprep.subr.bf16.mxu0 %v712
        %861 = vmatpush1.bf16.msra.mxu0 %v711
        %862 = vmatprep.subr.bf16.mxu0 %v714
        %863 = vmatpush1.bf16.msra.mxu0 %v713
        %864 = vmatprep.subr.bf16.mxu0 %v716
        %865 = vmatpush1.bf16.msra.mxu0 %v715
        %866 = vmatprep.subr.bf16.mxu0 %v718
        %867 = vmatpush1.bf16.msra.mxu0 %v717
        %868 = vmatprep.subr.bf16.mxu0 %v720
        %869 = vmatpush1.bf16.msra.mxu0 %v719
        %870 = vmatprep.subr.bf16.mxu0 %v722
        %871 = vmatpush1.bf16.msra.mxu0 %v721
        %872 = vmatprep.subr.bf16.mxu0 %v724
        %873 = vmatpush1.bf16.msra.mxu0 %v723
        %874 = vmatprep.subr.bf16.mxu0 %v726
        %875 = vmatpush1.bf16.msra.mxu0 %v725
        %876 = vmatprep.subr.bf16.mxu0 %v728
        %877 = vmatpush1.bf16.msra.mxu0 %v727
        %878 = vmatprep.subr.bf16.mxu0 %v730
        %879 = vmatpush1.bf16.msra.mxu0 %v729
        %880 = vmatprep.subr.bf16.mxu0 %v732
        %881 = vmatpush1.bf16.msra.mxu0 %v731
        %882 = vmatprep.subr.bf16.mxu0 %v734
        %883 = vmatpush1.bf16.msra.mxu0 %v733
        %884 = vmatprep.subr.bf16.mxu0 %v736
        %885 = vmatpush1.bf16.msra.mxu0 %v735
        %886 = vmatprep.subr.bf16.mxu0 %v738
        %887 = vmatpush1.bf16.msra.mxu0 %v737
        %888 = vmatprep.subr.bf16.mxu0 %v740
        %889 = vmatpush1.bf16.msra.mxu0 %v739
        %890 = vmatprep.subr.bf16.mxu0 %v742
        %891 = vmatpush1.bf16.msra.mxu0 %v741
        %892 = vmatprep.mubr.bf16.mxu0 %v474
        %893 = vmatmul.mubr.bf16.gmra.mrb[0].mxu0 %v473
        %v894 = vpop.f32.mrb[0].mxu0
        %v895 = vadd.f32 %v842, %v894
        %v896 = vpop.f32.mrb[0].mxu0
        %v897 = vadd.f32 %v844, %v896
        %v898 = vpop.f32.mrb[0].mxu0
        %v899 = vadd.f32 %v846, %v898
        %v900 = vpop.f32.mrb[0].mxu0
        %v901 = vadd.f32 %v848, %v900
        %902 = vmatprep.mubr.bf16.mxu0 %v478
        %903 = vmatmul.mubr.bf16.gmra.mrb[0].mxu0 %v477
        %v904 = vpop.f32.mrb[0].mxu0
        %v905 = vadd.f32 %v852, %v904
        %v906 = vpop.f32.mrb[0].mxu0
        %v907 = vadd.f32 %v854, %v906
        %v908 = vpop.f32.mrb[0].mxu0
        %v909 = vadd.f32 %v856, %v908
        %v910 = vpop.f32.mrb[0].mxu0
        %v911 = vadd.f32 %v858, %v910
        %912 = vdwg.mxu0
        %v913 = vadd.f32 %v367, %v895
        %v914 = vadd.f32 %v368, %v897
        %v915 = vadd.f32 %v369, %v899
        %v916 = vadd.f32 %v370, %v901
        %v917 = vadd.f32 %v371, %v905
        %v918 = vadd.f32 %v372, %v907
        %v919 = vadd.f32 %v373, %v909
        %v920 = vadd.f32 %v374, %v911
        %921 = vst [vmem:[#allocation2] sm:$0xff] %v913
        %922 = vst [vmem:[#allocation2 + $0x8] sm:$0xff] %v914
        %923 = vst [vmem:[#allocation2 + $0x10] sm:$0xff] %v915
        %924 = vst [vmem:[#allocation2 + $0x18] sm:$0xff] %v916
        %925 = vst [vmem:[#allocation2 + $0x20] sm:$0xff] %v917
        %926 = vst [vmem:[#allocation2 + $0x28] sm:$0xff] %v918
        %927 = vst [vmem:[#allocation2 + $0x30] sm:$0xff] %v919
        %928 = vst [vmem:[#allocation2 + $0x38] sm:$0xff] %v920
        %p929 = scmp.eq.s32.totalorder %s24, 3
        // Predicated region
        $region56: #{generator_forward.11} parent=46 // pred_check
          %p930 = pneg %p929
        $region57: #{generator_forward.11} parent=46 // pred_check_branch
          %932 = sbr.rel (%p930) target = $region59
        $region58: #{generator_forward.11} parent=46 // pred_region
          %v933 = vld [vmem:[#allocation2] sm:$0xff]
          %v934 = vld [vmem:[#allocation2 + $0x8] sm:$0xff]
          %v935 = vld [vmem:[#allocation2 + $0x10] sm:$0xff]
          %v936 = vld [vmem:[#allocation2 + $0x18] sm:$0xff]
          %v937 = vld [vmem:[#allocation2 + $0x20] sm:$0xff]
          %v938 = vld [vmem:[#allocation2 + $0x28] sm:$0xff]
          %v939 = vld [vmem:[#allocation2 + $0x30] sm:$0xff]
          %v940 = vld [vmem:[#allocation2 + $0x38] sm:$0xff]
          %941 = vst [vmem:[%s338] sm:$0xff] %v933
          %942 = vst [vmem:[%s338 + $0x8] sm:$0xff] %v934
          %943 = vst [vmem:[%s338 + $0x10] sm:$0xff] %v935
          %944 = vst [vmem:[%s338 + $0x18] sm:$0xff] %v936
          %945 = vst [vmem:[%s338 + $0x20] sm:$0xff] %v937
          %946 = vst [vmem:[%s338 + $0x28] sm:$0xff] %v938
          %947 = vst [vmem:[%s338 + $0x30] sm:$0xff] %v939
          %948 = vst [vmem:[%s338 + $0x38] sm:$0xff] %v940
          %v949 = vadd.f32 %v933, %v935
          %v950 = vadd.f32 %v949, %v937
          %v951 = vadd.f32 %v950, %v939
          %v952 = vrot.slane %v951, 4
          %v953 = vadd.f32 %v951, %v952
          %v954 = vrot.slane %v953, 2
          %v955 = vadd.f32 %v953, %v954
          %v956 = vrot.slane %v955, 1
          %v957 = vadd.f32 %v955, %v956
          %v958 = vadd.f32 %v934, %v936
          %v959 = vadd.f32 %v958, %v938
          %v960 = vadd.f32 %v959, %v940
          %v961 = vrot.slane %v960, 4
          %v962 = vadd.f32 %v960, %v961
          %v963 = vrot.slane %v962, 2
          %v964 = vadd.f32 %v962, %v963
          %v965 = vrot.slane %v964, 1
          %v966 = vadd.f32 %v964, %v965
          %v967 = vmul.f32 %v933, %v933
          %v968 = vmul.f32 %v934, %v934
          %v969 = vmul.f32 %v935, %v935
          %v970 = vmul.f32 %v936, %v936
          %v971 = vmul.f32 %v937, %v937
          %v972 = vmul.f32 %v938, %v938
          %v973 = vmul.f32 %v939, %v939
          %v974 = vmul.f32 %v940, %v940
          %v975 = vadd.f32 %v967, %v969
          %v976 = vadd.f32 %v975, %v971
          %v977 = vadd.f32 %v976, %v973
          %v978 = vrot.slane %v977, 4
          %v979 = vadd.f32 %v977, %v978
          %v980 = vrot.slane %v979, 2
          %v981 = vadd.f32 %v979, %v980
          %v982 = vrot.slane %v981, 1
          %v983 = vadd.f32 %v981, %v982
          %v984 = vadd.f32 %v968, %v970
          %v985 = vadd.f32 %v984, %v972
          %v986 = vadd.f32 %v985, %v974
          %v987 = vrot.slane %v986, 4
          %v988 = vadd.f32 %v986, %v987
          %v989 = vrot.slane %v988, 2
          %v990 = vadd.f32 %v988, %v989
          %v991 = vrot.slane %v990, 1
          %v992 = vadd.f32 %v990, %v991
          %v993 = vlaneseq
          %v994 = vshrl.u32 %v993, 7
          %vm995 = vcmp.eq.s32.totalorder %v994, 0
          %vm996 = vcmp.eq.s32.totalorder %v994, 1
          %v997 = vsel %vm996, %v983, 0.0
          %v998 = vsel %vm996, %v992, 0.0
          %v999 = vsel %vm995, %v957, %v997
          %v1000 = vsel %vm995, %v966, %v998
          %1001 = vst [vmem:[%s353] sm:$0xff] %v999
          %1002 = vst [vmem:[%s353 + $0x8] sm:$0xff] %v1000
        $region59: #{generator_forward.11} parent=46 // pred_fallthru
          _
        %s1003 = smul.u32 4, %s22
        %s1004 = smul.u32 2, %s23
        %p1005 = scmp.lt.s32.totalorder %s21, 3
        %s1006 = scalar_select %p1005, %s21, 3
        %p1007 = scmp.lt.s32.totalorder %s1003, 3
        %s1008 = scalar_select %p1007, %s1003, 3
        %p1009 = scmp.lt.s32.totalorder %s1004, 1
        %s1010 = scalar_select %p1009, %s1004, 1
        %s1011 = smul.addr %s1008, 2
        %s1012 = sadd.s32 %s1010, %s1011
        %s1013 = smul.addr %s1006, 8
        %s1014 = sadd.s32 %s1012, %s1013
        %s1015 = smul.addr %s1014, 8
        %s1016 = scalar_lea.vmem %s2, %s1015
        %s1017 = smul.u32 2, %s23
        %p1018 = scmp.lt.s32.totalorder %s21, 3
        %s1019 = scalar_select %p1018, %s21, 3
        %p1020 = scmp.lt.s32.totalorder %s22, 0
        %s1021 = scalar_select %p1020, %s22, 0
        %p1022 = scmp.lt.s32.totalorder %s1017, 1
        %s1023 = scalar_select %p1022, %s1017, 1
        %s1024 = smul.addr %s1021, 2
        %s1025 = sadd.s32 %s1023, %s1024
        %s1026 = smul.addr %s1019, 2
        %s1027 = sadd.s32 %s1025, %s1026
        %s1028 = smul.addr %s1027, 8
        %s1029 = scalar_lea.vmem %s3, %s1028
        // Predicated region
        $region60: #{generator_forward.11} parent=46 // pred_check
          %p1030 = pneg %p123
        $region61: #{generator_forward.11} parent=46 // pred_check_branch
          %1032 = sbr.rel (%p1030) target = $region63
        $region62: #{generator_forward.11} parent=46 // pred_region
          %s1033 = smul.u32 4, %s22
          %s1034 = smul.u32 2, %s23
        $region63: #{generator_forward.11} parent=46 // pred_fallthru
          _
        // Predicated region
        $region64: #{generator_forward.11} parent=46 // pred_check
          %p1035 = pneg %p153
        $region65: #{generator_forward.11} parent=46 // pred_check_branch
          %1037 = sbr.rel (%p1035) target = $region67
        $region66: #{generator_forward.11} parent=46 // pred_region
          %s1038 = smul.u32 2, %s23
        $region67: #{generator_forward.11} parent=46 // pred_fallthru
          _
      $region47: #{generator_forward.11} parent=5 // pred_fallthru
        _
      %p1039 = scmp.le.s32.totalorder 2, %s10
      // Predicated region
      $region68: #{generator_forward.11} parent=5 // pred_check
        %p1040 = pneg %p1039
      $region69: #{generator_forward.11} parent=5 // pred_check_branch
        %1042 = sbr.rel (%p1040) target = $region71
      $region70: #{generator_forward.11} parent=5 // pred_region
        %s1043 = ssub.s32 %s10, 2
        // Predicated region
        $region72: #{generator_forward.11} parent=70 // pred_check
          %p1044 = pneg %p129
        $region73: #{generator_forward.11} parent=70 // pred_check_branch
          %1046 = sbr.rel (%p1044) target = $region75
        $region74: #{generator_forward.11} parent=70 // pred_region
          %s1047 = smul.u32 4, %s26
          %s1048 = smul.u32 2, %s27
          %p1049 = scmp.lt.s32.totalorder %s25, 3
          %s1050 = scalar_select %p1049, %s25, 3
          %p1051 = scmp.lt.s32.totalorder %s1047, 3
          %s1052 = scalar_select %p1051, %s1047, 3
          %p1053 = scmp.lt.s32.totalorder %s1048, 1
          %s1054 = scalar_select %p1053, %s1048, 1
          %s1055 = smul.addr %s1052, 2
          %s1056 = sadd.s32 %s1054, %s1055
          %s1057 = smul.addr %s1050, 8
          %s1058 = sadd.s32 %s1056, %s1057
          %s1059 = smul.addr %s1058, 8
          %s1060 = scalar_lea.vmem %s2, %s1059
        $region75: #{generator_forward.11} parent=70 // pred_fallthru
          _
        // Predicated region
        $region76: #{generator_forward.11} parent=70 // pred_check
          %p1061 = pneg %p159
        $region77: #{generator_forward.11} parent=70 // pred_check_branch
          %1063 = sbr.rel (%p1061) target = $region79
        $region78: #{generator_forward.11} parent=70 // pred_region
          %s1064 = smul.u32 2, %s27
          %p1065 = scmp.lt.s32.totalorder %s25, 3
          %s1066 = scalar_select %p1065, %s25, 3
          %p1067 = scmp.lt.s32.totalorder %s26, 0
          %s1068 = scalar_select %p1067, %s26, 0
          %p1069 = scmp.lt.s32.totalorder %s1064, 1
          %s1070 = scalar_select %p1069, %s1064, 1
          %s1071 = smul.addr %s1068, 2
          %s1072 = sadd.s32 %s1070, %s1071
          %s1073 = smul.addr %s1066, 2
          %s1074 = sadd.s32 %s1072, %s1073
          %s1075 = smul.addr %s1074, 8
          %s1076 = scalar_lea.vmem %s3, %s1075
        $region79: #{generator_forward.11} parent=70 // pred_fallthru
          _
      $region71: #{generator_forward.11} parent=5 // pred_fallthru
        _
    $region6: #{generator_forward.11} parent=1 // loop_footer
      %s14 = sadd.s32 1, %s10
    $region7: #{generator_forward.11} parent=1 // loop_footer_branch
      %9 = sbr.rel target = $region3
    $region8: #{generator_forward.11} parent=1 // loop_exit
      _

// kernel: generator_forward.13
$region0: #{generator_forward.13}
  #allocation0 [shape = 'u32[]', space=smem, size = 0x4, offset = 0x4, fixed_abs, tag = 'smem constant byte address 0x4 - core index']
  #allocation1 [shape = 'u32[144,128]{1,0:T(1,128)}', space=vmem, size = 0x12000, scoped, tag = 'internal scratch']
  #allocation2 [shape = 'f32[128,128]{1,0:T(8,128)}', space=vmem, size = 0x10000, scoped, tag = 'scratch operand']
  %s0 = inlined_call_operand.vmem [shape: bf16[4,128,1024], index: 0, kind: input, shape index: {}]
  %s1 = inlined_call_operand.vmem [shape: bf16[4,1024,128], index: 1, kind: input, shape index: {}]
  %s2 = inlined_call_operand.vmem [shape: f32[4,128,128], index: 2, kind: output, shape index: {0}]
  %s3 = inlined_call_operand.vmem [shape: f32[4,8,128], index: 3, kind: output, shape index: {1}]
  %4 = xla_tuple %s2, %s3
  %s5 = sld [smem:[#allocation0]]
  $region80: #{generator_forward.13} parent=0
    _
  %s7 = ssub.s32 1, %s5
  %s8 = scalar_select 0, %s7, %s5
  $region1: #{generator_forward.13} parent=0
    #allocation3 [shape = 'u8[262144]{0}', space=vmem, size = 0x40000, scoped, tag = 'input window, operand 0']
    loop: start=0, step=1, limit=10
    $region2: #{generator_forward.13} parent=1 // loop_pre_header
      _
    $region3: #{generator_forward.13} parent=1 // loop_header
      %s10 = sphi 0, %s14
      %p11 = scmp.ge.s32.totalorder %s10, 10
      %s17 = sphi 0, %s43
      %s18 = sphi 0, %s39
      %s19 = sphi 0, %s35
      %s20 = sphi 0, %s31
      %s21 = sphi 0, %s17
      %s22 = sphi 0, %s18
      %s23 = sphi 0, %s19
      %s24 = sphi 0, %s20
      %s25 = sphi 0, %s21
      %s26 = sphi 0, %s22
      %s27 = sphi 0, %s23
      %s28 = sphi 0, %s24
      %s50 = sphi 0, %s52
      %s53 = sphi 0, %s50
      %s54 = sphi 0, %s53
      %s70 = sphi 0, %s54
      %s80 = sphi 0, %s82
      %s83 = sphi 0, %s80
      %s84 = sphi 0, %s83
      %s100 = sphi 0, %s84
      %s110 = sphi 0, %s112
      %s113 = sphi 0, %s110
      %s114 = sphi 0, %s113
      %s130 = sphi 0, %s114
      %s140 = sphi 0, %s142
      %s143 = sphi 0, %s140
      %s144 = sphi 0, %s143
      %s160 = sphi 0, %s144
    $region4: #{generator_forward.13} parent=1 // loop_header_branch
      %13 = sbr.rel (%p11) target = $region8
    $region5: #{generator_forward.13} parent=1 // loop_body
      %s15 = ssub.s32 %s10, 1
      %s16 = ssub.s32 %s10, 2
      %s29 = sadd.s32 1, %s20
      %p30 = scmp.ge.s32.totalorder %s29, 2
      %s31 = scalar_select %p30, 0, %s29
      %s32 = sadd.s32 1, %s19
      %s33 = scalar_select %p30, %s32, %s19
      %p34 = scmp.ge.s32.totalorder %s33, 1
      %s35 = scalar_select %p34, 0, %s33
      %s36 = sadd.s32 1, %s18
      %s37 = scalar_select %p34, %s36, %s18
      %p38 = scmp.ge.s32.totalorder %s37, 1
      %s39 = scalar_select %p38, 0, %s37
      %s40 = sadd.s32 1, %s17
      %s41 = scalar_select %p38, %s40, %s17
      %p42 = scmp.ge.s32.totalorder %s41, 4
      %s43 = scalar_select %p42, 0, %s41
      %s44 = ssub.s32 %s17, %s43
      %s45 = ssub.s32 %s18, %s39
      %s46 = sor.u32 %s44, %s45
      %s47 = ssub.s32 %s20, %s31
      %s48 = sor.u32 %s46, %s47
      %p49 = scmp.eq.s32.totalorder %s48, 0
      %s51 = sadd.s32 %s50, 1
      %s52 = scalar_select %p49, %s50, %s51
      %p55 = pneg %p49
      %p56 = scmp.eq.s32.totalorder %s10, 7
      %p57 = por %p55, %p56
      %p58 = scmp.ne.s32.totalorder %s50, %s53
      %p59 = scmp.eq.s32.totalorder %s10, 0
      %p60 = por %p58, %p59
      %p61 = scmp.ne.s32.totalorder %s50, %s53
      %p62 = scmp.eq.s32.totalorder %s15, 7
      %p63 = por %p61, %p62
      %p64 = scmp.ne.s32.totalorder %s53, %s54
      %p65 = scmp.eq.s32.totalorder %s15, 0
      %p66 = por %p64, %p65
      %p67 = scmp.ne.s32.totalorder %s53, %s54
      %p68 = scmp.eq.s32.totalorder %s16, 7
      %p69 = por %p67, %p68
      %p71 = scmp.ne.s32.totalorder %s54, %s70
      %p72 = scmp.eq.s32.totalorder %s16, 0
      %p73 = por %p71, %p72
      %s74 = ssub.s32 %s17, %s43
      %s75 = ssub.s32 %s20, %s31
      %s76 = sor.u32 %s74, %s75
      %s77 = ssub.s32 %s19, %s35
      %s78 = sor.u32 %s76, %s77
      %p79 = scmp.eq.s32.totalorder %s78, 0
      %s81 = sadd.s32 %s80, 1
      %s82 = scalar_select %p79, %s80, %s81
      %p85 = pneg %p79
      %p86 = scmp.eq.s32.totalorder %s10, 7
      %p87 = por %p85, %p86
      %p88 = scmp.ne.s32.totalorder %s80, %s83
      %p89 = scmp.eq.s32.totalorder %s10, 0
      %p90 = por %p88, %p89
      %p91 = scmp.ne.s32.totalorder %s80, %s83
      %p92 = scmp.eq.s32.totalorder %s15, 7
      %p93 = por %p91, %p92
      %p94 = scmp.ne.s32.totalorder %s83, %s84
      %p95 = scmp.eq.s32.totalorder %s15, 0
      %p96 = por %p94, %p95
      %p97 = scmp.ne.s32.totalorder %s83, %s84
      %p98 = scmp.eq.s32.totalorder %s16, 7
      %p99 = por %p97, %p98
      %p101 = scmp.ne.s32.totalorder %s84, %s100
      %p102 = scmp.eq.s32.totalorder %s16, 0
      %p103 = por %p101, %p102
      %s104 = ssub.s32 %s17, %s43
      %s105 = ssub.s32 %s18, %s39
      %s106 = sor.u32 %s104, %s105
      %s107 = ssub.s32 %s19, %s35
      %s108 = sor.u32 %s106, %s107
      %p109 = scmp.eq.s32.totalorder %s108, 0
      %s111 = sadd.s32 %s110, 1
      %s112 = scalar_select %p109, %s110, %s111
      %p115 = pneg %p109
      %p116 = scmp.eq.s32.totalorder %s10, 7
      %p117 = por %p115, %p116
      %p118 = scmp.ne.s32.totalorder %s110, %s113
      %p119 = scmp.eq.s32.totalorder %s10, 0
      %p120 = por %p118, %p119
      %p121 = scmp.ne.s32.totalorder %s110, %s113
      %p122 = scmp.eq.s32.totalorder %s15, 7
      %p123 = por %p121, %p122
      %p124 = scmp.ne.s32.totalorder %s113, %s114
      %p125 = scmp.eq.s32.totalorder %s15, 0
      %p126 = por %p124, %p125
      %p127 = scmp.ne.s32.totalorder %s113, %s114
      %p128 = scmp.eq.s32.totalorder %s16, 7
      %p129 = por %p127, %p128
      %p131 = scmp.ne.s32.totalorder %s114, %s130
      %p132 = scmp.eq.s32.totalorder %s16, 0
      %p133 = por %p131, %p132
      %s134 = ssub.s32 %s17, %s43
      %s135 = ssub.s32 %s18, %s39
      %s136 = sor.u32 %s134, %s135
      %s137 = ssub.s32 %s19, %s35
      %s138 = sor.u32 %s136, %s137
      %p139 = scmp.eq.s32.totalorder %s138, 0
      %s141 = sadd.s32 %s140, 1
      %s142 = scalar_select %p139, %s140, %s141
      %p145 = pneg %p139
      %p146 = scmp.eq.s32.totalorder %s10, 7
      %p147 = por %p145, %p146
      %p148 = scmp.ne.s32.totalorder %s140, %s143
      %p149 = scmp.eq.s32.totalorder %s10, 0
      %p150 = por %p148, %p149
      %p151 = scmp.ne.s32.totalorder %s140, %s143
      %p152 = scmp.eq.s32.totalorder %s15, 7
      %p153 = por %p151, %p152
      %p154 = scmp.ne.s32.totalorder %s143, %s144
      %p155 = scmp.eq.s32.totalorder %s15, 0
      %p156 = por %p154, %p155
      %p157 = scmp.ne.s32.totalorder %s143, %s144
      %p158 = scmp.eq.s32.totalorder %s16, 7
      %p159 = por %p157, %p158
      %p161 = scmp.ne.s32.totalorder %s144, %s160
      %p162 = scmp.eq.s32.totalorder %s16, 0
      %p163 = por %p161, %p162
      %p164 = scmp.le.s32.totalorder 1, %s10
      %p165 = scmp.lt.s32.totalorder %s10, 9
      %p166 = pnand %p164, %p165
      %p167 = pneg %p166
      // Predicated region
      $region9: #{generator_forward.13} parent=5 // pred_check
        _
      $region10: #{generator_forward.13} parent=5 // pred_check_branch
        %169 = sbr.rel (%p166) target = $region12
      $region11: #{generator_forward.13} parent=5 // pred_region
        %s170 = ssub.s32 %s10, 1
      $region12: #{generator_forward.13} parent=5 // pred_fallthru
        _
      %p171 = scmp.lt.s32.totalorder %s10, 8
      // Predicated region
      $region13: #{generator_forward.13} parent=5 // pred_check
        %p172 = pneg %p171
      $region14: #{generator_forward.13} parent=5 // pred_check_branch
        %174 = sbr.rel (%p172) target = $region16
      $region15: #{generator_forward.13} parent=5 // pred_region
        // Predicated region
        $region17: #{generator_forward.13} parent=15 // pred_check
          %p175 = pneg %p60
        $region18: #{generator_forward.13} parent=15 // pred_check_branch
          %177 = sbr.rel (%p175) target = $region20
        $region19: #{generator_forward.13} parent=15 // pred_region
          %s178 = sand.u32 %s50, 1
          %s179 = sand.u32 %s50, 1
          %s180 = smul.addr %s179, 256
          %s181 = scalar_lea.vmem [#allocation3], %s180
          %s182 = smul.u32 16, %s18
          %s183 = smul.u32 4, %s20
          %s184 = smul.addr %s182, 8
          %s185 = sadd.s32 %s183, %s184
          %s186 = smul.addr %s17, 128
          %s187 = sadd.s32 %s185, %s186
          %s188 = smul.addr %s187, 4
          %s189 = scalar_lea.vmem %s0, %s188
          // Predicated region
          $region21: #{generator_forward.13} parent=19 // pred_check
            _
          $region22: #{generator_forward.13} parent=19 // pred_check_branch
            %191 = sbr.rel (0) target = $region24
          $region23: #{generator_forward.13} parent=19 // pred_region
            // Predicated region
            $region25: #{generator_forward.13} parent=23 // pred_check
              _
            $region26: #{generator_forward.13} parent=23 // pred_check_branch
              %193 = sbr.rel (0) target = $region28
            $region27: #{generator_forward.13} parent=23 // pred_region
              loop: start=0, step=1, limit=1
              $region29: #{generator_forward.13} parent=27 // loop_pre_header
                _
              $region30: #{generator_forward.13} parent=27 // loop_header
                %s195 = sphi 0, %s199
                %p196 = scmp.ge.s32.totalorder %s195, 1
                %s200 = sphi %s189, %s189
                %s201 = sphi %s181, %s181
              $region31: #{generator_forward.13} parent=27 // loop_header_branch
                %198 = sbr.rel (%p196) target = $region35
              $region32: #{generator_forward.13} parent=27 // loop_body
                %v202 = vld [vmem:[%s200] sm:$0xff]
                %203 = vst [vmem:[%s201] sm:$0xff] %v202
                %v204 = vld [vmem:[%s200 + $0x8] sm:$0xff]
                %205 = vst [vmem:[%s201 + $0x8] sm:$0xff] %v204
                %v206 = vld [vmem:[%s200 + $0x20] sm:$0xff]
                %207 = vst [vmem:[%s201 + $0x10] sm:$0xff] %v206
                %v208 = vld [vmem:[%s200 + $0x28] sm:$0xff]
                %209 = vst [vmem:[%s201 + $0x18] sm:$0xff] %v208
                %v210 = vld [vmem:[%s200 + $0x40] sm:$0xff]
                %211 = vst [vmem:[%s201 + $0x20] sm:$0xff] %v210
                %v212 = vld [vmem:[%s200 + $0x48] sm:$0xff]
                %213 = vst [vmem:[%s201 + $0x28] sm:$0xff] %v212
                %v214 = vld [vmem:[%s200 + $0x60] sm:$0xff]
                %215 = vst [vmem:[%s201 + $0x30] sm:$0xff] %v214
                %v216 = vld [vmem:[%s200 + $0x68] sm:$0xff]
                %217 = vst [vmem:[%s201 + $0x38] sm:$0xff] %v216
                %v218 = vld [vmem:[%s200 + $0x80] sm:$0xff]
                %219 = vst [vmem:[%s201 + $0x40] sm:$0xff] %v218
                %v220 = vld [vmem:[%s200 + $0x88] sm:$0xff]
                %221 = vst [vmem:[%s201 + $0x48] sm:$0xff] %v220
                %v222 = vld [vmem:[%s200 + $0xa0] sm:$0xff]
                %223 = vst [vmem:[%s201 + $0x50] sm:$0xff] %v222
                %v224 = vld [vmem:[%s200 + $0xa8] sm:$0xff]
                %225 = vst [vmem:[%s201 + $0x58] sm:$0xff] %v224
                %v226 = vld [vmem:[%s200 + $0xc0] sm:$0xff]
                %227 = vst [vmem:[%s201 + $0x60] sm:$0xff] %v226
                %v228 = vld [vmem:[%s200 + $0xc8] sm:$0xff]
                %229 = vst [vmem:[%s201 + $0x68] sm:$0xff] %v228
                %v230 = vld [vmem:[%s200 + $0xe0] sm:$0xff]
                %231 = vst [vmem:[%s201 + $0x70] sm:$0xff] %v230
                %v232 = vld [vmem:[%s200 + $0xe8] sm:$0xff]
                %233 = vst [vmem:[%s201 + $0x78] sm:$0xff] %v232
                %v234 = vld [vmem:[%s200 + $0x100] sm:$0xff]
                %235 = vst [vmem:[%s201 + $0x80] sm:$0xff] %v234
                %v236 = vld [vmem:[%s200 + $0x108] sm:$0xff]
                %237 = vst [vmem:[%s201 + $0x88] sm:$0xff] %v236
                %v238 = vld [vmem:[%s200 + $0x120] sm:$0xff]
                %239 = vst [vmem:[%s201 + $0x90] sm:$0xff] %v238
                %v240 = vld [vmem:[%s200 + $0x128] sm:$0xff]
                %241 = vst [vmem:[%s201 + $0x98] sm:$0xff] %v240
                %v242 = vld [vmem:[%s200 + $0x140] sm:$0xff]
                %243 = vst [vmem:[%s201 + $0xa0] sm:$0xff] %v242
                %v244 = vld [vmem:[%s200 + $0x148] sm:$0xff]
                %245 = vst [vmem:[%s201 + $0xa8] sm:$0xff] %v244
                %v246 = vld [vmem:[%s200 + $0x160] sm:$0xff]
                %247 = vst [vmem:[%s201 + $0xb0] sm:$0xff] %v246
                %v248 = vld [vmem:[%s200 + $0x168] sm:$0xff]
                %249 = vst [vmem:[%s201 + $0xb8] sm:$0xff] %v248
                %v250 = vld [vmem:[%s200 + $0x180] sm:$0xff]
                %251 = vst [vmem:[%s201 + $0xc0] sm:$0xff] %v250
                %v252 = vld [vmem:[%s200 + $0x188] sm:$0xff]
                %253 = vst [vmem:[%s201 + $0xc8] sm:$0xff] %v252
                %v254 = vld [vmem:[%s200 + $0x1a0] sm:$0xff]
                %255 = vst [vmem:[%s201 + $0xd0] sm:$0xff] %v254
                %v256 = vld [vmem:[%s200 + $0x1a8] sm:$0xff]
                %257 = vst [vmem:[%s201 + $0xd8] sm:$0xff] %v256
                %v258 = vld [vmem:[%s200 + $0x1c0] sm:$0xff]
                %259 = vst [vmem:[%s201 + $0xe0] sm:$0xff] %v258
                %v260 = vld [vmem:[%s200 + $0x1c8] sm:$0xff]
                %261 = vst [vmem:[%s201 + $0xe8] sm:$0xff] %v260
                %v262 = vld [vmem:[%s200 + $0x1e0] sm:$0xff]
                %263 = vst [vmem:[%s201 + $0xf0] sm:$0xff] %v262
                %v264 = vld [vmem:[%s200 + $0x1e8] sm:$0xff]
                %265 = vst [vmem:[%s201 + $0xf8] sm:$0xff] %v264
              $region33: #{generator_forward.13} parent=27 // loop_footer
                %s199 = sadd.s32 1, %s195
              $region34: #{generator_forward.13} parent=27 // loop_footer_branch
                %194 = sbr.rel target = $region30
              $region35: #{generator_forward.13} parent=27 // loop_exit
                _
            $region28: #{generator_forward.13} parent=23 // pred_fallthru
              _
            // Predicated region
            $region36: #{generator_forward.13} parent=23 // pred_check
              _
            $region37: #{generator_forward.13} parent=23 // pred_check_branch
              %267 = sbr.rel target = $region39
            $region38: #{generator_forward.13} parent=23 // pred_region
              _
            $region39: #{generator_forward.13} parent=23 // pred_fallthru
              _
          $region24: #{generator_forward.13} parent=19 // pred_fallthru
            _
          %268 = vnop
        $region20: #{generator_forward.13} parent=15 // pred_fallthru
          _
        // Predicated region
        $region40: #{generator_forward.13} parent=15 // pred_check
          %p269 = pneg %p90
        $region41: #{generator_forward.13} parent=15 // pred_check_branch
          %271 = sbr.rel (%p269) target = $region43
        $region42: #{generator_forward.13} parent=15 // pred_region
          %s272 = smul.u32 64, %s20
          %p273 = scmp.lt.s32.totalorder %s17, 3
          %s274 = scalar_select %p273, %s17, 3
          %p275 = scmp.lt.s32.totalorder %s272, 127
          %s276 = scalar_select %p275, %s272, 127
          %p277 = scmp.lt.s32.totalorder %s19, 0
          %s278 = scalar_select %p277, %s19, 0
          %s279 = sadd.s32 %s278, %s276
          %s280 = smul.addr %s274, 128
          %s281 = sadd.s32 %s279, %s280
          %s282 = smul.addr %s281, 4
          %s283 = scalar_lea.vmem %s1, %s282
          %s284 = smul.u32 64, %s20
        $region43: #{generator_forward.13} parent=15 // pred_fallthru
          _
      $region16: #{generator_forward.13} parent=5 // pred_fallthru
        _
      %p285 = scmp.le.s32.totalorder 1, %s10
      %p286 = scmp.lt.s32.totalorder %s10, 9
      %p287 = pnand %p285, %p286
      %p288 = pneg %p287
      // Predicated region
      $region44: #{generator_forward.13} parent=5 // pred_check
        _
      $region45: #{generator_forward.13} parent=5 // pred_check_branch
        %290 = sbr.rel (%p287) target = $region47
      $region46: #{generator_forward.13} parent=5 // pred_region
        %s291 = ssub.s32 %s10, 1
        %s292 = sand.u32 %s53, 1
        %s293 = sand.u32 %s53, 1
        %s294 = smul.addr %s293, 256
        %s295 = scalar_lea.vmem [#allocation3], %s294
        // Predicated region
        $region48: #{generator_forward.13} parent=46 // pred_check
          %p296 = pneg %p66
        $region49: #{generator_forward.13} parent=46 // pred_check_branch
          %298 = sbr.rel (%p296) target = $region51
        $region50: #{generator_forward.13} parent=46 // pred_region
          _
        $region51: #{generator_forward.13} parent=46 // pred_fallthru
          _
        %s299 = sand.u32 %s53, 1
        %s300 = sand.u32 %s53, 1
        %s301 = smul.addr %s300, 256
        %s302 = scalar_lea.vmem [#allocation3], %s301
        %p303 = pneg %p66
        %p304 = pneg %p63
        %s305 = smul.u32 64, %s24
        %p306 = scmp.lt.s32.totalorder %s21, 3
        %s307 = scalar_select %p306, %s21, 3
        %p308 = scmp.lt.s32.totalorder %s305, 127
        %s309 = scalar_select %p308, %s305, 127
        %p310 = scmp.lt.s32.totalorder %s23, 0
        %s311 = scalar_select %p310, %s23, 0
        %s312 = sadd.s32 %s311, %s309
        %s313 = smul.addr %s307, 128
        %s314 = sadd.s32 %s312, %s313
        %s315 = smul.addr %s314, 4
        %s316 = scalar_lea.vmem %s1, %s315
        %p317 = pneg %p96
        %p318 = pneg %p93
        %p319 = pneg %p126
        %p320 = pneg %p123
        %s321 = smul.u32 16, %s22
        %p322 = scmp.lt.s32.totalorder %s21, 3
        %s323 = scalar_select %p322, %s21, 3
        %p324 = scmp.lt.s32.totalorder %s321, 15
        %s325 = scalar_select %p324, %s321, 15
        %p326 = scmp.lt.s32.totalorder %s23, 0
        %s327 = scalar_select %p326, %s23, 0
        %s328 = sadd.s32 %s327, %s325
        %s329 = smul.addr %s323, 16
        %s330 = sadd.s32 %s328, %s329
        %s331 = smul.addr %s330, 8
        %s332 = scalar_lea.vmem %s2, %s331
        %p333 = pneg %p156
        %p334 = pneg %p153
        %p335 = scmp.lt.s32.totalorder %s21, 3
        %s336 = scalar_select %p335, %s21, 3
        %p337 = scmp.lt.s32.totalorder %s22, 0
        %s338 = scalar_select %p337, %s22, 0
        %p339 = scmp.lt.s32.totalorder %s23, 0
        %s340 = scalar_select %p339, %s23, 0
        %s341 = sadd.s32 %s340, %s338
        %s342 = sadd.s32 %s341, %s336
        %s343 = smul.addr %s342, 8
        %s344 = scalar_lea.vmem %s3, %s343
        %s345 = smul.u32 16, %s22
        %s346 = smul.u32 4, %s24
        %s347 = smul.u32 64, %s24
        %p348 = scmp.lt.s32.totalorder %s21, 3
        %s349 = scalar_select %p348, %s21, 3
        %p350 = scmp.lt.s32.totalorder %s347, 127
        %s351 = scalar_select %p350, %s347, 127
        %p352 = scmp.lt.s32.totalorder %s23, 0
        %s353 = scalar_select %p352, %s23, 0
        %s354 = sadd.s32 %s353, %s351
        %s355 = smul.addr %s349, 128
        %s356 = sadd.s32 %s354, %s355
        %s357 = smul.addr %s356, 4
        %s358 = scalar_lea.vmem %s1, %s357
        %s359 = smul.u32 64, %s24
        %s360 = smul.u32 16, %s22
        %p361 = scmp.lt.s32.totalorder %s21, 3
        %s362 = scalar_select %p361, %s21, 3
        %p363 = scmp.lt.s32.totalorder %s360, 15
        %s364 = scalar_select %p363, %s360, 15
        %p365 = scmp.lt.s32.totalorder %s23, 0
        %s366 = scalar_select %p365, %s23, 0
        %s367 = sadd.s32 %s366, %s364
        %s368 = smul.addr %s362, 16
        %s369 = sadd.s32 %s367, %s368
        %s370 = smul.addr %s369, 8
        %s371 = scalar_lea.vmem %s2, %s370
        %s372 = smul.u32 16, %s22
        %p373 = scmp.lt.s32.totalorder %s21, 3
        %s374 = scalar_select %p373, %s21, 3
        %p375 = scmp.lt.s32.totalorder %s22, 0
        %s376 = scalar_select %p375, %s22, 0
        %p377 = scmp.lt.s32.totalorder %s23, 0
        %s378 = scalar_select %p377, %s23, 0
        %s379 = sadd.s32 %s378, %s376
        %s380 = sadd.s32 %s379, %s374
        %s381 = smul.addr %s380, 8
        %s382 = scalar_lea.vmem %s3, %s381
        %p384 = scmp.eq.s32.totalorder %s24, 0
        // Predicated region
        $region52: #{generator_forward.13} parent=46 // pred_check
          %p385 = pneg %p384
        $region53: #{generator_forward.13} parent=46 // pred_check_branch
          %387 = sbr.rel (%p385) target = $region55
        $region54: #{generator_forward.13} parent=46 // pred_region
          %388 = vst [vmem:[#allocation2] sm:$0xff] 0.0
          %389 = vst [vmem:[#allocation2 + $0x8] sm:$0xff] 0.0
          %390 = vst [vmem:[#allocation2 + $0x10] sm:$0xff] 0.0
          %391 = vst [vmem:[#allocation2 + $0x18] sm:$0xff] 0.0
          %392 = vst [vmem:[#allocation2 + $0x20] sm:$0xff] 0.0
          %393 = vst [vmem:[#allocation2 + $0x28] sm:$0xff] 0.0
          %394 = vst [vmem:[#allocation2 + $0x30] sm:$0xff] 0.0
          %395 = vst [vmem:[#allocation2 + $0x38] sm:$0xff] 0.0
          %396 = vst [vmem:[#allocation2 + $0x40] sm:$0xff] 0.0
          %397 = vst [vmem:[#allocation2 + $0x48] sm:$0xff] 0.0
          %398 = vst [vmem:[#allocation2 + $0x50] sm:$0xff] 0.0
          %399 = vst [vmem:[#allocation2 + $0x58] sm:$0xff] 0.0
          %400 = vst [vmem:[#allocation2 + $0x60] sm:$0xff] 0.0
          %401 = vst [vmem:[#allocation2 + $0x68] sm:$0xff] 0.0
          %402 = vst [vmem:[#allocation2 + $0x70] sm:$0xff] 0.0
          %403 = vst [vmem:[#allocation2 + $0x78] sm:$0xff] 0.0
        $region55: #{generator_forward.13} parent=46 // pred_fallthru
          _
        %v404 = vld [vmem:[#allocation2] sm:$0xff]
        %v405 = vld [vmem:[#allocation2 + $0x8] sm:$0xff]
        %v406 = vld [vmem:[#allocation2 + $0x10] sm:$0xff]
        %v407 = vld [vmem:[#allocation2 + $0x18] sm:$0xff]
        %v408 = vld [vmem:[#allocation2 + $0x20] sm:$0xff]
        %v409 = vld [vmem:[#allocation2 + $0x28] sm:$0xff]
        %v410 = vld [vmem:[#allocation2 + $0x30] sm:$0xff]
        %v411 = vld [vmem:[#allocation2 + $0x38] sm:$0xff]
        %v412 = vld [vmem:[#allocation2 + $0x40] sm:$0xff]
        %v413 = vld [vmem:[#allocation2 + $0x48] sm:$0xff]
        %v414 = vld [vmem:[#allocation2 + $0x50] sm:$0xff]
        %v415 = vld [vmem:[#allocation2 + $0x58] sm:$0xff]
        %v416 = vld [vmem:[#allocation2 + $0x60] sm:$0xff]
        %v417 = vld [vmem:[#allocation2 + $0x68] sm:$0xff]
        %v418 = vld [vmem:[#allocation2 + $0x70] sm:$0xff]
        %v419 = vld [vmem:[#allocation2 + $0x78] sm:$0xff]
        %v420 = vld [vmem:[%s295] sm:$0xff]
        %v421 = vld [vmem:[%s295 + $0x8] sm:$0xff]
        %v422 = vld [vmem:[%s295 + $0x10] sm:$0xff]
        %v423 = vld [vmem:[%s295 + $0x18] sm:$0xff]
        %v424 = vld [vmem:[%s295 + $0x20] sm:$0xff]
        %v425 = vld [vmem:[%s295 + $0x28] sm:$0xff]
        %v426 = vld [vmem:[%s295 + $0x30] sm:$0xff]
        %v427 = vld [vmem:[%s295 + $0x38] sm:$0xff]
        %v428 = vld [vmem:[%s295 + $0x40] sm:$0xff]
        %v429 = vld [vmem:[%s295 + $0x48] sm:$0xff]
        %v430 = vld [vmem:[%s295 + $0x50] sm:$0xff]
        %v431 = vld [vmem:[%s295 + $0x58] sm:$0xff]
        %v432 = vld [vmem:[%s295 + $0x60] sm:$0xff]
        %v433 = vld [vmem:[%s295 + $0x68] sm:$0xff]
        %v434 = vld [vmem:[%s295 + $0x70] sm:$0xff]
        %v435 = vld [vmem:[%s295 + $0x78] sm:$0xff]
        %v436 = vld [vmem:[%s295 + $0x80] sm:$0xff]
        %v437 = vld [vmem:[%s295 + $0x88] sm:$0xff]
        %v438 = vld [vmem:[%s295 + $0x90] sm:$0xff]
        %v439 = vld [vmem:[%s295 + $0x98] sm:$0xff]
        %v440 = vld [vmem:[%s295 + $0xa0] sm:$0xff]
        %v441 = vld [vmem:[%s295 + $0xa8] sm:$0xff]
        %v442 = vld [vmem:[%s295 + $0xb0] sm:$0xff]
        %v443 = vld [vmem:[%s295 + $0xb8] sm:$0xff]
        %v444 = vld [vmem:[%s295 + $0xc0] sm:$0xff]
        %v445 = vld [vmem:[%s295 + $0xc8] sm:$0xff]
        %v446 = vld [vmem:[%s295 + $0xd0] sm:$0xff]
        %v447 = vld [vmem:[%s295 + $0xd8] sm:$0xff]
        %v448 = vld [vmem:[%s295 + $0xe0] sm:$0xff]
        %v449 = vld [vmem:[%s295 + $0xe8] sm:$0xff]
        %v450 = vld [vmem:[%s295 + $0xf0] sm:$0xff]
        %v451 = vld [vmem:[%s295 + $0xf8] sm:$0xff]
        %v452 = vld [vmem:[%s358] sm:$0xf]
        %v453 = vld [vmem:[%s358 + $0x4] sm:$0xf]
        %v454 = vld [vmem:[%s358 + $0x8] sm:$0xf]
        %v455 = vld [vmem:[%s358 + $0xc] sm:$0xf]
        %v456 = vld [vmem:[%s358 + $0x10] sm:$0xf]
        %v457 = vld [vmem:[%s358 + $0x14] sm:$0xf]
        %v458 = vld [vmem:[%s358 + $0x18] sm:$0xf]
        %v459 = vld [vmem:[%s358 + $0x1c] sm:$0xf]
        %v460 = vld [vmem:[%s358 + $0x20] sm:$0xf]
        %v461 = vld [vmem:[%s358 + $0x24] sm:$0xf]
        %v462 = vld [vmem:[%s358 + $0x28] sm:$0xf]
        %v463 = vld [vmem:[%s358 + $0x2c] sm:$0xf]
        %v464 = vld [vmem:[%s358 + $0x30] sm:$0xf]
        %v465 = vld [vmem:[%s358 + $0x34] sm:$0xf]
        %v466 = vld [vmem:[%s358 + $0x38] sm:$0xf]
        %v467 = vld [vmem:[%s358 + $0x3c] sm:$0xf]
        %v468 = vld [vmem:[%s358 + $0x40] sm:$0xf]
        %v469 = vld [vmem:[%s358 + $0x44] sm:$0xf]
        %v470 = vld [vmem:[%s358 + $0x48] sm:$0xf]
        %v471 = vld [vmem:[%s358 + $0x4c] sm:$0xf]
        %v472 = vld [vmem:[%s358 + $0x50] sm:$0xf]
        %v473 = vld [vmem:[%s358 + $0x54] sm:$0xf]
        %v474 = vld [vmem:[%s358 + $0x58] sm:$0xf]
        %v475 = vld [vmem:[%s358 + $0x5c] sm:$0xf]
        %v476 = vld [vmem:[%s358 + $0x60] sm:$0xf]
        %v477 = vld [vmem:[%s358 + $0x64] sm:$0xf]
        %v478 = vld [vmem:[%s358 + $0x68] sm:$0xf]
        %v479 = vld [vmem:[%s358 + $0x6c] sm:$0xf]
        %v480 = vld [vmem:[%s358 + $0x70] sm:$0xf]
        %v481 = vld [vmem:[%s358 + $0x74] sm:$0xf]
        %v482 = vld [vmem:[%s358 + $0x78] sm:$0xf]
        %v483 = vld [vmem:[%s358 + $0x7c] sm:$0xf]
        %v484 = vld [vmem:[%s358 + $0x80] sm:$0xf]
        %v485 = vld [vmem:[%s358 + $0x84] sm:$0xf]
        %v486 = vld [vmem:[%s358 + $0x88] sm:$0xf]
        %v487 = vld [vmem:[%s358 + $0x8c] sm:$0xf]
        %v488 = vld [vmem:[%s358 + $0x90] sm:$0xf]
        %v489 = vld [vmem:[%s358 + $0x94] sm:$0xf]
        %v490 = vld [vmem:[%s358 + $0x98] sm:$0xf]
        %v491 = vld [vmem:[%s358 + $0x9c] sm:$0xf]
        %v492 = vld [vmem:[%s358 + $0xa0] sm:$0xf]
        %v493 = vld [vmem:[%s358 + $0xa4] sm:$0xf]
        %v494 = vld [vmem:[%s358 + $0xa8] sm:$0xf]
        %v495 = vld [vmem:[%s358 + $0xac] sm:$0xf]
        %v496 = vld [vmem:[%s358 + $0xb0] sm:$0xf]
        %v497 = vld [vmem:[%s358 + $0xb4] sm:$0xf]
        %v498 = vld [vmem:[%s358 + $0xb8] sm:$0xf]
        %v499 = vld [vmem:[%s358 + $0xbc] sm:$0xf]
        %v500 = vld [vmem:[%s358 + $0xc0] sm:$0xf]
        %v501 = vld [vmem:[%s358 + $0xc4] sm:$0xf]
        %v502 = vld [vmem:[%s358 + $0xc8] sm:$0xf]
        %v503 = vld [vmem:[%s358 + $0xcc] sm:$0xf]
        %v504 = vld [vmem:[%s358 + $0xd0] sm:$0xf]
        %v505 = vld [vmem:[%s358 + $0xd4] sm:$0xf]
        %v506 = vld [vmem:[%s358 + $0xd8] sm:$0xf]
        %v507 = vld [vmem:[%s358 + $0xdc] sm:$0xf]
        %v508 = vld [vmem:[%s358 + $0xe0] sm:$0xf]
        %v509 = vld [vmem:[%s358 + $0xe4] sm:$0xf]
        %v510 = vld [vmem:[%s358 + $0xe8] sm:$0xf]
        %v511 = vld [vmem:[%s358 + $0xec] sm:$0xf]
        %v512 = vld [vmem:[%s358 + $0xf0] sm:$0xf]
        %v513 = vld [vmem:[%s358 + $0xf4] sm:$0xf]
        %v514 = vld [vmem:[%s358 + $0xf8] sm:$0xf]
        %v515 = vld [vmem:[%s358 + $0xfc] sm:$0xf]
        %v548 = vunpack.c.l.b16 %v420
        %v549 = vunpack.c.h.b16 %v420
        %v550 = vunpack.c.l.b16 %v421
        %v551 = vunpack.c.h.b16 %v421
        %v552 = vunpack.c.l.b16 %v422
        %v553 = vunpack.c.h.b16 %v422
        %v554 = vunpack.c.l.b16 %v423
        %v555 = vunpack.c.h.b16 %v423
        %v556 = vunpack.c.l.b16 %v424
        %v557 = vunpack.c.h.b16 %v424
        %v558 = vunpack.c.l.b16 %v425
        %v559 = vunpack.c.h.b16 %v425
        %v560 = vunpack.c.l.b16 %v426
        %v561 = vunpack.c.h.b16 %v426
        %v562 = vunpack.c.l.b16 %v427
        %v563 = vunpack.c.h.b16 %v427
        %v564 = vunpack.c.l.b16 %v428
        %v565 = vunpack.c.h.b16 %v428
        %v566 = vunpack.c.l.b16 %v429
        %v567 = vunpack.c.h.b16 %v429
        %v568 = vunpack.c.l.b16 %v430
        %v569 = vunpack.c.h.b16 %v430
        %v570 = vunpack.c.l.b16 %v431
        %v571 = vunpack.c.h.b16 %v431
        %v572 = vunpack.c.l.b16 %v432
        %v573 = vunpack.c.h.b16 %v432
        %v574 = vunpack.c.l.b16 %v433
        %v575 = vunpack.c.h.b16 %v433
        %v576 = vunpack.c.l.b16 %v434
        %v577 = vunpack.c.h.b16 %v434
        %v578 = vunpack.c.l.b16 %v435
        %v579 = vunpack.c.h.b16 %v435
        %v580 = vunpack.c.l.b16 %v436
        %v581 = vunpack.c.h.b16 %v436
        %v582 = vunpack.c.l.b16 %v437
        %v583 = vunpack.c.h.b16 %v437
        %v584 = vunpack.c.l.b16 %v438
        %v585 = vunpack.c.h.b16 %v438
        %v586 = vunpack.c.l.b16 %v439
        %v587 = vunpack.c.h.b16 %v439
        %v588 = vunpack.c.l.b16 %v440
        %v589 = vunpack.c.h.b16 %v440
        %v590 = vunpack.c.l.b16 %v441
        %v591 = vunpack.c.h.b16 %v441
        %v592 = vunpack.c.l.b16 %v442
        %v593 = vunpack.c.h.b16 %v442
        %v594 = vunpack.c.l.b16 %v443
        %v595 = vunpack.c.h.b16 %v443
        %v596 = vunpack.c.l.b16 %v444
        %v597 = vunpack.c.h.b16 %v444
        %v598 = vunpack.c.l.b16 %v445
        %v599 = vunpack.c.h.b16 %v445
        %v600 = vunpack.c.l.b16 %v446
        %v601 = vunpack.c.h.b16 %v446
        %v602 = vunpack.c.l.b16 %v447
        %v603 = vunpack.c.h.b16 %v447
        %v604 = vunpack.c.l.b16 %v448
        %v605 = vunpack.c.h.b16 %v448
        %v606 = vunpack.c.l.b16 %v449
        %v607 = vunpack.c.h.b16 %v449
        %v608 = vunpack.c.l.b16 %v450
        %v609 = vunpack.c.h.b16 %v450
        %v610 = vunpack.c.l.b16 %v451
        %v611 = vunpack.c.h.b16 %v451
        %v612 = vpack.c.b16 %v552, %v548
        %v613 = vpack.c.b16 %v553, %v549
        %v614 = vpack.c.b16 %v554, %v550
        %v615 = vpack.c.b16 %v555, %v551
        %v616 = vpack.c.b16 %v560, %v556
        %v617 = vpack.c.b16 %v561, %v557
        %v618 = vpack.c.b16 %v562, %v558
        %v619 = vpack.c.b16 %v563, %v559
        %v620 = vpack.c.b16 %v568, %v564
        %v621 = vpack.c.b16 %v569, %v565
        %v622 = vpack.c.b16 %v570, %v566
        %v623 = vpack.c.b16 %v571, %v567
        %v624 = vpack.c.b16 %v576, %v572
        %v625 = vpack.c.b16 %v577, %v573
        %v626 = vpack.c.b16 %v578, %v574
        %v627 = vpack.c.b16 %v579, %v575
        %v628 = vpack.c.b16 %v584, %v580
        %v629 = vpack.c.b16 %v585, %v581
        %v630 = vpack.c.b16 %v586, %v582
        %v631 = vpack.c.b16 %v587, %v583
        %v632 = vpack.c.b16 %v592, %v588
        %v633 = vpack.c.b16 %v593, %v589
        %v634 = vpack.c.b16 %v594, %v590
        %v635 = vpack.c.b16 %v595, %v591
        %v636 = vpack.c.b16 %v600, %v596
        %v637 = vpack.c.b16 %v601, %v597
        %v638 = vpack.c.b16 %v602, %v598
        %v639 = vpack.c.b16 %v603, %v599
        %v640 = vpack.c.b16 %v608, %v604
        %v641 = vpack.c.b16 %v609, %v605
        %v642 = vpack.c.b16 %v610, %v606
        %v643 = vpack.c.b16 %v611, %v607
        %v740 = vunpack.c.l.b16 %v452
        %v741 = vunpack.c.l.b16 %v453
        %v742 = vunpack.c.l.b16 %v454
        %v743 = vunpack.c.l.b16 %v455
        %v744 = vunpack.c.l.b16 %v456
        %v745 = vunpack.c.l.b16 %v457
        %v746 = vunpack.c.l.b16 %v458
        %v747 = vunpack.c.l.b16 %v459
        %v748 = vunpack.c.l.b16 %v460
        %v749 = vunpack.c.l.b16 %v461
        %v750 = vunpack.c.l.b16 %v462
        %v751 = vunpack.c.l.b16 %v463
        %v752 = vunpack.c.l.b16 %v464
        %v753 = vunpack.c.l.b16 %v465
        %v754 = vunpack.c.l.b16 %v466
        %v755 = vunpack.c.l.b16 %v467
        %v756 = vunpack.c.l.b16 %v468
        %v757 = vunpack.c.l.b16 %v469
        %v758 = vunpack.c.l.b16 %v470
        %v759 = vunpack.c.l.b16 %v471
        %v760 = vunpack.c.l.b16 %v472
        %v761 = vunpack.c.l.b16 %v473
        %v762 = vunpack.c.l.b16 %v474
        %v763 = vunpack.c.l.b16 %v475
        %v764 = vunpack.c.l.b16 %v476
        %v765 = vunpack.c.l.b16 %v477
        %v766 = vunpack.c.l.b16 %v478
        %v767 = vunpack.c.l.b16 %v479
        %v768 = vunpack.c.l.b16 %v480
        %v769 = vunpack.c.l.b16 %v481
        %v770 = vunpack.c.l.b16 %v482
        %v771 = vunpack.c.l.b16 %v483
        %v772 = vunpack.c.l.b16 %v484
        %v773 = vunpack.c.l.b16 %v485
        %v774 = vunpack.c.l.b16 %v486
        %v775 = vunpack.c.l.b16 %v487
        %v776 = vunpack.c.l.b16 %v488
        %v777 = vunpack.c.l.b16 %v489
        %v778 = vunpack.c.l.b16 %v490
        %v779 = vunpack.c.l.b16 %v491
        %v780 = vunpack.c.l.b16 %v492
        %v781 = vunpack.c.l.b16 %v493
        %v782 = vunpack.c.l.b16 %v494
        %v783 = vunpack.c.l.b16 %v495
        %v784 = vunpack.c.l.b16 %v496
        %v785 = vunpack.c.l.b16 %v497
        %v786 = vunpack.c.l.b16 %v498
        %v787 = vunpack.c.l.b16 %v499
        %v788 = vunpack.c.l.b16 %v500
        %v789 = vunpack.c.l.b16 %v501
        %v790 = vunpack.c.l.b16 %v502
        %v791 = vunpack.c.l.b16 %v503
        %v792 = vunpack.c.l.b16 %v504
        %v793 = vunpack.c.l.b16 %v505
        %v794 = vunpack.c.l.b16 %v506
        %v795 = vunpack.c.l.b16 %v507
        %v796 = vunpack.c.l.b16 %v508
        %v797 = vunpack.c.l.b16 %v509
        %v798 = vunpack.c.l.b16 %v510
        %v799 = vunpack.c.l.b16 %v511
        %v800 = vunpack.c.l.b16 %v512
        %v801 = vunpack.c.l.b16 %v513
        %v802 = vunpack.c.l.b16 %v514
        %v803 = vunpack.c.l.b16 %v515
        %v804 = vpack.c.b16 %v741, %v740
        %v805 = vpack.c.b16 %v743, %v742
        %v806 = vpack.c.b16 %v745, %v744
        %v807 = vpack.c.b16 %v747, %v746
        %v808 = vpack.c.b16 %v749, %v748
        %v809 = vpack.c.b16 %v751, %v750
        %v810 = vpack.c.b16 %v753, %v752
        %v811 = vpack.c.b16 %v755, %v754
        %v812 = vpack.c.b16 %v757, %v756
        %v813 = vpack.c.b16 %v759, %v758
        %v814 = vpack.c.b16 %v761, %v760
        %v815 = vpack.c.b16 %v763, %v762
        %v816 = vpack.c.b16 %v765, %v764
        %v817 = vpack.c.b16 %v767, %v766
        %v818 = vpack.c.b16 %v769, %v768
        %v819 = vpack.c.b16 %v771, %v770
        %v820 = vpack.c.b16 %v773, %v772
        %v821 = vpack.c.b16 %v775, %v774
        %v822 = vpack.c.b16 %v777, %v776
        %v823 = vpack.c.b16 %v779, %v778
        %v824 = vpack.c.b16 %v781, %v780
        %v825 = vpack.c.b16 %v783, %v782
        %v826 = vpack.c.b16 %v785, %v784
        %v827 = vpack.c.b16 %v787, %v786
        %v828 = vpack.c.b16 %v789, %v788
        %v829 = vpack.c.b16 %v791, %v790
        %v830 = vpack.c.b16 %v793, %v792
        %v831 = vpack.c.b16 %v795, %v794
        %v832 = vpack.c.b16 %v797, %v796
        %v833 = vpack.c.b16 %v799, %v798
        %v834 = vpack.c.b16 %v801, %v800
        %v835 = vpack.c.b16 %v803, %v802
        %868 = vmatprep.subr.bf16.mxu0 0
        %869 = vmatpush1.bf16.msra.mxu0 %v804
        %870 = vmatprep.subr.bf16.mxu0 0
        %871 = vmatpush1.bf16.msra.mxu0 %v805
        %872 = vmatprep.subr.bf16.mxu0 0
        %873 = vmatpush1.bf16.msra.mxu0 %v806
        %874 = vmatprep.subr.bf16.mxu0 0
        %875 = vmatpush1.bf16.msra.mxu0 %v807
        %876 = vmatprep.subr.bf16.mxu0 0
        %877 = vmatpush1.bf16.msra.mxu0 %v808
        %878 = vmatprep.subr.bf16.mxu0 0
        %879 = vmatpush1.bf16.msra.mxu0 %v809
        %880 = vmatprep.subr.bf16.mxu0 0
        %881 = vmatpush1.bf16.msra.mxu0 %v810
        %882 = vmatprep.subr.bf16.mxu0 0
        %883 = vmatpush1.bf16.msra.mxu0 %v811
        %884 = vmatprep.subr.bf16.mxu0 0
        %885 = vmatpush1.bf16.msra.mxu0 %v812
        %886 = vmatprep.subr.bf16.mxu0 0
        %887 = vmatpush1.bf16.msra.mxu0 %v813
        %888 = vmatprep.subr.bf16.mxu0 0
        %889 = vmatpush1.bf16.msra.mxu0 %v814
        %890 = vmatprep.subr.bf16.mxu0 0
        %891 = vmatpush1.bf16.msra.mxu0 %v815
        %892 = vmatprep.subr.bf16.mxu0 0
        %893 = vmatpush1.bf16.msra.mxu0 %v816
        %894 = vmatprep.subr.bf16.mxu0 0
        %895 = vmatpush1.bf16.msra.mxu0 %v817
        %896 = vmatprep.subr.bf16.mxu0 0
        %897 = vmatpush1.bf16.msra.mxu0 %v818
        %898 = vmatprep.subr.bf16.mxu0 0
        %899 = vmatpush1.bf16.msra.mxu0 %v819
        %900 = vmatprep.mubr.bf16.mxu0 %v613
        %901 = vmatmul.mubr.bf16.gmra.mrb[0].mxu0 %v612
        %v902 = vpop.f32.mrb[0].mxu0
        %v903 = vadd.f32 0.0, %v902
        %v904 = vpop.f32.mrb[0].mxu0
        %v905 = vpop.f32.mrb[0].mxu0
        %v906 = vadd.f32 0.0, %v905
        %v907 = vpop.f32.mrb[0].mxu0
        %908 = vmatprep.mubr.bf16.mxu0 %v617
        %909 = vmatmul.mubr.bf16.gmra.mrb[0].mxu0 %v616
        %v910 = vpop.f32.mrb[0].mxu0
        %v911 = vadd.f32 0.0, %v910
        %v912 = vpop.f32.mrb[0].mxu0
        %v913 = vpop.f32.mrb[0].mxu0
        %v914 = vadd.f32 0.0, %v913
        %v915 = vpop.f32.mrb[0].mxu0
        %916 = vmatprep.mubr.bf16.mxu0 %v621
        %917 = vmatmul.mubr.bf16.gmra.mrb[0].mxu0 %v620
        %v918 = vpop.f32.mrb[0].mxu0
        %v919 = vadd.f32 0.0, %v918
        %v920 = vpop.f32.mrb[0].mxu0
        %v921 = vpop.f32.mrb[0].mxu0
        %v922 = vadd.f32 0.0, %v921
        %v923 = vpop.f32.mrb[0].mxu0
        %924 = vmatprep.mubr.bf16.mxu0 %v625
        %925 = vmatmul.mubr.bf16.gmra.mrb[0].mxu0 %v624
        %v926 = vpop.f32.mrb[0].mxu0
        %v927 = vadd.f32 0.0, %v926
        %v928 = vpop.f32.mrb[0].mxu0
        %v929 = vpop.f32.mrb[0].mxu0
        %v930 = vadd.f32 0.0, %v929
        %v931 = vpop.f32.mrb[0].mxu0
        %932 = vmatprep.mubr.bf16.mxu0 %v629
        %933 = vmatmul.mubr.bf16.gmra.mrb[0].mxu0 %v628
        %v934 = vpop.f32.mrb[0].mxu0
        %v935 = vadd.f32 0.0, %v934
        %v936 = vpop.f32.mrb[0].mxu0
        %v937 = vpop.f32.mrb[0].mxu0
        %v938 = vadd.f32 0.0, %v937
        %v939 = vpop.f32.mrb[0].mxu0
        %940 = vmatprep.mubr.bf16.mxu0 %v633
        %941 = vmatmul.mubr.bf16.gmra.mrb[0].mxu0 %v632
        %v942 = vpop.f32.mrb[0].mxu0
        %v943 = vadd.f32 0.0, %v942
        %v944 = vpop.f32.mrb[0].mxu0
        %v945 = vpop.f32.mrb[0].mxu0
        %v946 = vadd.f32 0.0, %v945
        %v947 = vpop.f32.mrb[0].mxu0
        %948 = vmatprep.mubr.bf16.mxu0 %v637
        %949 = vmatmul.mubr.bf16.gmra.mrb[0].mxu0 %v636
        %v950 = vpop.f32.mrb[0].mxu0
        %v951 = vadd.f32 0.0, %v950
        %v952 = vpop.f32.mrb[0].mxu0
        %v953 = vpop.f32.mrb[0].mxu0
        %v954 = vadd.f32 0.0, %v953
        %v955 = vpop.f32.mrb[0].mxu0
        %956 = vmatprep.mubr.bf16.mxu0 %v641
        %957 = vmatmul.mubr.bf16.gmra.mrb[0].mxu0 %v640
        %v958 = vpop.f32.mrb[0].mxu0
        %v959 = vadd.f32 0.0, %v958
        %v960 = vpop.f32.mrb[0].mxu0
        %v961 = vpop.f32.mrb[0].mxu0
        %v962 = vadd.f32 0.0, %v961
        %v963 = vpop.f32.mrb[0].mxu0
        %964 = vdwg.mxu0
        %965 = vmatprep.subr.bf16.mxu0 0
        %966 = vmatpush1.bf16.msra.mxu0 %v820
        %967 = vmatprep.subr.bf16.mxu0 0
        %968 = vmatpush1.bf16.msra.mxu0 %v821
        %969 = vmatprep.subr.bf16.mxu0 0
        %970 = vmatpush1.bf16.msra.mxu0 %v822
        %971 = vmatprep.subr.bf16.mxu0 0
        %972 = vmatpush1.bf16.msra.mxu0 %v823
        %973 = vmatprep.subr.bf16.mxu0 0
        %974 = vmatpush1.bf16.msra.mxu0 %v824
        %975 = vmatprep.subr.bf16.mxu0 0
        %976 = vmatpush1.bf16.msra.mxu0 %v825
        %977 = vmatprep.subr.bf16.mxu0 0
        %978 = vmatpush1.bf16.msra.mxu0 %v826
        %979 = vmatprep.subr.bf16.mxu0 0
        %980 = vmatpush1.bf16.msra.mxu0 %v827
        %981 = vmatprep.subr.bf16.mxu0 0
        %982 = vmatpush1.bf16.msra.mxu0 %v828
        %983 = vmatprep.subr.bf16.mxu0 0
        %984 = vmatpush1.bf16.msra.mxu0 %v829
        %985 = vmatprep.subr.bf16.mxu0 0
        %986 = vmatpush1.bf16.msra.mxu0 %v830
        %987 = vmatprep.subr.bf16.mxu0 0
        %988 = vmatpush1.bf16.msra.mxu0 %v831
        %989 = vmatprep.subr.bf16.mxu0 0
        %990 = vmatpush1.bf16.msra.mxu0 %v832
        %991 = vmatprep.subr.bf16.mxu0 0
        %992 = vmatpush1.bf16.msra.mxu0 %v833
        %993 = vmatprep.subr.bf16.mxu0 0
        %994 = vmatpush1.bf16.msra.mxu0 %v834
        %995 = vmatprep.subr.bf16.mxu0 0
        %996 = vmatpush1.bf16.msra.mxu0 %v835
        %997 = vmatprep.mubr.bf16.mxu0 %v615
        %998 = vmatmul.mubr.bf16.gmra.mrb[0].mxu0 %v614
        %v999 = vpop.f32.mrb[0].mxu0
        %v1000 = vadd.f32 %v903, %v999
        %v1001 = vpop.f32.mrb[0].mxu0
        %v1002 = vpop.f32.mrb[0].mxu0
        %v1003 = vadd.f32 %v906, %v1002
        %v1004 = vpop.f32.mrb[0].mxu0
        %1005 = vmatprep.mubr.bf16.mxu0 %v619
        %1006 = vmatmul.mubr.bf16.gmra.mrb[0].mxu0 %v618
        %v1007 = vpop.f32.mrb[0].mxu0
        %v1008 = vadd.f32 %v911, %v1007
        %v1009 = vpop.f32.mrb[0].mxu0
        %v1010 = vpop.f32.mrb[0].mxu0
        %v1011 = vadd.f32 %v914, %v1010
        %v1012 = vpop.f32.mrb[0].mxu0
        %1013 = vmatprep.mubr.bf16.mxu0 %v623
        %1014 = vmatmul.mubr.bf16.gmra.mrb[0].mxu0 %v622
        %v1015 = vpop.f32.mrb[0].mxu0
        %v1016 = vadd.f32 %v919, %v1015
        %v1017 = vpop.f32.mrb[0].mxu0
        %v1018 = vpop.f32.mrb[0].mxu0
        %v1019 = vadd.f32 %v922, %v1018
        %v1020 = vpop.f32.mrb[0].mxu0
        %1021 = vmatprep.mubr.bf16.mxu0 %v627
        %1022 = vmatmul.mubr.bf16.gmra.mrb[0].mxu0 %v626
        %v1023 = vpop.f32.mrb[0].mxu0
        %v1024 = vadd.f32 %v927, %v1023
        %v1025 = vpop.f32.mrb[0].mxu0
        %v1026 = vpop.f32.mrb[0].mxu0
        %v1027 = vadd.f32 %v930, %v1026
        %v1028 = vpop.f32.mrb[0].mxu0
        %1029 = vmatprep.mubr.bf16.mxu0 %v631
        %1030 = vmatmul.mubr.bf16.gmra.mrb[0].mxu0 %v630
        %v1031 = vpop.f32.mrb[0].mxu0
        %v1032 = vadd.f32 %v935, %v1031
        %v1033 = vpop.f32.mrb[0].mxu0
        %v1034 = vpop.f32.mrb[0].mxu0
        %v1035 = vadd.f32 %v938, %v1034
        %v1036 = vpop.f32.mrb[0].mxu0
        %1037 = vmatprep.mubr.bf16.mxu0 %v635
        %1038 = vmatmul.mubr.bf16.gmra.mrb[0].mxu0 %v634
        %v1039 = vpop.f32.mrb[0].mxu0
        %v1040 = vadd.f32 %v943, %v1039
        %v1041 = vpop.f32.mrb[0].mxu0
        %v1042 = vpop.f32.mrb[0].mxu0
        %v1043 = vadd.f32 %v946, %v1042
        %v1044 = vpop.f32.mrb[0].mxu0
        %1045 = vmatprep.mubr.bf16.mxu0 %v639
        %1046 = vmatmul.mubr.bf16.gmra.mrb[0].mxu0 %v638
        %v1047 = vpop.f32.mrb[0].mxu0
        %v1048 = vadd.f32 %v951, %v1047
        %v1049 = vpop.f32.mrb[0].mxu0
        %v1050 = vpop.f32.mrb[0].mxu0
        %v1051 = vadd.f32 %v954, %v1050
        %v1052 = vpop.f32.mrb[0].mxu0
        %1053 = vmatprep.mubr.bf16.mxu0 %v643
        %1054 = vmatmul.mubr.bf16.gmra.mrb[0].mxu0 %v642
        %v1055 = vpop.f32.mrb[0].mxu0
        %v1056 = vadd.f32 %v959, %v1055
        %v1057 = vpop.f32.mrb[0].mxu0
        %v1058 = vpop.f32.mrb[0].mxu0
        %v1059 = vadd.f32 %v962, %v1058
        %v1060 = vpop.f32.mrb[0].mxu0
        %1061 = vdwg.mxu0
        %v1062 = vadd.f32 %v404, %v1000
        %v1063 = vadd.f32 %v405, %v1003
        %v1064 = vadd.f32 %v406, %v1008
        %v1065 = vadd.f32 %v407, %v1011
        %v1066 = vadd.f32 %v408, %v1016
        %v1067 = vadd.f32 %v409, %v1019
        %v1068 = vadd.f32 %v410, %v1024
        %v1069 = vadd.f32 %v411, %v1027
        %v1070 = vadd.f32 %v412, %v1032
        %v1071 = vadd.f32 %v413, %v1035
        %v1072 = vadd.f32 %v414, %v1040
        %v1073 = vadd.f32 %v415, %v1043
        %v1074 = vadd.f32 %v416, %v1048
        %v1075 = vadd.f32 %v417, %v1051
        %v1076 = vadd.f32 %v418, %v1056
        %v1077 = vadd.f32 %v419, %v1059
        %1078 = vst [vmem:[#allocation2] sm:$0xff] %v1062
        %1079 = vst [vmem:[#allocation2 + $0x8] sm:$0xff] %v1063
        %1080 = vst [vmem:[#allocation2 + $0x10] sm:$0xff] %v1064
        %1081 = vst [vmem:[#allocation2 + $0x18] sm:$0xff] %v1065
        %1082 = vst [vmem:[#allocation2 + $0x20] sm:$0xff] %v1066
        %1083 = vst [vmem:[#allocation2 + $0x28] sm:$0xff] %v1067
        %1084 = vst [vmem:[#allocation2 + $0x30] sm:$0xff] %v1068
        %1085 = vst [vmem:[#allocation2 + $0x38] sm:$0xff] %v1069
        %1086 = vst [vmem:[#allocation2 + $0x40] sm:$0xff] %v1070
        %1087 = vst [vmem:[#allocation2 + $0x48] sm:$0xff] %v1071
        %1088 = vst [vmem:[#allocation2 + $0x50] sm:$0xff] %v1072
        %1089 = vst [vmem:[#allocation2 + $0x58] sm:$0xff] %v1073
        %1090 = vst [vmem:[#allocation2 + $0x60] sm:$0xff] %v1074
        %1091 = vst [vmem:[#allocation2 + $0x68] sm:$0xff] %v1075
        %1092 = vst [vmem:[#allocation2 + $0x70] sm:$0xff] %v1076
        %1093 = vst [vmem:[#allocation2 + $0x78] sm:$0xff] %v1077
        %p1094 = scmp.eq.s32.totalorder %s24, 1
        // Predicated region
        $region56: #{generator_forward.13} parent=46 // pred_check
          %p1095 = pneg %p1094
        $region57: #{generator_forward.13} parent=46 // pred_check_branch
          %1097 = sbr.rel (%p1095) target = $region59
        $region58: #{generator_forward.13} parent=46 // pred_region
          %v1098 = vld [vmem:[#allocation2] sm:$0xff]
          %v1099 = vld [vmem:[#allocation2 + $0x8] sm:$0xff]
          %v1100 = vld [vmem:[#allocation2 + $0x10] sm:$0xff]
          %v1101 = vld [vmem:[#allocation2 + $0x18] sm:$0xff]
          %v1102 = vld [vmem:[#allocation2 + $0x20] sm:$0xff]
          %v1103 = vld [vmem:[#allocation2 + $0x28] sm:$0xff]
          %v1104 = vld [vmem:[#allocation2 + $0x30] sm:$0xff]
          %v1105 = vld [vmem:[#allocation2 + $0x38] sm:$0xff]
          %v1106 = vld [vmem:[#allocation2 + $0x40] sm:$0xff]
          %v1107 = vld [vmem:[#allocation2 + $0x48] sm:$0xff]
          %v1108 = vld [vmem:[#allocation2 + $0x50] sm:$0xff]
          %v1109 = vld [vmem:[#allocation2 + $0x58] sm:$0xff]
          %v1110 = vld [vmem:[#allocation2 + $0x60] sm:$0xff]
          %v1111 = vld [vmem:[#allocation2 + $0x68] sm:$0xff]
          %v1112 = vld [vmem:[#allocation2 + $0x70] sm:$0xff]
          %v1113 = vld [vmem:[#allocation2 + $0x78] sm:$0xff]
          %1114 = vst [vmem:[%s371] sm:$0xff] %v1098
          %1115 = vst [vmem:[%s371 + $0x8] sm:$0xff] %v1099
          %1116 = vst [vmem:[%s371 + $0x10] sm:$0xff] %v1100
          %1117 = vst [vmem:[%s371 + $0x18] sm:$0xff] %v1101
          %1118 = vst [vmem:[%s371 + $0x20] sm:$0xff] %v1102
          %1119 = vst [vmem:[%s371 + $0x28] sm:$0xff] %v1103
          %1120 = vst [vmem:[%s371 + $0x30] sm:$0xff] %v1104
          %1121 = vst [vmem:[%s371 + $0x38] sm:$0xff] %v1105
          %1122 = vst [vmem:[%s371 + $0x40] sm:$0xff] %v1106
          %1123 = vst [vmem:[%s371 + $0x48] sm:$0xff] %v1107
          %1124 = vst [vmem:[%s371 + $0x50] sm:$0xff] %v1108
          %1125 = vst [vmem:[%s371 + $0x58] sm:$0xff] %v1109
          %1126 = vst [vmem:[%s371 + $0x60] sm:$0xff] %v1110
          %1127 = vst [vmem:[%s371 + $0x68] sm:$0xff] %v1111
          %1128 = vst [vmem:[%s371 + $0x70] sm:$0xff] %v1112
          %1129 = vst [vmem:[%s371 + $0x78] sm:$0xff] %v1113
          %v1130 = vadd.f32 %v1098, %v1099
          %v1131 = vadd.f32 %v1130, %v1100
          %v1132 = vadd.f32 %v1131, %v1101
          %v1133 = vadd.f32 %v1132, %v1102
          %v1134 = vadd.f32 %v1133, %v1103
          %v1135 = vadd.f32 %v1134, %v1104
          %v1136 = vadd.f32 %v1135, %v1105
          %v1137 = vadd.f32 %v1136, %v1106
          %v1138 = vadd.f32 %v1137, %v1107
          %v1139 = vadd.f32 %v1138, %v1108
          %v1140 = vadd.f32 %v1139, %v1109
          %v1141 = vadd.f32 %v1140, %v1110
          %v1142 = vadd.f32 %v1141, %v1111
          %v1143 = vadd.f32 %v1142, %v1112
          %v1144 = vadd.f32 %v1143, %v1113
          %v1145 = vrot.slane %v1144, 4
          %v1146 = vadd.f32 %v1144, %v1145
          %v1147 = vrot.slane %v1146, 2
          %v1148 = vadd.f32 %v1146, %v1147
          %v1149 = vrot.slane %v1148, 1
          %v1150 = vadd.f32 %v1148, %v1149
          %v1151 = vmul.f32 %v1098, %v1098
          %v1152 = vmul.f32 %v1099, %v1099
          %v1153 = vmul.f32 %v1100, %v1100
          %v1154 = vmul.f32 %v1101, %v1101
          %v1155 = vmul.f32 %v1102, %v1102
          %v1156 = vmul.f32 %v1103, %v1103
          %v1157 = vmul.f32 %v1104, %v1104
          %v1158 = vmul.f32 %v1105, %v1105
          %v1159 = vmul.f32 %v1106, %v1106
          %v1160 = vmul.f32 %v1107, %v1107
          %v1161 = vmul.f32 %v1108, %v1108
          %v1162 = vmul.f32 %v1109, %v1109
          %v1163 = vmul.f32 %v1110, %v1110
          %v1164 = vmul.f32 %v1111, %v1111
          %v1165 = vmul.f32 %v1112, %v1112
          %v1166 = vmul.f32 %v1113, %v1113
          %v1167 = vadd.f32 %v1151, %v1152
          %v1168 = vadd.f32 %v1167, %v1153
          %v1169 = vadd.f32 %v1168, %v1154
          %v1170 = vadd.f32 %v1169, %v1155
          %v1171 = vadd.f32 %v1170, %v1156
          %v1172 = vadd.f32 %v1171, %v1157
          %v1173 = vadd.f32 %v1172, %v1158
          %v1174 = vadd.f32 %v1173, %v1159
          %v1175 = vadd.f32 %v1174, %v1160
          %v1176 = vadd.f32 %v1175, %v1161
          %v1177 = vadd.f32 %v1176, %v1162
          %v1178 = vadd.f32 %v1177, %v1163
          %v1179 = vadd.f32 %v1178, %v1164
          %v1180 = vadd.f32 %v1179, %v1165
          %v1181 = vadd.f32 %v1180, %v1166
          %v1182 = vrot.slane %v1181, 4
          %v1183 = vadd.f32 %v1181, %v1182
          %v1184 = vrot.slane %v1183, 2
          %v1185 = vadd.f32 %v1183, %v1184
          %v1186 = vrot.slane %v1185, 1
          %v1187 = vadd.f32 %v1185, %v1186
          %v1188 = vlaneseq
          %v1189 = vshrl.u32 %v1188, 7
          %vm1190 = vcmp.eq.s32.totalorder %v1189, 0
          %vm1191 = vcmp.eq.s32.totalorder %v1189, 1
          %v1192 = vsel %vm1191, %v1187, 0.0
          %v1193 = vsel %vm1190, %v1150, %v1192
          %1194 = vst [vmem:[%s382] sm:$0xff] %v1193
        $region59: #{generator_forward.13} parent=46 // pred_fallthru
          _
        %s1195 = smul.u32 16, %s22
        %p1196 = scmp.lt.s32.totalorder %s21, 3
        %s1197 = scalar_select %p1196, %s21, 3
        %p1198 = scmp.lt.s32.totalorder %s1195, 15
        %s1199 = scalar_select %p1198, %s1195, 15
        %p1200 = scmp.lt.s32.totalorder %s23, 0
        %s1201 = scalar_select %p1200, %s23, 0
        %s1202 = sadd.s32 %s1201, %s1199
        %s1203 = smul.addr %s1197, 16
        %s1204 = sadd.s32 %s1202, %s1203
        %s1205 = smul.addr %s1204, 8
        %s1206 = scalar_lea.vmem %s2, %s1205
        %p1207 = scmp.lt.s32.totalorder %s21, 3
        %s1208 = scalar_select %p1207, %s21, 3
        %p1209 = scmp.lt.s32.totalorder %s22, 0
        %s1210 = scalar_select %p1209, %s22, 0
        %p1211 = scmp.lt.s32.totalorder %s23, 0
        %s1212 = scalar_select %p1211, %s23, 0
        %s1213 = sadd.s32 %s1212, %s1210
        %s1214 = sadd.s32 %s1213, %s1208
        %s1215 = smul.addr %s1214, 8
        %s1216 = scalar_lea.vmem %s3, %s1215
        // Predicated region
        $region60: #{generator_forward.13} parent=46 // pred_check
          %p1217 = pneg %p123
        $region61: #{generator_forward.13} parent=46 // pred_check_branch
          %1219 = sbr.rel (%p1217) target = $region63
        $region62: #{generator_forward.13} parent=46 // pred_region
          %s1220 = smul.u32 16, %s22
        $region63: #{generator_forward.13} parent=46 // pred_fallthru
          _
        // Predicated region
        $region64: #{generator_forward.13} parent=46 // pred_check
          %p1221 = pneg %p153
        $region65: #{generator_forward.13} parent=46 // pred_check_branch
          %1223 = sbr.rel (%p1221) target = $region67
        $region66: #{generator_forward.13} parent=46 // pred_region
          _
        $region67: #{generator_forward.13} parent=46 // pred_fallthru
          _
      $region47: #{generator_forward.13} parent=5 // pred_fallthru
        _
      %p1224 = scmp.le.s32.totalorder 2, %s10
      // Predicated region
      $region68: #{generator_forward.13} parent=5 // pred_check
        %p1225 = pneg %p1224
      $region69: #{generator_forward.13} parent=5 // pred_check_branch
        %1227 = sbr.rel (%p1225) target = $region71
      $region70: #{generator_forward.13} parent=5 // pred_region
        %s1228 = ssub.s32 %s10, 2
        // Predicated region
        $region72: #{generator_forward.13} parent=70 // pred_check
          %p1229 = pneg %p129
        $region73: #{generator_forward.13} parent=70 // pred_check_branch
          %1231 = sbr.rel (%p1229) target = $region75
        $region74: #{generator_forward.13} parent=70 // pred_region
          %s1232 = smul.u32 16, %s26
          %p1233 = scmp.lt.s32.totalorder %s25, 3
          %s1234 = scalar_select %p1233, %s25, 3
          %p1235 = scmp.lt.s32.totalorder %s1232, 15
          %s1236 = scalar_select %p1235, %s1232, 15
          %p1237 = scmp.lt.s32.totalorder %s27, 0
          %s1238 = scalar_select %p1237, %s27, 0
          %s1239 = sadd.s32 %s1238, %s1236
          %s1240 = smul.addr %s1234, 16
          %s1241 = sadd.s32 %s1239, %s1240
          %s1242 = smul.addr %s1241, 8
          %s1243 = scalar_lea.vmem %s2, %s1242
        $region75: #{generator_forward.13} parent=70 // pred_fallthru
          _
        // Predicated region
        $region76: #{generator_forward.13} parent=70 // pred_check
          %p1244 = pneg %p159
        $region77: #{generator_forward.13} parent=70 // pred_check_branch
          %1246 = sbr.rel (%p1244) target = $region79
        $region78: #{generator_forward.13} parent=70 // pred_region
          %p1247 = scmp.lt.s32.totalorder %s25, 3
          %s1248 = scalar_select %p1247, %s25, 3
          %p1249 = scmp.lt.s32.totalorder %s26, 0
          %s1250 = scalar_select %p1249, %s26, 0
          %p1251 = scmp.lt.s32.totalorder %s27, 0
          %s1252 = scalar_select %p1251, %s27, 0
          %s1253 = sadd.s32 %s1252, %s1250
          %s1254 = sadd.s32 %s1253, %s1248
          %s1255 = smul.addr %s1254, 8
          %s1256 = scalar_lea.vmem %s3, %s1255
        $region79: #{generator_forward.13} parent=70 // pred_fallthru
          _
      $region71: #{generator_forward.13} parent=5 // pred_fallthru
        _
    $region6: #{generator_forward.13} parent=1 // loop_footer
      %s14 = sadd.s32 1, %s10
    $region7: #{generator_forward.13} parent=1 // loop_footer_branch
      %9 = sbr.rel target = $region3
    $region8: #{generator_forward.13} parent=1 // loop_exit
      _

// kernel: generator_forward.14
$region0: #{generator_forward.14}
  #allocation0 [shape = 'u32[]', space=smem, size = 0x4, offset = 0x4, fixed_abs, tag = 'smem constant byte address 0x4 - core index']
  #allocation1 [shape = 'u32[144,128]{1,0:T(1,128)}', space=vmem, size = 0x12000, scoped, tag = 'internal scratch']
  %s0 = inlined_call_operand.vmem [shape: f32[512,128], index: 0, kind: input, shape index: {}]
  %s1 = inlined_call_operand.vmem [shape: f32[1,128], index: 1, kind: input, shape index: {}]
  %s2 = inlined_call_operand.vmem [shape: f32[1,128], index: 2, kind: input, shape index: {}]
  %s3 = inlined_call_operand.vmem [shape: f32[512,128], index: 3, kind: output, shape index: {}]
  %s4 = sld [smem:[#allocation0]]
  $region22: #{generator_forward.14} parent=0
    _
  %s6 = ssub.s32 1, %s4
  %s7 = scalar_select 0, %s6, %s4
  // Predicated region
  $region2: #{generator_forward.14} parent=0 // pred_check
    _
  $region3: #{generator_forward.14} parent=0 // pred_check_branch
    %9 = sbr.rel (0) target = $region5
  $region4: #{generator_forward.14} parent=0 // pred_region
    _
  $region5: #{generator_forward.14} parent=0 // pred_fallthru
    _
  // Predicated region
  $region6: #{generator_forward.14} parent=0 // pred_check
    _
  $region7: #{generator_forward.14} parent=0 // pred_check_branch
    %11 = sbr.rel (0) target = $region9
  $region8: #{generator_forward.14} parent=0 // pred_region
    _
  $region9: #{generator_forward.14} parent=0 // pred_fallthru
    _
  // Predicated region
  $region10: #{generator_forward.14} parent=0 // pred_check
    _
  $region11: #{generator_forward.14} parent=0 // pred_check_branch
    %13 = sbr.rel (0) target = $region13
  $region12: #{generator_forward.14} parent=0 // pred_region
    _
  $region13: #{generator_forward.14} parent=0 // pred_fallthru
    _
  %v14 = vld [vmem:[%s0] sm:$0xff]
  %v15 = vld [vmem:[%s0 + $0x8] sm:$0xff]
  %v16 = vld [vmem:[%s0 + $0x10] sm:$0xff]
  %v17 = vld [vmem:[%s0 + $0x18] sm:$0xff]
  %v18 = vld [vmem:[%s0 + $0x20] sm:$0xff]
  %v19 = vld [vmem:[%s0 + $0x28] sm:$0xff]
  %v20 = vld [vmem:[%s0 + $0x30] sm:$0xff]
  %v21 = vld [vmem:[%s0 + $0x38] sm:$0xff]
  %v22 = vld [vmem:[%s0 + $0x40] sm:$0xff]
  %v23 = vld [vmem:[%s0 + $0x48] sm:$0xff]
  %v24 = vld [vmem:[%s0 + $0x50] sm:$0xff]
  %v25 = vld [vmem:[%s0 + $0x58] sm:$0xff]
  %v26 = vld [vmem:[%s0 + $0x60] sm:$0xff]
  %v27 = vld [vmem:[%s0 + $0x68] sm:$0xff]
  %v28 = vld [vmem:[%s0 + $0x70] sm:$0xff]
  %v29 = vld [vmem:[%s0 + $0x78] sm:$0xff]
  %v30 = vld [vmem:[%s0 + $0x80] sm:$0xff]
  %v31 = vld [vmem:[%s0 + $0x88] sm:$0xff]
  %v32 = vld [vmem:[%s0 + $0x90] sm:$0xff]
  %v33 = vld [vmem:[%s0 + $0x98] sm:$0xff]
  %v34 = vld [vmem:[%s0 + $0xa0] sm:$0xff]
  %v35 = vld [vmem:[%s0 + $0xa8] sm:$0xff]
  %v36 = vld [vmem:[%s0 + $0xb0] sm:$0xff]
  %v37 = vld [vmem:[%s0 + $0xb8] sm:$0xff]
  %v38 = vld [vmem:[%s0 + $0xc0] sm:$0xff]
  %v39 = vld [vmem:[%s0 + $0xc8] sm:$0xff]
  %v40 = vld [vmem:[%s0 + $0xd0] sm:$0xff]
  %v41 = vld [vmem:[%s0 + $0xd8] sm:$0xff]
  %v42 = vld [vmem:[%s0 + $0xe0] sm:$0xff]
  %v43 = vld [vmem:[%s0 + $0xe8] sm:$0xff]
  %v44 = vld [vmem:[%s0 + $0xf0] sm:$0xff]
  %v45 = vld [vmem:[%s0 + $0xf8] sm:$0xff]
  %v46 = vld [vmem:[%s0 + $0x100] sm:$0xff]
  %v47 = vld [vmem:[%s0 + $0x108] sm:$0xff]
  %v48 = vld [vmem:[%s0 + $0x110] sm:$0xff]
  %v49 = vld [vmem:[%s0 + $0x118] sm:$0xff]
  %v50 = vld [vmem:[%s0 + $0x120] sm:$0xff]
  %v51 = vld [vmem:[%s0 + $0x128] sm:$0xff]
  %v52 = vld [vmem:[%s0 + $0x130] sm:$0xff]
  %v53 = vld [vmem:[%s0 + $0x138] sm:$0xff]
  %v54 = vld [vmem:[%s0 + $0x140] sm:$0xff]
  %v55 = vld [vmem:[%s0 + $0x148] sm:$0xff]
  %v56 = vld [vmem:[%s0 + $0x150] sm:$0xff]
  %v57 = vld [vmem:[%s0 + $0x158] sm:$0xff]
  %v58 = vld [vmem:[%s0 + $0x160] sm:$0xff]
  %v59 = vld [vmem:[%s0 + $0x168] sm:$0xff]
  %v60 = vld [vmem:[%s0 + $0x170] sm:$0xff]
  %v61 = vld [vmem:[%s0 + $0x178] sm:$0xff]
  %v62 = vld [vmem:[%s0 + $0x180] sm:$0xff]
  %v63 = vld [vmem:[%s0 + $0x188] sm:$0xff]
  %v64 = vld [vmem:[%s0 + $0x190] sm:$0xff]
  %v65 = vld [vmem:[%s0 + $0x198] sm:$0xff]
  %v66 = vld [vmem:[%s0 + $0x1a0] sm:$0xff]
  %v67 = vld [vmem:[%s0 + $0x1a8] sm:$0xff]
  %v68 = vld [vmem:[%s0 + $0x1b0] sm:$0xff]
  %v69 = vld [vmem:[%s0 + $0x1b8] sm:$0xff]
  %v70 = vld [vmem:[%s0 + $0x1c0] sm:$0xff]
  %v71 = vld [vmem:[%s0 + $0x1c8] sm:$0xff]
  %v72 = vld [vmem:[%s0 + $0x1d0] sm:$0xff]
  %v73 = vld [vmem:[%s0 + $0x1d8] sm:$0xff]
  %v74 = vld [vmem:[%s0 + $0x1e0] sm:$0xff]
  %v75 = vld [vmem:[%s0 + $0x1e8] sm:$0xff]
  %v76 = vld [vmem:[%s0 + $0x1f0] sm:$0xff]
  %v77 = vld [vmem:[%s0 + $0x1f8] sm:$0xff]
  %v78 = vld [vmem:[%s1] sm:$0x1]
  %v80 = vlaneseq
  %v81 = vshrl.u32 %v80, 7
  %v82 = vsub.s32 0, %v81
  %v83 = vrot.slane %v78, %v82
  %v85 = vmul.f32 %v14, %v83
  %v86 = vmul.f32 %v15, %v83
  %v87 = vmul.f32 %v16, %v83
  %v88 = vmul.f32 %v17, %v83
  %v89 = vmul.f32 %v18, %v83
  %v90 = vmul.f32 %v19, %v83
  %v91 = vmul.f32 %v20, %v83
  %v92 = vmul.f32 %v21, %v83
  %v93 = vmul.f32 %v22, %v83
  %v94 = vmul.f32 %v23, %v83
  %v95 = vmul.f32 %v24, %v83
  %v96 = vmul.f32 %v25, %v83
  %v97 = vmul.f32 %v26, %v83
  %v98 = vmul.f32 %v27, %v83
  %v99 = vmul.f32 %v28, %v83
  %v100 = vmul.f32 %v29, %v83
  %v101 = vmul.f32 %v30, %v83
  %v102 = vmul.f32 %v31, %v83
  %v103 = vmul.f32 %v32, %v83
  %v104 = vmul.f32 %v33, %v83
  %v105 = vmul.f32 %v34, %v83
  %v106 = vmul.f32 %v35, %v83
  %v107 = vmul.f32 %v36, %v83
  %v108 = vmul.f32 %v37, %v83
  %v109 = vmul.f32 %v38, %v83
  %v110 = vmul.f32 %v39, %v83
  %v111 = vmul.f32 %v40, %v83
  %v112 = vmul.f32 %v41, %v83
  %v113 = vmul.f32 %v42, %v83
  %v114 = vmul.f32 %v43, %v83
  %v115 = vmul.f32 %v44, %v83
  %v116 = vmul.f32 %v45, %v83
  %v117 = vmul.f32 %v46, %v83
  %v118 = vmul.f32 %v47, %v83
  %v119 = vmul.f32 %v48, %v83
  %v120 = vmul.f32 %v49, %v83
  %v121 = vmul.f32 %v50, %v83
  %v122 = vmul.f32 %v51, %v83
  %v123 = vmul.f32 %v52, %v83
  %v124 = vmul.f32 %v53, %v83
  %v125 = vmul.f32 %v54, %v83
  %v126 = vmul.f32 %v55, %v83
  %v127 = vmul.f32 %v56, %v83
  %v128 = vmul.f32 %v57, %v83
  %v129 = vmul.f32 %v58, %v83
  %v130 = vmul.f32 %v59, %v83
  %v131 = vmul.f32 %v60, %v83
  %v132 = vmul.f32 %v61, %v83
  %v133 = vmul.f32 %v62, %v83
  %v134 = vmul.f32 %v63, %v83
  %v135 = vmul.f32 %v64, %v83
  %v136 = vmul.f32 %v65, %v83
  %v137 = vmul.f32 %v66, %v83
  %v138 = vmul.f32 %v67, %v83
  %v139 = vmul.f32 %v68, %v83
  %v140 = vmul.f32 %v69, %v83
  %v141 = vmul.f32 %v70, %v83
  %v142 = vmul.f32 %v71, %v83
  %v143 = vmul.f32 %v72, %v83
  %v144 = vmul.f32 %v73, %v83
  %v145 = vmul.f32 %v74, %v83
  %v146 = vmul.f32 %v75, %v83
  %v147 = vmul.f32 %v76, %v83
  %v148 = vmul.f32 %v77, %v83
  %v149 = vld [vmem:[%s2] sm:$0x1]
  %v151 = vlaneseq
  %v152 = vshrl.u32 %v151, 7
  %v153 = vsub.s32 0, %v152
  %v154 = vrot.slane %v149, %v153
  %v156 = vadd.f32 %v85, %v154
  %v157 = vadd.f32 %v86, %v154
  %v158 = vadd.f32 %v87, %v154
  %v159 = vadd.f32 %v88, %v154
  %v160 = vadd.f32 %v89, %v154
  %v161 = vadd.f32 %v90, %v154
  %v162 = vadd.f32 %v91, %v154
  %v163 = vadd.f32 %v92, %v154
  %v164 = vadd.f32 %v93, %v154
  %v165 = vadd.f32 %v94, %v154
  %v166 = vadd.f32 %v95, %v154
  %v167 = vadd.f32 %v96, %v154
  %v168 = vadd.f32 %v97, %v154
  %v169 = vadd.f32 %v98, %v154
  %v170 = vadd.f32 %v99, %v154
  %v171 = vadd.f32 %v100, %v154
  %v172 = vadd.f32 %v101, %v154
  %v173 = vadd.f32 %v102, %v154
  %v174 = vadd.f32 %v103, %v154
  %v175 = vadd.f32 %v104, %v154
  %v176 = vadd.f32 %v105, %v154
  %v177 = vadd.f32 %v106, %v154
  %v178 = vadd.f32 %v107, %v154
  %v179 = vadd.f32 %v108, %v154
  %v180 = vadd.f32 %v109, %v154
  %v181 = vadd.f32 %v110, %v154
  %v182 = vadd.f32 %v111, %v154
  %v183 = vadd.f32 %v112, %v154
  %v184 = vadd.f32 %v113, %v154
  %v185 = vadd.f32 %v114, %v154
  %v186 = vadd.f32 %v115, %v154
  %v187 = vadd.f32 %v116, %v154
  %v188 = vadd.f32 %v117, %v154
  %v189 = vadd.f32 %v118, %v154
  %v190 = vadd.f32 %v119, %v154
  %v191 = vadd.f32 %v120, %v154
  %v192 = vadd.f32 %v121, %v154
  %v193 = vadd.f32 %v122, %v154
  %v194 = vadd.f32 %v123, %v154
  %v195 = vadd.f32 %v124, %v154
  %v196 = vadd.f32 %v125, %v154
  %v197 = vadd.f32 %v126, %v154
  %v198 = vadd.f32 %v127, %v154
  %v199 = vadd.f32 %v128, %v154
  %v200 = vadd.f32 %v129, %v154
  %v201 = vadd.f32 %v130, %v154
  %v202 = vadd.f32 %v131, %v154
  %v203 = vadd.f32 %v132, %v154
  %v204 = vadd.f32 %v133, %v154
  %v205 = vadd.f32 %v134, %v154
  %v206 = vadd.f32 %v135, %v154
  %v207 = vadd.f32 %v136, %v154
  %v208 = vadd.f32 %v137, %v154
  %v209 = vadd.f32 %v138, %v154
  %v210 = vadd.f32 %v139, %v154
  %v211 = vadd.f32 %v140, %v154
  %v212 = vadd.f32 %v141, %v154
  %v213 = vadd.f32 %v142, %v154
  %v214 = vadd.f32 %v143, %v154
  %v215 = vadd.f32 %v144, %v154
  %v216 = vadd.f32 %v145, %v154
  %v217 = vadd.f32 %v146, %v154
  %v218 = vadd.f32 %v147, %v154
  %v219 = vadd.f32 %v148, %v154
  %v220 = vmax.f32 %v156, 0.0
  %v221 = vmax.f32 %v157, 0.0
  %v222 = vmax.f32 %v158, 0.0
  %v223 = vmax.f32 %v159, 0.0
  %v224 = vmax.f32 %v160, 0.0
  %v225 = vmax.f32 %v161, 0.0
  %v226 = vmax.f32 %v162, 0.0
  %v227 = vmax.f32 %v163, 0.0
  %v228 = vmax.f32 %v164, 0.0
  %v229 = vmax.f32 %v165, 0.0
  %v230 = vmax.f32 %v166, 0.0
  %v231 = vmax.f32 %v167, 0.0
  %v232 = vmax.f32 %v168, 0.0
  %v233 = vmax.f32 %v169, 0.0
  %v234 = vmax.f32 %v170, 0.0
  %v235 = vmax.f32 %v171, 0.0
  %v236 = vmax.f32 %v172, 0.0
  %v237 = vmax.f32 %v173, 0.0
  %v238 = vmax.f32 %v174, 0.0
  %v239 = vmax.f32 %v175, 0.0
  %v240 = vmax.f32 %v176, 0.0
  %v241 = vmax.f32 %v177, 0.0
  %v242 = vmax.f32 %v178, 0.0
  %v243 = vmax.f32 %v179, 0.0
  %v244 = vmax.f32 %v180, 0.0
  %v245 = vmax.f32 %v181, 0.0
  %v246 = vmax.f32 %v182, 0.0
  %v247 = vmax.f32 %v183, 0.0
  %v248 = vmax.f32 %v184, 0.0
  %v249 = vmax.f32 %v185, 0.0
  %v250 = vmax.f32 %v186, 0.0
  %v251 = vmax.f32 %v187, 0.0
  %v252 = vmax.f32 %v188, 0.0
  %v253 = vmax.f32 %v189, 0.0
  %v254 = vmax.f32 %v190, 0.0
  %v255 = vmax.f32 %v191, 0.0
  %v256 = vmax.f32 %v192, 0.0
  %v257 = vmax.f32 %v193, 0.0
  %v258 = vmax.f32 %v194, 0.0
  %v259 = vmax.f32 %v195, 0.0
  %v260 = vmax.f32 %v196, 0.0
  %v261 = vmax.f32 %v197, 0.0
  %v262 = vmax.f32 %v198, 0.0
  %v263 = vmax.f32 %v199, 0.0
  %v264 = vmax.f32 %v200, 0.0
  %v265 = vmax.f32 %v201, 0.0
  %v266 = vmax.f32 %v202, 0.0
  %v267 = vmax.f32 %v203, 0.0
  %v268 = vmax.f32 %v204, 0.0
  %v269 = vmax.f32 %v205, 0.0
  %v270 = vmax.f32 %v206, 0.0
  %v271 = vmax.f32 %v207, 0.0
  %v272 = vmax.f32 %v208, 0.0
  %v273 = vmax.f32 %v209, 0.0
  %v274 = vmax.f32 %v210, 0.0
  %v275 = vmax.f32 %v211, 0.0
  %v276 = vmax.f32 %v212, 0.0
  %v277 = vmax.f32 %v213, 0.0
  %v278 = vmax.f32 %v214, 0.0
  %v279 = vmax.f32 %v215, 0.0
  %v280 = vmax.f32 %v216, 0.0
  %v281 = vmax.f32 %v217, 0.0
  %v282 = vmax.f32 %v218, 0.0
  %v283 = vmax.f32 %v219, 0.0
  %284 = vst [vmem:[%s3] sm:$0xff] %v220
  %285 = vst [vmem:[%s3 + $0x8] sm:$0xff] %v221
  %286 = vst [vmem:[%s3 + $0x10] sm:$0xff] %v222
  %287 = vst [vmem:[%s3 + $0x18] sm:$0xff] %v223
  %288 = vst [vmem:[%s3 + $0x20] sm:$0xff] %v224
  %289 = vst [vmem:[%s3 + $0x28] sm:$0xff] %v225
  %290 = vst [vmem:[%s3 + $0x30] sm:$0xff] %v226
  %291 = vst [vmem:[%s3 + $0x38] sm:$0xff] %v227
  %292 = vst [vmem:[%s3 + $0x40] sm:$0xff] %v228
  %293 = vst [vmem:[%s3 + $0x48] sm:$0xff] %v229
  %294 = vst [vmem:[%s3 + $0x50] sm:$0xff] %v230
  %295 = vst [vmem:[%s3 + $0x58] sm:$0xff] %v231
  %296 = vst [vmem:[%s3 + $0x60] sm:$0xff] %v232
  %297 = vst [vmem:[%s3 + $0x68] sm:$0xff] %v233
  %298 = vst [vmem:[%s3 + $0x70] sm:$0xff] %v234
  %299 = vst [vmem:[%s3 + $0x78] sm:$0xff] %v235
  %300 = vst [vmem:[%s3 + $0x80] sm:$0xff] %v236
  %301 = vst [vmem:[%s3 + $0x88] sm:$0xff] %v237
  %302 = vst [vmem:[%s3 + $0x90] sm:$0xff] %v238
  %303 = vst [vmem:[%s3 + $0x98] sm:$0xff] %v239
  %304 = vst [vmem:[%s3 + $0xa0] sm:$0xff] %v240
  %305 = vst [vmem:[%s3 + $0xa8] sm:$0xff] %v241
  %306 = vst [vmem:[%s3 + $0xb0] sm:$0xff] %v242
  %307 = vst [vmem:[%s3 + $0xb8] sm:$0xff] %v243
  %308 = vst [vmem:[%s3 + $0xc0] sm:$0xff] %v244
  %309 = vst [vmem:[%s3 + $0xc8] sm:$0xff] %v245
  %310 = vst [vmem:[%s3 + $0xd0] sm:$0xff] %v246
  %311 = vst [vmem:[%s3 + $0xd8] sm:$0xff] %v247
  %312 = vst [vmem:[%s3 + $0xe0] sm:$0xff] %v248
  %313 = vst [vmem:[%s3 + $0xe8] sm:$0xff] %v249
  %314 = vst [vmem:[%s3 + $0xf0] sm:$0xff] %v250
  %315 = vst [vmem:[%s3 + $0xf8] sm:$0xff] %v251
  %316 = vst [vmem:[%s3 + $0x100] sm:$0xff] %v252
  %317 = vst [vmem:[%s3 + $0x108] sm:$0xff] %v253
  %318 = vst [vmem:[%s3 + $0x110] sm:$0xff] %v254
  %319 = vst [vmem:[%s3 + $0x118] sm:$0xff] %v255
  %320 = vst [vmem:[%s3 + $0x120] sm:$0xff] %v256
  %321 = vst [vmem:[%s3 + $0x128] sm:$0xff] %v257
  %322 = vst [vmem:[%s3 + $0x130] sm:$0xff] %v258
  %323 = vst [vmem:[%s3 + $0x138] sm:$0xff] %v259
  %324 = vst [vmem:[%s3 + $0x140] sm:$0xff] %v260
  %325 = vst [vmem:[%s3 + $0x148] sm:$0xff] %v261
  %326 = vst [vmem:[%s3 + $0x150] sm:$0xff] %v262
  %327 = vst [vmem:[%s3 + $0x158] sm:$0xff] %v263
  %328 = vst [vmem:[%s3 + $0x160] sm:$0xff] %v264
  %329 = vst [vmem:[%s3 + $0x168] sm:$0xff] %v265
  %330 = vst [vmem:[%s3 + $0x170] sm:$0xff] %v266
  %331 = vst [vmem:[%s3 + $0x178] sm:$0xff] %v267
  %332 = vst [vmem:[%s3 + $0x180] sm:$0xff] %v268
  %333 = vst [vmem:[%s3 + $0x188] sm:$0xff] %v269
  %334 = vst [vmem:[%s3 + $0x190] sm:$0xff] %v270
  %335 = vst [vmem:[%s3 + $0x198] sm:$0xff] %v271
  %336 = vst [vmem:[%s3 + $0x1a0] sm:$0xff] %v272
  %337 = vst [vmem:[%s3 + $0x1a8] sm:$0xff] %v273
  %338 = vst [vmem:[%s3 + $0x1b0] sm:$0xff] %v274
  %339 = vst [vmem:[%s3 + $0x1b8] sm:$0xff] %v275
  %340 = vst [vmem:[%s3 + $0x1c0] sm:$0xff] %v276
  %341 = vst [vmem:[%s3 + $0x1c8] sm:$0xff] %v277
  %342 = vst [vmem:[%s3 + $0x1d0] sm:$0xff] %v278
  %343 = vst [vmem:[%s3 + $0x1d8] sm:$0xff] %v279
  %344 = vst [vmem:[%s3 + $0x1e0] sm:$0xff] %v280
  %345 = vst [vmem:[%s3 + $0x1e8] sm:$0xff] %v281
  %346 = vst [vmem:[%s3 + $0x1f0] sm:$0xff] %v282
  %347 = vst [vmem:[%s3 + $0x1f8] sm:$0xff] %v283
  // Predicated region
  $region14: #{generator_forward.14} parent=0 // pred_check
    _
  $region15: #{generator_forward.14} parent=0 // pred_check_branch
    %349 = sbr.rel (0) target = $region17
  $region16: #{generator_forward.14} parent=0 // pred_region
    _
  $region17: #{generator_forward.14} parent=0 // pred_fallthru
    _
  // Predicated region
  $region18: #{generator_forward.14} parent=0 // pred_check
    _
  $region19: #{generator_forward.14} parent=0 // pred_check_branch
    %351 = sbr.rel (0) target = $region21
  $region20: #{generator_forward.14} parent=0 // pred_region
    _
  $region21: #{generator_forward.14} parent=0 // pred_fallthru
    _

// kernel: generator_forward.15
$region0: #{generator_forward.15}
  #allocation0 [shape = 'u32[]', space=smem, size = 0x4, offset = 0x4, fixed_abs, tag = 'smem constant byte address 0x4 - core index']
  #allocation1 [shape = 'u32[144,128]{1,0:T(1,128)}', space=vmem, size = 0x12000, scoped, tag = 'internal scratch']
  #allocation2 [shape = 'f32[512,128]{1,0:T(8,128)}', space=vmem, size = 0x40000, scoped, tag = 'scratch operand']
  %s0 = inlined_call_operand.vmem [shape: bf16[4,512,512], index: 0, kind: input, shape index: {}]
  %s1 = inlined_call_operand.vmem [shape: bf16[4,512,128], index: 1, kind: input, shape index: {}]
  %s2 = inlined_call_operand.vmem [shape: f32[4,512,128], index: 2, kind: output, shape index: {0}]
  %s3 = inlined_call_operand.vmem [shape: f32[4,8,128], index: 3, kind: output, shape index: {1}]
  %4 = xla_tuple %s2, %s3
  %s5 = sld [smem:[#allocation0]]
  $region57: #{generator_forward.15} parent=0
    _
  %s7 = ssub.s32 1, %s5
  %s8 = scalar_select 0, %s7, %s5
  loop: start=0, step=1, limit=6
  $region2: #{generator_forward.15} parent=0 // loop_pre_header
    _
  $region3: #{generator_forward.15} parent=0 // loop_header
    %s10 = sphi 0, %s14
    %p11 = scmp.ge.s32.totalorder %s10, 6
    %s17 = sphi 0, %s43
    %s18 = sphi 0, %s39
    %s19 = sphi 0, %s35
    %s20 = sphi 0, %s31
    %s21 = sphi 0, %s17
    %s22 = sphi 0, %s18
    %s23 = sphi 0, %s19
    %s24 = sphi 0, %s20
    %s25 = sphi 0, %s21
    %s26 = sphi 0, %s22
    %s27 = sphi 0, %s23
    %s28 = sphi 0, %s24
    %s50 = sphi 0, %s52
    %s53 = sphi 0, %s50
    %s54 = sphi 0, %s53
    %s70 = sphi 0, %s54
    %s80 = sphi 0, %s82
    %s83 = sphi 0, %s80
    %s84 = sphi 0, %s83
    %s100 = sphi 0, %s84
    %s110 = sphi 0, %s112
    %s113 = sphi 0, %s110
    %s114 = sphi 0, %s113
    %s130 = sphi 0, %s114
    %s140 = sphi 0, %s142
    %s143 = sphi 0, %s140
    %s144 = sphi 0, %s143
    %s160 = sphi 0, %s144
  $region4: #{generator_forward.15} parent=0 // loop_header_branch
    %13 = sbr.rel (%p11) target = $region8
  $region5: #{generator_forward.15} parent=0 // loop_body
    %s15 = ssub.s32 %s10, 1
    %s16 = ssub.s32 %s10, 2
    %s29 = sadd.s32 1, %s20
    %p30 = scmp.ge.s32.totalorder %s29, 1
    %s31 = scalar_select %p30, 0, %s29
    %s32 = sadd.s32 1, %s19
    %s33 = scalar_select %p30, %s32, %s19
    %p34 = scmp.ge.s32.totalorder %s33, 1
    %s35 = scalar_select %p34, 0, %s33
    %s36 = sadd.s32 1, %s18
    %s37 = scalar_select %p34, %s36, %s18
    %p38 = scmp.ge.s32.totalorder %s37, 1
    %s39 = scalar_select %p38, 0, %s37
    %s40 = sadd.s32 1, %s17
    %s41 = scalar_select %p38, %s40, %s17
    %p42 = scmp.ge.s32.totalorder %s41, 4
    %s43 = scalar_select %p42, 0, %s41
    %s44 = ssub.s32 %s17, %s43
    %s45 = ssub.s32 %s18, %s39
    %s46 = sor.u32 %s44, %s45
    %s47 = ssub.s32 %s20, %s31
    %s48 = sor.u32 %s46, %s47
    %p49 = scmp.eq.s32.totalorder %s48, 0
    %s51 = sadd.s32 %s50, 1
    %s52 = scalar_select %p49, %s50, %s51
    %p55 = pneg %p49
    %p56 = scmp.eq.s32.totalorder %s10, 3
    %p57 = por %p55, %p56
    %p58 = scmp.ne.s32.totalorder %s50, %s53
    %p59 = scmp.eq.s32.totalorder %s10, 0
    %p60 = por %p58, %p59
    %p61 = scmp.ne.s32.totalorder %s50, %s53
    %p62 = scmp.eq.s32.totalorder %s15, 3
    %p63 = por %p61, %p62
    %p64 = scmp.ne.s32.totalorder %s53, %s54
    %p65 = scmp.eq.s32.totalorder %s15, 0
    %p66 = por %p64, %p65
    %p67 = scmp.ne.s32.totalorder %s53, %s54
    %p68 = scmp.eq.s32.totalorder %s16, 3
    %p69 = por %p67, %p68
    %p71 = scmp.ne.s32.totalorder %s54, %s70
    %p72 = scmp.eq.s32.totalorder %s16, 0
    %p73 = por %p71, %p72
    %s74 = ssub.s32 %s17, %s43
    %s75 = ssub.s32 %s20, %s31
    %s76 = sor.u32 %s74, %s75
    %s77 = ssub.s32 %s19, %s35
    %s78 = sor.u32 %s76, %s77
    %p79 = scmp.eq.s32.totalorder %s78, 0
    %s81 = sadd.s32 %s80, 1
    %s82 = scalar_select %p79, %s80, %s81
    %p85 = pneg %p79
    %p86 = scmp.eq.s32.totalorder %s10, 3
    %p87 = por %p85, %p86
    %p88 = scmp.ne.s32.totalorder %s80, %s83
    %p89 = scmp.eq.s32.totalorder %s10, 0
    %p90 = por %p88, %p89
    %p91 = scmp.ne.s32.totalorder %s80, %s83
    %p92 = scmp.eq.s32.totalorder %s15, 3
    %p93 = por %p91, %p92
    %p94 = scmp.ne.s32.totalorder %s83, %s84
    %p95 = scmp.eq.s32.totalorder %s15, 0
    %p96 = por %p94, %p95
    %p97 = scmp.ne.s32.totalorder %s83, %s84
    %p98 = scmp.eq.s32.totalorder %s16, 3
    %p99 = por %p97, %p98
    %p101 = scmp.ne.s32.totalorder %s84, %s100
    %p102 = scmp.eq.s32.totalorder %s16, 0
    %p103 = por %p101, %p102
    %s104 = ssub.s32 %s17, %s43
    %s105 = ssub.s32 %s18, %s39
    %s106 = sor.u32 %s104, %s105
    %s107 = ssub.s32 %s19, %s35
    %s108 = sor.u32 %s106, %s107
    %p109 = scmp.eq.s32.totalorder %s108, 0
    %s111 = sadd.s32 %s110, 1
    %s112 = scalar_select %p109, %s110, %s111
    %p115 = pneg %p109
    %p116 = scmp.eq.s32.totalorder %s10, 3
    %p117 = por %p115, %p116
    %p118 = scmp.ne.s32.totalorder %s110, %s113
    %p119 = scmp.eq.s32.totalorder %s10, 0
    %p120 = por %p118, %p119
    %p121 = scmp.ne.s32.totalorder %s110, %s113
    %p122 = scmp.eq.s32.totalorder %s15, 3
    %p123 = por %p121, %p122
    %p124 = scmp.ne.s32.totalorder %s113, %s114
    %p125 = scmp.eq.s32.totalorder %s15, 0
    %p126 = por %p124, %p125
    %p127 = scmp.ne.s32.totalorder %s113, %s114
    %p128 = scmp.eq.s32.totalorder %s16, 3
    %p129 = por %p127, %p128
    %p131 = scmp.ne.s32.totalorder %s114, %s130
    %p132 = scmp.eq.s32.totalorder %s16, 0
    %p133 = por %p131, %p132
    %s134 = ssub.s32 %s17, %s43
    %s135 = ssub.s32 %s18, %s39
    %s136 = sor.u32 %s134, %s135
    %s137 = ssub.s32 %s19, %s35
    %s138 = sor.u32 %s136, %s137
    %p139 = scmp.eq.s32.totalorder %s138, 0
    %s141 = sadd.s32 %s140, 1
    %s142 = scalar_select %p139, %s140, %s141
    %p145 = pneg %p139
    %p146 = scmp.eq.s32.totalorder %s10, 3
    %p147 = por %p145, %p146
    %p148 = scmp.ne.s32.totalorder %s140, %s143
    %p149 = scmp.eq.s32.totalorder %s10, 0
    %p150 = por %p148, %p149
    %p151 = scmp.ne.s32.totalorder %s140, %s143
    %p152 = scmp.eq.s32.totalorder %s15, 3
    %p153 = por %p151, %p152
    %p154 = scmp.ne.s32.totalorder %s143, %s144
    %p155 = scmp.eq.s32.totalorder %s15, 0
    %p156 = por %p154, %p155
    %p157 = scmp.ne.s32.totalorder %s143, %s144
    %p158 = scmp.eq.s32.totalorder %s16, 3
    %p159 = por %p157, %p158
    %p161 = scmp.ne.s32.totalorder %s144, %s160
    %p162 = scmp.eq.s32.totalorder %s16, 0
    %p163 = por %p161, %p162
    %p164 = scmp.le.s32.totalorder 1, %s10
    %p165 = scmp.lt.s32.totalorder %s10, 5
    %p166 = pnand %p164, %p165
    %p167 = pneg %p166
    // Predicated region
    $region9: #{generator_forward.15} parent=5 // pred_check
      _
    $region10: #{generator_forward.15} parent=5 // pred_check_branch
      %169 = sbr.rel (%p166) target = $region12
    $region11: #{generator_forward.15} parent=5 // pred_region
      %s170 = ssub.s32 %s10, 1
    $region12: #{generator_forward.15} parent=5 // pred_fallthru
      _
    %p171 = scmp.lt.s32.totalorder %s10, 4
    // Predicated region
    $region13: #{generator_forward.15} parent=5 // pred_check
      %p172 = pneg %p171
    $region14: #{generator_forward.15} parent=5 // pred_check_branch
      %174 = sbr.rel (%p172) target = $region16
    $region15: #{generator_forward.15} parent=5 // pred_region
      // Predicated region
      $region17: #{generator_forward.15} parent=15 // pred_check
        %p175 = pneg %p60
      $region18: #{generator_forward.15} parent=15 // pred_check_branch
        %177 = sbr.rel (%p175) target = $region20
      $region19: #{generator_forward.15} parent=15 // pred_region
        %s178 = smul.u32 64, %s18
        %s179 = smul.u32 4, %s20
        %p180 = scmp.lt.s32.totalorder %s17, 3
        %s181 = scalar_select %p180, %s17, 3
        %p182 = scmp.lt.s32.totalorder %s178, 63
        %s183 = scalar_select %p182, %s178, 63
        %p184 = scmp.lt.s32.totalorder %s179, 3
        %s185 = scalar_select %p184, %s179, 3
        %s186 = smul.addr %s183, 4
        %s187 = sadd.s32 %s185, %s186
        %s188 = smul.addr %s181, 256
        %s189 = sadd.s32 %s187, %s188
        %s190 = smul.addr %s189, 4
        %s191 = scalar_lea.vmem %s0, %s190
        %s192 = smul.u32 64, %s18
        %s193 = smul.u32 4, %s20
      $region20: #{generator_forward.15} parent=15 // pred_fallthru
        _
      // Predicated region
      $region21: #{generator_forward.15} parent=15 // pred_check
        %p194 = pneg %p90
      $region22: #{generator_forward.15} parent=15 // pred_check_branch
        %196 = sbr.rel (%p194) target = $region24
      $region23: #{generator_forward.15} parent=15 // pred_region
        %s197 = smul.u32 64, %s20
        %p198 = scmp.lt.s32.totalorder %s17, 3
        %s199 = scalar_select %p198, %s17, 3
        %p200 = scmp.lt.s32.totalorder %s197, 63
        %s201 = scalar_select %p200, %s197, 63
        %p202 = scmp.lt.s32.totalorder %s19, 0
        %s203 = scalar_select %p202, %s19, 0
        %s204 = sadd.s32 %s203, %s201
        %s205 = smul.addr %s199, 64
        %s206 = sadd.s32 %s204, %s205
        %s207 = smul.addr %s206, 4
        %s208 = scalar_lea.vmem %s1, %s207
        %s209 = smul.u32 64, %s20
      $region24: #{generator_forward.15} parent=15 // pred_fallthru
        _
    $region16: #{generator_forward.15} parent=5 // pred_fallthru
      _
    %p210 = scmp.le.s32.totalorder 1, %s10
    %p211 = scmp.lt.s32.totalorder %s10, 5
    %p212 = pnand %p210, %p211
    %p213 = pneg %p212
    // Predicated region
    $region25: #{generator_forward.15} parent=5 // pred_check
      _
    $region26: #{generator_forward.15} parent=5 // pred_check_branch
      %215 = sbr.rel (%p212) target = $region28
    $region27: #{generator_forward.15} parent=5 // pred_region
      %s216 = ssub.s32 %s10, 1
      %s217 = smul.u32 64, %s22
      %s218 = smul.u32 4, %s24
      %p219 = scmp.lt.s32.totalorder %s21, 3
      %s220 = scalar_select %p219, %s21, 3
      %p221 = scmp.lt.s32.totalorder %s217, 63
      %s222 = scalar_select %p221, %s217, 63
      %p223 = scmp.lt.s32.totalorder %s218, 3
      %s224 = scalar_select %p223, %s218, 3
      %s225 = smul.addr %s222, 4
      %s226 = sadd.s32 %s224, %s225
      %s227 = smul.addr %s220, 256
      %s228 = sadd.s32 %s226, %s227
      %s229 = smul.addr %s228, 4
      %s230 = scalar_lea.vmem %s0, %s229
      %p231 = pneg %p66
      %p232 = pneg %p63
      %s233 = smul.u32 64, %s24
      %p234 = scmp.lt.s32.totalorder %s21, 3
      %s235 = scalar_select %p234, %s21, 3
      %p236 = scmp.lt.s32.totalorder %s233, 63
      %s237 = scalar_select %p236, %s233, 63
      %p238 = scmp.lt.s32.totalorder %s23, 0
      %s239 = scalar_select %p238, %s23, 0
      %s240 = sadd.s32 %s239, %s237
      %s241 = smul.addr %s235, 64
      %s242 = sadd.s32 %s240, %s241
      %s243 = smul.addr %s242, 4
      %s244 = scalar_lea.vmem %s1, %s243
      %p245 = pneg %p96
      %p246 = pneg %p93
      %p247 = pneg %p126
      %p248 = pneg %p123
      %s249 = smul.u32 64, %s22
      %p250 = scmp.lt.s32.totalorder %s21, 3
      %s251 = scalar_select %p250, %s21, 3
      %p252 = scmp.lt.s32.totalorder %s249, 63
      %s253 = scalar_select %p252, %s249, 63
      %p254 = scmp.lt.s32.totalorder %s23, 0
      %s255 = scalar_select %p254, %s23, 0
      %s256 = sadd.s32 %s255, %s253
      %s257 = smul.addr %s251, 64
      %s258 = sadd.s32 %s256, %s257
      %s259 = smul.addr %s258, 8
      %s260 = scalar_lea.vmem %s2, %s259
      %p261 = pneg %p156
      %p262 = pneg %p153
      %p263 = scmp.lt.s32.totalorder %s21, 3
      %s264 = scalar_select %p263, %s21, 3
      %p265 = scmp.lt.s32.totalorder %s22, 0
      %s266 = scalar_select %p265, %s22, 0
      %p267 = scmp.lt.s32.totalorder %s23, 0
      %s268 = scalar_select %p267, %s23, 0
      %s269 = sadd.s32 %s268, %s266
      %s270 = sadd.s32 %s269, %s264
      %s271 = smul.addr %s270, 8
      %s272 = scalar_lea.vmem %s3, %s271
      %s273 = smul.u32 64, %s22
      %s274 = smul.u32 4, %s24
      %p275 = scmp.lt.s32.totalorder %s21, 3
      %s276 = scalar_select %p275, %s21, 3
      %p277 = scmp.lt.s32.totalorder %s273, 63
      %s278 = scalar_select %p277, %s273, 63
      %p279 = scmp.lt.s32.totalorder %s274, 3
      %s280 = scalar_select %p279, %s274, 3
      %s281 = smul.addr %s278, 4
      %s282 = sadd.s32 %s280, %s281
      %s283 = smul.addr %s276, 256
      %s284 = sadd.s32 %s282, %s283
      %s285 = smul.addr %s284, 4
      %s286 = scalar_lea.vmem %s0, %s285
      %s287 = smul.u32 64, %s22
      %s288 = smul.u32 4, %s24
      %s289 = smul.u32 64, %s24
      %p290 = scmp.lt.s32.totalorder %s21, 3
      %s291 = scalar_select %p290, %s21, 3
      %p292 = scmp.lt.s32.totalorder %s289, 63
      %s293 = scalar_select %p292, %s289, 63
      %p294 = scmp.lt.s32.totalorder %s23, 0
      %s295 = scalar_select %p294, %s23, 0
      %s296 = sadd.s32 %s295, %s293
      %s297 = smul.addr %s291, 64
      %s298 = sadd.s32 %s296, %s297
      %s299 = smul.addr %s298, 4
      %s300 = scalar_lea.vmem %s1, %s299
      %s301 = smul.u32 64, %s24
      %s302 = smul.u32 64, %s22
      %p303 = scmp.lt.s32.totalorder %s21, 3
      %s304 = scalar_select %p303, %s21, 3
      %p305 = scmp.lt.s32.totalorder %s302, 63
      %s306 = scalar_select %p305, %s302, 63
      %p307 = scmp.lt.s32.totalorder %s23, 0
      %s308 = scalar_select %p307, %s23, 0
      %s309 = sadd.s32 %s308, %s306
      %s310 = smul.addr %s304, 64
      %s311 = sadd.s32 %s309, %s310
      %s312 = smul.addr %s311, 8
      %s313 = scalar_lea.vmem %s2, %s312
      %s314 = smul.u32 64, %s22
      %p315 = scmp.lt.s32.totalorder %s21, 3
      %s316 = scalar_select %p315, %s21, 3
      %p317 = scmp.lt.s32.totalorder %s22, 0
      %s318 = scalar_select %p317, %s22, 0
      %p319 = scmp.lt.s32.totalorder %s23, 0
      %s320 = scalar_select %p319, %s23, 0
      %s321 = sadd.s32 %s320, %s318
      %s322 = sadd.s32 %s321, %s316
      %s323 = smul.addr %s322, 8
      %s324 = scalar_lea.vmem %s3, %s323
      %p326 = scmp.eq.s32.totalorder %s24, 0
      // Predicated region
      $region29: #{generator_forward.15} parent=27 // pred_check
        %p327 = pneg %p326
      $region30: #{generator_forward.15} parent=27 // pred_check_branch
        %329 = sbr.rel (%p327) target = $region32
      $region31: #{generator_forward.15} parent=27 // pred_region
        %330 = vst [vmem:[#allocation2] sm:$0xff] 0.0
        %331 = vst [vmem:[#allocation2 + $0x8] sm:$0xff] 0.0
        %332 = vst [vmem:[#allocation2 + $0x10] sm:$0xff] 0.0
        %333 = vst [vmem:[#allocation2 + $0x18] sm:$0xff] 0.0
        %334 = vst [vmem:[#allocation2 + $0x20] sm:$0xff] 0.0
        %335 = vst [vmem:[#allocation2 + $0x28] sm:$0xff] 0.0
        %336 = vst [vmem:[#allocation2 + $0x30] sm:$0xff] 0.0
        %337 = vst [vmem:[#allocation2 + $0x38] sm:$0xff] 0.0
        %338 = vst [vmem:[#allocation2 + $0x40] sm:$0xff] 0.0
        %339 = vst [vmem:[#allocation2 + $0x48] sm:$0xff] 0.0
        %340 = vst [vmem:[#allocation2 + $0x50] sm:$0xff] 0.0
        %341 = vst [vmem:[#allocation2 + $0x58] sm:$0xff] 0.0
        %342 = vst [vmem:[#allocation2 + $0x60] sm:$0xff] 0.0
        %343 = vst [vmem:[#allocation2 + $0x68] sm:$0xff] 0.0
        %344 = vst [vmem:[#allocation2 + $0x70] sm:$0xff] 0.0
        %345 = vst [vmem:[#allocation2 + $0x78] sm:$0xff] 0.0
        %346 = vst [vmem:[#allocation2 + $0x80] sm:$0xff] 0.0
        %347 = vst [vmem:[#allocation2 + $0x88] sm:$0xff] 0.0
        %348 = vst [vmem:[#allocation2 + $0x90] sm:$0xff] 0.0
        %349 = vst [vmem:[#allocation2 + $0x98] sm:$0xff] 0.0
        %350 = vst [vmem:[#allocation2 + $0xa0] sm:$0xff] 0.0
        %351 = vst [vmem:[#allocation2 + $0xa8] sm:$0xff] 0.0
        %352 = vst [vmem:[#allocation2 + $0xb0] sm:$0xff] 0.0
        %353 = vst [vmem:[#allocation2 + $0xb8] sm:$0xff] 0.0
        %354 = vst [vmem:[#allocation2 + $0xc0] sm:$0xff] 0.0
        %355 = vst [vmem:[#allocation2 + $0xc8] sm:$0xff] 0.0
        %356 = vst [vmem:[#allocation2 + $0xd0] sm:$0xff] 0.0
        %357 = vst [vmem:[#allocation2 + $0xd8] sm:$0xff] 0.0
        %358 = vst [vmem:[#allocation2 + $0xe0] sm:$0xff] 0.0
        %359 = vst [vmem:[#allocation2 + $0xe8] sm:$0xff] 0.0
        %360 = vst [vmem:[#allocation2 + $0xf0] sm:$0xff] 0.0
        %361 = vst [vmem:[#allocation2 + $0xf8] sm:$0xff] 0.0
        %362 = vst [vmem:[#allocation2 + $0x100] sm:$0xff] 0.0
        %363 = vst [vmem:[#allocation2 + $0x108] sm:$0xff] 0.0
        %364 = vst [vmem:[#allocation2 + $0x110] sm:$0xff] 0.0
        %365 = vst [vmem:[#allocation2 + $0x118] sm:$0xff] 0.0
        %366 = vst [vmem:[#allocation2 + $0x120] sm:$0xff] 0.0
        %367 = vst [vmem:[#allocation2 + $0x128] sm:$0xff] 0.0
        %368 = vst [vmem:[#allocation2 + $0x130] sm:$0xff] 0.0
        %369 = vst [vmem:[#allocation2 + $0x138] sm:$0xff] 0.0
        %370 = vst [vmem:[#allocation2 + $0x140] sm:$0xff] 0.0
        %371 = vst [vmem:[#allocation2 + $0x148] sm:$0xff] 0.0
        %372 = vst [vmem:[#allocation2 + $0x150] sm:$0xff] 0.0
        %373 = vst [vmem:[#allocation2 + $0x158] sm:$0xff] 0.0
        %374 = vst [vmem:[#allocation2 + $0x160] sm:$0xff] 0.0
        %375 = vst [vmem:[#allocation2 + $0x168] sm:$0xff] 0.0
        %376 = vst [vmem:[#allocation2 + $0x170] sm:$0xff] 0.0
        %377 = vst [vmem:[#allocation2 + $0x178] sm:$0xff] 0.0
        %378 = vst [vmem:[#allocation2 + $0x180] sm:$0xff] 0.0
        %379 = vst [vmem:[#allocation2 + $0x188] sm:$0xff] 0.0
        %380 = vst [vmem:[#allocation2 + $0x190] sm:$0xff] 0.0
        %381 = vst [vmem:[#allocation2 + $0x198] sm:$0xff] 0.0
        %382 = vst [vmem:[#allocation2 + $0x1a0] sm:$0xff] 0.0
        %383 = vst [vmem:[#allocation2 + $0x1a8] sm:$0xff] 0.0
        %384 = vst [vmem:[#allocation2 + $0x1b0] sm:$0xff] 0.0
        %385 = vst [vmem:[#allocation2 + $0x1b8] sm:$0xff] 0.0
        %386 = vst [vmem:[#allocation2 + $0x1c0] sm:$0xff] 0.0
        %387 = vst [vmem:[#allocation2 + $0x1c8] sm:$0xff] 0.0
        %388 = vst [vmem:[#allocation2 + $0x1d0] sm:$0xff] 0.0
        %389 = vst [vmem:[#allocation2 + $0x1d8] sm:$0xff] 0.0
        %390 = vst [vmem:[#allocation2 + $0x1e0] sm:$0xff] 0.0
        %391 = vst [vmem:[#allocation2 + $0x1e8] sm:$0xff] 0.0
        %392 = vst [vmem:[#allocation2 + $0x1f0] sm:$0xff] 0.0
        %393 = vst [vmem:[#allocation2 + $0x1f8] sm:$0xff] 0.0
      $region32: #{generator_forward.15} parent=27 // pred_fallthru
        _
      %v394 = vld [vmem:[#allocation2] sm:$0xff]
      %v395 = vld [vmem:[#allocation2 + $0x8] sm:$0xff]
      %v396 = vld [vmem:[#allocation2 + $0x10] sm:$0xff]
      %v397 = vld [vmem:[#allocation2 + $0x18] sm:$0xff]
      %v398 = vld [vmem:[#allocation2 + $0x20] sm:$0xff]
      %v399 = vld [vmem:[#allocation2 + $0x28] sm:$0xff]
      %v400 = vld [vmem:[#allocation2 + $0x30] sm:$0xff]
      %v401 = vld [vmem:[#allocation2 + $0x38] sm:$0xff]
      %v402 = vld [vmem:[#allocation2 + $0x40] sm:$0xff]
      %v403 = vld [vmem:[#allocation2 + $0x48] sm:$0xff]
      %v404 = vld [vmem:[#allocation2 + $0x50] sm:$0xff]
      %v405 = vld [vmem:[#allocation2 + $0x58] sm:$0xff]
      %v406 = vld [vmem:[#allocation2 + $0x60] sm:$0xff]
      %v407 = vld [vmem:[#allocation2 + $0x68] sm:$0xff]
      %v408 = vld [vmem:[#allocation2 + $0x70] sm:$0xff]
      %v409 = vld [vmem:[#allocation2 + $0x78] sm:$0xff]
      %v410 = vld [vmem:[#allocation2 + $0x80] sm:$0xff]
      %v411 = vld [vmem:[#allocation2 + $0x88] sm:$0xff]
      %v412 = vld [vmem:[#allocation2 + $0x90] sm:$0xff]
      %v413 = vld [vmem:[#allocation2 + $0x98] sm:$0xff]
      %v414 = vld [vmem:[#allocation2 + $0xa0] sm:$0xff]
      %v415 = vld [vmem:[#allocation2 + $0xa8] sm:$0xff]
      %v416 = vld [vmem:[#allocation2 + $0xb0] sm:$0xff]
      %v417 = vld [vmem:[#allocation2 + $0xb8] sm:$0xff]
      %v418 = vld [vmem:[#allocation2 + $0xc0] sm:$0xff]
      %v419 = vld [vmem:[#allocation2 + $0xc8] sm:$0xff]
      %v420 = vld [vmem:[#allocation2 + $0xd0] sm:$0xff]
      %v421 = vld [vmem:[#allocation2 + $0xd8] sm:$0xff]
      %v422 = vld [vmem:[#allocation2 + $0xe0] sm:$0xff]
      %v423 = vld [vmem:[#allocation2 + $0xe8] sm:$0xff]
      %v424 = vld [vmem:[#allocation2 + $0xf0] sm:$0xff]
      %v425 = vld [vmem:[#allocation2 + $0xf8] sm:$0xff]
      %v426 = vld [vmem:[#allocation2 + $0x100] sm:$0xff]
      %v427 = vld [vmem:[#allocation2 + $0x108] sm:$0xff]
      %v428 = vld [vmem:[#allocation2 + $0x110] sm:$0xff]
      %v429 = vld [vmem:[#allocation2 + $0x118] sm:$0xff]
      %v430 = vld [vmem:[#allocation2 + $0x120] sm:$0xff]
      %v431 = vld [vmem:[#allocation2 + $0x128] sm:$0xff]
      %v432 = vld [vmem:[#allocation2 + $0x130] sm:$0xff]
      %v433 = vld [vmem:[#allocation2 + $0x138] sm:$0xff]
      %v434 = vld [vmem:[#allocation2 + $0x140] sm:$0xff]
      %v435 = vld [vmem:[#allocation2 + $0x148] sm:$0xff]
      %v436 = vld [vmem:[#allocation2 + $0x150] sm:$0xff]
      %v437 = vld [vmem:[#allocation2 + $0x158] sm:$0xff]
      %v438 = vld [vmem:[#allocation2 + $0x160] sm:$0xff]
      %v439 = vld [vmem:[#allocation2 + $0x168] sm:$0xff]
      %v440 = vld [vmem:[#allocation2 + $0x170] sm:$0xff]
      %v441 = vld [vmem:[#allocation2 + $0x178] sm:$0xff]
      %v442 = vld [vmem:[#allocation2 + $0x180] sm:$0xff]
      %v443 = vld [vmem:[#allocation2 + $0x188] sm:$0xff]
      %v444 = vld [vmem:[#allocation2 + $0x190] sm:$0xff]
      %v445 = vld [vmem:[#allocation2 + $0x198] sm:$0xff]
      %v446 = vld [vmem:[#allocation2 + $0x1a0] sm:$0xff]
      %v447 = vld [vmem:[#allocation2 + $0x1a8] sm:$0xff]
      %v448 = vld [vmem:[#allocation2 + $0x1b0] sm:$0xff]
      %v449 = vld [vmem:[#allocation2 + $0x1b8] sm:$0xff]
      %v450 = vld [vmem:[#allocation2 + $0x1c0] sm:$0xff]
      %v451 = vld [vmem:[#allocation2 + $0x1c8] sm:$0xff]
      %v452 = vld [vmem:[#allocation2 + $0x1d0] sm:$0xff]
      %v453 = vld [vmem:[#allocation2 + $0x1d8] sm:$0xff]
      %v454 = vld [vmem:[#allocation2 + $0x1e0] sm:$0xff]
      %v455 = vld [vmem:[#allocation2 + $0x1e8] sm:$0xff]
      %v456 = vld [vmem:[#allocation2 + $0x1f0] sm:$0xff]
      %v457 = vld [vmem:[#allocation2 + $0x1f8] sm:$0xff]
      %v458 = vld [vmem:[%s286] sm:$0xff]
      %v459 = vld [vmem:[%s286 + $0x8] sm:$0xff]
      %v460 = vld [vmem:[%s286 + $0x10] sm:$0xff]
      %v461 = vld [vmem:[%s286 + $0x18] sm:$0xff]
      %v462 = vld [vmem:[%s286 + $0x20] sm:$0xff]
      %v463 = vld [vmem:[%s286 + $0x28] sm:$0xff]
      %v464 = vld [vmem:[%s286 + $0x30] sm:$0xff]
      %v465 = vld [vmem:[%s286 + $0x38] sm:$0xff]
      %v466 = vld [vmem:[%s286 + $0x40] sm:$0xff]
      %v467 = vld [vmem:[%s286 + $0x48] sm:$0xff]
      %v468 = vld [vmem:[%s286 + $0x50] sm:$0xff]
      %v469 = vld [vmem:[%s286 + $0x58] sm:$0xff]
      %v470 = vld [vmem:[%s286 + $0x60] sm:$0xff]
      %v471 = vld [vmem:[%s286 + $0x68] sm:$0xff]
      %v472 = vld [vmem:[%s286 + $0x70] sm:$0xff]
      %v473 = vld [vmem:[%s286 + $0x78] sm:$0xff]
      %v474 = vld [vmem:[%s286 + $0x80] sm:$0xff]
      %v475 = vld [vmem:[%s286 + $0x88] sm:$0xff]
      %v476 = vld [vmem:[%s286 + $0x90] sm:$0xff]
      %v477 = vld [vmem:[%s286 + $0x98] sm:$0xff]
      %v478 = vld [vmem:[%s286 + $0xa0] sm:$0xff]
      %v479 = vld [vmem:[%s286 + $0xa8] sm:$0xff]
      %v480 = vld [vmem:[%s286 + $0xb0] sm:$0xff]
      %v481 = vld [vmem:[%s286 + $0xb8] sm:$0xff]
      %v482 = vld [vmem:[%s286 + $0xc0] sm:$0xff]
      %v483 = vld [vmem:[%s286 + $0xc8] sm:$0xff]
      %v484 = vld [vmem:[%s286 + $0xd0] sm:$0xff]
      %v485 = vld [vmem:[%s286 + $0xd8] sm:$0xff]
      %v486 = vld [vmem:[%s286 + $0xe0] sm:$0xff]
      %v487 = vld [vmem:[%s286 + $0xe8] sm:$0xff]
      %v488 = vld [vmem:[%s286 + $0xf0] sm:$0xff]
      %v489 = vld [vmem:[%s286 + $0xf8] sm:$0xff]
      %v490 = vld [vmem:[%s286 + $0x100] sm:$0xff]
      %v491 = vld [vmem:[%s286 + $0x108] sm:$0xff]
      %v492 = vld [vmem:[%s286 + $0x110] sm:$0xff]
      %v493 = vld [vmem:[%s286 + $0x118] sm:$0xff]
      %v494 = vld [vmem:[%s286 + $0x120] sm:$0xff]
      %v495 = vld [vmem:[%s286 + $0x128] sm:$0xff]
      %v496 = vld [vmem:[%s286 + $0x130] sm:$0xff]
      %v497 = vld [vmem:[%s286 + $0x138] sm:$0xff]
      %v498 = vld [vmem:[%s286 + $0x140] sm:$0xff]
      %v499 = vld [vmem:[%s286 + $0x148] sm:$0xff]
      %v500 = vld [vmem:[%s286 + $0x150] sm:$0xff]
      %v501 = vld [vmem:[%s286 + $0x158] sm:$0xff]
      %v502 = vld [vmem:[%s286 + $0x160] sm:$0xff]
      %v503 = vld [vmem:[%s286 + $0x168] sm:$0xff]
      %v504 = vld [vmem:[%s286 + $0x170] sm:$0xff]
      %v505 = vld [vmem:[%s286 + $0x178] sm:$0xff]
      %v506 = vld [vmem:[%s286 + $0x180] sm:$0xff]
      %v507 = vld [vmem:[%s286 + $0x188] sm:$0xff]
      %v508 = vld [vmem:[%s286 + $0x190] sm:$0xff]
      %v509 = vld [vmem:[%s286 + $0x198] sm:$0xff]
      %v510 = vld [vmem:[%s286 + $0x1a0] sm:$0xff]
      %v511 = vld [vmem:[%s286 + $0x1a8] sm:$0xff]
      %v512 = vld [vmem:[%s286 + $0x1b0] sm:$0xff]
      %v513 = vld [vmem:[%s286 + $0x1b8] sm:$0xff]
      %v514 = vld [vmem:[%s286 + $0x1c0] sm:$0xff]
      %v515 = vld [vmem:[%s286 + $0x1c8] sm:$0xff]
      %v516 = vld [vmem:[%s286 + $0x1d0] sm:$0xff]
      %v517 = vld [vmem:[%s286 + $0x1d8] sm:$0xff]
      %v518 = vld [vmem:[%s286 + $0x1e0] sm:$0xff]
      %v519 = vld [vmem:[%s286 + $0x1e8] sm:$0xff]
      %v520 = vld [vmem:[%s286 + $0x1f0] sm:$0xff]
      %v521 = vld [vmem:[%s286 + $0x1f8] sm:$0xff]
      %v522 = vld [vmem:[%s286 + $0x200] sm:$0xff]
      %v523 = vld [vmem:[%s286 + $0x208] sm:$0xff]
      %v524 = vld [vmem:[%s286 + $0x210] sm:$0xff]
      %v525 = vld [vmem:[%s286 + $0x218] sm:$0xff]
      %v526 = vld [vmem:[%s286 + $0x220] sm:$0xff]
      %v527 = vld [vmem:[%s286 + $0x228] sm:$0xff]
      %v528 = vld [vmem:[%s286 + $0x230] sm:$0xff]
      %v529 = vld [vmem:[%s286 + $0x238] sm:$0xff]
      %v530 = vld [vmem:[%s286 + $0x240] sm:$0xff]
      %v531 = vld [vmem:[%s286 + $0x248] sm:$0xff]
      %v532 = vld [vmem:[%s286 + $0x250] sm:$0xff]
      %v533 = vld [vmem:[%s286 + $0x258] sm:$0xff]
      %v534 = vld [vmem:[%s286 + $0x260] sm:$0xff]
      %v535 = vld [vmem:[%s286 + $0x268] sm:$0xff]
      %v536 = vld [vmem:[%s286 + $0x270] sm:$0xff]
      %v537 = vld [vmem:[%s286 + $0x278] sm:$0xff]
      %v538 = vld [vmem:[%s286 + $0x280] sm:$0xff]
      %v539 = vld [vmem:[%s286 + $0x288] sm:$0xff]
      %v540 = vld [vmem:[%s286 + $0x290] sm:$0xff]
      %v541 = vld [vmem:[%s286 + $0x298] sm:$0xff]
      %v542 = vld [vmem:[%s286 + $0x2a0] sm:$0xff]
      %v543 = vld [vmem:[%s286 + $0x2a8] sm:$0xff]
      %v544 = vld [vmem:[%s286 + $0x2b0] sm:$0xff]
      %v545 = vld [vmem:[%s286 + $0x2b8] sm:$0xff]
      %v546 = vld [vmem:[%s286 + $0x2c0] sm:$0xff]
      %v547 = vld [vmem:[%s286 + $0x2c8] sm:$0xff]
      %v548 = vld [vmem:[%s286 + $0x2d0] sm:$0xff]
      %v549 = vld [vmem:[%s286 + $0x2d8] sm:$0xff]
      %v550 = vld [vmem:[%s286 + $0x2e0] sm:$0xff]
      %v551 = vld [vmem:[%s286 + $0x2e8] sm:$0xff]
      %v552 = vld [vmem:[%s286 + $0x2f0] sm:$0xff]
      %v553 = vld [vmem:[%s286 + $0x2f8] sm:$0xff]
      %v554 = vld [vmem:[%s286 + $0x300] sm:$0xff]
      %v555 = vld [vmem:[%s286 + $0x308] sm:$0xff]
      %v556 = vld [vmem:[%s286 + $0x310] sm:$0xff]
      %v557 = vld [vmem:[%s286 + $0x318] sm:$0xff]
      %v558 = vld [vmem:[%s286 + $0x320] sm:$0xff]
      %v559 = vld [vmem:[%s286 + $0x328] sm:$0xff]
      %v560 = vld [vmem:[%s286 + $0x330] sm:$0xff]
      %v561 = vld [vmem:[%s286 + $0x338] sm:$0xff]
      %v562 = vld [vmem:[%s286 + $0x340] sm:$0xff]
      %v563 = vld [vmem:[%s286 + $0x348] sm:$0xff]
      %v564 = vld [vmem:[%s286 + $0x350] sm:$0xff]
      %v565 = vld [vmem:[%s286 + $0x358] sm:$0xff]
      %v566 = vld [vmem:[%s286 + $0x360] sm:$0xff]
      %v567 = vld [vmem:[%s286 + $0x368] sm:$0xff]
      %v568 = vld [vmem:[%s286 + $0x370] sm:$0xff]
      %v569 = vld [vmem:[%s286 + $0x378] sm:$0xff]
      %v570 = vld [vmem:[%s286 + $0x380] sm:$0xff]
      %v571 = vld [vmem:[%s286 + $0x388] sm:$0xff]
      %v572 = vld [vmem:[%s286 + $0x390] sm:$0xff]
      %v573 = vld [vmem:[%s286 + $0x398] sm:$0xff]
      %v574 = vld [vmem:[%s286 + $0x3a0] sm:$0xff]
      %v575 = vld [vmem:[%s286 + $0x3a8] sm:$0xff]
      %v576 = vld [vmem:[%s286 + $0x3b0] sm:$0xff]
      %v577 = vld [vmem:[%s286 + $0x3b8] sm:$0xff]
      %v578 = vld [vmem:[%s286 + $0x3c0] sm:$0xff]
      %v579 = vld [vmem:[%s286 + $0x3c8] sm:$0xff]
      %v580 = vld [vmem:[%s286 + $0x3d0] sm:$0xff]
      %v581 = vld [vmem:[%s286 + $0x3d8] sm:$0xff]
      %v582 = vld [vmem:[%s286 + $0x3e0] sm:$0xff]
      %v583 = vld [vmem:[%s286 + $0x3e8] sm:$0xff]
      %v584 = vld [vmem:[%s286 + $0x3f0] sm:$0xff]
      %v585 = vld [vmem:[%s286 + $0x3f8] sm:$0xff]
      %v586 = vld [vmem:[%s300] sm:$0xf]
      %v587 = vld [vmem:[%s300 + $0x4] sm:$0xf]
      %v588 = vld [vmem:[%s300 + $0x8] sm:$0xf]
      %v589 = vld [vmem:[%s300 + $0xc] sm:$0xf]
      %v590 = vld [vmem:[%s300 + $0x10] sm:$0xf]
      %v591 = vld [vmem:[%s300 + $0x14] sm:$0xf]
      %v592 = vld [vmem:[%s300 + $0x18] sm:$0xf]
      %v593 = vld [vmem:[%s300 + $0x1c] sm:$0xf]
      %v594 = vld [vmem:[%s300 + $0x20] sm:$0xf]
      %v595 = vld [vmem:[%s300 + $0x24] sm:$0xf]
      %v596 = vld [vmem:[%s300 + $0x28] sm:$0xf]
      %v597 = vld [vmem:[%s300 + $0x2c] sm:$0xf]
      %v598 = vld [vmem:[%s300 + $0x30] sm:$0xf]
      %v599 = vld [vmem:[%s300 + $0x34] sm:$0xf]
      %v600 = vld [vmem:[%s300 + $0x38] sm:$0xf]
      %v601 = vld [vmem:[%s300 + $0x3c] sm:$0xf]
      %v602 = vld [vmem:[%s300 + $0x40] sm:$0xf]
      %v603 = vld [vmem:[%s300 + $0x44] sm:$0xf]
      %v604 = vld [vmem:[%s300 + $0x48] sm:$0xf]
      %v605 = vld [vmem:[%s300 + $0x4c] sm:$0xf]
      %v606 = vld [vmem:[%s300 + $0x50] sm:$0xf]
      %v607 = vld [vmem:[%s300 + $0x54] sm:$0xf]
      %v608 = vld [vmem:[%s300 + $0x58] sm:$0xf]
      %v609 = vld [vmem:[%s300 + $0x5c] sm:$0xf]
      %v610 = vld [vmem:[%s300 + $0x60] sm:$0xf]
      %v611 = vld [vmem:[%s300 + $0x64] sm:$0xf]
      %v612 = vld [vmem:[%s300 + $0x68] sm:$0xf]
      %v613 = vld [vmem:[%s300 + $0x6c] sm:$0xf]
      %v614 = vld [vmem:[%s300 + $0x70] sm:$0xf]
      %v615 = vld [vmem:[%s300 + $0x74] sm:$0xf]
      %v616 = vld [vmem:[%s300 + $0x78] sm:$0xf]
      %v617 = vld [vmem:[%s300 + $0x7c] sm:$0xf]
      %v618 = vld [vmem:[%s300 + $0x80] sm:$0xf]
      %v619 = vld [vmem:[%s300 + $0x84] sm:$0xf]
      %v620 = vld [vmem:[%s300 + $0x88] sm:$0xf]
      %v621 = vld [vmem:[%s300 + $0x8c] sm:$0xf]
      %v622 = vld [vmem:[%s300 + $0x90] sm:$0xf]
      %v623 = vld [vmem:[%s300 + $0x94] sm:$0xf]
      %v624 = vld [vmem:[%s300 + $0x98] sm:$0xf]
      %v625 = vld [vmem:[%s300 + $0x9c] sm:$0xf]
      %v626 = vld [vmem:[%s300 + $0xa0] sm:$0xf]
      %v627 = vld [vmem:[%s300 + $0xa4] sm:$0xf]
      %v628 = vld [vmem:[%s300 + $0xa8] sm:$0xf]
      %v629 = vld [vmem:[%s300 + $0xac] sm:$0xf]
      %v630 = vld [vmem:[%s300 + $0xb0] sm:$0xf]
      %v631 = vld [vmem:[%s300 + $0xb4] sm:$0xf]
      %v632 = vld [vmem:[%s300 + $0xb8] sm:$0xf]
      %v633 = vld [vmem:[%s300 + $0xbc] sm:$0xf]
      %v634 = vld [vmem:[%s300 + $0xc0] sm:$0xf]
      %v635 = vld [vmem:[%s300 + $0xc4] sm:$0xf]
      %v636 = vld [vmem:[%s300 + $0xc8] sm:$0xf]
      %v637 = vld [vmem:[%s300 + $0xcc] sm:$0xf]
      %v638 = vld [vmem:[%s300 + $0xd0] sm:$0xf]
      %v639 = vld [vmem:[%s300 + $0xd4] sm:$0xf]
      %v640 = vld [vmem:[%s300 + $0xd8] sm:$0xf]
      %v641 = vld [vmem:[%s300 + $0xdc] sm:$0xf]
      %v642 = vld [vmem:[%s300 + $0xe0] sm:$0xf]
      %v643 = vld [vmem:[%s300 + $0xe4] sm:$0xf]
      %v644 = vld [vmem:[%s300 + $0xe8] sm:$0xf]
      %v645 = vld [vmem:[%s300 + $0xec] sm:$0xf]
      %v646 = vld [vmem:[%s300 + $0xf0] sm:$0xf]
      %v647 = vld [vmem:[%s300 + $0xf4] sm:$0xf]
      %v648 = vld [vmem:[%s300 + $0xf8] sm:$0xf]
      %v649 = vld [vmem:[%s300 + $0xfc] sm:$0xf]
      %v778 = vunpack.c.l.b16 %v458
      %v779 = vunpack.c.h.b16 %v458
      %v780 = vunpack.c.l.b16 %v459
      %v781 = vunpack.c.h.b16 %v459
      %v782 = vunpack.c.l.b16 %v460
      %v783 = vunpack.c.h.b16 %v460
      %v784 = vunpack.c.l.b16 %v461
      %v785 = vunpack.c.h.b16 %v461
      %v786 = vunpack.c.l.b16 %v462
      %v787 = vunpack.c.h.b16 %v462
      %v788 = vunpack.c.l.b16 %v463
      %v789 = vunpack.c.h.b16 %v463
      %v790 = vunpack.c.l.b16 %v464
      %v791 = vunpack.c.h.b16 %v464
      %v792 = vunpack.c.l.b16 %v465
      %v793 = vunpack.c.h.b16 %v465
      %v794 = vunpack.c.l.b16 %v466
      %v795 = vunpack.c.h.b16 %v466
      %v796 = vunpack.c.l.b16 %v467
      %v797 = vunpack.c.h.b16 %v467
      %v798 = vunpack.c.l.b16 %v468
      %v799 = vunpack.c.h.b16 %v468
      %v800 = vunpack.c.l.b16 %v469
      %v801 = vunpack.c.h.b16 %v469
      %v802 = vunpack.c.l.b16 %v470
      %v803 = vunpack.c.h.b16 %v470
      %v804 = vunpack.c.l.b16 %v471
      %v805 = vunpack.c.h.b16 %v471
      %v806 = vunpack.c.l.b16 %v472
      %v807 = vunpack.c.h.b16 %v472
      %v808 = vunpack.c.l.b16 %v473
      %v809 = vunpack.c.h.b16 %v473
      %v810 = vunpack.c.l.b16 %v474
      %v811 = vunpack.c.h.b16 %v474
      %v812 = vunpack.c.l.b16 %v475
      %v813 = vunpack.c.h.b16 %v475
      %v814 = vunpack.c.l.b16 %v476
      %v815 = vunpack.c.h.b16 %v476
      %v816 = vunpack.c.l.b16 %v477
      %v817 = vunpack.c.h.b16 %v477
      %v818 = vunpack.c.l.b16 %v478
      %v819 = vunpack.c.h.b16 %v478
      %v820 = vunpack.c.l.b16 %v479
      %v821 = vunpack.c.h.b16 %v479
      %v822 = vunpack.c.l.b16 %v480
      %v823 = vunpack.c.h.b16 %v480
      %v824 = vunpack.c.l.b16 %v481
      %v825 = vunpack.c.h.b16 %v481
      %v826 = vunpack.c.l.b16 %v482
      %v827 = vunpack.c.h.b16 %v482
      %v828 = vunpack.c.l.b16 %v483
      %v829 = vunpack.c.h.b16 %v483
      %v830 = vunpack.c.l.b16 %v484
      %v831 = vunpack.c.h.b16 %v484
      %v832 = vunpack.c.l.b16 %v485
      %v833 = vunpack.c.h.b16 %v485
      %v834 = vunpack.c.l.b16 %v486
      %v835 = vunpack.c.h.b16 %v486
      %v836 = vunpack.c.l.b16 %v487
      %v837 = vunpack.c.h.b16 %v487
      %v838 = vunpack.c.l.b16 %v488
      %v839 = vunpack.c.h.b16 %v488
      %v840 = vunpack.c.l.b16 %v489
      %v841 = vunpack.c.h.b16 %v489
      %v842 = vunpack.c.l.b16 %v490
      %v843 = vunpack.c.h.b16 %v490
      %v844 = vunpack.c.l.b16 %v491
      %v845 = vunpack.c.h.b16 %v491
      %v846 = vunpack.c.l.b16 %v492
      %v847 = vunpack.c.h.b16 %v492
      %v848 = vunpack.c.l.b16 %v493
      %v849 = vunpack.c.h.b16 %v493
      %v850 = vunpack.c.l.b16 %v494
      %v851 = vunpack.c.h.b16 %v494
      %v852 = vunpack.c.l.b16 %v495
      %v853 = vunpack.c.h.b16 %v495
      %v854 = vunpack.c.l.b16 %v496
      %v855 = vunpack.c.h.b16 %v496
      %v856 = vunpack.c.l.b16 %v497
      %v857 = vunpack.c.h.b16 %v497
      %v858 = vunpack.c.l.b16 %v498
      %v859 = vunpack.c.h.b16 %v498
      %v860 = vunpack.c.l.b16 %v499
      %v861 = vunpack.c.h.b16 %v499
      %v862 = vunpack.c.l.b16 %v500
      %v863 = vunpack.c.h.b16 %v500
      %v864 = vunpack.c.l.b16 %v501
      %v865 = vunpack.c.h.b16 %v501
      %v866 = vunpack.c.l.b16 %v502
      %v867 = vunpack.c.h.b16 %v502
      %v868 = vunpack.c.l.b16 %v503
      %v869 = vunpack.c.h.b16 %v503
      %v870 = vunpack.c.l.b16 %v504
      %v871 = vunpack.c.h.b16 %v504
      %v872 = vunpack.c.l.b16 %v505
      %v873 = vunpack.c.h.b16 %v505
      %v874 = vunpack.c.l.b16 %v506
      %v875 = vunpack.c.h.b16 %v506
      %v876 = vunpack.c.l.b16 %v507
      %v877 = vunpack.c.h.b16 %v507
      %v878 = vunpack.c.l.b16 %v508
      %v879 = vunpack.c.h.b16 %v508
      %v880 = vunpack.c.l.b16 %v509
      %v881 = vunpack.c.h.b16 %v509
      %v882 = vunpack.c.l.b16 %v510
      %v883 = vunpack.c.h.b16 %v510
      %v884 = vunpack.c.l.b16 %v511
      %v885 = vunpack.c.h.b16 %v511
      %v886 = vunpack.c.l.b16 %v512
      %v887 = vunpack.c.h.b16 %v512
      %v888 = vunpack.c.l.b16 %v513
      %v889 = vunpack.c.h.b16 %v513
      %v890 = vunpack.c.l.b16 %v514
      %v891 = vunpack.c.h.b16 %v514
      %v892 = vunpack.c.l.b16 %v515
      %v893 = vunpack.c.h.b16 %v515
      %v894 = vunpack.c.l.b16 %v516
      %v895 = vunpack.c.h.b16 %v516
      %v896 = vunpack.c.l.b16 %v517
      %v897 = vunpack.c.h.b16 %v517
      %v898 = vunpack.c.l.b16 %v518
      %v899 = vunpack.c.h.b16 %v518
      %v900 = vunpack.c.l.b16 %v519
      %v901 = vunpack.c.h.b16 %v519
      %v902 = vunpack.c.l.b16 %v520
      %v903 = vunpack.c.h.b16 %v520
      %v904 = vunpack.c.l.b16 %v521
      %v905 = vunpack.c.h.b16 %v521
      %v906 = vunpack.c.l.b16 %v522
      %v907 = vunpack.c.h.b16 %v522
      %v908 = vunpack.c.l.b16 %v523
      %v909 = vunpack.c.h.b16 %v523
      %v910 = vunpack.c.l.b16 %v524
      %v911 = vunpack.c.h.b16 %v524
      %v912 = vunpack.c.l.b16 %v525
      %v913 = vunpack.c.h.b16 %v525
      %v914 = vunpack.c.l.b16 %v526
      %v915 = vunpack.c.h.b16 %v526
      %v916 = vunpack.c.l.b16 %v527
      %v917 = vunpack.c.h.b16 %v527
      %v918 = vunpack.c.l.b16 %v528
      %v919 = vunpack.c.h.b16 %v528
      %v920 = vunpack.c.l.b16 %v529
      %v921 = vunpack.c.h.b16 %v529
      %v922 = vunpack.c.l.b16 %v530
      %v923 = vunpack.c.h.b16 %v530
      %v924 = vunpack.c.l.b16 %v531
      %v925 = vunpack.c.h.b16 %v531
      %v926 = vunpack.c.l.b16 %v532
      %v927 = vunpack.c.h.b16 %v532
      %v928 = vunpack.c.l.b16 %v533
      %v929 = vunpack.c.h.b16 %v533
      %v930 = vunpack.c.l.b16 %v534
      %v931 = vunpack.c.h.b16 %v534
      %v932 = vunpack.c.l.b16 %v535
      %v933 = vunpack.c.h.b16 %v535
      %v934 = vunpack.c.l.b16 %v536
      %v935 = vunpack.c.h.b16 %v536
      %v936 = vunpack.c.l.b16 %v537
      %v937 = vunpack.c.h.b16 %v537
      %v938 = vunpack.c.l.b16 %v538
      %v939 = vunpack.c.h.b16 %v538
      %v940 = vunpack.c.l.b16 %v539
      %v941 = vunpack.c.h.b16 %v539
      %v942 = vunpack.c.l.b16 %v540
      %v943 = vunpack.c.h.b16 %v540
      %v944 = vunpack.c.l.b16 %v541
      %v945 = vunpack.c.h.b16 %v541
      %v946 = vunpack.c.l.b16 %v542
      %v947 = vunpack.c.h.b16 %v542
      %v948 = vunpack.c.l.b16 %v543
      %v949 = vunpack.c.h.b16 %v543
      %v950 = vunpack.c.l.b16 %v544
      %v951 = vunpack.c.h.b16 %v544
      %v952 = vunpack.c.l.b16 %v545
      %v953 = vunpack.c.h.b16 %v545
      %v954 = vunpack.c.l.b16 %v546
      %v955 = vunpack.c.h.b16 %v546
      %v956 = vunpack.c.l.b16 %v547
      %v957 = vunpack.c.h.b16 %v547
      %v958 = vunpack.c.l.b16 %v548
      %v959 = vunpack.c.h.b16 %v548
      %v960 = vunpack.c.l.b16 %v549
      %v961 = vunpack.c.h.b16 %v549
      %v962 = vunpack.c.l.b16 %v550
      %v963 = vunpack.c.h.b16 %v550
      %v964 = vunpack.c.l.b16 %v551
      %v965 = vunpack.c.h.b16 %v551
      %v966 = vunpack.c.l.b16 %v552
      %v967 = vunpack.c.h.b16 %v552
      %v968 = vunpack.c.l.b16 %v553
      %v969 = vunpack.c.h.b16 %v553
      %v970 = vunpack.c.l.b16 %v554
      %v971 = vunpack.c.h.b16 %v554
      %v972 = vunpack.c.l.b16 %v555
      %v973 = vunpack.c.h.b16 %v555
      %v974 = vunpack.c.l.b16 %v556
      %v975 = vunpack.c.h.b16 %v556
      %v976 = vunpack.c.l.b16 %v557
      %v977 = vunpack.c.h.b16 %v557
      %v978 = vunpack.c.l.b16 %v558
      %v979 = vunpack.c.h.b16 %v558
      %v980 = vunpack.c.l.b16 %v559
      %v981 = vunpack.c.h.b16 %v559
      %v982 = vunpack.c.l.b16 %v560
      %v983 = vunpack.c.h.b16 %v560
      %v984 = vunpack.c.l.b16 %v561
      %v985 = vunpack.c.h.b16 %v561
      %v986 = vunpack.c.l.b16 %v562
      %v987 = vunpack.c.h.b16 %v562
      %v988 = vunpack.c.l.b16 %v563
      %v989 = vunpack.c.h.b16 %v563
      %v990 = vunpack.c.l.b16 %v564
      %v991 = vunpack.c.h.b16 %v564
      %v992 = vunpack.c.l.b16 %v565
      %v993 = vunpack.c.h.b16 %v565
      %v994 = vunpack.c.l.b16 %v566
      %v995 = vunpack.c.h.b16 %v566
      %v996 = vunpack.c.l.b16 %v567
      %v997 = vunpack.c.h.b16 %v567
      %v998 = vunpack.c.l.b16 %v568
      %v999 = vunpack.c.h.b16 %v568
      %v1000 = vunpack.c.l.b16 %v569
      %v1001 = vunpack.c.h.b16 %v569
      %v1002 = vunpack.c.l.b16 %v570
      %v1003 = vunpack.c.h.b16 %v570
      %v1004 = vunpack.c.l.b16 %v571
      %v1005 = vunpack.c.h.b16 %v571
      %v1006 = vunpack.c.l.b16 %v572
      %v1007 = vunpack.c.h.b16 %v572
      %v1008 = vunpack.c.l.b16 %v573
      %v1009 = vunpack.c.h.b16 %v573
      %v1010 = vunpack.c.l.b16 %v574
      %v1011 = vunpack.c.h.b16 %v574
      %v1012 = vunpack.c.l.b16 %v575
      %v1013 = vunpack.c.h.b16 %v575
      %v1014 = vunpack.c.l.b16 %v576
      %v1015 = vunpack.c.h.b16 %v576
      %v1016 = vunpack.c.l.b16 %v577
      %v1017 = vunpack.c.h.b16 %v577
      %v1018 = vunpack.c.l.b16 %v578
      %v1019 = vunpack.c.h.b16 %v578
      %v1020 = vunpack.c.l.b16 %v579
      %v1021 = vunpack.c.h.b16 %v579
      %v1022 = vunpack.c.l.b16 %v580
      %v1023 = vunpack.c.h.b16 %v580
      %v1024 = vunpack.c.l.b16 %v581
      %v1025 = vunpack.c.h.b16 %v581
      %v1026 = vunpack.c.l.b16 %v582
      %v1027 = vunpack.c.h.b16 %v582
      %v1028 = vunpack.c.l.b16 %v583
      %v1029 = vunpack.c.h.b16 %v583
      %v1030 = vunpack.c.l.b16 %v584
      %v1031 = vunpack.c.h.b16 %v584
      %v1032 = vunpack.c.l.b16 %v585
      %v1033 = vunpack.c.h.b16 %v585
      %v1034 = vpack.c.b16 %v782, %v778
      %v1035 = vpack.c.b16 %v783, %v779
      %v1036 = vpack.c.b16 %v784, %v780
      %v1037 = vpack.c.b16 %v785, %v781
      %v1038 = vpack.c.b16 %v790, %v786
      %v1039 = vpack.c.b16 %v791, %v787
      %v1040 = vpack.c.b16 %v792, %v788
      %v1041 = vpack.c.b16 %v793, %v789
      %v1042 = vpack.c.b16 %v798, %v794
      %v1043 = vpack.c.b16 %v799, %v795
      %v1044 = vpack.c.b16 %v800, %v796
      %v1045 = vpack.c.b16 %v801, %v797
      %v1046 = vpack.c.b16 %v806, %v802
      %v1047 = vpack.c.b16 %v807, %v803
      %v1048 = vpack.c.b16 %v808, %v804
      %v1049 = vpack.c.b16 %v809, %v805
      %v1050 = vpack.c.b16 %v814, %v810
      %v1051 = vpack.c.b16 %v815, %v811
      %v1052 = vpack.c.b16 %v816, %v812
      %v1053 = vpack.c.b16 %v817, %v813
      %v1054 = vpack.c.b16 %v822, %v818
      %v1055 = vpack.c.b16 %v823, %v819
      %v1056 = vpack.c.b16 %v824, %v820
      %v1057 = vpack.c.b16 %v825, %v821
      %v1058 = vpack.c.b16 %v830, %v826
      %v1059 = vpack.c.b16 %v831, %v827
      %v1060 = vpack.c.b16 %v832, %v828
      %v1061 = vpack.c.b16 %v833, %v829
      %v1062 = vpack.c.b16 %v838, %v834
      %v1063 = vpack.c.b16 %v839, %v835
      %v1064 = vpack.c.b16 %v840, %v836
      %v1065 = vpack.c.b16 %v841, %v837
      %v1066 = vpack.c.b16 %v846, %v842
      %v1067 = vpack.c.b16 %v847, %v843
      %v1068 = vpack.c.b16 %v848, %v844
      %v1069 = vpack.c.b16 %v849, %v845
      %v1070 = vpack.c.b16 %v854, %v850
      %v1071 = vpack.c.b16 %v855, %v851
      %v1072 = vpack.c.b16 %v856, %v852
      %v1073 = vpack.c.b16 %v857, %v853
      %v1074 = vpack.c.b16 %v862, %v858
      %v1075 = vpack.c.b16 %v863, %v859
      %v1076 = vpack.c.b16 %v864, %v860
      %v1077 = vpack.c.b16 %v865, %v861
      %v1078 = vpack.c.b16 %v870, %v866
      %v1079 = vpack.c.b16 %v871, %v867
      %v1080 = vpack.c.b16 %v872, %v868
      %v1081 = vpack.c.b16 %v873, %v869
      %v1082 = vpack.c.b16 %v878, %v874
      %v1083 = vpack.c.b16 %v879, %v875
      %v1084 = vpack.c.b16 %v880, %v876
      %v1085 = vpack.c.b16 %v881, %v877
      %v1086 = vpack.c.b16 %v886, %v882
      %v1087 = vpack.c.b16 %v887, %v883
      %v1088 = vpack.c.b16 %v888, %v884
      %v1089 = vpack.c.b16 %v889, %v885
      %v1090 = vpack.c.b16 %v894, %v890
      %v1091 = vpack.c.b16 %v895, %v891
      %v1092 = vpack.c.b16 %v896, %v892
      %v1093 = vpack.c.b16 %v897, %v893
      %v1094 = vpack.c.b16 %v902, %v898
      %v1095 = vpack.c.b16 %v903, %v899
      %v1096 = vpack.c.b16 %v904, %v900
      %v1097 = vpack.c.b16 %v905, %v901
      %v1098 = vpack.c.b16 %v910, %v906
      %v1099 = vpack.c.b16 %v911, %v907
      %v1100 = vpack.c.b16 %v912, %v908
      %v1101 = vpack.c.b16 %v913, %v909
      %v1102 = vpack.c.b16 %v918, %v914
      %v1103 = vpack.c.b16 %v919, %v915
      %v1104 = vpack.c.b16 %v920, %v916
      %v1105 = vpack.c.b16 %v921, %v917
      %v1106 = vpack.c.b16 %v926, %v922
      %v1107 = vpack.c.b16 %v927, %v923
      %v1108 = vpack.c.b16 %v928, %v924
      %v1109 = vpack.c.b16 %v929, %v925
      %v1110 = vpack.c.b16 %v934, %v930
      %v1111 = vpack.c.b16 %v935, %v931
      %v1112 = vpack.c.b16 %v936, %v932
      %v1113 = vpack.c.b16 %v937, %v933
      %v1114 = vpack.c.b16 %v942, %v938
      %v1115 = vpack.c.b16 %v943, %v939
      %v1116 = vpack.c.b16 %v944, %v940
      %v1117 = vpack.c.b16 %v945, %v941
      %v1118 = vpack.c.b16 %v950, %v946
      %v1119 = vpack.c.b16 %v951, %v947
      %v1120 = vpack.c.b16 %v952, %v948
      %v1121 = vpack.c.b16 %v953, %v949
      %v1122 = vpack.c.b16 %v958, %v954
      %v1123 = vpack.c.b16 %v959, %v955
      %v1124 = vpack.c.b16 %v960, %v956
      %v1125 = vpack.c.b16 %v961, %v957
      %v1126 = vpack.c.b16 %v966, %v962
      %v1127 = vpack.c.b16 %v967, %v963
      %v1128 = vpack.c.b16 %v968, %v964
      %v1129 = vpack.c.b16 %v969, %v965
      %v1130 = vpack.c.b16 %v974, %v970
      %v1131 = vpack.c.b16 %v975, %v971
      %v1132 = vpack.c.b16 %v976, %v972
      %v1133 = vpack.c.b16 %v977, %v973
      %v1134 = vpack.c.b16 %v982, %v978
      %v1135 = vpack.c.b16 %v983, %v979
      %v1136 = vpack.c.b16 %v984, %v980
      %v1137 = vpack.c.b16 %v985, %v981
      %v1138 = vpack.c.b16 %v990, %v986
      %v1139 = vpack.c.b16 %v991, %v987
      %v1140 = vpack.c.b16 %v992, %v988
      %v1141 = vpack.c.b16 %v993, %v989
      %v1142 = vpack.c.b16 %v998, %v994
      %v1143 = vpack.c.b16 %v999, %v995
      %v1144 = vpack.c.b16 %v1000, %v996
      %v1145 = vpack.c.b16 %v1001, %v997
      %v1146 = vpack.c.b16 %v1006, %v1002
      %v1147 = vpack.c.b16 %v1007, %v1003
      %v1148 = vpack.c.b16 %v1008, %v1004
      %v1149 = vpack.c.b16 %v1009, %v1005
      %v1150 = vpack.c.b16 %v1014, %v1010
      %v1151 = vpack.c.b16 %v1015, %v1011
      %v1152 = vpack.c.b16 %v1016, %v1012
      %v1153 = vpack.c.b16 %v1017, %v1013
      %v1154 = vpack.c.b16 %v1022, %v1018
      %v1155 = vpack.c.b16 %v1023, %v1019
      %v1156 = vpack.c.b16 %v1024, %v1020
      %v1157 = vpack.c.b16 %v1025, %v1021
      %v1158 = vpack.c.b16 %v1030, %v1026
      %v1159 = vpack.c.b16 %v1031, %v1027
      %v1160 = vpack.c.b16 %v1032, %v1028
      %v1161 = vpack.c.b16 %v1033, %v1029
      %v1354 = vunpack.c.l.b16 %v586
      %v1355 = vunpack.c.l.b16 %v587
      %v1356 = vunpack.c.l.b16 %v588
      %v1357 = vunpack.c.l.b16 %v589
      %v1358 = vunpack.c.l.b16 %v590
      %v1359 = vunpack.c.l.b16 %v591
      %v1360 = vunpack.c.l.b16 %v592
      %v1361 = vunpack.c.l.b16 %v593
      %v1362 = vunpack.c.l.b16 %v594
      %v1363 = vunpack.c.l.b16 %v595
      %v1364 = vunpack.c.l.b16 %v596
      %v1365 = vunpack.c.l.b16 %v597
      %v1366 = vunpack.c.l.b16 %v598
      %v1367 = vunpack.c.l.b16 %v599
      %v1368 = vunpack.c.l.b16 %v600
      %v1369 = vunpack.c.l.b16 %v601
      %v1370 = vunpack.c.l.b16 %v602
      %v1371 = vunpack.c.l.b16 %v603
      %v1372 = vunpack.c.l.b16 %v604
      %v1373 = vunpack.c.l.b16 %v605
      %v1374 = vunpack.c.l.b16 %v606
      %v1375 = vunpack.c.l.b16 %v607
      %v1376 = vunpack.c.l.b16 %v608
      %v1377 = vunpack.c.l.b16 %v609
      %v1378 = vunpack.c.l.b16 %v610
      %v1379 = vunpack.c.l.b16 %v611
      %v1380 = vunpack.c.l.b16 %v612
      %v1381 = vunpack.c.l.b16 %v613
      %v1382 = vunpack.c.l.b16 %v614
      %v1383 = vunpack.c.l.b16 %v615
      %v1384 = vunpack.c.l.b16 %v616
      %v1385 = vunpack.c.l.b16 %v617
      %v1386 = vunpack.c.l.b16 %v618
      %v1387 = vunpack.c.l.b16 %v619
      %v1388 = vunpack.c.l.b16 %v620
      %v1389 = vunpack.c.l.b16 %v621
      %v1390 = vunpack.c.l.b16 %v622
      %v1391 = vunpack.c.l.b16 %v623
      %v1392 = vunpack.c.l.b16 %v624
      %v1393 = vunpack.c.l.b16 %v625
      %v1394 = vunpack.c.l.b16 %v626
      %v1395 = vunpack.c.l.b16 %v627
      %v1396 = vunpack.c.l.b16 %v628
      %v1397 = vunpack.c.l.b16 %v629
      %v1398 = vunpack.c.l.b16 %v630
      %v1399 = vunpack.c.l.b16 %v631
      %v1400 = vunpack.c.l.b16 %v632
      %v1401 = vunpack.c.l.b16 %v633
      %v1402 = vunpack.c.l.b16 %v634
      %v1403 = vunpack.c.l.b16 %v635
      %v1404 = vunpack.c.l.b16 %v636
      %v1405 = vunpack.c.l.b16 %v637
      %v1406 = vunpack.c.l.b16 %v638
      %v1407 = vunpack.c.l.b16 %v639
      %v1408 = vunpack.c.l.b16 %v640
      %v1409 = vunpack.c.l.b16 %v641
      %v1410 = vunpack.c.l.b16 %v642
      %v1411 = vunpack.c.l.b16 %v643
      %v1412 = vunpack.c.l.b16 %v644
      %v1413 = vunpack.c.l.b16 %v645
      %v1414 = vunpack.c.l.b16 %v646
      %v1415 = vunpack.c.l.b16 %v647
      %v1416 = vunpack.c.l.b16 %v648
      %v1417 = vunpack.c.l.b16 %v649
      %v1418 = vpack.c.b16 %v1355, %v1354
      %v1419 = vpack.c.b16 %v1357, %v1356
      %v1420 = vpack.c.b16 %v1359, %v1358
      %v1421 = vpack.c.b16 %v1361, %v1360
      %v1422 = vpack.c.b16 %v1363, %v1362
      %v1423 = vpack.c.b16 %v1365, %v1364
      %v1424 = vpack.c.b16 %v1367, %v1366
      %v1425 = vpack.c.b16 %v1369, %v1368
      %v1426 = vpack.c.b16 %v1371, %v1370
      %v1427 = vpack.c.b16 %v1373, %v1372
      %v1428 = vpack.c.b16 %v1375, %v1374
      %v1429 = vpack.c.b16 %v1377, %v1376
      %v1430 = vpack.c.b16 %v1379, %v1378
      %v1431 = vpack.c.b16 %v1381, %v1380
      %v1432 = vpack.c.b16 %v1383, %v1382
      %v1433 = vpack.c.b16 %v1385, %v1384
      %v1434 = vpack.c.b16 %v1387, %v1386
      %v1435 = vpack.c.b16 %v1389, %v1388
      %v1436 = vpack.c.b16 %v1391, %v1390
      %v1437 = vpack.c.b16 %v1393, %v1392
      %v1438 = vpack.c.b16 %v1395, %v1394
      %v1439 = vpack.c.b16 %v1397, %v1396
      %v1440 = vpack.c.b16 %v1399, %v1398
      %v1441 = vpack.c.b16 %v1401, %v1400
      %v1442 = vpack.c.b16 %v1403, %v1402
      %v1443 = vpack.c.b16 %v1405, %v1404
      %v1444 = vpack.c.b16 %v1407, %v1406
      %v1445 = vpack.c.b16 %v1409, %v1408
      %v1446 = vpack.c.b16 %v1411, %v1410
      %v1447 = vpack.c.b16 %v1413, %v1412
      %v1448 = vpack.c.b16 %v1415, %v1414
      %v1449 = vpack.c.b16 %v1417, %v1416
      %1482 = vmatprep.subr.bf16.mxu0 0
      %1483 = vmatpush1.bf16.msra.mxu0 %v1418
      %1484 = vmatprep.subr.bf16.mxu0 0
      %1485 = vmatpush1.bf16.msra.mxu0 %v1419
      %1486 = vmatprep.subr.bf16.mxu0 0
      %1487 = vmatpush1.bf16.msra.mxu0 %v1420
      %1488 = vmatprep.subr.bf16.mxu0 0
      %1489 = vmatpush1.bf16.msra.mxu0 %v1421
      %1490 = vmatprep.subr.bf16.mxu0 0
      %1491 = vmatpush1.bf16.msra.mxu0 %v1422
      %1492 = vmatprep.subr.bf16.mxu0 0
      %1493 = vmatpush1.bf16.msra.mxu0 %v1423
      %1494 = vmatprep.subr.bf16.mxu0 0
      %1495 = vmatpush1.bf16.msra.mxu0 %v1424
      %1496 = vmatprep.subr.bf16.mxu0 0
      %1497 = vmatpush1.bf16.msra.mxu0 %v1425
      %1498 = vmatprep.subr.bf16.mxu0 0
      %1499 = vmatpush1.bf16.msra.mxu0 %v1426
      %1500 = vmatprep.subr.bf16.mxu0 0
      %1501 = vmatpush1.bf16.msra.mxu0 %v1427
      %1502 = vmatprep.subr.bf16.mxu0 0
      %1503 = vmatpush1.bf16.msra.mxu0 %v1428
      %1504 = vmatprep.subr.bf16.mxu0 0
      %1505 = vmatpush1.bf16.msra.mxu0 %v1429
      %1506 = vmatprep.subr.bf16.mxu0 0
      %1507 = vmatpush1.bf16.msra.mxu0 %v1430
      %1508 = vmatprep.subr.bf16.mxu0 0
      %1509 = vmatpush1.bf16.msra.mxu0 %v1431
      %1510 = vmatprep.subr.bf16.mxu0 0
      %1511 = vmatpush1.bf16.msra.mxu0 %v1432
      %1512 = vmatprep.subr.bf16.mxu0 0
      %1513 = vmatpush1.bf16.msra.mxu0 %v1433
      %1514 = vmatprep.mubr.bf16.mxu0 %v1035
      %1515 = vmatmul.mubr.bf16.gmra.mrb[0].mxu0 %v1034
      %v1516 = vpop.f32.mrb[0].mxu0
      %v1517 = vadd.f32 0.0, %v1516
      %v1518 = vpop.f32.mrb[0].mxu0
      %v1519 = vpop.f32.mrb[0].mxu0
      %v1520 = vadd.f32 0.0, %v1519
      %v1521 = vpop.f32.mrb[0].mxu0
      %1522 = vmatprep.mubr.bf16.mxu0 %v1039
      %1523 = vmatmul.mubr.bf16.gmra.mrb[0].mxu0 %v1038
      %v1524 = vpop.f32.mrb[0].mxu0
      %v1525 = vadd.f32 0.0, %v1524
      %v1526 = vpop.f32.mrb[0].mxu0
      %v1527 = vpop.f32.mrb[0].mxu0
      %v1528 = vadd.f32 0.0, %v1527
      %v1529 = vpop.f32.mrb[0].mxu0
      %1530 = vmatprep.mubr.bf16.mxu0 %v1043
      %1531 = vmatmul.mubr.bf16.gmra.mrb[0].mxu0 %v1042
      %v1532 = vpop.f32.mrb[0].mxu0
      %v1533 = vadd.f32 0.0, %v1532
      %v1534 = vpop.f32.mrb[0].mxu0
      %v1535 = vpop.f32.mrb[0].mxu0
      %v1536 = vadd.f32 0.0, %v1535
      %v1537 = vpop.f32.mrb[0].mxu0
      %1538 = vmatprep.mubr.bf16.mxu0 %v1047
      %1539 = vmatmul.mubr.bf16.gmra.mrb[0].mxu0 %v1046
      %v1540 = vpop.f32.mrb[0].mxu0
      %v1541 = vadd.f32 0.0, %v1540
      %v1542 = vpop.f32.mrb[0].mxu0
      %v1543 = vpop.f32.mrb[0].mxu0
      %v1544 = vadd.f32 0.0, %v1543
      %v1545 = vpop.f32.mrb[0].mxu0
      %1546 = vmatprep.mubr.bf16.mxu0 %v1051
      %1547 = vmatmul.mubr.bf16.gmra.mrb[0].mxu0 %v1050
      %v1548 = vpop.f32.mrb[0].mxu0
      %v1549 = vadd.f32 0.0, %v1548
      %v1550 = vpop.f32.mrb[0].mxu0
      %v1551 = vpop.f32.mrb[0].mxu0
      %v1552 = vadd.f32 0.0, %v1551
      %v1553 = vpop.f32.mrb[0].mxu0
      %1554 = vmatprep.mubr.bf16.mxu0 %v1055
      %1555 = vmatmul.mubr.bf16.gmra.mrb[0].mxu0 %v1054
      %v1556 = vpop.f32.mrb[0].mxu0
      %v1557 = vadd.f32 0.0, %v1556
      %v1558 = vpop.f32.mrb[0].mxu0
      %v1559 = vpop.f32.mrb[0].mxu0
      %v1560 = vadd.f32 0.0, %v1559
      %v1561 = vpop.f32.mrb[0].mxu0
      %1562 = vmatprep.mubr.bf16.mxu0 %v1059
      %1563 = vmatmul.mubr.bf16.gmra.mrb[0].mxu0 %v1058
      %v1564 = vpop.f32.mrb[0].mxu0
      %v1565 = vadd.f32 0.0, %v1564
      %v1566 = vpop.f32.mrb[0].mxu0
      %v1567 = vpop.f32.mrb[0].mxu0
      %v1568 = vadd.f32 0.0, %v1567
      %v1569 = vpop.f32.mrb[0].mxu0
      %1570 = vmatprep.mubr.bf16.mxu0 %v1063
      %1571 = vmatmul.mubr.bf16.gmra.mrb[0].mxu0 %v1062
      %v1572 = vpop.f32.mrb[0].mxu0
      %v1573 = vadd.f32 0.0, %v1572
      %v1574 = vpop.f32.mrb[0].mxu0
      %v1575 = vpop.f32.mrb[0].mxu0
      %v1576 = vadd.f32 0.0, %v1575
      %v1577 = vpop.f32.mrb[0].mxu0
      %1578 = vmatprep.mubr.bf16.mxu0 %v1067
      %1579 = vmatmul.mubr.bf16.gmra.mrb[0].mxu0 %v1066
      %v1580 = vpop.f32.mrb[0].mxu0
      %v1581 = vadd.f32 0.0, %v1580
      %v1582 = vpop.f32.mrb[0].mxu0
      %v1583 = vpop.f32.mrb[0].mxu0
      %v1584 = vadd.f32 0.0, %v1583
      %v1585 = vpop.f32.mrb[0].mxu0
      %1586 = vmatprep.mubr.bf16.mxu0 %v1071
      %1587 = vmatmul.mubr.bf16.gmra.mrb[0].mxu0 %v1070
      %v1588 = vpop.f32.mrb[0].mxu0
      %v1589 = vadd.f32 0.0, %v1588
      %v1590 = vpop.f32.mrb[0].mxu0
      %v1591 = vpop.f32.mrb[0].mxu0
      %v1592 = vadd.f32 0.0, %v1591
      %v1593 = vpop.f32.mrb[0].mxu0
      %1594 = vmatprep.mubr.bf16.mxu0 %v1075
      %1595 = vmatmul.mubr.bf16.gmra.mrb[0].mxu0 %v1074
      %v1596 = vpop.f32.mrb[0].mxu0
      %v1597 = vadd.f32 0.0, %v1596
      %v1598 = vpop.f32.mrb[0].mxu0
      %v1599 = vpop.f32.mrb[0].mxu0
      %v1600 = vadd.f32 0.0, %v1599
      %v1601 = vpop.f32.mrb[0].mxu0
      %1602 = vmatprep.mubr.bf16.mxu0 %v1079
      %1603 = vmatmul.mubr.bf16.gmra.mrb[0].mxu0 %v1078
      %v1604 = vpop.f32.mrb[0].mxu0
      %v1605 = vadd.f32 0.0, %v1604
      %v1606 = vpop.f32.mrb[0].mxu0
      %v1607 = vpop.f32.mrb[0].mxu0
      %v1608 = vadd.f32 0.0, %v1607
      %v1609 = vpop.f32.mrb[0].mxu0
      %1610 = vmatprep.mubr.bf16.mxu0 %v1083
      %1611 = vmatmul.mubr.bf16.gmra.mrb[0].mxu0 %v1082
      %v1612 = vpop.f32.mrb[0].mxu0
      %v1613 = vadd.f32 0.0, %v1612
      %v1614 = vpop.f32.mrb[0].mxu0
      %v1615 = vpop.f32.mrb[0].mxu0
      %v1616 = vadd.f32 0.0, %v1615
      %v1617 = vpop.f32.mrb[0].mxu0
      %1618 = vmatprep.mubr.bf16.mxu0 %v1087
      %1619 = vmatmul.mubr.bf16.gmra.mrb[0].mxu0 %v1086
      %v1620 = vpop.f32.mrb[0].mxu0
      %v1621 = vadd.f32 0.0, %v1620
      %v1622 = vpop.f32.mrb[0].mxu0
      %v1623 = vpop.f32.mrb[0].mxu0
      %v1624 = vadd.f32 0.0, %v1623
      %v1625 = vpop.f32.mrb[0].mxu0
      %1626 = vmatprep.mubr.bf16.mxu0 %v1091
      %1627 = vmatmul.mubr.bf16.gmra.mrb[0].mxu0 %v1090
      %v1628 = vpop.f32.mrb[0].mxu0
      %v1629 = vadd.f32 0.0, %v1628
      %v1630 = vpop.f32.mrb[0].mxu0
      %v1631 = vpop.f32.mrb[0].mxu0
      %v1632 = vadd.f32 0.0, %v1631
      %v1633 = vpop.f32.mrb[0].mxu0
      %1634 = vmatprep.mubr.bf16.mxu0 %v1095
      %1635 = vmatmul.mubr.bf16.gmra.mrb[0].mxu0 %v1094
      %v1636 = vpop.f32.mrb[0].mxu0
      %v1637 = vadd.f32 0.0, %v1636
      %v1638 = vpop.f32.mrb[0].mxu0
      %v1639 = vpop.f32.mrb[0].mxu0
      %v1640 = vadd.f32 0.0, %v1639
      %v1641 = vpop.f32.mrb[0].mxu0
      %1642 = vmatprep.mubr.bf16.mxu0 %v1099
      %1643 = vmatmul.mubr.bf16.gmra.mrb[0].mxu0 %v1098
      %v1644 = vpop.f32.mrb[0].mxu0
      %v1645 = vadd.f32 0.0, %v1644
      %v1646 = vpop.f32.mrb[0].mxu0
      %v1647 = vpop.f32.mrb[0].mxu0
      %v1648 = vadd.f32 0.0, %v1647
      %v1649 = vpop.f32.mrb[0].mxu0
      %1650 = vmatprep.mubr.bf16.mxu0 %v1103
      %1651 = vmatmul.mubr.bf16.gmra.mrb[0].mxu0 %v1102
      %v1652 = vpop.f32.mrb[0].mxu0
      %v1653 = vadd.f32 0.0, %v1652
      %v1654 = vpop.f32.mrb[0].mxu0
      %v1655 = vpop.f32.mrb[0].mxu0
      %v1656 = vadd.f32 0.0, %v1655
      %v1657 = vpop.f32.mrb[0].mxu0
      %1658 = vmatprep.mubr.bf16.mxu0 %v1107
      %1659 = vmatmul.mubr.bf16.gmra.mrb[0].mxu0 %v1106
      %v1660 = vpop.f32.mrb[0].mxu0
      %v1661 = vadd.f32 0.0, %v1660
      %v1662 = vpop.f32.mrb[0].mxu0
      %v1663 = vpop.f32.mrb[0].mxu0
      %v1664 = vadd.f32 0.0, %v1663
      %v1665 = vpop.f32.mrb[0].mxu0
      %1666 = vmatprep.mubr.bf16.mxu0 %v1111
      %1667 = vmatmul.mubr.bf16.gmra.mrb[0].mxu0 %v1110
      %v1668 = vpop.f32.mrb[0].mxu0
      %v1669 = vadd.f32 0.0, %v1668
      %v1670 = vpop.f32.mrb[0].mxu0
      %v1671 = vpop.f32.mrb[0].mxu0
      %v1672 = vadd.f32 0.0, %v1671
      %v1673 = vpop.f32.mrb[0].mxu0
      %1674 = vmatprep.mubr.bf16.mxu0 %v1115
      %1675 = vmatmul.mubr.bf16.gmra.mrb[0].mxu0 %v1114
      %v1676 = vpop.f32.mrb[0].mxu0
      %v1677 = vadd.f32 0.0, %v1676
      %v1678 = vpop.f32.mrb[0].mxu0
      %v1679 = vpop.f32.mrb[0].mxu0
      %v1680 = vadd.f32 0.0, %v1679
      %v1681 = vpop.f32.mrb[0].mxu0
      %1682 = vmatprep.mubr.bf16.mxu0 %v1119
      %1683 = vmatmul.mubr.bf16.gmra.mrb[0].mxu0 %v1118
      %v1684 = vpop.f32.mrb[0].mxu0
      %v1685 = vadd.f32 0.0, %v1684
      %v1686 = vpop.f32.mrb[0].mxu0
      %v1687 = vpop.f32.mrb[0].mxu0
      %v1688 = vadd.f32 0.0, %v1687
      %v1689 = vpop.f32.mrb[0].mxu0
      %1690 = vmatprep.mubr.bf16.mxu0 %v1123
      %1691 = vmatmul.mubr.bf16.gmra.mrb[0].mxu0 %v1122
      %v1692 = vpop.f32.mrb[0].mxu0
      %v1693 = vadd.f32 0.0, %v1692
      %v1694 = vpop.f32.mrb[0].mxu0
      %v1695 = vpop.f32.mrb[0].mxu0
      %v1696 = vadd.f32 0.0, %v1695
      %v1697 = vpop.f32.mrb[0].mxu0
      %1698 = vmatprep.mubr.bf16.mxu0 %v1127
      %1699 = vmatmul.mubr.bf16.gmra.mrb[0].mxu0 %v1126
      %v1700 = vpop.f32.mrb[0].mxu0
      %v1701 = vadd.f32 0.0, %v1700
      %v1702 = vpop.f32.mrb[0].mxu0
      %v1703 = vpop.f32.mrb[0].mxu0
      %v1704 = vadd.f32 0.0, %v1703
      %v1705 = vpop.f32.mrb[0].mxu0
      %1706 = vmatprep.mubr.bf16.mxu0 %v1131
      %1707 = vmatmul.mubr.bf16.gmra.mrb[0].mxu0 %v1130
      %v1708 = vpop.f32.mrb[0].mxu0
      %v1709 = vadd.f32 0.0, %v1708
      %v1710 = vpop.f32.mrb[0].mxu0
      %v1711 = vpop.f32.mrb[0].mxu0
      %v1712 = vadd.f32 0.0, %v1711
      %v1713 = vpop.f32.mrb[0].mxu0
      %1714 = vmatprep.mubr.bf16.mxu0 %v1135
      %1715 = vmatmul.mubr.bf16.gmra.mrb[0].mxu0 %v1134
      %v1716 = vpop.f32.mrb[0].mxu0
      %v1717 = vadd.f32 0.0, %v1716
      %v1718 = vpop.f32.mrb[0].mxu0
      %v1719 = vpop.f32.mrb[0].mxu0
      %v1720 = vadd.f32 0.0, %v1719
      %v1721 = vpop.f32.mrb[0].mxu0
      %1722 = vmatprep.mubr.bf16.mxu0 %v1139
      %1723 = vmatmul.mubr.bf16.gmra.mrb[0].mxu0 %v1138
      %v1724 = vpop.f32.mrb[0].mxu0
      %v1725 = vadd.f32 0.0, %v1724
      %v1726 = vpop.f32.mrb[0].mxu0
      %v1727 = vpop.f32.mrb[0].mxu0
      %v1728 = vadd.f32 0.0, %v1727
      %v1729 = vpop.f32.mrb[0].mxu0
      %1730 = vmatprep.mubr.bf16.mxu0 %v1143
      %1731 = vmatmul.mubr.bf16.gmra.mrb[0].mxu0 %v1142
      %v1732 = vpop.f32.mrb[0].mxu0
      %v1733 = vadd.f32 0.0, %v1732
      %v1734 = vpop.f32.mrb[0].mxu0
      %v1735 = vpop.f32.mrb[0].mxu0
      %v1736 = vadd.f32 0.0, %v1735
      %v1737 = vpop.f32.mrb[0].mxu0
      %1738 = vmatprep.mubr.bf16.mxu0 %v1147
      %1739 = vmatmul.mubr.bf16.gmra.mrb[0].mxu0 %v1146
      %v1740 = vpop.f32.mrb[0].mxu0
      %v1741 = vadd.f32 0.0, %v1740
      %v1742 = vpop.f32.mrb[0].mxu0
      %v1743 = vpop.f32.mrb[0].mxu0
      %v1744 = vadd.f32 0.0, %v1743
      %v1745 = vpop.f32.mrb[0].mxu0
      %1746 = vmatprep.mubr.bf16.mxu0 %v1151
      %1747 = vmatmul.mubr.bf16.gmra.mrb[0].mxu0 %v1150
      %v1748 = vpop.f32.mrb[0].mxu0
      %v1749 = vadd.f32 0.0, %v1748
      %v1750 = vpop.f32.mrb[0].mxu0
      %v1751 = vpop.f32.mrb[0].mxu0
      %v1752 = vadd.f32 0.0, %v1751
      %v1753 = vpop.f32.mrb[0].mxu0
      %1754 = vmatprep.mubr.bf16.mxu0 %v1155
      %1755 = vmatmul.mubr.bf16.gmra.mrb[0].mxu0 %v1154
      %v1756 = vpop.f32.mrb[0].mxu0
      %v1757 = vadd.f32 0.0, %v1756
      %v1758 = vpop.f32.mrb[0].mxu0
      %v1759 = vpop.f32.mrb[0].mxu0
      %v1760 = vadd.f32 0.0, %v1759
      %v1761 = vpop.f32.mrb[0].mxu0
      %1762 = vmatprep.mubr.bf16.mxu0 %v1159
      %1763 = vmatmul.mubr.bf16.gmra.mrb[0].mxu0 %v1158
      %v1764 = vpop.f32.mrb[0].mxu0
      %v1765 = vadd.f32 0.0, %v1764
      %v1766 = vpop.f32.mrb[0].mxu0
      %v1767 = vpop.f32.mrb[0].mxu0
      %v1768 = vadd.f32 0.0, %v1767
      %v1769 = vpop.f32.mrb[0].mxu0
      %1770 = vdwg.mxu0
      %1771 = vmatprep.subr.bf16.mxu0 0
      %1772 = vmatpush1.bf16.msra.mxu0 %v1434
      %1773 = vmatprep.subr.bf16.mxu0 0
      %1774 = vmatpush1.bf16.msra.mxu0 %v1435
      %1775 = vmatprep.subr.bf16.mxu0 0
      %1776 = vmatpush1.bf16.msra.mxu0 %v1436
      %1777 = vmatprep.subr.bf16.mxu0 0
      %1778 = vmatpush1.bf16.msra.mxu0 %v1437
      %1779 = vmatprep.subr.bf16.mxu0 0
      %1780 = vmatpush1.bf16.msra.mxu0 %v1438
      %1781 = vmatprep.subr.bf16.mxu0 0
      %1782 = vmatpush1.bf16.msra.mxu0 %v1439
      %1783 = vmatprep.subr.bf16.mxu0 0
      %1784 = vmatpush1.bf16.msra.mxu0 %v1440
      %1785 = vmatprep.subr.bf16.mxu0 0
      %1786 = vmatpush1.bf16.msra.mxu0 %v1441
      %1787 = vmatprep.subr.bf16.mxu0 0
      %1788 = vmatpush1.bf16.msra.mxu0 %v1442
      %1789 = vmatprep.subr.bf16.mxu0 0
      %1790 = vmatpush1.bf16.msra.mxu0 %v1443
      %1791 = vmatprep.subr.bf16.mxu0 0
      %1792 = vmatpush1.bf16.msra.mxu0 %v1444
      %1793 = vmatprep.subr.bf16.mxu0 0
      %1794 = vmatpush1.bf16.msra.mxu0 %v1445
      %1795 = vmatprep.subr.bf16.mxu0 0
      %1796 = vmatpush1.bf16.msra.mxu0 %v1446
      %1797 = vmatprep.subr.bf16.mxu0 0
      %1798 = vmatpush1.bf16.msra.mxu0 %v1447
      %1799 = vmatprep.subr.bf16.mxu0 0
      %1800 = vmatpush1.bf16.msra.mxu0 %v1448
      %1801 = vmatprep.subr.bf16.mxu0 0
      %1802 = vmatpush1.bf16.msra.mxu0 %v1449
      %1803 = vmatprep.mubr.bf16.mxu0 %v1037
      %1804 = vmatmul.mubr.bf16.gmra.mrb[0].mxu0 %v1036
      %v1805 = vpop.f32.mrb[0].mxu0
      %v1806 = vadd.f32 %v1517, %v1805
      %v1807 = vpop.f32.mrb[0].mxu0
      %v1808 = vpop.f32.mrb[0].mxu0
      %v1809 = vadd.f32 %v1520, %v1808
      %v1810 = vpop.f32.mrb[0].mxu0
      %1811 = vmatprep.mubr.bf16.mxu0 %v1041
      %1812 = vmatmul.mubr.bf16.gmra.mrb[0].mxu0 %v1040
      %v1813 = vpop.f32.mrb[0].mxu0
      %v1814 = vadd.f32 %v1525, %v1813
      %v1815 = vpop.f32.mrb[0].mxu0
      %v1816 = vpop.f32.mrb[0].mxu0
      %v1817 = vadd.f32 %v1528, %v1816
      %v1818 = vpop.f32.mrb[0].mxu0
      %1819 = vmatprep.mubr.bf16.mxu0 %v1045
      %1820 = vmatmul.mubr.bf16.gmra.mrb[0].mxu0 %v1044
      %v1821 = vpop.f32.mrb[0].mxu0
      %v1822 = vadd.f32 %v1533, %v1821
      %v1823 = vpop.f32.mrb[0].mxu0
      %v1824 = vpop.f32.mrb[0].mxu0
      %v1825 = vadd.f32 %v1536, %v1824
      %v1826 = vpop.f32.mrb[0].mxu0
      %1827 = vmatprep.mubr.bf16.mxu0 %v1049
      %1828 = vmatmul.mubr.bf16.gmra.mrb[0].mxu0 %v1048
      %v1829 = vpop.f32.mrb[0].mxu0
      %v1830 = vadd.f32 %v1541, %v1829
      %v1831 = vpop.f32.mrb[0].mxu0
      %v1832 = vpop.f32.mrb[0].mxu0
      %v1833 = vadd.f32 %v1544, %v1832
      %v1834 = vpop.f32.mrb[0].mxu0
      %1835 = vmatprep.mubr.bf16.mxu0 %v1053
      %1836 = vmatmul.mubr.bf16.gmra.mrb[0].mxu0 %v1052
      %v1837 = vpop.f32.mrb[0].mxu0
      %v1838 = vadd.f32 %v1549, %v1837
      %v1839 = vpop.f32.mrb[0].mxu0
      %v1840 = vpop.f32.mrb[0].mxu0
      %v1841 = vadd.f32 %v1552, %v1840
      %v1842 = vpop.f32.mrb[0].mxu0
      %1843 = vmatprep.mubr.bf16.mxu0 %v1057
      %1844 = vmatmul.mubr.bf16.gmra.mrb[0].mxu0 %v1056
      %v1845 = vpop.f32.mrb[0].mxu0
      %v1846 = vadd.f32 %v1557, %v1845
      %v1847 = vpop.f32.mrb[0].mxu0
      %v1848 = vpop.f32.mrb[0].mxu0
      %v1849 = vadd.f32 %v1560, %v1848
      %v1850 = vpop.f32.mrb[0].mxu0
      %1851 = vmatprep.mubr.bf16.mxu0 %v1061
      %1852 = vmatmul.mubr.bf16.gmra.mrb[0].mxu0 %v1060
      %v1853 = vpop.f32.mrb[0].mxu0
      %v1854 = vadd.f32 %v1565, %v1853
      %v1855 = vpop.f32.mrb[0].mxu0
      %v1856 = vpop.f32.mrb[0].mxu0
      %v1857 = vadd.f32 %v1568, %v1856
      %v1858 = vpop.f32.mrb[0].mxu0
      %1859 = vmatprep.mubr.bf16.mxu0 %v1065
      %1860 = vmatmul.mubr.bf16.gmra.mrb[0].mxu0 %v1064
      %v1861 = vpop.f32.mrb[0].mxu0
      %v1862 = vadd.f32 %v1573, %v1861
      %v1863 = vpop.f32.mrb[0].mxu0
      %v1864 = vpop.f32.mrb[0].mxu0
      %v1865 = vadd.f32 %v1576, %v1864
      %v1866 = vpop.f32.mrb[0].mxu0
      %1867 = vmatprep.mubr.bf16.mxu0 %v1069
      %1868 = vmatmul.mubr.bf16.gmra.mrb[0].mxu0 %v1068
      %v1869 = vpop.f32.mrb[0].mxu0
      %v1870 = vadd.f32 %v1581, %v1869
      %v1871 = vpop.f32.mrb[0].mxu0
      %v1872 = vpop.f32.mrb[0].mxu0
      %v1873 = vadd.f32 %v1584, %v1872
      %v1874 = vpop.f32.mrb[0].mxu0
      %1875 = vmatprep.mubr.bf16.mxu0 %v1073
      %1876 = vmatmul.mubr.bf16.gmra.mrb[0].mxu0 %v1072
      %v1877 = vpop.f32.mrb[0].mxu0
      %v1878 = vadd.f32 %v1589, %v1877
      %v1879 = vpop.f32.mrb[0].mxu0
      %v1880 = vpop.f32.mrb[0].mxu0
      %v1881 = vadd.f32 %v1592, %v1880
      %v1882 = vpop.f32.mrb[0].mxu0
      %1883 = vmatprep.mubr.bf16.mxu0 %v1077
      %1884 = vmatmul.mubr.bf16.gmra.mrb[0].mxu0 %v1076
      %v1885 = vpop.f32.mrb[0].mxu0
      %v1886 = vadd.f32 %v1597, %v1885
      %v1887 = vpop.f32.mrb[0].mxu0
      %v1888 = vpop.f32.mrb[0].mxu0
      %v1889 = vadd.f32 %v1600, %v1888
      %v1890 = vpop.f32.mrb[0].mxu0
      %1891 = vmatprep.mubr.bf16.mxu0 %v1081
      %1892 = vmatmul.mubr.bf16.gmra.mrb[0].mxu0 %v1080
      %v1893 = vpop.f32.mrb[0].mxu0
      %v1894 = vadd.f32 %v1605, %v1893
      %v1895 = vpop.f32.mrb[0].mxu0
      %v1896 = vpop.f32.mrb[0].mxu0
      %v1897 = vadd.f32 %v1608, %v1896
      %v1898 = vpop.f32.mrb[0].mxu0
      %1899 = vmatprep.mubr.bf16.mxu0 %v1085
      %1900 = vmatmul.mubr.bf16.gmra.mrb[0].mxu0 %v1084
      %v1901 = vpop.f32.mrb[0].mxu0
      %v1902 = vadd.f32 %v1613, %v1901
      %v1903 = vpop.f32.mrb[0].mxu0
      %v1904 = vpop.f32.mrb[0].mxu0
      %v1905 = vadd.f32 %v1616, %v1904
      %v1906 = vpop.f32.mrb[0].mxu0
      %1907 = vmatprep.mubr.bf16.mxu0 %v1089
      %1908 = vmatmul.mubr.bf16.gmra.mrb[0].mxu0 %v1088
      %v1909 = vpop.f32.mrb[0].mxu0
      %v1910 = vadd.f32 %v1621, %v1909
      %v1911 = vpop.f32.mrb[0].mxu0
      %v1912 = vpop.f32.mrb[0].mxu0
      %v1913 = vadd.f32 %v1624, %v1912
      %v1914 = vpop.f32.mrb[0].mxu0
      %1915 = vmatprep.mubr.bf16.mxu0 %v1093
      %1916 = vmatmul.mubr.bf16.gmra.mrb[0].mxu0 %v1092
      %v1917 = vpop.f32.mrb[0].mxu0
      %v1918 = vadd.f32 %v1629, %v1917
      %v1919 = vpop.f32.mrb[0].mxu0
      %v1920 = vpop.f32.mrb[0].mxu0
      %v1921 = vadd.f32 %v1632, %v1920
      %v1922 = vpop.f32.mrb[0].mxu0
      %1923 = vmatprep.mubr.bf16.mxu0 %v1097
      %1924 = vmatmul.mubr.bf16.gmra.mrb[0].mxu0 %v1096
      %v1925 = vpop.f32.mrb[0].mxu0
      %v1926 = vadd.f32 %v1637, %v1925
      %v1927 = vpop.f32.mrb[0].mxu0
      %v1928 = vpop.f32.mrb[0].mxu0
      %v1929 = vadd.f32 %v1640, %v1928
      %v1930 = vpop.f32.mrb[0].mxu0
      %1931 = vmatprep.mubr.bf16.mxu0 %v1101
      %1932 = vmatmul.mubr.bf16.gmra.mrb[0].mxu0 %v1100
      %v1933 = vpop.f32.mrb[0].mxu0
      %v1934 = vadd.f32 %v1645, %v1933
      %v1935 = vpop.f32.mrb[0].mxu0
      %v1936 = vpop.f32.mrb[0].mxu0
      %v1937 = vadd.f32 %v1648, %v1936
      %v1938 = vpop.f32.mrb[0].mxu0
      %1939 = vmatprep.mubr.bf16.mxu0 %v1105
      %1940 = vmatmul.mubr.bf16.gmra.mrb[0].mxu0 %v1104
      %v1941 = vpop.f32.mrb[0].mxu0
      %v1942 = vadd.f32 %v1653, %v1941
      %v1943 = vpop.f32.mrb[0].mxu0
      %v1944 = vpop.f32.mrb[0].mxu0
      %v1945 = vadd.f32 %v1656, %v1944
      %v1946 = vpop.f32.mrb[0].mxu0
      %1947 = vmatprep.mubr.bf16.mxu0 %v1109
      %1948 = vmatmul.mubr.bf16.gmra.mrb[0].mxu0 %v1108
      %v1949 = vpop.f32.mrb[0].mxu0
      %v1950 = vadd.f32 %v1661, %v1949
      %v1951 = vpop.f32.mrb[0].mxu0
      %v1952 = vpop.f32.mrb[0].mxu0
      %v1953 = vadd.f32 %v1664, %v1952
      %v1954 = vpop.f32.mrb[0].mxu0
      %1955 = vmatprep.mubr.bf16.mxu0 %v1113
      %1956 = vmatmul.mubr.bf16.gmra.mrb[0].mxu0 %v1112
      %v1957 = vpop.f32.mrb[0].mxu0
      %v1958 = vadd.f32 %v1669, %v1957
      %v1959 = vpop.f32.mrb[0].mxu0
      %v1960 = vpop.f32.mrb[0].mxu0
      %v1961 = vadd.f32 %v1672, %v1960
      %v1962 = vpop.f32.mrb[0].mxu0
      %1963 = vmatprep.mubr.bf16.mxu0 %v1117
      %1964 = vmatmul.mubr.bf16.gmra.mrb[0].mxu0 %v1116
      %v1965 = vpop.f32.mrb[0].mxu0
      %v1966 = vadd.f32 %v1677, %v1965
      %v1967 = vpop.f32.mrb[0].mxu0
      %v1968 = vpop.f32.mrb[0].mxu0
      %v1969 = vadd.f32 %v1680, %v1968
      %v1970 = vpop.f32.mrb[0].mxu0
      %1971 = vmatprep.mubr.bf16.mxu0 %v1121
      %1972 = vmatmul.mubr.bf16.gmra.mrb[0].mxu0 %v1120
      %v1973 = vpop.f32.mrb[0].mxu0
      %v1974 = vadd.f32 %v1685, %v1973
      %v1975 = vpop.f32.mrb[0].mxu0
      %v1976 = vpop.f32.mrb[0].mxu0
      %v1977 = vadd.f32 %v1688, %v1976
      %v1978 = vpop.f32.mrb[0].mxu0
      %1979 = vmatprep.mubr.bf16.mxu0 %v1125
      %1980 = vmatmul.mubr.bf16.gmra.mrb[0].mxu0 %v1124
      %v1981 = vpop.f32.mrb[0].mxu0
      %v1982 = vadd.f32 %v1693, %v1981
      %v1983 = vpop.f32.mrb[0].mxu0
      %v1984 = vpop.f32.mrb[0].mxu0
      %v1985 = vadd.f32 %v1696, %v1984
      %v1986 = vpop.f32.mrb[0].mxu0
      %1987 = vmatprep.mubr.bf16.mxu0 %v1129
      %1988 = vmatmul.mubr.bf16.gmra.mrb[0].mxu0 %v1128
      %v1989 = vpop.f32.mrb[0].mxu0
      %v1990 = vadd.f32 %v1701, %v1989
      %v1991 = vpop.f32.mrb[0].mxu0
      %v1992 = vpop.f32.mrb[0].mxu0
      %v1993 = vadd.f32 %v1704, %v1992
      %v1994 = vpop.f32.mrb[0].mxu0
      %1995 = vmatprep.mubr.bf16.mxu0 %v1133
      %1996 = vmatmul.mubr.bf16.gmra.mrb[0].mxu0 %v1132
      %v1997 = vpop.f32.mrb[0].mxu0
      %v1998 = vadd.f32 %v1709, %v1997
      %v1999 = vpop.f32.mrb[0].mxu0
      %v2000 = vpop.f32.mrb[0].mxu0
      %v2001 = vadd.f32 %v1712, %v2000
      %v2002 = vpop.f32.mrb[0].mxu0
      %2003 = vmatprep.mubr.bf16.mxu0 %v1137
      %2004 = vmatmul.mubr.bf16.gmra.mrb[0].mxu0 %v1136
      %v2005 = vpop.f32.mrb[0].mxu0
      %v2006 = vadd.f32 %v1717, %v2005
      %v2007 = vpop.f32.mrb[0].mxu0
      %v2008 = vpop.f32.mrb[0].mxu0
      %v2009 = vadd.f32 %v1720, %v2008
      %v2010 = vpop.f32.mrb[0].mxu0
      %2011 = vmatprep.mubr.bf16.mxu0 %v1141
      %2012 = vmatmul.mubr.bf16.gmra.mrb[0].mxu0 %v1140
      %v2013 = vpop.f32.mrb[0].mxu0
      %v2014 = vadd.f32 %v1725, %v2013
      %v2015 = vpop.f32.mrb[0].mxu0
      %v2016 = vpop.f32.mrb[0].mxu0
      %v2017 = vadd.f32 %v1728, %v2016
      %v2018 = vpop.f32.mrb[0].mxu0
      %2019 = vmatprep.mubr.bf16.mxu0 %v1145
      %2020 = vmatmul.mubr.bf16.gmra.mrb[0].mxu0 %v1144
      %v2021 = vpop.f32.mrb[0].mxu0
      %v2022 = vadd.f32 %v1733, %v2021
      %v2023 = vpop.f32.mrb[0].mxu0
      %v2024 = vpop.f32.mrb[0].mxu0
      %v2025 = vadd.f32 %v1736, %v2024
      %v2026 = vpop.f32.mrb[0].mxu0
      %2027 = vmatprep.mubr.bf16.mxu0 %v1149
      %2028 = vmatmul.mubr.bf16.gmra.mrb[0].mxu0 %v1148
      %v2029 = vpop.f32.mrb[0].mxu0
      %v2030 = vadd.f32 %v1741, %v2029
      %v2031 = vpop.f32.mrb[0].mxu0
      %v2032 = vpop.f32.mrb[0].mxu0
      %v2033 = vadd.f32 %v1744, %v2032
      %v2034 = vpop.f32.mrb[0].mxu0
      %2035 = vmatprep.mubr.bf16.mxu0 %v1153
      %2036 = vmatmul.mubr.bf16.gmra.mrb[0].mxu0 %v1152
      %v2037 = vpop.f32.mrb[0].mxu0
      %v2038 = vadd.f32 %v1749, %v2037
      %v2039 = vpop.f32.mrb[0].mxu0
      %v2040 = vpop.f32.mrb[0].mxu0
      %v2041 = vadd.f32 %v1752, %v2040
      %v2042 = vpop.f32.mrb[0].mxu0
      %2043 = vmatprep.mubr.bf16.mxu0 %v1157
      %2044 = vmatmul.mubr.bf16.gmra.mrb[0].mxu0 %v1156
      %v2045 = vpop.f32.mrb[0].mxu0
      %v2046 = vadd.f32 %v1757, %v2045
      %v2047 = vpop.f32.mrb[0].mxu0
      %v2048 = vpop.f32.mrb[0].mxu0
      %v2049 = vadd.f32 %v1760, %v2048
      %v2050 = vpop.f32.mrb[0].mxu0
      %2051 = vmatprep.mubr.bf16.mxu0 %v1161
      %2052 = vmatmul.mubr.bf16.gmra.mrb[0].mxu0 %v1160
      %v2053 = vpop.f32.mrb[0].mxu0
      %v2054 = vadd.f32 %v1765, %v2053
      %v2055 = vpop.f32.mrb[0].mxu0
      %v2056 = vpop.f32.mrb[0].mxu0
      %v2057 = vadd.f32 %v1768, %v2056
      %v2058 = vpop.f32.mrb[0].mxu0
      %2059 = vdwg.mxu0
      %v2060 = vadd.f32 %v394, %v1806
      %v2061 = vadd.f32 %v395, %v1809
      %v2062 = vadd.f32 %v396, %v1814
      %v2063 = vadd.f32 %v397, %v1817
      %v2064 = vadd.f32 %v398, %v1822
      %v2065 = vadd.f32 %v399, %v1825
      %v2066 = vadd.f32 %v400, %v1830
      %v2067 = vadd.f32 %v401, %v1833
      %v2068 = vadd.f32 %v402, %v1838
      %v2069 = vadd.f32 %v403, %v1841
      %v2070 = vadd.f32 %v404, %v1846
      %v2071 = vadd.f32 %v405, %v1849
      %v2072 = vadd.f32 %v406, %v1854
      %v2073 = vadd.f32 %v407, %v1857
      %v2074 = vadd.f32 %v408, %v1862
      %v2075 = vadd.f32 %v409, %v1865
      %v2076 = vadd.f32 %v410, %v1870
      %v2077 = vadd.f32 %v411, %v1873
      %v2078 = vadd.f32 %v412, %v1878
      %v2079 = vadd.f32 %v413, %v1881
      %v2080 = vadd.f32 %v414, %v1886
      %v2081 = vadd.f32 %v415, %v1889
      %v2082 = vadd.f32 %v416, %v1894
      %v2083 = vadd.f32 %v417, %v1897
      %v2084 = vadd.f32 %v418, %v1902
      %v2085 = vadd.f32 %v419, %v1905
      %v2086 = vadd.f32 %v420, %v1910
      %v2087 = vadd.f32 %v421, %v1913
      %v2088 = vadd.f32 %v422, %v1918
      %v2089 = vadd.f32 %v423, %v1921
      %v2090 = vadd.f32 %v424, %v1926
      %v2091 = vadd.f32 %v425, %v1929
      %v2092 = vadd.f32 %v426, %v1934
      %v2093 = vadd.f32 %v427, %v1937
      %v2094 = vadd.f32 %v428, %v1942
      %v2095 = vadd.f32 %v429, %v1945
      %v2096 = vadd.f32 %v430, %v1950
      %v2097 = vadd.f32 %v431, %v1953
      %v2098 = vadd.f32 %v432, %v1958
      %v2099 = vadd.f32 %v433, %v1961
      %v2100 = vadd.f32 %v434, %v1966
      %v2101 = vadd.f32 %v435, %v1969
      %v2102 = vadd.f32 %v436, %v1974
      %v2103 = vadd.f32 %v437, %v1977
      %v2104 = vadd.f32 %v438, %v1982
      %v2105 = vadd.f32 %v439, %v1985
      %v2106 = vadd.f32 %v440, %v1990
      %v2107 = vadd.f32 %v441, %v1993
      %v2108 = vadd.f32 %v442, %v1998
      %v2109 = vadd.f32 %v443, %v2001
      %v2110 = vadd.f32 %v444, %v2006
      %v2111 = vadd.f32 %v445, %v2009
      %v2112 = vadd.f32 %v446, %v2014
      %v2113 = vadd.f32 %v447, %v2017
      %v2114 = vadd.f32 %v448, %v2022
      %v2115 = vadd.f32 %v449, %v2025
      %v2116 = vadd.f32 %v450, %v2030
      %v2117 = vadd.f32 %v451, %v2033
      %v2118 = vadd.f32 %v452, %v2038
      %v2119 = vadd.f32 %v453, %v2041
      %v2120 = vadd.f32 %v454, %v2046
      %v2121 = vadd.f32 %v455, %v2049
      %v2122 = vadd.f32 %v456, %v2054
      %v2123 = vadd.f32 %v457, %v2057
      %2124 = vst [vmem:[#allocation2] sm:$0xff] %v2060
      %2125 = vst [vmem:[#allocation2 + $0x8] sm:$0xff] %v2061
      %2126 = vst [vmem:[#allocation2 + $0x10] sm:$0xff] %v2062
      %2127 = vst [vmem:[#allocation2 + $0x18] sm:$0xff] %v2063
      %2128 = vst [vmem:[#allocation2 + $0x20] sm:$0xff] %v2064
      %2129 = vst [vmem:[#allocation2 + $0x28] sm:$0xff] %v2065
      %2130 = vst [vmem:[#allocation2 + $0x30] sm:$0xff] %v2066
      %2131 = vst [vmem:[#allocation2 + $0x38] sm:$0xff] %v2067
      %2132 = vst [vmem:[#allocation2 + $0x40] sm:$0xff] %v2068
      %2133 = vst [vmem:[#allocation2 + $0x48] sm:$0xff] %v2069
      %2134 = vst [vmem:[#allocation2 + $0x50] sm:$0xff] %v2070
      %2135 = vst [vmem:[#allocation2 + $0x58] sm:$0xff] %v2071
      %2136 = vst [vmem:[#allocation2 + $0x60] sm:$0xff] %v2072
      %2137 = vst [vmem:[#allocation2 + $0x68] sm:$0xff] %v2073
      %2138 = vst [vmem:[#allocation2 + $0x70] sm:$0xff] %v2074
      %2139 = vst [vmem:[#allocation2 + $0x78] sm:$0xff] %v2075
      %2140 = vst [vmem:[#allocation2 + $0x80] sm:$0xff] %v2076
      %2141 = vst [vmem:[#allocation2 + $0x88] sm:$0xff] %v2077
      %2142 = vst [vmem:[#allocation2 + $0x90] sm:$0xff] %v2078
      %2143 = vst [vmem:[#allocation2 + $0x98] sm:$0xff] %v2079
      %2144 = vst [vmem:[#allocation2 + $0xa0] sm:$0xff] %v2080
      %2145 = vst [vmem:[#allocation2 + $0xa8] sm:$0xff] %v2081
      %2146 = vst [vmem:[#allocation2 + $0xb0] sm:$0xff] %v2082
      %2147 = vst [vmem:[#allocation2 + $0xb8] sm:$0xff] %v2083
      %2148 = vst [vmem:[#allocation2 + $0xc0] sm:$0xff] %v2084
      %2149 = vst [vmem:[#allocation2 + $0xc8] sm:$0xff] %v2085
      %2150 = vst [vmem:[#allocation2 + $0xd0] sm:$0xff] %v2086
      %2151 = vst [vmem:[#allocation2 + $0xd8] sm:$0xff] %v2087
      %2152 = vst [vmem:[#allocation2 + $0xe0] sm:$0xff] %v2088
      %2153 = vst [vmem:[#allocation2 + $0xe8] sm:$0xff] %v2089
      %2154 = vst [vmem:[#allocation2 + $0xf0] sm:$0xff] %v2090
      %2155 = vst [vmem:[#allocation2 + $0xf8] sm:$0xff] %v2091
      %2156 = vst [vmem:[#allocation2 + $0x100] sm:$0xff] %v2092
      %2157 = vst [vmem:[#allocation2 + $0x108] sm:$0xff] %v2093
      %2158 = vst [vmem:[#allocation2 + $0x110] sm:$0xff] %v2094
      %2159 = vst [vmem:[#allocation2 + $0x118] sm:$0xff] %v2095
      %2160 = vst [vmem:[#allocation2 + $0x120] sm:$0xff] %v2096
      %2161 = vst [vmem:[#allocation2 + $0x128] sm:$0xff] %v2097
      %2162 = vst [vmem:[#allocation2 + $0x130] sm:$0xff] %v2098
      %2163 = vst [vmem:[#allocation2 + $0x138] sm:$0xff] %v2099
      %2164 = vst [vmem:[#allocation2 + $0x140] sm:$0xff] %v2100
      %2165 = vst [vmem:[#allocation2 + $0x148] sm:$0xff] %v2101
      %2166 = vst [vmem:[#allocation2 + $0x150] sm:$0xff] %v2102
      %2167 = vst [vmem:[#allocation2 + $0x158] sm:$0xff] %v2103
      %2168 = vst [vmem:[#allocation2 + $0x160] sm:$0xff] %v2104
      %2169 = vst [vmem:[#allocation2 + $0x168] sm:$0xff] %v2105
      %2170 = vst [vmem:[#allocation2 + $0x170] sm:$0xff] %v2106
      %2171 = vst [vmem:[#allocation2 + $0x178] sm:$0xff] %v2107
      %2172 = vst [vmem:[#allocation2 + $0x180] sm:$0xff] %v2108
      %2173 = vst [vmem:[#allocation2 + $0x188] sm:$0xff] %v2109
      %2174 = vst [vmem:[#allocation2 + $0x190] sm:$0xff] %v2110
      %2175 = vst [vmem:[#allocation2 + $0x198] sm:$0xff] %v2111
      %2176 = vst [vmem:[#allocation2 + $0x1a0] sm:$0xff] %v2112
      %2177 = vst [vmem:[#allocation2 + $0x1a8] sm:$0xff] %v2113
      %2178 = vst [vmem:[#allocation2 + $0x1b0] sm:$0xff] %v2114
      %2179 = vst [vmem:[#allocation2 + $0x1b8] sm:$0xff] %v2115
      %2180 = vst [vmem:[#allocation2 + $0x1c0] sm:$0xff] %v2116
      %2181 = vst [vmem:[#allocation2 + $0x1c8] sm:$0xff] %v2117
      %2182 = vst [vmem:[#allocation2 + $0x1d0] sm:$0xff] %v2118
      %2183 = vst [vmem:[#allocation2 + $0x1d8] sm:$0xff] %v2119
      %2184 = vst [vmem:[#allocation2 + $0x1e0] sm:$0xff] %v2120
      %2185 = vst [vmem:[#allocation2 + $0x1e8] sm:$0xff] %v2121
      %2186 = vst [vmem:[#allocation2 + $0x1f0] sm:$0xff] %v2122
      %2187 = vst [vmem:[#allocation2 + $0x1f8] sm:$0xff] %v2123
      // Predicated region
      $region33: #{generator_forward.15} parent=27 // pred_check
        %p2188 = pneg %p326
      $region34: #{generator_forward.15} parent=27 // pred_check_branch
        %2190 = sbr.rel (%p2188) target = $region36
      $region35: #{generator_forward.15} parent=27 // pred_region
        %v2191 = vld [vmem:[#allocation2] sm:$0xff]
        %v2192 = vld [vmem:[#allocation2 + $0x8] sm:$0xff]
        %v2193 = vld [vmem:[#allocation2 + $0x10] sm:$0xff]
        %v2194 = vld [vmem:[#allocation2 + $0x18] sm:$0xff]
        %v2195 = vld [vmem:[#allocation2 + $0x20] sm:$0xff]
        %v2196 = vld [vmem:[#allocation2 + $0x28] sm:$0xff]
        %v2197 = vld [vmem:[#allocation2 + $0x30] sm:$0xff]
        %v2198 = vld [vmem:[#allocation2 + $0x38] sm:$0xff]
        %v2199 = vld [vmem:[#allocation2 + $0x40] sm:$0xff]
        %v2200 = vld [vmem:[#allocation2 + $0x48] sm:$0xff]
        %v2201 = vld [vmem:[#allocation2 + $0x50] sm:$0xff]
        %v2202 = vld [vmem:[#allocation2 + $0x58] sm:$0xff]
        %v2203 = vld [vmem:[#allocation2 + $0x60] sm:$0xff]
        %v2204 = vld [vmem:[#allocation2 + $0x68] sm:$0xff]
        %v2205 = vld [vmem:[#allocation2 + $0x70] sm:$0xff]
        %v2206 = vld [vmem:[#allocation2 + $0x78] sm:$0xff]
        %v2207 = vld [vmem:[#allocation2 + $0x80] sm:$0xff]
        %v2208 = vld [vmem:[#allocation2 + $0x88] sm:$0xff]
        %v2209 = vld [vmem:[#allocation2 + $0x90] sm:$0xff]
        %v2210 = vld [vmem:[#allocation2 + $0x98] sm:$0xff]
        %v2211 = vld [vmem:[#allocation2 + $0xa0] sm:$0xff]
        %v2212 = vld [vmem:[#allocation2 + $0xa8] sm:$0xff]
        %v2213 = vld [vmem:[#allocation2 + $0xb0] sm:$0xff]
        %v2214 = vld [vmem:[#allocation2 + $0xb8] sm:$0xff]
        %v2215 = vld [vmem:[#allocation2 + $0xc0] sm:$0xff]
        %v2216 = vld [vmem:[#allocation2 + $0xc8] sm:$0xff]
        %v2217 = vld [vmem:[#allocation2 + $0xd0] sm:$0xff]
        %v2218 = vld [vmem:[#allocation2 + $0xd8] sm:$0xff]
        %v2219 = vld [vmem:[#allocation2 + $0xe0] sm:$0xff]
        %v2220 = vld [vmem:[#allocation2 + $0xe8] sm:$0xff]
        %v2221 = vld [vmem:[#allocation2 + $0xf0] sm:$0xff]
        %v2222 = vld [vmem:[#allocation2 + $0xf8] sm:$0xff]
        %v2223 = vld [vmem:[#allocation2 + $0x100] sm:$0xff]
        %v2224 = vld [vmem:[#allocation2 + $0x108] sm:$0xff]
        %v2225 = vld [vmem:[#allocation2 + $0x110] sm:$0xff]
        %v2226 = vld [vmem:[#allocation2 + $0x118] sm:$0xff]
        %v2227 = vld [vmem:[#allocation2 + $0x120] sm:$0xff]
        %v2228 = vld [vmem:[#allocation2 + $0x128] sm:$0xff]
        %v2229 = vld [vmem:[#allocation2 + $0x130] sm:$0xff]
        %v2230 = vld [vmem:[#allocation2 + $0x138] sm:$0xff]
        %v2231 = vld [vmem:[#allocation2 + $0x140] sm:$0xff]
        %v2232 = vld [vmem:[#allocation2 + $0x148] sm:$0xff]
        %v2233 = vld [vmem:[#allocation2 + $0x150] sm:$0xff]
        %v2234 = vld [vmem:[#allocation2 + $0x158] sm:$0xff]
        %v2235 = vld [vmem:[#allocation2 + $0x160] sm:$0xff]
        %v2236 = vld [vmem:[#allocation2 + $0x168] sm:$0xff]
        %v2237 = vld [vmem:[#allocation2 + $0x170] sm:$0xff]
        %v2238 = vld [vmem:[#allocation2 + $0x178] sm:$0xff]
        %v2239 = vld [vmem:[#allocation2 + $0x180] sm:$0xff]
        %v2240 = vld [vmem:[#allocation2 + $0x188] sm:$0xff]
        %v2241 = vld [vmem:[#allocation2 + $0x190] sm:$0xff]
        %v2242 = vld [vmem:[#allocation2 + $0x198] sm:$0xff]
        %v2243 = vld [vmem:[#allocation2 + $0x1a0] sm:$0xff]
        %v2244 = vld [vmem:[#allocation2 + $0x1a8] sm:$0xff]
        %v2245 = vld [vmem:[#allocation2 + $0x1b0] sm:$0xff]
        %v2246 = vld [vmem:[#allocation2 + $0x1b8] sm:$0xff]
        %v2247 = vld [vmem:[#allocation2 + $0x1c0] sm:$0xff]
        %v2248 = vld [vmem:[#allocation2 + $0x1c8] sm:$0xff]
        %v2249 = vld [vmem:[#allocation2 + $0x1d0] sm:$0xff]
        %v2250 = vld [vmem:[#allocation2 + $0x1d8] sm:$0xff]
        %v2251 = vld [vmem:[#allocation2 + $0x1e0] sm:$0xff]
        %v2252 = vld [vmem:[#allocation2 + $0x1e8] sm:$0xff]
        %v2253 = vld [vmem:[#allocation2 + $0x1f0] sm:$0xff]
        %v2254 = vld [vmem:[#allocation2 + $0x1f8] sm:$0xff]
        %2255 = vst [vmem:[%s313] sm:$0xff] %v2191
        %2256 = vst [vmem:[%s313 + $0x8] sm:$0xff] %v2192
        %2257 = vst [vmem:[%s313 + $0x10] sm:$0xff] %v2193
        %2258 = vst [vmem:[%s313 + $0x18] sm:$0xff] %v2194
        %2259 = vst [vmem:[%s313 + $0x20] sm:$0xff] %v2195
        %2260 = vst [vmem:[%s313 + $0x28] sm:$0xff] %v2196
        %2261 = vst [vmem:[%s313 + $0x30] sm:$0xff] %v2197
        %2262 = vst [vmem:[%s313 + $0x38] sm:$0xff] %v2198
        %2263 = vst [vmem:[%s313 + $0x40] sm:$0xff] %v2199
        %2264 = vst [vmem:[%s313 + $0x48] sm:$0xff] %v2200
        %2265 = vst [vmem:[%s313 + $0x50] sm:$0xff] %v2201
        %2266 = vst [vmem:[%s313 + $0x58] sm:$0xff] %v2202
        %2267 = vst [vmem:[%s313 + $0x60] sm:$0xff] %v2203
        %2268 = vst [vmem:[%s313 + $0x68] sm:$0xff] %v2204
        %2269 = vst [vmem:[%s313 + $0x70] sm:$0xff] %v2205
        %2270 = vst [vmem:[%s313 + $0x78] sm:$0xff] %v2206
        %2271 = vst [vmem:[%s313 + $0x80] sm:$0xff] %v2207
        %2272 = vst [vmem:[%s313 + $0x88] sm:$0xff] %v2208
        %2273 = vst [vmem:[%s313 + $0x90] sm:$0xff] %v2209
        %2274 = vst [vmem:[%s313 + $0x98] sm:$0xff] %v2210
        %2275 = vst [vmem:[%s313 + $0xa0] sm:$0xff] %v2211
        %2276 = vst [vmem:[%s313 + $0xa8] sm:$0xff] %v2212
        %2277 = vst [vmem:[%s313 + $0xb0] sm:$0xff] %v2213
        %2278 = vst [vmem:[%s313 + $0xb8] sm:$0xff] %v2214
        %2279 = vst [vmem:[%s313 + $0xc0] sm:$0xff] %v2215
        %2280 = vst [vmem:[%s313 + $0xc8] sm:$0xff] %v2216
        %2281 = vst [vmem:[%s313 + $0xd0] sm:$0xff] %v2217
        %2282 = vst [vmem:[%s313 + $0xd8] sm:$0xff] %v2218
        %2283 = vst [vmem:[%s313 + $0xe0] sm:$0xff] %v2219
        %2284 = vst [vmem:[%s313 + $0xe8] sm:$0xff] %v2220
        %2285 = vst [vmem:[%s313 + $0xf0] sm:$0xff] %v2221
        %2286 = vst [vmem:[%s313 + $0xf8] sm:$0xff] %v2222
        %2287 = vst [vmem:[%s313 + $0x100] sm:$0xff] %v2223
        %2288 = vst [vmem:[%s313 + $0x108] sm:$0xff] %v2224
        %2289 = vst [vmem:[%s313 + $0x110] sm:$0xff] %v2225
        %2290 = vst [vmem:[%s313 + $0x118] sm:$0xff] %v2226
        %2291 = vst [vmem:[%s313 + $0x120] sm:$0xff] %v2227
        %2292 = vst [vmem:[%s313 + $0x128] sm:$0xff] %v2228
        %2293 = vst [vmem:[%s313 + $0x130] sm:$0xff] %v2229
        %2294 = vst [vmem:[%s313 + $0x138] sm:$0xff] %v2230
        %2295 = vst [vmem:[%s313 + $0x140] sm:$0xff] %v2231
        %2296 = vst [vmem:[%s313 + $0x148] sm:$0xff] %v2232
        %2297 = vst [vmem:[%s313 + $0x150] sm:$0xff] %v2233
        %2298 = vst [vmem:[%s313 + $0x158] sm:$0xff] %v2234
        %2299 = vst [vmem:[%s313 + $0x160] sm:$0xff] %v2235
        %2300 = vst [vmem:[%s313 + $0x168] sm:$0xff] %v2236
        %2301 = vst [vmem:[%s313 + $0x170] sm:$0xff] %v2237
        %2302 = vst [vmem:[%s313 + $0x178] sm:$0xff] %v2238
        %2303 = vst [vmem:[%s313 + $0x180] sm:$0xff] %v2239
        %2304 = vst [vmem:[%s313 + $0x188] sm:$0xff] %v2240
        %2305 = vst [vmem:[%s313 + $0x190] sm:$0xff] %v2241
        %2306 = vst [vmem:[%s313 + $0x198] sm:$0xff] %v2242
        %2307 = vst [vmem:[%s313 + $0x1a0] sm:$0xff] %v2243
        %2308 = vst [vmem:[%s313 + $0x1a8] sm:$0xff] %v2244
        %2309 = vst [vmem:[%s313 + $0x1b0] sm:$0xff] %v2245
        %2310 = vst [vmem:[%s313 + $0x1b8] sm:$0xff] %v2246
        %2311 = vst [vmem:[%s313 + $0x1c0] sm:$0xff] %v2247
        %2312 = vst [vmem:[%s313 + $0x1c8] sm:$0xff] %v2248
        %2313 = vst [vmem:[%s313 + $0x1d0] sm:$0xff] %v2249
        %2314 = vst [vmem:[%s313 + $0x1d8] sm:$0xff] %v2250
        %2315 = vst [vmem:[%s313 + $0x1e0] sm:$0xff] %v2251
        %2316 = vst [vmem:[%s313 + $0x1e8] sm:$0xff] %v2252
        %2317 = vst [vmem:[%s313 + $0x1f0] sm:$0xff] %v2253
        %2318 = vst [vmem:[%s313 + $0x1f8] sm:$0xff] %v2254
        %v2319 = vadd.f32 %v2191, %v2192
        %v2320 = vadd.f32 %v2319, %v2193
        %v2321 = vadd.f32 %v2320, %v2194
        %v2322 = vadd.f32 %v2321, %v2195
        %v2323 = vadd.f32 %v2322, %v2196
        %v2324 = vadd.f32 %v2323, %v2197
        %v2325 = vadd.f32 %v2324, %v2198
        %v2326 = vadd.f32 %v2325, %v2199
        %v2327 = vadd.f32 %v2326, %v2200
        %v2328 = vadd.f32 %v2327, %v2201
        %v2329 = vadd.f32 %v2328, %v2202
        %v2330 = vadd.f32 %v2329, %v2203
        %v2331 = vadd.f32 %v2330, %v2204
        %v2332 = vadd.f32 %v2331, %v2205
        %v2333 = vadd.f32 %v2332, %v2206
        %v2334 = vadd.f32 %v2333, %v2207
        %v2335 = vadd.f32 %v2334, %v2208
        %v2336 = vadd.f32 %v2335, %v2209
        %v2337 = vadd.f32 %v2336, %v2210
        %v2338 = vadd.f32 %v2337, %v2211
        %v2339 = vadd.f32 %v2338, %v2212
        %v2340 = vadd.f32 %v2339, %v2213
        %v2341 = vadd.f32 %v2340, %v2214
        %v2342 = vadd.f32 %v2341, %v2215
        %v2343 = vadd.f32 %v2342, %v2216
        %v2344 = vadd.f32 %v2343, %v2217
        %v2345 = vadd.f32 %v2344, %v2218
        %v2346 = vadd.f32 %v2345, %v2219
        %v2347 = vadd.f32 %v2346, %v2220
        %v2348 = vadd.f32 %v2347, %v2221
        %v2349 = vadd.f32 %v2348, %v2222
        %v2350 = vadd.f32 %v2349, %v2223
        %v2351 = vadd.f32 %v2350, %v2224
        %v2352 = vadd.f32 %v2351, %v2225
        %v2353 = vadd.f32 %v2352, %v2226
        %v2354 = vadd.f32 %v2353, %v2227
        %v2355 = vadd.f32 %v2354, %v2228
        %v2356 = vadd.f32 %v2355, %v2229
        %v2357 = vadd.f32 %v2356, %v2230
        %v2358 = vadd.f32 %v2357, %v2231
        %v2359 = vadd.f32 %v2358, %v2232
        %v2360 = vadd.f32 %v2359, %v2233
        %v2361 = vadd.f32 %v2360, %v2234
        %v2362 = vadd.f32 %v2361, %v2235
        %v2363 = vadd.f32 %v2362, %v2236
        %v2364 = vadd.f32 %v2363, %v2237
        %v2365 = vadd.f32 %v2364, %v2238
        %v2366 = vadd.f32 %v2365, %v2239
        %v2367 = vadd.f32 %v2366, %v2240
        %v2368 = vadd.f32 %v2367, %v2241
        %v2369 = vadd.f32 %v2368, %v2242
        %v2370 = vadd.f32 %v2369, %v2243
        %v2371 = vadd.f32 %v2370, %v2244
        %v2372 = vadd.f32 %v2371, %v2245
        %v2373 = vadd.f32 %v2372, %v2246
        %v2374 = vadd.f32 %v2373, %v2247
        %v2375 = vadd.f32 %v2374, %v2248
        %v2376 = vadd.f32 %v2375, %v2249
        %v2377 = vadd.f32 %v2376, %v2250
        %v2378 = vadd.f32 %v2377, %v2251
        %v2379 = vadd.f32 %v2378, %v2252
        %v2380 = vadd.f32 %v2379, %v2253
        %v2381 = vadd.f32 %v2380, %v2254
        %v2382 = vrot.slane %v2381, 4
        %v2383 = vadd.f32 %v2381, %v2382
        %v2384 = vrot.slane %v2383, 2
        %v2385 = vadd.f32 %v2383, %v2384
        %v2386 = vrot.slane %v2385, 1
        %v2387 = vadd.f32 %v2385, %v2386
        %v2388 = vmul.f32 %v2191, %v2191
        %v2389 = vmul.f32 %v2192, %v2192
        %v2390 = vmul.f32 %v2193, %v2193
        %v2391 = vmul.f32 %v2194, %v2194
        %v2392 = vmul.f32 %v2195, %v2195
        %v2393 = vmul.f32 %v2196, %v2196
        %v2394 = vmul.f32 %v2197, %v2197
        %v2395 = vmul.f32 %v2198, %v2198
        %v2396 = vmul.f32 %v2199, %v2199
        %v2397 = vmul.f32 %v2200, %v2200
        %v2398 = vmul.f32 %v2201, %v2201
        %v2399 = vmul.f32 %v2202, %v2202
        %v2400 = vmul.f32 %v2203, %v2203
        %v2401 = vmul.f32 %v2204, %v2204
        %v2402 = vmul.f32 %v2205, %v2205
        %v2403 = vmul.f32 %v2206, %v2206
        %v2404 = vmul.f32 %v2207, %v2207
        %v2405 = vmul.f32 %v2208, %v2208
        %v2406 = vmul.f32 %v2209, %v2209
        %v2407 = vmul.f32 %v2210, %v2210
        %v2408 = vmul.f32 %v2211, %v2211
        %v2409 = vmul.f32 %v2212, %v2212
        %v2410 = vmul.f32 %v2213, %v2213
        %v2411 = vmul.f32 %v2214, %v2214
        %v2412 = vmul.f32 %v2215, %v2215
        %v2413 = vmul.f32 %v2216, %v2216
        %v2414 = vmul.f32 %v2217, %v2217
        %v2415 = vmul.f32 %v2218, %v2218
        %v2416 = vmul.f32 %v2219, %v2219
        %v2417 = vmul.f32 %v2220, %v2220
        %v2418 = vmul.f32 %v2221, %v2221
        %v2419 = vmul.f32 %v2222, %v2222
        %v2420 = vmul.f32 %v2223, %v2223
        %v2421 = vmul.f32 %v2224, %v2224
        %v2422 = vmul.f32 %v2225, %v2225
        %v2423 = vmul.f32 %v2226, %v2226
        %v2424 = vmul.f32 %v2227, %v2227
        %v2425 = vmul.f32 %v2228, %v2228
        %v2426 = vmul.f32 %v2229, %v2229
        %v2427 = vmul.f32 %v2230, %v2230
        %v2428 = vmul.f32 %v2231, %v2231
        %v2429 = vmul.f32 %v2232, %v2232
        %v2430 = vmul.f32 %v2233, %v2233
        %v2431 = vmul.f32 %v2234, %v2234
        %v2432 = vmul.f32 %v2235, %v2235
        %v2433 = vmul.f32 %v2236, %v2236
        %v2434 = vmul.f32 %v2237, %v2237
        %v2435 = vmul.f32 %v2238, %v2238
        %v2436 = vmul.f32 %v2239, %v2239
        %v2437 = vmul.f32 %v2240, %v2240
        %v2438 = vmul.f32 %v2241, %v2241
        %v2439 = vmul.f32 %v2242, %v2242
        %v2440 = vmul.f32 %v2243, %v2243
        %v2441 = vmul.f32 %v2244, %v2244
        %v2442 = vmul.f32 %v2245, %v2245
        %v2443 = vmul.f32 %v2246, %v2246
        %v2444 = vmul.f32 %v2247, %v2247
        %v2445 = vmul.f32 %v2248, %v2248
        %v2446 = vmul.f32 %v2249, %v2249
        %v2447 = vmul.f32 %v2250, %v2250
        %v2448 = vmul.f32 %v2251, %v2251
        %v2449 = vmul.f32 %v2252, %v2252
        %v2450 = vmul.f32 %v2253, %v2253
        %v2451 = vmul.f32 %v2254, %v2254
        %v2452 = vadd.f32 %v2388, %v2389
        %v2453 = vadd.f32 %v2452, %v2390
        %v2454 = vadd.f32 %v2453, %v2391
        %v2455 = vadd.f32 %v2454, %v2392
        %v2456 = vadd.f32 %v2455, %v2393
        %v2457 = vadd.f32 %v2456, %v2394
        %v2458 = vadd.f32 %v2457, %v2395
        %v2459 = vadd.f32 %v2458, %v2396
        %v2460 = vadd.f32 %v2459, %v2397
        %v2461 = vadd.f32 %v2460, %v2398
        %v2462 = vadd.f32 %v2461, %v2399
        %v2463 = vadd.f32 %v2462, %v2400
        %v2464 = vadd.f32 %v2463, %v2401
        %v2465 = vadd.f32 %v2464, %v2402
        %v2466 = vadd.f32 %v2465, %v2403
        %v2467 = vadd.f32 %v2466, %v2404
        %v2468 = vadd.f32 %v2467, %v2405
        %v2469 = vadd.f32 %v2468, %v2406
        %v2470 = vadd.f32 %v2469, %v2407
        %v2471 = vadd.f32 %v2470, %v2408
        %v2472 = vadd.f32 %v2471, %v2409
        %v2473 = vadd.f32 %v2472, %v2410
        %v2474 = vadd.f32 %v2473, %v2411
        %v2475 = vadd.f32 %v2474, %v2412
        %v2476 = vadd.f32 %v2475, %v2413
        %v2477 = vadd.f32 %v2476, %v2414
        %v2478 = vadd.f32 %v2477, %v2415
        %v2479 = vadd.f32 %v2478, %v2416
        %v2480 = vadd.f32 %v2479, %v2417
        %v2481 = vadd.f32 %v2480, %v2418
        %v2482 = vadd.f32 %v2481, %v2419
        %v2483 = vadd.f32 %v2482, %v2420
        %v2484 = vadd.f32 %v2483, %v2421
        %v2485 = vadd.f32 %v2484, %v2422
        %v2486 = vadd.f32 %v2485, %v2423
        %v2487 = vadd.f32 %v2486, %v2424
        %v2488 = vadd.f32 %v2487, %v2425
        %v2489 = vadd.f32 %v2488, %v2426
        %v2490 = vadd.f32 %v2489, %v2427
        %v2491 = vadd.f32 %v2490, %v2428
        %v2492 = vadd.f32 %v2491, %v2429
        %v2493 = vadd.f32 %v2492, %v2430
        %v2494 = vadd.f32 %v2493, %v2431
        %v2495 = vadd.f32 %v2494, %v2432
        %v2496 = vadd.f32 %v2495, %v2433
        %v2497 = vadd.f32 %v2496, %v2434
        %v2498 = vadd.f32 %v2497, %v2435
        %v2499 = vadd.f32 %v2498, %v2436
        %v2500 = vadd.f32 %v2499, %v2437
        %v2501 = vadd.f32 %v2500, %v2438
        %v2502 = vadd.f32 %v2501, %v2439
        %v2503 = vadd.f32 %v2502, %v2440
        %v2504 = vadd.f32 %v2503, %v2441
        %v2505 = vadd.f32 %v2504, %v2442
        %v2506 = vadd.f32 %v2505, %v2443
        %v2507 = vadd.f32 %v2506, %v2444
        %v2508 = vadd.f32 %v2507, %v2445
        %v2509 = vadd.f32 %v2508, %v2446
        %v2510 = vadd.f32 %v2509, %v2447
        %v2511 = vadd.f32 %v2510, %v2448
        %v2512 = vadd.f32 %v2511, %v2449
        %v2513 = vadd.f32 %v2512, %v2450
        %v2514 = vadd.f32 %v2513, %v2451
        %v2515 = vrot.slane %v2514, 4
        %v2516 = vadd.f32 %v2514, %v2515
        %v2517 = vrot.slane %v2516, 2
        %v2518 = vadd.f32 %v2516, %v2517
        %v2519 = vrot.slane %v2518, 1
        %v2520 = vadd.f32 %v2518, %v2519
        %v2521 = vlaneseq
        %v2522 = vshrl.u32 %v2521, 7
        %vm2523 = vcmp.eq.s32.totalorder %v2522, 0
        %vm2524 = vcmp.eq.s32.totalorder %v2522, 1
        %v2525 = vsel %vm2524, %v2520, 0.0
        %v2526 = vsel %vm2523, %v2387, %v2525
        %2527 = vst [vmem:[%s324] sm:$0xff] %v2526
      $region36: #{generator_forward.15} parent=27 // pred_fallthru
        _
      %s2528 = smul.u32 64, %s22
      %p2529 = scmp.lt.s32.totalorder %s21, 3
      %s2530 = scalar_select %p2529, %s21, 3
      %p2531 = scmp.lt.s32.totalorder %s2528, 63
      %s2532 = scalar_select %p2531, %s2528, 63
      %p2533 = scmp.lt.s32.totalorder %s23, 0
      %s2534 = scalar_select %p2533, %s23, 0
      %s2535 = sadd.s32 %s2534, %s2532
      %s2536 = smul.addr %s2530, 64
      %s2537 = sadd.s32 %s2535, %s2536
      %s2538 = smul.addr %s2537, 8
      %s2539 = scalar_lea.vmem %s2, %s2538
      %p2540 = scmp.lt.s32.totalorder %s21, 3
      %s2541 = scalar_select %p2540, %s21, 3
      %p2542 = scmp.lt.s32.totalorder %s22, 0
      %s2543 = scalar_select %p2542, %s22, 0
      %p2544 = scmp.lt.s32.totalorder %s23, 0
      %s2545 = scalar_select %p2544, %s23, 0
      %s2546 = sadd.s32 %s2545, %s2543
      %s2547 = sadd.s32 %s2546, %s2541
      %s2548 = smul.addr %s2547, 8
      %s2549 = scalar_lea.vmem %s3, %s2548
      // Predicated region
      $region37: #{generator_forward.15} parent=27 // pred_check
        %p2550 = pneg %p123
      $region38: #{generator_forward.15} parent=27 // pred_check_branch
        %2552 = sbr.rel (%p2550) target = $region40
      $region39: #{generator_forward.15} parent=27 // pred_region
        %s2553 = smul.u32 64, %s22
      $region40: #{generator_forward.15} parent=27 // pred_fallthru
        _
      // Predicated region
      $region41: #{generator_forward.15} parent=27 // pred_check
        %p2554 = pneg %p153
      $region42: #{generator_forward.15} parent=27 // pred_check_branch
        %2556 = sbr.rel (%p2554) target = $region44
      $region43: #{generator_forward.15} parent=27 // pred_region
        _
      $region44: #{generator_forward.15} parent=27 // pred_fallthru
        _
    $region28: #{generator_forward.15} parent=5 // pred_fallthru
      _
    %p2557 = scmp.le.s32.totalorder 2, %s10
    // Predicated region
    $region45: #{generator_forward.15} parent=5 // pred_check
      %p2558 = pneg %p2557
    $region46: #{generator_forward.15} parent=5 // pred_check_branch
      %2560 = sbr.rel (%p2558) target = $region48
    $region47: #{generator_forward.15} parent=5 // pred_region
      %s2561 = ssub.s32 %s10, 2
      // Predicated region
      $region49: #{generator_forward.15} parent=47 // pred_check
        %p2562 = pneg %p129
      $region50: #{generator_forward.15} parent=47 // pred_check_branch
        %2564 = sbr.rel (%p2562) target = $region52
      $region51: #{generator_forward.15} parent=47 // pred_region
        %s2565 = smul.u32 64, %s26
        %p2566 = scmp.lt.s32.totalorder %s25, 3
        %s2567 = scalar_select %p2566, %s25, 3
        %p2568 = scmp.lt.s32.totalorder %s2565, 63
        %s2569 = scalar_select %p2568, %s2565, 63
        %p2570 = scmp.lt.s32.totalorder %s27, 0
        %s2571 = scalar_select %p2570, %s27, 0
        %s2572 = sadd.s32 %s2571, %s2569
        %s2573 = smul.addr %s2567, 64
        %s2574 = sadd.s32 %s2572, %s2573
        %s2575 = smul.addr %s2574, 8
        %s2576 = scalar_lea.vmem %s2, %s2575
      $region52: #{generator_forward.15} parent=47 // pred_fallthru
        _
      // Predicated region
      $region53: #{generator_forward.15} parent=47 // pred_check
        %p2577 = pneg %p159
      $region54: #{generator_forward.15} parent=47 // pred_check_branch
        %2579 = sbr.rel (%p2577) target = $region56
      $region55: #{generator_forward.15} parent=47 // pred_region
        %p2580 = scmp.lt.s32.totalorder %s25, 3
        %s2581 = scalar_select %p2580, %s25, 3
        %p2582 = scmp.lt.s32.totalorder %s26, 0
        %s2583 = scalar_select %p2582, %s26, 0
        %p2584 = scmp.lt.s32.totalorder %s27, 0
        %s2585 = scalar_select %p2584, %s27, 0
        %s2586 = sadd.s32 %s2585, %s2583
        %s2587 = sadd.s32 %s2586, %s2581
        %s2588 = smul.addr %s2587, 8
        %s2589 = scalar_lea.vmem %s3, %s2588
      $region56: #{generator_forward.15} parent=47 // pred_fallthru
        _
    $region48: #{generator_forward.15} parent=5 // pred_fallthru
      _
  $region6: #{generator_forward.15} parent=0 // loop_footer
    %s14 = sadd.s32 1, %s10
  $region7: #{generator_forward.15} parent=0 // loop_footer_branch
    %9 = sbr.rel target = $region3
  $region8: #{generator_forward.15} parent=0 // loop_exit
    _

// kernel: generator_forward.16
$region0: #{generator_forward.16}
  #allocation0 [shape = 'u32[]', space=smem, size = 0x4, offset = 0x4, fixed_abs, tag = 'smem constant byte address 0x4 - core index']
  #allocation1 [shape = 'u32[144,128]{1,0:T(1,128)}', space=vmem, size = 0x12000, scoped, tag = 'internal scratch']
  %s0 = inlined_call_operand.vmem [shape: f32[2048,128], index: 0, kind: input, shape index: {}]
  %s1 = inlined_call_operand.vmem [shape: f32[1,128], index: 1, kind: input, shape index: {}]
  %s2 = inlined_call_operand.vmem [shape: f32[1,128], index: 2, kind: input, shape index: {}]
  %s3 = inlined_call_operand.vmem [shape: f32[2048,128], index: 3, kind: output, shape index: {}]
  %s4 = sld [smem:[#allocation0]]
  $region45: #{generator_forward.16} parent=0
    _
  %s6 = ssub.s32 1, %s4
  %s7 = scalar_select 0, %s6, %s4
  loop: start=0, step=1, limit=4
  $region2: #{generator_forward.16} parent=0 // loop_pre_header
    _
  $region3: #{generator_forward.16} parent=0 // loop_header
    %s9 = sphi 0, %s13
    %p10 = scmp.ge.s32.totalorder %s9, 4
    %s19 = sphi 0, %s21
    %s22 = sphi 0, %s19
    %s23 = sphi 0, %s22
    %s39 = sphi 0, %s23
    %s43 = sphi 0, %s43
    %s45 = sphi 0, %s43
    %s46 = sphi 0, %s45
    %s60 = sphi 0, %s46
    %s64 = sphi 0, %s64
    %s66 = sphi 0, %s64
    %s67 = sphi 0, %s66
    %s81 = sphi 0, %s67
    %s87 = sphi 0, %s89
    %s90 = sphi 0, %s87
    %s91 = sphi 0, %s90
    %s107 = sphi 0, %s91
  $region4: #{generator_forward.16} parent=0 // loop_header_branch
    %12 = sbr.rel (%p10) target = $region8
  $region5: #{generator_forward.16} parent=0 // loop_body
    %s14 = ssub.s32 %s9, 1
    %s15 = ssub.s32 %s9, 2
    %s16 = sadd.s32 %s9, 1
    %s17 = ssub.s32 %s9, %s16
    %p18 = scmp.eq.s32.totalorder %s17, 0
    %s20 = sadd.s32 %s19, 1
    %s21 = scalar_select %p18, %s19, %s20
    %p24 = pneg %p18
    %p25 = scmp.eq.s32.totalorder %s9, 1
    %p26 = por %p24, %p25
    %p27 = scmp.ne.s32.totalorder %s19, %s22
    %p28 = scmp.eq.s32.totalorder %s9, 0
    %p29 = por %p27, %p28
    %p30 = scmp.ne.s32.totalorder %s19, %s22
    %p31 = scmp.eq.s32.totalorder %s14, 1
    %p32 = por %p30, %p31
    %p33 = scmp.ne.s32.totalorder %s22, %s23
    %p34 = scmp.eq.s32.totalorder %s14, 0
    %p35 = por %p33, %p34
    %p36 = scmp.ne.s32.totalorder %s22, %s23
    %p37 = scmp.eq.s32.totalorder %s15, 1
    %p38 = por %p36, %p37
    %p40 = scmp.ne.s32.totalorder %s23, %s39
    %p41 = scmp.eq.s32.totalorder %s15, 0
    %p42 = por %p40, %p41
    %s44 = sadd.s32 %s43, 1
    %p47 = scmp.eq.s32.totalorder %s9, 1
    %p48 = scmp.ne.s32.totalorder %s43, %s45
    %p49 = scmp.eq.s32.totalorder %s9, 0
    %p50 = por %p48, %p49
    %p51 = scmp.ne.s32.totalorder %s43, %s45
    %p52 = scmp.eq.s32.totalorder %s14, 1
    %p53 = por %p51, %p52
    %p54 = scmp.ne.s32.totalorder %s45, %s46
    %p55 = scmp.eq.s32.totalorder %s14, 0
    %p56 = por %p54, %p55
    %p57 = scmp.ne.s32.totalorder %s45, %s46
    %p58 = scmp.eq.s32.totalorder %s15, 1
    %p59 = por %p57, %p58
    %p61 = scmp.ne.s32.totalorder %s46, %s60
    %p62 = scmp.eq.s32.totalorder %s15, 0
    %p63 = por %p61, %p62
    %s65 = sadd.s32 %s64, 1
    %p68 = scmp.eq.s32.totalorder %s9, 1
    %p69 = scmp.ne.s32.totalorder %s64, %s66
    %p70 = scmp.eq.s32.totalorder %s9, 0
    %p71 = por %p69, %p70
    %p72 = scmp.ne.s32.totalorder %s64, %s66
    %p73 = scmp.eq.s32.totalorder %s14, 1
    %p74 = por %p72, %p73
    %p75 = scmp.ne.s32.totalorder %s66, %s67
    %p76 = scmp.eq.s32.totalorder %s14, 0
    %p77 = por %p75, %p76
    %p78 = scmp.ne.s32.totalorder %s66, %s67
    %p79 = scmp.eq.s32.totalorder %s15, 1
    %p80 = por %p78, %p79
    %p82 = scmp.ne.s32.totalorder %s67, %s81
    %p83 = scmp.eq.s32.totalorder %s15, 0
    %p84 = por %p82, %p83
    %s85 = ssub.s32 %s9, %s16
    %p86 = scmp.eq.s32.totalorder %s85, 0
    %s88 = sadd.s32 %s87, 1
    %s89 = scalar_select %p86, %s87, %s88
    %p92 = pneg %p86
    %p93 = scmp.eq.s32.totalorder %s9, 1
    %p94 = por %p92, %p93
    %p95 = scmp.ne.s32.totalorder %s87, %s90
    %p96 = scmp.eq.s32.totalorder %s9, 0
    %p97 = por %p95, %p96
    %p98 = scmp.ne.s32.totalorder %s87, %s90
    %p99 = scmp.eq.s32.totalorder %s14, 1
    %p100 = por %p98, %p99
    %p101 = scmp.ne.s32.totalorder %s90, %s91
    %p102 = scmp.eq.s32.totalorder %s14, 0
    %p103 = por %p101, %p102
    %p104 = scmp.ne.s32.totalorder %s90, %s91
    %p105 = scmp.eq.s32.totalorder %s15, 1
    %p106 = por %p104, %p105
    %p108 = scmp.ne.s32.totalorder %s91, %s107
    %p109 = scmp.eq.s32.totalorder %s15, 0
    %p110 = por %p108, %p109
    %p111 = scmp.le.s32.totalorder 1, %s9
    %p112 = scmp.lt.s32.totalorder %s9, 3
    %p113 = pnand %p111, %p112
    %p114 = pneg %p113
    // Predicated region
    $region9: #{generator_forward.16} parent=5 // pred_check
      _
    $region10: #{generator_forward.16} parent=5 // pred_check_branch
      %116 = sbr.rel (%p113) target = $region12
    $region11: #{generator_forward.16} parent=5 // pred_region
      %s117 = ssub.s32 %s9, 1
      // Predicated region
      $region13: #{generator_forward.16} parent=11 // pred_check
        %p118 = pneg %p56
      $region14: #{generator_forward.16} parent=11 // pred_check_branch
        %120 = sbr.rel (%p118) target = $region16
      $region15: #{generator_forward.16} parent=11 // pred_region
        _
      $region16: #{generator_forward.16} parent=11 // pred_fallthru
        _
      // Predicated region
      $region17: #{generator_forward.16} parent=11 // pred_check
        %p121 = pneg %p77
      $region18: #{generator_forward.16} parent=11 // pred_check_branch
        %123 = sbr.rel (%p121) target = $region20
      $region19: #{generator_forward.16} parent=11 // pred_region
        _
      $region20: #{generator_forward.16} parent=11 // pred_fallthru
        _
    $region12: #{generator_forward.16} parent=5 // pred_fallthru
      _
    %p124 = scmp.lt.s32.totalorder %s9, 2
    // Predicated region
    $region21: #{generator_forward.16} parent=5 // pred_check
      %p125 = pneg %p124
    $region22: #{generator_forward.16} parent=5 // pred_check_branch
      %127 = sbr.rel (%p125) target = $region24
    $region23: #{generator_forward.16} parent=5 // pred_region
      // Predicated region
      $region25: #{generator_forward.16} parent=23 // pred_check
        %p128 = pneg %p29
      $region26: #{generator_forward.16} parent=23 // pred_check_branch
        %130 = sbr.rel (%p128) target = $region28
      $region27: #{generator_forward.16} parent=23 // pred_region
        %s131 = smul.u32 128, %s9
        %p132 = scmp.lt.s32.totalorder %s131, 255
        %s133 = scalar_select %p132, %s131, 255
        %s134 = smul.addr %s133, 8
        %s135 = scalar_lea.vmem %s0, %s134
        %s136 = smul.u32 128, %s9
      $region28: #{generator_forward.16} parent=23 // pred_fallthru
        _
    $region24: #{generator_forward.16} parent=5 // pred_fallthru
      _
    %p137 = scmp.le.s32.totalorder 1, %s9
    %p138 = scmp.lt.s32.totalorder %s9, 3
    %p139 = pnand %p137, %p138
    %p140 = pneg %p139
    // Predicated region
    $region29: #{generator_forward.16} parent=5 // pred_check
      _
    $region30: #{generator_forward.16} parent=5 // pred_check_branch
      %142 = sbr.rel (%p139) target = $region32
    $region31: #{generator_forward.16} parent=5 // pred_region
      %s143 = ssub.s32 %s9, 1
      %s144 = smul.u32 128, %s14
      %p145 = scmp.lt.s32.totalorder %s144, 255
      %s146 = scalar_select %p145, %s144, 255
      %s147 = smul.addr %s146, 8
      %s148 = scalar_lea.vmem %s0, %s147
      %p149 = pneg %p35
      %p150 = pneg %p32
      %p151 = pneg %p56
      %p152 = pneg %p53
      %p153 = pneg %p77
      %p154 = pneg %p74
      %p155 = pneg %p103
      %p156 = pneg %p100
      %s157 = smul.u32 128, %s14
      %p158 = scmp.lt.s32.totalorder %s157, 255
      %s159 = scalar_select %p158, %s157, 255
      %s160 = smul.addr %s159, 8
      %s161 = scalar_lea.vmem %s3, %s160
      %s162 = smul.u32 128, %s14
      %p163 = scmp.lt.s32.totalorder %s162, 255
      %s164 = scalar_select %p163, %s162, 255
      %s165 = smul.addr %s164, 8
      %s166 = scalar_lea.vmem %s0, %s165
      %s167 = smul.u32 128, %s14
      %s168 = smul.u32 128, %s14
      %p169 = scmp.lt.s32.totalorder %s168, 255
      %s170 = scalar_select %p169, %s168, 255
      %s171 = smul.addr %s170, 8
      %s172 = scalar_lea.vmem %s3, %s171
      %s173 = smul.u32 128, %s14
      %v174 = vld [vmem:[%s166] sm:$0xff]
      %v175 = vld [vmem:[%s166 + $0x8] sm:$0xff]
      %v176 = vld [vmem:[%s166 + $0x10] sm:$0xff]
      %v177 = vld [vmem:[%s166 + $0x18] sm:$0xff]
      %v178 = vld [vmem:[%s166 + $0x20] sm:$0xff]
      %v179 = vld [vmem:[%s166 + $0x28] sm:$0xff]
      %v180 = vld [vmem:[%s166 + $0x30] sm:$0xff]
      %v181 = vld [vmem:[%s166 + $0x38] sm:$0xff]
      %v182 = vld [vmem:[%s166 + $0x40] sm:$0xff]
      %v183 = vld [vmem:[%s166 + $0x48] sm:$0xff]
      %v184 = vld [vmem:[%s166 + $0x50] sm:$0xff]
      %v185 = vld [vmem:[%s166 + $0x58] sm:$0xff]
      %v186 = vld [vmem:[%s166 + $0x60] sm:$0xff]
      %v187 = vld [vmem:[%s166 + $0x68] sm:$0xff]
      %v188 = vld [vmem:[%s166 + $0x70] sm:$0xff]
      %v189 = vld [vmem:[%s166 + $0x78] sm:$0xff]
      %v190 = vld [vmem:[%s166 + $0x80] sm:$0xff]
      %v191 = vld [vmem:[%s166 + $0x88] sm:$0xff]
      %v192 = vld [vmem:[%s166 + $0x90] sm:$0xff]
      %v193 = vld [vmem:[%s166 + $0x98] sm:$0xff]
      %v194 = vld [vmem:[%s166 + $0xa0] sm:$0xff]
      %v195 = vld [vmem:[%s166 + $0xa8] sm:$0xff]
      %v196 = vld [vmem:[%s166 + $0xb0] sm:$0xff]
      %v197 = vld [vmem:[%s166 + $0xb8] sm:$0xff]
      %v198 = vld [vmem:[%s166 + $0xc0] sm:$0xff]
      %v199 = vld [vmem:[%s166 + $0xc8] sm:$0xff]
      %v200 = vld [vmem:[%s166 + $0xd0] sm:$0xff]
      %v201 = vld [vmem:[%s166 + $0xd8] sm:$0xff]
      %v202 = vld [vmem:[%s166 + $0xe0] sm:$0xff]
      %v203 = vld [vmem:[%s166 + $0xe8] sm:$0xff]
      %v204 = vld [vmem:[%s166 + $0xf0] sm:$0xff]
      %v205 = vld [vmem:[%s166 + $0xf8] sm:$0xff]
      %v206 = vld [vmem:[%s166 + $0x100] sm:$0xff]
      %v207 = vld [vmem:[%s166 + $0x108] sm:$0xff]
      %v208 = vld [vmem:[%s166 + $0x110] sm:$0xff]
      %v209 = vld [vmem:[%s166 + $0x118] sm:$0xff]
      %v210 = vld [vmem:[%s166 + $0x120] sm:$0xff]
      %v211 = vld [vmem:[%s166 + $0x128] sm:$0xff]
      %v212 = vld [vmem:[%s166 + $0x130] sm:$0xff]
      %v213 = vld [vmem:[%s166 + $0x138] sm:$0xff]
      %v214 = vld [vmem:[%s166 + $0x140] sm:$0xff]
      %v215 = vld [vmem:[%s166 + $0x148] sm:$0xff]
      %v216 = vld [vmem:[%s166 + $0x150] sm:$0xff]
      %v217 = vld [vmem:[%s166 + $0x158] sm:$0xff]
      %v218 = vld [vmem:[%s166 + $0x160] sm:$0xff]
      %v219 = vld [vmem:[%s166 + $0x168] sm:$0xff]
      %v220 = vld [vmem:[%s166 + $0x170] sm:$0xff]
      %v221 = vld [vmem:[%s166 + $0x178] sm:$0xff]
      %v222 = vld [vmem:[%s166 + $0x180] sm:$0xff]
      %v223 = vld [vmem:[%s166 + $0x188] sm:$0xff]
      %v224 = vld [vmem:[%s166 + $0x190] sm:$0xff]
      %v225 = vld [vmem:[%s166 + $0x198] sm:$0xff]
      %v226 = vld [vmem:[%s166 + $0x1a0] sm:$0xff]
      %v227 = vld [vmem:[%s166 + $0x1a8] sm:$0xff]
      %v228 = vld [vmem:[%s166 + $0x1b0] sm:$0xff]
      %v229 = vld [vmem:[%s166 + $0x1b8] sm:$0xff]
      %v230 = vld [vmem:[%s166 + $0x1c0] sm:$0xff]
      %v231 = vld [vmem:[%s166 + $0x1c8] sm:$0xff]
      %v232 = vld [vmem:[%s166 + $0x1d0] sm:$0xff]
      %v233 = vld [vmem:[%s166 + $0x1d8] sm:$0xff]
      %v234 = vld [vmem:[%s166 + $0x1e0] sm:$0xff]
      %v235 = vld [vmem:[%s166 + $0x1e8] sm:$0xff]
      %v236 = vld [vmem:[%s166 + $0x1f0] sm:$0xff]
      %v237 = vld [vmem:[%s166 + $0x1f8] sm:$0xff]
      %v238 = vld [vmem:[%s166 + $0x200] sm:$0xff]
      %v239 = vld [vmem:[%s166 + $0x208] sm:$0xff]
      %v240 = vld [vmem:[%s166 + $0x210] sm:$0xff]
      %v241 = vld [vmem:[%s166 + $0x218] sm:$0xff]
      %v242 = vld [vmem:[%s166 + $0x220] sm:$0xff]
      %v243 = vld [vmem:[%s166 + $0x228] sm:$0xff]
      %v244 = vld [vmem:[%s166 + $0x230] sm:$0xff]
      %v245 = vld [vmem:[%s166 + $0x238] sm:$0xff]
      %v246 = vld [vmem:[%s166 + $0x240] sm:$0xff]
      %v247 = vld [vmem:[%s166 + $0x248] sm:$0xff]
      %v248 = vld [vmem:[%s166 + $0x250] sm:$0xff]
      %v249 = vld [vmem:[%s166 + $0x258] sm:$0xff]
      %v250 = vld [vmem:[%s166 + $0x260] sm:$0xff]
      %v251 = vld [vmem:[%s166 + $0x268] sm:$0xff]
      %v252 = vld [vmem:[%s166 + $0x270] sm:$0xff]
      %v253 = vld [vmem:[%s166 + $0x278] sm:$0xff]
      %v254 = vld [vmem:[%s166 + $0x280] sm:$0xff]
      %v255 = vld [vmem:[%s166 + $0x288] sm:$0xff]
      %v256 = vld [vmem:[%s166 + $0x290] sm:$0xff]
      %v257 = vld [vmem:[%s166 + $0x298] sm:$0xff]
      %v258 = vld [vmem:[%s166 + $0x2a0] sm:$0xff]
      %v259 = vld [vmem:[%s166 + $0x2a8] sm:$0xff]
      %v260 = vld [vmem:[%s166 + $0x2b0] sm:$0xff]
      %v261 = vld [vmem:[%s166 + $0x2b8] sm:$0xff]
      %v262 = vld [vmem:[%s166 + $0x2c0] sm:$0xff]
      %v263 = vld [vmem:[%s166 + $0x2c8] sm:$0xff]
      %v264 = vld [vmem:[%s166 + $0x2d0] sm:$0xff]
      %v265 = vld [vmem:[%s166 + $0x2d8] sm:$0xff]
      %v266 = vld [vmem:[%s166 + $0x2e0] sm:$0xff]
      %v267 = vld [vmem:[%s166 + $0x2e8] sm:$0xff]
      %v268 = vld [vmem:[%s166 + $0x2f0] sm:$0xff]
      %v269 = vld [vmem:[%s166 + $0x2f8] sm:$0xff]
      %v270 = vld [vmem:[%s166 + $0x300] sm:$0xff]
      %v271 = vld [vmem:[%s166 + $0x308] sm:$0xff]
      %v272 = vld [vmem:[%s166 + $0x310] sm:$0xff]
      %v273 = vld [vmem:[%s166 + $0x318] sm:$0xff]
      %v274 = vld [vmem:[%s166 + $0x320] sm:$0xff]
      %v275 = vld [vmem:[%s166 + $0x328] sm:$0xff]
      %v276 = vld [vmem:[%s166 + $0x330] sm:$0xff]
      %v277 = vld [vmem:[%s166 + $0x338] sm:$0xff]
      %v278 = vld [vmem:[%s166 + $0x340] sm:$0xff]
      %v279 = vld [vmem:[%s166 + $0x348] sm:$0xff]
      %v280 = vld [vmem:[%s166 + $0x350] sm:$0xff]
      %v281 = vld [vmem:[%s166 + $0x358] sm:$0xff]
      %v282 = vld [vmem:[%s166 + $0x360] sm:$0xff]
      %v283 = vld [vmem:[%s166 + $0x368] sm:$0xff]
      %v284 = vld [vmem:[%s166 + $0x370] sm:$0xff]
      %v285 = vld [vmem:[%s166 + $0x378] sm:$0xff]
      %v286 = vld [vmem:[%s166 + $0x380] sm:$0xff]
      %v287 = vld [vmem:[%s166 + $0x388] sm:$0xff]
      %v288 = vld [vmem:[%s166 + $0x390] sm:$0xff]
      %v289 = vld [vmem:[%s166 + $0x398] sm:$0xff]
      %v290 = vld [vmem:[%s166 + $0x3a0] sm:$0xff]
      %v291 = vld [vmem:[%s166 + $0x3a8] sm:$0xff]
      %v292 = vld [vmem:[%s166 + $0x3b0] sm:$0xff]
      %v293 = vld [vmem:[%s166 + $0x3b8] sm:$0xff]
      %v294 = vld [vmem:[%s166 + $0x3c0] sm:$0xff]
      %v295 = vld [vmem:[%s166 + $0x3c8] sm:$0xff]
      %v296 = vld [vmem:[%s166 + $0x3d0] sm:$0xff]
      %v297 = vld [vmem:[%s166 + $0x3d8] sm:$0xff]
      %v298 = vld [vmem:[%s166 + $0x3e0] sm:$0xff]
      %v299 = vld [vmem:[%s166 + $0x3e8] sm:$0xff]
      %v300 = vld [vmem:[%s166 + $0x3f0] sm:$0xff]
      %v301 = vld [vmem:[%s166 + $0x3f8] sm:$0xff]
      %v302 = vld [vmem:[%s1] sm:$0x1]
      %v304 = vlaneseq
      %v305 = vshrl.u32 %v304, 7
      %v306 = vsub.s32 0, %v305
      %v307 = vrot.slane %v302, %v306
      %v309 = vmul.f32 %v174, %v307
      %v310 = vmul.f32 %v175, %v307
      %v311 = vmul.f32 %v176, %v307
      %v312 = vmul.f32 %v177, %v307
      %v313 = vmul.f32 %v178, %v307
      %v314 = vmul.f32 %v179, %v307
      %v315 = vmul.f32 %v180, %v307
      %v316 = vmul.f32 %v181, %v307
      %v317 = vmul.f32 %v182, %v307
      %v318 = vmul.f32 %v183, %v307
      %v319 = vmul.f32 %v184, %v307
      %v320 = vmul.f32 %v185, %v307
      %v321 = vmul.f32 %v186, %v307
      %v322 = vmul.f32 %v187, %v307
      %v323 = vmul.f32 %v188, %v307
      %v324 = vmul.f32 %v189, %v307
      %v325 = vmul.f32 %v190, %v307
      %v326 = vmul.f32 %v191, %v307
      %v327 = vmul.f32 %v192, %v307
      %v328 = vmul.f32 %v193, %v307
      %v329 = vmul.f32 %v194, %v307
      %v330 = vmul.f32 %v195, %v307
      %v331 = vmul.f32 %v196, %v307
      %v332 = vmul.f32 %v197, %v307
      %v333 = vmul.f32 %v198, %v307
      %v334 = vmul.f32 %v199, %v307
      %v335 = vmul.f32 %v200, %v307
      %v336 = vmul.f32 %v201, %v307
      %v337 = vmul.f32 %v202, %v307
      %v338 = vmul.f32 %v203, %v307
      %v339 = vmul.f32 %v204, %v307
      %v340 = vmul.f32 %v205, %v307
      %v341 = vmul.f32 %v206, %v307
      %v342 = vmul.f32 %v207, %v307
      %v343 = vmul.f32 %v208, %v307
      %v344 = vmul.f32 %v209, %v307
      %v345 = vmul.f32 %v210, %v307
      %v346 = vmul.f32 %v211, %v307
      %v347 = vmul.f32 %v212, %v307
      %v348 = vmul.f32 %v213, %v307
      %v349 = vmul.f32 %v214, %v307
      %v350 = vmul.f32 %v215, %v307
      %v351 = vmul.f32 %v216, %v307
      %v352 = vmul.f32 %v217, %v307
      %v353 = vmul.f32 %v218, %v307
      %v354 = vmul.f32 %v219, %v307
      %v355 = vmul.f32 %v220, %v307
      %v356 = vmul.f32 %v221, %v307
      %v357 = vmul.f32 %v222, %v307
      %v358 = vmul.f32 %v223, %v307
      %v359 = vmul.f32 %v224, %v307
      %v360 = vmul.f32 %v225, %v307
      %v361 = vmul.f32 %v226, %v307
      %v362 = vmul.f32 %v227, %v307
      %v363 = vmul.f32 %v228, %v307
      %v364 = vmul.f32 %v229, %v307
      %v365 = vmul.f32 %v230, %v307
      %v366 = vmul.f32 %v231, %v307
      %v367 = vmul.f32 %v232, %v307
      %v368 = vmul.f32 %v233, %v307
      %v369 = vmul.f32 %v234, %v307
      %v370 = vmul.f32 %v235, %v307
      %v371 = vmul.f32 %v236, %v307
      %v372 = vmul.f32 %v237, %v307
      %v373 = vmul.f32 %v238, %v307
      %v374 = vmul.f32 %v239, %v307
      %v375 = vmul.f32 %v240, %v307
      %v376 = vmul.f32 %v241, %v307
      %v377 = vmul.f32 %v242, %v307
      %v378 = vmul.f32 %v243, %v307
      %v379 = vmul.f32 %v244, %v307
      %v380 = vmul.f32 %v245, %v307
      %v381 = vmul.f32 %v246, %v307
      %v382 = vmul.f32 %v247, %v307
      %v383 = vmul.f32 %v248, %v307
      %v384 = vmul.f32 %v249, %v307
      %v385 = vmul.f32 %v250, %v307
      %v386 = vmul.f32 %v251, %v307
      %v387 = vmul.f32 %v252, %v307
      %v388 = vmul.f32 %v253, %v307
      %v389 = vmul.f32 %v254, %v307
      %v390 = vmul.f32 %v255, %v307
      %v391 = vmul.f32 %v256, %v307
      %v392 = vmul.f32 %v257, %v307
      %v393 = vmul.f32 %v258, %v307
      %v394 = vmul.f32 %v259, %v307
      %v395 = vmul.f32 %v260, %v307
      %v396 = vmul.f32 %v261, %v307
      %v397 = vmul.f32 %v262, %v307
      %v398 = vmul.f32 %v263, %v307
      %v399 = vmul.f32 %v264, %v307
      %v400 = vmul.f32 %v265, %v307
      %v401 = vmul.f32 %v266, %v307
      %v402 = vmul.f32 %v267, %v307
      %v403 = vmul.f32 %v268, %v307
      %v404 = vmul.f32 %v269, %v307
      %v405 = vmul.f32 %v270, %v307
      %v406 = vmul.f32 %v271, %v307
      %v407 = vmul.f32 %v272, %v307
      %v408 = vmul.f32 %v273, %v307
      %v409 = vmul.f32 %v274, %v307
      %v410 = vmul.f32 %v275, %v307
      %v411 = vmul.f32 %v276, %v307
      %v412 = vmul.f32 %v277, %v307
      %v413 = vmul.f32 %v278, %v307
      %v414 = vmul.f32 %v279, %v307
      %v415 = vmul.f32 %v280, %v307
      %v416 = vmul.f32 %v281, %v307
      %v417 = vmul.f32 %v282, %v307
      %v418 = vmul.f32 %v283, %v307
      %v419 = vmul.f32 %v284, %v307
      %v420 = vmul.f32 %v285, %v307
      %v421 = vmul.f32 %v286, %v307
      %v422 = vmul.f32 %v287, %v307
      %v423 = vmul.f32 %v288, %v307
      %v424 = vmul.f32 %v289, %v307
      %v425 = vmul.f32 %v290, %v307
      %v426 = vmul.f32 %v291, %v307
      %v427 = vmul.f32 %v292, %v307
      %v428 = vmul.f32 %v293, %v307
      %v429 = vmul.f32 %v294, %v307
      %v430 = vmul.f32 %v295, %v307
      %v431 = vmul.f32 %v296, %v307
      %v432 = vmul.f32 %v297, %v307
      %v433 = vmul.f32 %v298, %v307
      %v434 = vmul.f32 %v299, %v307
      %v435 = vmul.f32 %v300, %v307
      %v436 = vmul.f32 %v301, %v307
      %v437 = vld [vmem:[%s2] sm:$0x1]
      %v439 = vlaneseq
      %v440 = vshrl.u32 %v439, 7
      %v441 = vsub.s32 0, %v440
      %v442 = vrot.slane %v437, %v441
      %v444 = vadd.f32 %v309, %v442
      %v445 = vadd.f32 %v310, %v442
      %v446 = vadd.f32 %v311, %v442
      %v447 = vadd.f32 %v312, %v442
      %v448 = vadd.f32 %v313, %v442
      %v449 = vadd.f32 %v314, %v442
      %v450 = vadd.f32 %v315, %v442
      %v451 = vadd.f32 %v316, %v442
      %v452 = vadd.f32 %v317, %v442
      %v453 = vadd.f32 %v318, %v442
      %v454 = vadd.f32 %v319, %v442
      %v455 = vadd.f32 %v320, %v442
      %v456 = vadd.f32 %v321, %v442
      %v457 = vadd.f32 %v322, %v442
      %v458 = vadd.f32 %v323, %v442
      %v459 = vadd.f32 %v324, %v442
      %v460 = vadd.f32 %v325, %v442
      %v461 = vadd.f32 %v326, %v442
      %v462 = vadd.f32 %v327, %v442
      %v463 = vadd.f32 %v328, %v442
      %v464 = vadd.f32 %v329, %v442
      %v465 = vadd.f32 %v330, %v442
      %v466 = vadd.f32 %v331, %v442
      %v467 = vadd.f32 %v332, %v442
      %v468 = vadd.f32 %v333, %v442
      %v469 = vadd.f32 %v334, %v442
      %v470 = vadd.f32 %v335, %v442
      %v471 = vadd.f32 %v336, %v442
      %v472 = vadd.f32 %v337, %v442
      %v473 = vadd.f32 %v338, %v442
      %v474 = vadd.f32 %v339, %v442
      %v475 = vadd.f32 %v340, %v442
      %v476 = vadd.f32 %v341, %v442
      %v477 = vadd.f32 %v342, %v442
      %v478 = vadd.f32 %v343, %v442
      %v479 = vadd.f32 %v344, %v442
      %v480 = vadd.f32 %v345, %v442
      %v481 = vadd.f32 %v346, %v442
      %v482 = vadd.f32 %v347, %v442
      %v483 = vadd.f32 %v348, %v442
      %v484 = vadd.f32 %v349, %v442
      %v485 = vadd.f32 %v350, %v442
      %v486 = vadd.f32 %v351, %v442
      %v487 = vadd.f32 %v352, %v442
      %v488 = vadd.f32 %v353, %v442
      %v489 = vadd.f32 %v354, %v442
      %v490 = vadd.f32 %v355, %v442
      %v491 = vadd.f32 %v356, %v442
      %v492 = vadd.f32 %v357, %v442
      %v493 = vadd.f32 %v358, %v442
      %v494 = vadd.f32 %v359, %v442
      %v495 = vadd.f32 %v360, %v442
      %v496 = vadd.f32 %v361, %v442
      %v497 = vadd.f32 %v362, %v442
      %v498 = vadd.f32 %v363, %v442
      %v499 = vadd.f32 %v364, %v442
      %v500 = vadd.f32 %v365, %v442
      %v501 = vadd.f32 %v366, %v442
      %v502 = vadd.f32 %v367, %v442
      %v503 = vadd.f32 %v368, %v442
      %v504 = vadd.f32 %v369, %v442
      %v505 = vadd.f32 %v370, %v442
      %v506 = vadd.f32 %v371, %v442
      %v507 = vadd.f32 %v372, %v442
      %v508 = vadd.f32 %v373, %v442
      %v509 = vadd.f32 %v374, %v442
      %v510 = vadd.f32 %v375, %v442
      %v511 = vadd.f32 %v376, %v442
      %v512 = vadd.f32 %v377, %v442
      %v513 = vadd.f32 %v378, %v442
      %v514 = vadd.f32 %v379, %v442
      %v515 = vadd.f32 %v380, %v442
      %v516 = vadd.f32 %v381, %v442
      %v517 = vadd.f32 %v382, %v442
      %v518 = vadd.f32 %v383, %v442
      %v519 = vadd.f32 %v384, %v442
      %v520 = vadd.f32 %v385, %v442
      %v521 = vadd.f32 %v386, %v442
      %v522 = vadd.f32 %v387, %v442
      %v523 = vadd.f32 %v388, %v442
      %v524 = vadd.f32 %v389, %v442
      %v525 = vadd.f32 %v390, %v442
      %v526 = vadd.f32 %v391, %v442
      %v527 = vadd.f32 %v392, %v442
      %v528 = vadd.f32 %v393, %v442
      %v529 = vadd.f32 %v394, %v442
      %v530 = vadd.f32 %v395, %v442
      %v531 = vadd.f32 %v396, %v442
      %v532 = vadd.f32 %v397, %v442
      %v533 = vadd.f32 %v398, %v442
      %v534 = vadd.f32 %v399, %v442
      %v535 = vadd.f32 %v400, %v442
      %v536 = vadd.f32 %v401, %v442
      %v537 = vadd.f32 %v402, %v442
      %v538 = vadd.f32 %v403, %v442
      %v539 = vadd.f32 %v404, %v442
      %v540 = vadd.f32 %v405, %v442
      %v541 = vadd.f32 %v406, %v442
      %v542 = vadd.f32 %v407, %v442
      %v543 = vadd.f32 %v408, %v442
      %v544 = vadd.f32 %v409, %v442
      %v545 = vadd.f32 %v410, %v442
      %v546 = vadd.f32 %v411, %v442
      %v547 = vadd.f32 %v412, %v442
      %v548 = vadd.f32 %v413, %v442
      %v549 = vadd.f32 %v414, %v442
      %v550 = vadd.f32 %v415, %v442
      %v551 = vadd.f32 %v416, %v442
      %v552 = vadd.f32 %v417, %v442
      %v553 = vadd.f32 %v418, %v442
      %v554 = vadd.f32 %v419, %v442
      %v555 = vadd.f32 %v420, %v442
      %v556 = vadd.f32 %v421, %v442
      %v557 = vadd.f32 %v422, %v442
      %v558 = vadd.f32 %v423, %v442
      %v559 = vadd.f32 %v424, %v442
      %v560 = vadd.f32 %v425, %v442
      %v561 = vadd.f32 %v426, %v442
      %v562 = vadd.f32 %v427, %v442
      %v563 = vadd.f32 %v428, %v442
      %v564 = vadd.f32 %v429, %v442
      %v565 = vadd.f32 %v430, %v442
      %v566 = vadd.f32 %v431, %v442
      %v567 = vadd.f32 %v432, %v442
      %v568 = vadd.f32 %v433, %v442
      %v569 = vadd.f32 %v434, %v442
      %v570 = vadd.f32 %v435, %v442
      %v571 = vadd.f32 %v436, %v442
      %v572 = vmax.f32 %v444, 0.0
      %v573 = vmax.f32 %v445, 0.0
      %v574 = vmax.f32 %v446, 0.0
      %v575 = vmax.f32 %v447, 0.0
      %v576 = vmax.f32 %v448, 0.0
      %v577 = vmax.f32 %v449, 0.0
      %v578 = vmax.f32 %v450, 0.0
      %v579 = vmax.f32 %v451, 0.0
      %v580 = vmax.f32 %v452, 0.0
      %v581 = vmax.f32 %v453, 0.0
      %v582 = vmax.f32 %v454, 0.0
      %v583 = vmax.f32 %v455, 0.0
      %v584 = vmax.f32 %v456, 0.0
      %v585 = vmax.f32 %v457, 0.0
      %v586 = vmax.f32 %v458, 0.0
      %v587 = vmax.f32 %v459, 0.0
      %v588 = vmax.f32 %v460, 0.0
      %v589 = vmax.f32 %v461, 0.0
      %v590 = vmax.f32 %v462, 0.0
      %v591 = vmax.f32 %v463, 0.0
      %v592 = vmax.f32 %v464, 0.0
      %v593 = vmax.f32 %v465, 0.0
      %v594 = vmax.f32 %v466, 0.0
      %v595 = vmax.f32 %v467, 0.0
      %v596 = vmax.f32 %v468, 0.0
      %v597 = vmax.f32 %v469, 0.0
      %v598 = vmax.f32 %v470, 0.0
      %v599 = vmax.f32 %v471, 0.0
      %v600 = vmax.f32 %v472, 0.0
      %v601 = vmax.f32 %v473, 0.0
      %v602 = vmax.f32 %v474, 0.0
      %v603 = vmax.f32 %v475, 0.0
      %v604 = vmax.f32 %v476, 0.0
      %v605 = vmax.f32 %v477, 0.0
      %v606 = vmax.f32 %v478, 0.0
      %v607 = vmax.f32 %v479, 0.0
      %v608 = vmax.f32 %v480, 0.0
      %v609 = vmax.f32 %v481, 0.0
      %v610 = vmax.f32 %v482, 0.0
      %v611 = vmax.f32 %v483, 0.0
      %v612 = vmax.f32 %v484, 0.0
      %v613 = vmax.f32 %v485, 0.0
      %v614 = vmax.f32 %v486, 0.0
      %v615 = vmax.f32 %v487, 0.0
      %v616 = vmax.f32 %v488, 0.0
      %v617 = vmax.f32 %v489, 0.0
      %v618 = vmax.f32 %v490, 0.0
      %v619 = vmax.f32 %v491, 0.0
      %v620 = vmax.f32 %v492, 0.0
      %v621 = vmax.f32 %v493, 0.0
      %v622 = vmax.f32 %v494, 0.0
      %v623 = vmax.f32 %v495, 0.0
      %v624 = vmax.f32 %v496, 0.0
      %v625 = vmax.f32 %v497, 0.0
      %v626 = vmax.f32 %v498, 0.0
      %v627 = vmax.f32 %v499, 0.0
      %v628 = vmax.f32 %v500, 0.0
      %v629 = vmax.f32 %v501, 0.0
      %v630 = vmax.f32 %v502, 0.0
      %v631 = vmax.f32 %v503, 0.0
      %v632 = vmax.f32 %v504, 0.0
      %v633 = vmax.f32 %v505, 0.0
      %v634 = vmax.f32 %v506, 0.0
      %v635 = vmax.f32 %v507, 0.0
      %v636 = vmax.f32 %v508, 0.0
      %v637 = vmax.f32 %v509, 0.0
      %v638 = vmax.f32 %v510, 0.0
      %v639 = vmax.f32 %v511, 0.0
      %v640 = vmax.f32 %v512, 0.0
      %v641 = vmax.f32 %v513, 0.0
      %v642 = vmax.f32 %v514, 0.0
      %v643 = vmax.f32 %v515, 0.0
      %v644 = vmax.f32 %v516, 0.0
      %v645 = vmax.f32 %v517, 0.0
      %v646 = vmax.f32 %v518, 0.0
      %v647 = vmax.f32 %v519, 0.0
      %v648 = vmax.f32 %v520, 0.0
      %v649 = vmax.f32 %v521, 0.0
      %v650 = vmax.f32 %v522, 0.0
      %v651 = vmax.f32 %v523, 0.0
      %v652 = vmax.f32 %v524, 0.0
      %v653 = vmax.f32 %v525, 0.0
      %v654 = vmax.f32 %v526, 0.0
      %v655 = vmax.f32 %v527, 0.0
      %v656 = vmax.f32 %v528, 0.0
      %v657 = vmax.f32 %v529, 0.0
      %v658 = vmax.f32 %v530, 0.0
      %v659 = vmax.f32 %v531, 0.0
      %v660 = vmax.f32 %v532, 0.0
      %v661 = vmax.f32 %v533, 0.0
      %v662 = vmax.f32 %v534, 0.0
      %v663 = vmax.f32 %v535, 0.0
      %v664 = vmax.f32 %v536, 0.0
      %v665 = vmax.f32 %v537, 0.0
      %v666 = vmax.f32 %v538, 0.0
      %v667 = vmax.f32 %v539, 0.0
      %v668 = vmax.f32 %v540, 0.0
      %v669 = vmax.f32 %v541, 0.0
      %v670 = vmax.f32 %v542, 0.0
      %v671 = vmax.f32 %v543, 0.0
      %v672 = vmax.f32 %v544, 0.0
      %v673 = vmax.f32 %v545, 0.0
      %v674 = vmax.f32 %v546, 0.0
      %v675 = vmax.f32 %v547, 0.0
      %v676 = vmax.f32 %v548, 0.0
      %v677 = vmax.f32 %v549, 0.0
      %v678 = vmax.f32 %v550, 0.0
      %v679 = vmax.f32 %v551, 0.0
      %v680 = vmax.f32 %v552, 0.0
      %v681 = vmax.f32 %v553, 0.0
      %v682 = vmax.f32 %v554, 0.0
      %v683 = vmax.f32 %v555, 0.0
      %v684 = vmax.f32 %v556, 0.0
      %v685 = vmax.f32 %v557, 0.0
      %v686 = vmax.f32 %v558, 0.0
      %v687 = vmax.f32 %v559, 0.0
      %v688 = vmax.f32 %v560, 0.0
      %v689 = vmax.f32 %v561, 0.0
      %v690 = vmax.f32 %v562, 0.0
      %v691 = vmax.f32 %v563, 0.0
      %v692 = vmax.f32 %v564, 0.0
      %v693 = vmax.f32 %v565, 0.0
      %v694 = vmax.f32 %v566, 0.0
      %v695 = vmax.f32 %v567, 0.0
      %v696 = vmax.f32 %v568, 0.0
      %v697 = vmax.f32 %v569, 0.0
      %v698 = vmax.f32 %v570, 0.0
      %v699 = vmax.f32 %v571, 0.0
      %700 = vst [vmem:[%s172] sm:$0xff] %v572
      %701 = vst [vmem:[%s172 + $0x8] sm:$0xff] %v573
      %702 = vst [vmem:[%s172 + $0x10] sm:$0xff] %v574
      %703 = vst [vmem:[%s172 + $0x18] sm:$0xff] %v575
      %704 = vst [vmem:[%s172 + $0x20] sm:$0xff] %v576
      %705 = vst [vmem:[%s172 + $0x28] sm:$0xff] %v577
      %706 = vst [vmem:[%s172 + $0x30] sm:$0xff] %v578
      %707 = vst [vmem:[%s172 + $0x38] sm:$0xff] %v579
      %708 = vst [vmem:[%s172 + $0x40] sm:$0xff] %v580
      %709 = vst [vmem:[%s172 + $0x48] sm:$0xff] %v581
      %710 = vst [vmem:[%s172 + $0x50] sm:$0xff] %v582
      %711 = vst [vmem:[%s172 + $0x58] sm:$0xff] %v583
      %712 = vst [vmem:[%s172 + $0x60] sm:$0xff] %v584
      %713 = vst [vmem:[%s172 + $0x68] sm:$0xff] %v585
      %714 = vst [vmem:[%s172 + $0x70] sm:$0xff] %v586
      %715 = vst [vmem:[%s172 + $0x78] sm:$0xff] %v587
      %716 = vst [vmem:[%s172 + $0x80] sm:$0xff] %v588
      %717 = vst [vmem:[%s172 + $0x88] sm:$0xff] %v589
      %718 = vst [vmem:[%s172 + $0x90] sm:$0xff] %v590
      %719 = vst [vmem:[%s172 + $0x98] sm:$0xff] %v591
      %720 = vst [vmem:[%s172 + $0xa0] sm:$0xff] %v592
      %721 = vst [vmem:[%s172 + $0xa8] sm:$0xff] %v593
      %722 = vst [vmem:[%s172 + $0xb0] sm:$0xff] %v594
      %723 = vst [vmem:[%s172 + $0xb8] sm:$0xff] %v595
      %724 = vst [vmem:[%s172 + $0xc0] sm:$0xff] %v596
      %725 = vst [vmem:[%s172 + $0xc8] sm:$0xff] %v597
      %726 = vst [vmem:[%s172 + $0xd0] sm:$0xff] %v598
      %727 = vst [vmem:[%s172 + $0xd8] sm:$0xff] %v599
      %728 = vst [vmem:[%s172 + $0xe0] sm:$0xff] %v600
      %729 = vst [vmem:[%s172 + $0xe8] sm:$0xff] %v601
      %730 = vst [vmem:[%s172 + $0xf0] sm:$0xff] %v602
      %731 = vst [vmem:[%s172 + $0xf8] sm:$0xff] %v603
      %732 = vst [vmem:[%s172 + $0x100] sm:$0xff] %v604
      %733 = vst [vmem:[%s172 + $0x108] sm:$0xff] %v605
      %734 = vst [vmem:[%s172 + $0x110] sm:$0xff] %v606
      %735 = vst [vmem:[%s172 + $0x118] sm:$0xff] %v607
      %736 = vst [vmem:[%s172 + $0x120] sm:$0xff] %v608
      %737 = vst [vmem:[%s172 + $0x128] sm:$0xff] %v609
      %738 = vst [vmem:[%s172 + $0x130] sm:$0xff] %v610
      %739 = vst [vmem:[%s172 + $0x138] sm:$0xff] %v611
      %740 = vst [vmem:[%s172 + $0x140] sm:$0xff] %v612
      %741 = vst [vmem:[%s172 + $0x148] sm:$0xff] %v613
      %742 = vst [vmem:[%s172 + $0x150] sm:$0xff] %v614
      %743 = vst [vmem:[%s172 + $0x158] sm:$0xff] %v615
      %744 = vst [vmem:[%s172 + $0x160] sm:$0xff] %v616
      %745 = vst [vmem:[%s172 + $0x168] sm:$0xff] %v617
      %746 = vst [vmem:[%s172 + $0x170] sm:$0xff] %v618
      %747 = vst [vmem:[%s172 + $0x178] sm:$0xff] %v619
      %748 = vst [vmem:[%s172 + $0x180] sm:$0xff] %v620
      %749 = vst [vmem:[%s172 + $0x188] sm:$0xff] %v621
      %750 = vst [vmem:[%s172 + $0x190] sm:$0xff] %v622
      %751 = vst [vmem:[%s172 + $0x198] sm:$0xff] %v623
      %752 = vst [vmem:[%s172 + $0x1a0] sm:$0xff] %v624
      %753 = vst [vmem:[%s172 + $0x1a8] sm:$0xff] %v625
      %754 = vst [vmem:[%s172 + $0x1b0] sm:$0xff] %v626
      %755 = vst [vmem:[%s172 + $0x1b8] sm:$0xff] %v627
      %756 = vst [vmem:[%s172 + $0x1c0] sm:$0xff] %v628
      %757 = vst [vmem:[%s172 + $0x1c8] sm:$0xff] %v629
      %758 = vst [vmem:[%s172 + $0x1d0] sm:$0xff] %v630
      %759 = vst [vmem:[%s172 + $0x1d8] sm:$0xff] %v631
      %760 = vst [vmem:[%s172 + $0x1e0] sm:$0xff] %v632
      %761 = vst [vmem:[%s172 + $0x1e8] sm:$0xff] %v633
      %762 = vst [vmem:[%s172 + $0x1f0] sm:$0xff] %v634
      %763 = vst [vmem:[%s172 + $0x1f8] sm:$0xff] %v635
      %764 = vst [vmem:[%s172 + $0x200] sm:$0xff] %v636
      %765 = vst [vmem:[%s172 + $0x208] sm:$0xff] %v637
      %766 = vst [vmem:[%s172 + $0x210] sm:$0xff] %v638
      %767 = vst [vmem:[%s172 + $0x218] sm:$0xff] %v639
      %768 = vst [vmem:[%s172 + $0x220] sm:$0xff] %v640
      %769 = vst [vmem:[%s172 + $0x228] sm:$0xff] %v641
      %770 = vst [vmem:[%s172 + $0x230] sm:$0xff] %v642
      %771 = vst [vmem:[%s172 + $0x238] sm:$0xff] %v643
      %772 = vst [vmem:[%s172 + $0x240] sm:$0xff] %v644
      %773 = vst [vmem:[%s172 + $0x248] sm:$0xff] %v645
      %774 = vst [vmem:[%s172 + $0x250] sm:$0xff] %v646
      %775 = vst [vmem:[%s172 + $0x258] sm:$0xff] %v647
      %776 = vst [vmem:[%s172 + $0x260] sm:$0xff] %v648
      %777 = vst [vmem:[%s172 + $0x268] sm:$0xff] %v649
      %778 = vst [vmem:[%s172 + $0x270] sm:$0xff] %v650
      %779 = vst [vmem:[%s172 + $0x278] sm:$0xff] %v651
      %780 = vst [vmem:[%s172 + $0x280] sm:$0xff] %v652
      %781 = vst [vmem:[%s172 + $0x288] sm:$0xff] %v653
      %782 = vst [vmem:[%s172 + $0x290] sm:$0xff] %v654
      %783 = vst [vmem:[%s172 + $0x298] sm:$0xff] %v655
      %784 = vst [vmem:[%s172 + $0x2a0] sm:$0xff] %v656
      %785 = vst [vmem:[%s172 + $0x2a8] sm:$0xff] %v657
      %786 = vst [vmem:[%s172 + $0x2b0] sm:$0xff] %v658
      %787 = vst [vmem:[%s172 + $0x2b8] sm:$0xff] %v659
      %788 = vst [vmem:[%s172 + $0x2c0] sm:$0xff] %v660
      %789 = vst [vmem:[%s172 + $0x2c8] sm:$0xff] %v661
      %790 = vst [vmem:[%s172 + $0x2d0] sm:$0xff] %v662
      %791 = vst [vmem:[%s172 + $0x2d8] sm:$0xff] %v663
      %792 = vst [vmem:[%s172 + $0x2e0] sm:$0xff] %v664
      %793 = vst [vmem:[%s172 + $0x2e8] sm:$0xff] %v665
      %794 = vst [vmem:[%s172 + $0x2f0] sm:$0xff] %v666
      %795 = vst [vmem:[%s172 + $0x2f8] sm:$0xff] %v667
      %796 = vst [vmem:[%s172 + $0x300] sm:$0xff] %v668
      %797 = vst [vmem:[%s172 + $0x308] sm:$0xff] %v669
      %798 = vst [vmem:[%s172 + $0x310] sm:$0xff] %v670
      %799 = vst [vmem:[%s172 + $0x318] sm:$0xff] %v671
      %800 = vst [vmem:[%s172 + $0x320] sm:$0xff] %v672
      %801 = vst [vmem:[%s172 + $0x328] sm:$0xff] %v673
      %802 = vst [vmem:[%s172 + $0x330] sm:$0xff] %v674
      %803 = vst [vmem:[%s172 + $0x338] sm:$0xff] %v675
      %804 = vst [vmem:[%s172 + $0x340] sm:$0xff] %v676
      %805 = vst [vmem:[%s172 + $0x348] sm:$0xff] %v677
      %806 = vst [vmem:[%s172 + $0x350] sm:$0xff] %v678
      %807 = vst [vmem:[%s172 + $0x358] sm:$0xff] %v679
      %808 = vst [vmem:[%s172 + $0x360] sm:$0xff] %v680
      %809 = vst [vmem:[%s172 + $0x368] sm:$0xff] %v681
      %810 = vst [vmem:[%s172 + $0x370] sm:$0xff] %v682
      %811 = vst [vmem:[%s172 + $0x378] sm:$0xff] %v683
      %812 = vst [vmem:[%s172 + $0x380] sm:$0xff] %v684
      %813 = vst [vmem:[%s172 + $0x388] sm:$0xff] %v685
      %814 = vst [vmem:[%s172 + $0x390] sm:$0xff] %v686
      %815 = vst [vmem:[%s172 + $0x398] sm:$0xff] %v687
      %816 = vst [vmem:[%s172 + $0x3a0] sm:$0xff] %v688
      %817 = vst [vmem:[%s172 + $0x3a8] sm:$0xff] %v689
      %818 = vst [vmem:[%s172 + $0x3b0] sm:$0xff] %v690
      %819 = vst [vmem:[%s172 + $0x3b8] sm:$0xff] %v691
      %820 = vst [vmem:[%s172 + $0x3c0] sm:$0xff] %v692
      %821 = vst [vmem:[%s172 + $0x3c8] sm:$0xff] %v693
      %822 = vst [vmem:[%s172 + $0x3d0] sm:$0xff] %v694
      %823 = vst [vmem:[%s172 + $0x3d8] sm:$0xff] %v695
      %824 = vst [vmem:[%s172 + $0x3e0] sm:$0xff] %v696
      %825 = vst [vmem:[%s172 + $0x3e8] sm:$0xff] %v697
      %826 = vst [vmem:[%s172 + $0x3f0] sm:$0xff] %v698
      %827 = vst [vmem:[%s172 + $0x3f8] sm:$0xff] %v699
      %s828 = smul.u32 128, %s14
      %p829 = scmp.lt.s32.totalorder %s828, 255
      %s830 = scalar_select %p829, %s828, 255
      %s831 = smul.addr %s830, 8
      %s832 = scalar_lea.vmem %s3, %s831
      // Predicated region
      $region33: #{generator_forward.16} parent=31 // pred_check
        %p833 = pneg %p100
      $region34: #{generator_forward.16} parent=31 // pred_check_branch
        %835 = sbr.rel (%p833) target = $region36
      $region35: #{generator_forward.16} parent=31 // pred_region
        %s836 = smul.u32 128, %s14
      $region36: #{generator_forward.16} parent=31 // pred_fallthru
        _
    $region32: #{generator_forward.16} parent=5 // pred_fallthru
      _
    %p837 = scmp.le.s32.totalorder 2, %s9
    // Predicated region
    $region37: #{generator_forward.16} parent=5 // pred_check
      %p838 = pneg %p837
    $region38: #{generator_forward.16} parent=5 // pred_check_branch
      %840 = sbr.rel (%p838) target = $region40
    $region39: #{generator_forward.16} parent=5 // pred_region
      %s841 = ssub.s32 %s9, 2
      // Predicated region
      $region41: #{generator_forward.16} parent=39 // pred_check
        %p842 = pneg %p106
      $region42: #{generator_forward.16} parent=39 // pred_check_branch
        %844 = sbr.rel (%p842) target = $region44
      $region43: #{generator_forward.16} parent=39 // pred_region
        %s845 = smul.u32 128, %s15
        %p846 = scmp.lt.s32.totalorder %s845, 255
        %s847 = scalar_select %p846, %s845, 255
        %s848 = smul.addr %s847, 8
        %s849 = scalar_lea.vmem %s3, %s848
      $region44: #{generator_forward.16} parent=39 // pred_fallthru
        _
    $region40: #{generator_forward.16} parent=5 // pred_fallthru
      _
  $region6: #{generator_forward.16} parent=0 // loop_footer
    %s13 = sadd.s32 1, %s9
  $region7: #{generator_forward.16} parent=0 // loop_footer_branch
    %8 = sbr.rel target = $region3
  $region8: #{generator_forward.16} parent=0 // loop_exit
    _

// kernel: generator_forward.17
$region0: #{generator_forward.17}
  #allocation0 [shape = 'u32[]', space=smem, size = 0x4, offset = 0x4, fixed_abs, tag = 'smem constant byte address 0x4 - core index']
  #allocation1 [shape = 'u32[144,128]{1,0:T(1,128)}', space=vmem, size = 0x12000, scoped, tag = 'internal scratch']
  #allocation2 [shape = 'f32[512,128]{1,0:T(8,128)}', space=vmem, size = 0x40000, scoped, tag = 'scratch operand']
  %s0 = inlined_call_operand.vmem [shape: bf16[4,2048,256], index: 0, kind: input, shape index: {}]
  %s1 = inlined_call_operand.vmem [shape: bf16[4,256,128], index: 1, kind: input, shape index: {}]
  %s2 = inlined_call_operand.vmem [shape: f32[4,2048,128], index: 2, kind: output, shape index: {}]
  %s3 = sld [smem:[#allocation0]]
  $region49: #{generator_forward.17} parent=0
    _
  %s5 = ssub.s32 1, %s3
  %s6 = scalar_select 0, %s5, %s3
  loop: start=0, step=1, limit=18
  $region2: #{generator_forward.17} parent=0 // loop_pre_header
    _
  $region3: #{generator_forward.17} parent=0 // loop_header
    %s8 = sphi 0, %s12
    %p9 = scmp.ge.s32.totalorder %s8, 18
    %s15 = sphi 0, %s41
    %s16 = sphi 0, %s37
    %s17 = sphi 0, %s33
    %s18 = sphi 0, %s29
    %s19 = sphi 0, %s15
    %s20 = sphi 0, %s16
    %s21 = sphi 0, %s17
    %s22 = sphi 0, %s18
    %s23 = sphi 0, %s19
    %s24 = sphi 0, %s20
    %s25 = sphi 0, %s21
    %s26 = sphi 0, %s22
    %s48 = sphi 0, %s50
    %s51 = sphi 0, %s48
    %s52 = sphi 0, %s51
    %s68 = sphi 0, %s52
    %s78 = sphi 0, %s80
    %s81 = sphi 0, %s78
    %s82 = sphi 0, %s81
    %s98 = sphi 0, %s82
    %s108 = sphi 0, %s110
    %s111 = sphi 0, %s108
    %s112 = sphi 0, %s111
    %s128 = sphi 0, %s112
  $region4: #{generator_forward.17} parent=0 // loop_header_branch
    %11 = sbr.rel (%p9) target = $region8
  $region5: #{generator_forward.17} parent=0 // loop_body
    %s13 = ssub.s32 %s8, 1
    %s14 = ssub.s32 %s8, 2
    %s27 = sadd.s32 1, %s18
    %p28 = scmp.ge.s32.totalorder %s27, 1
    %s29 = scalar_select %p28, 0, %s27
    %s30 = sadd.s32 1, %s17
    %s31 = scalar_select %p28, %s30, %s17
    %p32 = scmp.ge.s32.totalorder %s31, 1
    %s33 = scalar_select %p32, 0, %s31
    %s34 = sadd.s32 1, %s16
    %s35 = scalar_select %p32, %s34, %s16
    %p36 = scmp.ge.s32.totalorder %s35, 4
    %s37 = scalar_select %p36, 0, %s35
    %s38 = sadd.s32 1, %s15
    %s39 = scalar_select %p36, %s38, %s15
    %p40 = scmp.ge.s32.totalorder %s39, 4
    %s41 = scalar_select %p40, 0, %s39
    %s42 = ssub.s32 %s15, %s41
    %s43 = ssub.s32 %s16, %s37
    %s44 = sor.u32 %s42, %s43
    %s45 = ssub.s32 %s18, %s29
    %s46 = sor.u32 %s44, %s45
    %p47 = scmp.eq.s32.totalorder %s46, 0
    %s49 = sadd.s32 %s48, 1
    %s50 = scalar_select %p47, %s48, %s49
    %p53 = pneg %p47
    %p54 = scmp.eq.s32.totalorder %s8, 15
    %p55 = por %p53, %p54
    %p56 = scmp.ne.s32.totalorder %s48, %s51
    %p57 = scmp.eq.s32.totalorder %s8, 0
    %p58 = por %p56, %p57
    %p59 = scmp.ne.s32.totalorder %s48, %s51
    %p60 = scmp.eq.s32.totalorder %s13, 15
    %p61 = por %p59, %p60
    %p62 = scmp.ne.s32.totalorder %s51, %s52
    %p63 = scmp.eq.s32.totalorder %s13, 0
    %p64 = por %p62, %p63
    %p65 = scmp.ne.s32.totalorder %s51, %s52
    %p66 = scmp.eq.s32.totalorder %s14, 15
    %p67 = por %p65, %p66
    %p69 = scmp.ne.s32.totalorder %s52, %s68
    %p70 = scmp.eq.s32.totalorder %s14, 0
    %p71 = por %p69, %p70
    %s72 = ssub.s32 %s15, %s41
    %s73 = ssub.s32 %s18, %s29
    %s74 = sor.u32 %s72, %s73
    %s75 = ssub.s32 %s17, %s33
    %s76 = sor.u32 %s74, %s75
    %p77 = scmp.eq.s32.totalorder %s76, 0
    %s79 = sadd.s32 %s78, 1
    %s80 = scalar_select %p77, %s78, %s79
    %p83 = pneg %p77
    %p84 = scmp.eq.s32.totalorder %s8, 15
    %p85 = por %p83, %p84
    %p86 = scmp.ne.s32.totalorder %s78, %s81
    %p87 = scmp.eq.s32.totalorder %s8, 0
    %p88 = por %p86, %p87
    %p89 = scmp.ne.s32.totalorder %s78, %s81
    %p90 = scmp.eq.s32.totalorder %s13, 15
    %p91 = por %p89, %p90
    %p92 = scmp.ne.s32.totalorder %s81, %s82
    %p93 = scmp.eq.s32.totalorder %s13, 0
    %p94 = por %p92, %p93
    %p95 = scmp.ne.s32.totalorder %s81, %s82
    %p96 = scmp.eq.s32.totalorder %s14, 15
    %p97 = por %p95, %p96
    %p99 = scmp.ne.s32.totalorder %s82, %s98
    %p100 = scmp.eq.s32.totalorder %s14, 0
    %p101 = por %p99, %p100
    %s102 = ssub.s32 %s15, %s41
    %s103 = ssub.s32 %s16, %s37
    %s104 = sor.u32 %s102, %s103
    %s105 = ssub.s32 %s17, %s33
    %s106 = sor.u32 %s104, %s105
    %p107 = scmp.eq.s32.totalorder %s106, 0
    %s109 = sadd.s32 %s108, 1
    %s110 = scalar_select %p107, %s108, %s109
    %p113 = pneg %p107
    %p114 = scmp.eq.s32.totalorder %s8, 15
    %p115 = por %p113, %p114
    %p116 = scmp.ne.s32.totalorder %s108, %s111
    %p117 = scmp.eq.s32.totalorder %s8, 0
    %p118 = por %p116, %p117
    %p119 = scmp.ne.s32.totalorder %s108, %s111
    %p120 = scmp.eq.s32.totalorder %s13, 15
    %p121 = por %p119, %p120
    %p122 = scmp.ne.s32.totalorder %s111, %s112
    %p123 = scmp.eq.s32.totalorder %s13, 0
    %p124 = por %p122, %p123
    %p125 = scmp.ne.s32.totalorder %s111, %s112
    %p126 = scmp.eq.s32.totalorder %s14, 15
    %p127 = por %p125, %p126
    %p129 = scmp.ne.s32.totalorder %s112, %s128
    %p130 = scmp.eq.s32.totalorder %s14, 0
    %p131 = por %p129, %p130
    %p132 = scmp.le.s32.totalorder 1, %s8
    %p133 = scmp.lt.s32.totalorder %s8, 17
    %p134 = pnand %p132, %p133
    %p135 = pneg %p134
    // Predicated region
    $region9: #{generator_forward.17} parent=5 // pred_check
      _
    $region10: #{generator_forward.17} parent=5 // pred_check_branch
      %137 = sbr.rel (%p134) target = $region12
    $region11: #{generator_forward.17} parent=5 // pred_region
      %s138 = ssub.s32 %s8, 1
    $region12: #{generator_forward.17} parent=5 // pred_fallthru
      _
    %p139 = scmp.lt.s32.totalorder %s8, 16
    // Predicated region
    $region13: #{generator_forward.17} parent=5 // pred_check
      %p140 = pneg %p139
    $region14: #{generator_forward.17} parent=5 // pred_check_branch
      %142 = sbr.rel (%p140) target = $region16
    $region15: #{generator_forward.17} parent=5 // pred_region
      // Predicated region
      $region17: #{generator_forward.17} parent=15 // pred_check
        %p143 = pneg %p58
      $region18: #{generator_forward.17} parent=15 // pred_check_branch
        %145 = sbr.rel (%p143) target = $region20
      $region19: #{generator_forward.17} parent=15 // pred_region
        %s146 = smul.u32 64, %s16
        %s147 = smul.u32 2, %s18
        %p148 = scmp.lt.s32.totalorder %s15, 3
        %s149 = scalar_select %p148, %s15, 3
        %p150 = scmp.lt.s32.totalorder %s146, 255
        %s151 = scalar_select %p150, %s146, 255
        %p152 = scmp.lt.s32.totalorder %s147, 1
        %s153 = scalar_select %p152, %s147, 1
        %s154 = smul.addr %s151, 2
        %s155 = sadd.s32 %s153, %s154
        %s156 = smul.addr %s149, 512
        %s157 = sadd.s32 %s155, %s156
        %s158 = smul.addr %s157, 4
        %s159 = scalar_lea.vmem %s0, %s158
        %s160 = smul.u32 64, %s16
        %s161 = smul.u32 2, %s18
      $region20: #{generator_forward.17} parent=15 // pred_fallthru
        _
      // Predicated region
      $region21: #{generator_forward.17} parent=15 // pred_check
        %p162 = pneg %p88
      $region22: #{generator_forward.17} parent=15 // pred_check_branch
        %164 = sbr.rel (%p162) target = $region24
      $region23: #{generator_forward.17} parent=15 // pred_region
        %s165 = smul.u32 32, %s18
        %p166 = scmp.lt.s32.totalorder %s15, 3
        %s167 = scalar_select %p166, %s15, 3
        %p168 = scmp.lt.s32.totalorder %s165, 31
        %s169 = scalar_select %p168, %s165, 31
        %p170 = scmp.lt.s32.totalorder %s17, 0
        %s171 = scalar_select %p170, %s17, 0
        %s172 = sadd.s32 %s171, %s169
        %s173 = smul.addr %s167, 32
        %s174 = sadd.s32 %s172, %s173
        %s175 = smul.addr %s174, 4
        %s176 = scalar_lea.vmem %s1, %s175
        %s177 = smul.u32 32, %s18
      $region24: #{generator_forward.17} parent=15 // pred_fallthru
        _
    $region16: #{generator_forward.17} parent=5 // pred_fallthru
      _
    %p178 = scmp.le.s32.totalorder 1, %s8
    %p179 = scmp.lt.s32.totalorder %s8, 17
    %p180 = pnand %p178, %p179
    %p181 = pneg %p180
    // Predicated region
    $region25: #{generator_forward.17} parent=5 // pred_check
      _
    $region26: #{generator_forward.17} parent=5 // pred_check_branch
      %183 = sbr.rel (%p180) target = $region28
    $region27: #{generator_forward.17} parent=5 // pred_region
      %s184 = ssub.s32 %s8, 1
      %s185 = smul.u32 64, %s20
      %s186 = smul.u32 2, %s22
      %p187 = scmp.lt.s32.totalorder %s19, 3
      %s188 = scalar_select %p187, %s19, 3
      %p189 = scmp.lt.s32.totalorder %s185, 255
      %s190 = scalar_select %p189, %s185, 255
      %p191 = scmp.lt.s32.totalorder %s186, 1
      %s192 = scalar_select %p191, %s186, 1
      %s193 = smul.addr %s190, 2
      %s194 = sadd.s32 %s192, %s193
      %s195 = smul.addr %s188, 512
      %s196 = sadd.s32 %s194, %s195
      %s197 = smul.addr %s196, 4
      %s198 = scalar_lea.vmem %s0, %s197
      %p199 = pneg %p64
      %p200 = pneg %p61
      %s201 = smul.u32 32, %s22
      %p202 = scmp.lt.s32.totalorder %s19, 3
      %s203 = scalar_select %p202, %s19, 3
      %p204 = scmp.lt.s32.totalorder %s201, 31
      %s205 = scalar_select %p204, %s201, 31
      %p206 = scmp.lt.s32.totalorder %s21, 0
      %s207 = scalar_select %p206, %s21, 0
      %s208 = sadd.s32 %s207, %s205
      %s209 = smul.addr %s203, 32
      %s210 = sadd.s32 %s208, %s209
      %s211 = smul.addr %s210, 4
      %s212 = scalar_lea.vmem %s1, %s211
      %p213 = pneg %p94
      %p214 = pneg %p91
      %p215 = pneg %p124
      %p216 = pneg %p121
      %s217 = smul.u32 64, %s20
      %p218 = scmp.lt.s32.totalorder %s19, 3
      %s219 = scalar_select %p218, %s19, 3
      %p220 = scmp.lt.s32.totalorder %s217, 255
      %s221 = scalar_select %p220, %s217, 255
      %p222 = scmp.lt.s32.totalorder %s21, 0
      %s223 = scalar_select %p222, %s21, 0
      %s224 = sadd.s32 %s223, %s221
      %s225 = smul.addr %s219, 256
      %s226 = sadd.s32 %s224, %s225
      %s227 = smul.addr %s226, 8
      %s228 = scalar_lea.vmem %s2, %s227
      %s229 = smul.u32 64, %s20
      %s230 = smul.u32 2, %s22
      %p231 = scmp.lt.s32.totalorder %s19, 3
      %s232 = scalar_select %p231, %s19, 3
      %p233 = scmp.lt.s32.totalorder %s229, 255
      %s234 = scalar_select %p233, %s229, 255
      %p235 = scmp.lt.s32.totalorder %s230, 1
      %s236 = scalar_select %p235, %s230, 1
      %s237 = smul.addr %s234, 2
      %s238 = sadd.s32 %s236, %s237
      %s239 = smul.addr %s232, 512
      %s240 = sadd.s32 %s238, %s239
      %s241 = smul.addr %s240, 4
      %s242 = scalar_lea.vmem %s0, %s241
      %s243 = smul.u32 64, %s20
      %s244 = smul.u32 2, %s22
      %s245 = smul.u32 32, %s22
      %p246 = scmp.lt.s32.totalorder %s19, 3
      %s247 = scalar_select %p246, %s19, 3
      %p248 = scmp.lt.s32.totalorder %s245, 31
      %s249 = scalar_select %p248, %s245, 31
      %p250 = scmp.lt.s32.totalorder %s21, 0
      %s251 = scalar_select %p250, %s21, 0
      %s252 = sadd.s32 %s251, %s249
      %s253 = smul.addr %s247, 32
      %s254 = sadd.s32 %s252, %s253
      %s255 = smul.addr %s254, 4
      %s256 = scalar_lea.vmem %s1, %s255
      %s257 = smul.u32 32, %s22
      %s258 = smul.u32 64, %s20
      %p259 = scmp.lt.s32.totalorder %s19, 3
      %s260 = scalar_select %p259, %s19, 3
      %p261 = scmp.lt.s32.totalorder %s258, 255
      %s262 = scalar_select %p261, %s258, 255
      %p263 = scmp.lt.s32.totalorder %s21, 0
      %s264 = scalar_select %p263, %s21, 0
      %s265 = sadd.s32 %s264, %s262
      %s266 = smul.addr %s260, 256
      %s267 = sadd.s32 %s265, %s266
      %s268 = smul.addr %s267, 8
      %s269 = scalar_lea.vmem %s2, %s268
      %s270 = smul.u32 64, %s20
      %p272 = scmp.eq.s32.totalorder %s22, 0
      // Predicated region
      $region29: #{generator_forward.17} parent=27 // pred_check
        %p273 = pneg %p272
      $region30: #{generator_forward.17} parent=27 // pred_check_branch
        %275 = sbr.rel (%p273) target = $region32
      $region31: #{generator_forward.17} parent=27 // pred_region
        %276 = vst [vmem:[#allocation2] sm:$0xff] 0.0
        %277 = vst [vmem:[#allocation2 + $0x8] sm:$0xff] 0.0
        %278 = vst [vmem:[#allocation2 + $0x10] sm:$0xff] 0.0
        %279 = vst [vmem:[#allocation2 + $0x18] sm:$0xff] 0.0
        %280 = vst [vmem:[#allocation2 + $0x20] sm:$0xff] 0.0
        %281 = vst [vmem:[#allocation2 + $0x28] sm:$0xff] 0.0
        %282 = vst [vmem:[#allocation2 + $0x30] sm:$0xff] 0.0
        %283 = vst [vmem:[#allocation2 + $0x38] sm:$0xff] 0.0
        %284 = vst [vmem:[#allocation2 + $0x40] sm:$0xff] 0.0
        %285 = vst [vmem:[#allocation2 + $0x48] sm:$0xff] 0.0
        %286 = vst [vmem:[#allocation2 + $0x50] sm:$0xff] 0.0
        %287 = vst [vmem:[#allocation2 + $0x58] sm:$0xff] 0.0
        %288 = vst [vmem:[#allocation2 + $0x60] sm:$0xff] 0.0
        %289 = vst [vmem:[#allocation2 + $0x68] sm:$0xff] 0.0
        %290 = vst [vmem:[#allocation2 + $0x70] sm:$0xff] 0.0
        %291 = vst [vmem:[#allocation2 + $0x78] sm:$0xff] 0.0
        %292 = vst [vmem:[#allocation2 + $0x80] sm:$0xff] 0.0
        %293 = vst [vmem:[#allocation2 + $0x88] sm:$0xff] 0.0
        %294 = vst [vmem:[#allocation2 + $0x90] sm:$0xff] 0.0
        %295 = vst [vmem:[#allocation2 + $0x98] sm:$0xff] 0.0
        %296 = vst [vmem:[#allocation2 + $0xa0] sm:$0xff] 0.0
        %297 = vst [vmem:[#allocation2 + $0xa8] sm:$0xff] 0.0
        %298 = vst [vmem:[#allocation2 + $0xb0] sm:$0xff] 0.0
        %299 = vst [vmem:[#allocation2 + $0xb8] sm:$0xff] 0.0
        %300 = vst [vmem:[#allocation2 + $0xc0] sm:$0xff] 0.0
        %301 = vst [vmem:[#allocation2 + $0xc8] sm:$0xff] 0.0
        %302 = vst [vmem:[#allocation2 + $0xd0] sm:$0xff] 0.0
        %303 = vst [vmem:[#allocation2 + $0xd8] sm:$0xff] 0.0
        %304 = vst [vmem:[#allocation2 + $0xe0] sm:$0xff] 0.0
        %305 = vst [vmem:[#allocation2 + $0xe8] sm:$0xff] 0.0
        %306 = vst [vmem:[#allocation2 + $0xf0] sm:$0xff] 0.0
        %307 = vst [vmem:[#allocation2 + $0xf8] sm:$0xff] 0.0
        %308 = vst [vmem:[#allocation2 + $0x100] sm:$0xff] 0.0
        %309 = vst [vmem:[#allocation2 + $0x108] sm:$0xff] 0.0
        %310 = vst [vmem:[#allocation2 + $0x110] sm:$0xff] 0.0
        %311 = vst [vmem:[#allocation2 + $0x118] sm:$0xff] 0.0
        %312 = vst [vmem:[#allocation2 + $0x120] sm:$0xff] 0.0
        %313 = vst [vmem:[#allocation2 + $0x128] sm:$0xff] 0.0
        %314 = vst [vmem:[#allocation2 + $0x130] sm:$0xff] 0.0
        %315 = vst [vmem:[#allocation2 + $0x138] sm:$0xff] 0.0
        %316 = vst [vmem:[#allocation2 + $0x140] sm:$0xff] 0.0
        %317 = vst [vmem:[#allocation2 + $0x148] sm:$0xff] 0.0
        %318 = vst [vmem:[#allocation2 + $0x150] sm:$0xff] 0.0
        %319 = vst [vmem:[#allocation2 + $0x158] sm:$0xff] 0.0
        %320 = vst [vmem:[#allocation2 + $0x160] sm:$0xff] 0.0
        %321 = vst [vmem:[#allocation2 + $0x168] sm:$0xff] 0.0
        %322 = vst [vmem:[#allocation2 + $0x170] sm:$0xff] 0.0
        %323 = vst [vmem:[#allocation2 + $0x178] sm:$0xff] 0.0
        %324 = vst [vmem:[#allocation2 + $0x180] sm:$0xff] 0.0
        %325 = vst [vmem:[#allocation2 + $0x188] sm:$0xff] 0.0
        %326 = vst [vmem:[#allocation2 + $0x190] sm:$0xff] 0.0
        %327 = vst [vmem:[#allocation2 + $0x198] sm:$0xff] 0.0
        %328 = vst [vmem:[#allocation2 + $0x1a0] sm:$0xff] 0.0
        %329 = vst [vmem:[#allocation2 + $0x1a8] sm:$0xff] 0.0
        %330 = vst [vmem:[#allocation2 + $0x1b0] sm:$0xff] 0.0
        %331 = vst [vmem:[#allocation2 + $0x1b8] sm:$0xff] 0.0
        %332 = vst [vmem:[#allocation2 + $0x1c0] sm:$0xff] 0.0
        %333 = vst [vmem:[#allocation2 + $0x1c8] sm:$0xff] 0.0
        %334 = vst [vmem:[#allocation2 + $0x1d0] sm:$0xff] 0.0
        %335 = vst [vmem:[#allocation2 + $0x1d8] sm:$0xff] 0.0
        %336 = vst [vmem:[#allocation2 + $0x1e0] sm:$0xff] 0.0
        %337 = vst [vmem:[#allocation2 + $0x1e8] sm:$0xff] 0.0
        %338 = vst [vmem:[#allocation2 + $0x1f0] sm:$0xff] 0.0
        %339 = vst [vmem:[#allocation2 + $0x1f8] sm:$0xff] 0.0
      $region32: #{generator_forward.17} parent=27 // pred_fallthru
        _
      %v340 = vld [vmem:[#allocation2] sm:$0xff]
      %v341 = vld [vmem:[#allocation2 + $0x8] sm:$0xff]
      %v342 = vld [vmem:[#allocation2 + $0x10] sm:$0xff]
      %v343 = vld [vmem:[#allocation2 + $0x18] sm:$0xff]
      %v344 = vld [vmem:[#allocation2 + $0x20] sm:$0xff]
      %v345 = vld [vmem:[#allocation2 + $0x28] sm:$0xff]
      %v346 = vld [vmem:[#allocation2 + $0x30] sm:$0xff]
      %v347 = vld [vmem:[#allocation2 + $0x38] sm:$0xff]
      %v348 = vld [vmem:[#allocation2 + $0x40] sm:$0xff]
      %v349 = vld [vmem:[#allocation2 + $0x48] sm:$0xff]
      %v350 = vld [vmem:[#allocation2 + $0x50] sm:$0xff]
      %v351 = vld [vmem:[#allocation2 + $0x58] sm:$0xff]
      %v352 = vld [vmem:[#allocation2 + $0x60] sm:$0xff]
      %v353 = vld [vmem:[#allocation2 + $0x68] sm:$0xff]
      %v354 = vld [vmem:[#allocation2 + $0x70] sm:$0xff]
      %v355 = vld [vmem:[#allocation2 + $0x78] sm:$0xff]
      %v356 = vld [vmem:[#allocation2 + $0x80] sm:$0xff]
      %v357 = vld [vmem:[#allocation2 + $0x88] sm:$0xff]
      %v358 = vld [vmem:[#allocation2 + $0x90] sm:$0xff]
      %v359 = vld [vmem:[#allocation2 + $0x98] sm:$0xff]
      %v360 = vld [vmem:[#allocation2 + $0xa0] sm:$0xff]
      %v361 = vld [vmem:[#allocation2 + $0xa8] sm:$0xff]
      %v362 = vld [vmem:[#allocation2 + $0xb0] sm:$0xff]
      %v363 = vld [vmem:[#allocation2 + $0xb8] sm:$0xff]
      %v364 = vld [vmem:[#allocation2 + $0xc0] sm:$0xff]
      %v365 = vld [vmem:[#allocation2 + $0xc8] sm:$0xff]
      %v366 = vld [vmem:[#allocation2 + $0xd0] sm:$0xff]
      %v367 = vld [vmem:[#allocation2 + $0xd8] sm:$0xff]
      %v368 = vld [vmem:[#allocation2 + $0xe0] sm:$0xff]
      %v369 = vld [vmem:[#allocation2 + $0xe8] sm:$0xff]
      %v370 = vld [vmem:[#allocation2 + $0xf0] sm:$0xff]
      %v371 = vld [vmem:[#allocation2 + $0xf8] sm:$0xff]
      %v372 = vld [vmem:[#allocation2 + $0x100] sm:$0xff]
      %v373 = vld [vmem:[#allocation2 + $0x108] sm:$0xff]
      %v374 = vld [vmem:[#allocation2 + $0x110] sm:$0xff]
      %v375 = vld [vmem:[#allocation2 + $0x118] sm:$0xff]
      %v376 = vld [vmem:[#allocation2 + $0x120] sm:$0xff]
      %v377 = vld [vmem:[#allocation2 + $0x128] sm:$0xff]
      %v378 = vld [vmem:[#allocation2 + $0x130] sm:$0xff]
      %v379 = vld [vmem:[#allocation2 + $0x138] sm:$0xff]
      %v380 = vld [vmem:[#allocation2 + $0x140] sm:$0xff]
      %v381 = vld [vmem:[#allocation2 + $0x148] sm:$0xff]
      %v382 = vld [vmem:[#allocation2 + $0x150] sm:$0xff]
      %v383 = vld [vmem:[#allocation2 + $0x158] sm:$0xff]
      %v384 = vld [vmem:[#allocation2 + $0x160] sm:$0xff]
      %v385 = vld [vmem:[#allocation2 + $0x168] sm:$0xff]
      %v386 = vld [vmem:[#allocation2 + $0x170] sm:$0xff]
      %v387 = vld [vmem:[#allocation2 + $0x178] sm:$0xff]
      %v388 = vld [vmem:[#allocation2 + $0x180] sm:$0xff]
      %v389 = vld [vmem:[#allocation2 + $0x188] sm:$0xff]
      %v390 = vld [vmem:[#allocation2 + $0x190] sm:$0xff]
      %v391 = vld [vmem:[#allocation2 + $0x198] sm:$0xff]
      %v392 = vld [vmem:[#allocation2 + $0x1a0] sm:$0xff]
      %v393 = vld [vmem:[#allocation2 + $0x1a8] sm:$0xff]
      %v394 = vld [vmem:[#allocation2 + $0x1b0] sm:$0xff]
      %v395 = vld [vmem:[#allocation2 + $0x1b8] sm:$0xff]
      %v396 = vld [vmem:[#allocation2 + $0x1c0] sm:$0xff]
      %v397 = vld [vmem:[#allocation2 + $0x1c8] sm:$0xff]
      %v398 = vld [vmem:[#allocation2 + $0x1d0] sm:$0xff]
      %v399 = vld [vmem:[#allocation2 + $0x1d8] sm:$0xff]
      %v400 = vld [vmem:[#allocation2 + $0x1e0] sm:$0xff]
      %v401 = vld [vmem:[#allocation2 + $0x1e8] sm:$0xff]
      %v402 = vld [vmem:[#allocation2 + $0x1f0] sm:$0xff]
      %v403 = vld [vmem:[#allocation2 + $0x1f8] sm:$0xff]
      %v404 = vld [vmem:[%s242] sm:$0xff]
      %v405 = vld [vmem:[%s242 + $0x8] sm:$0xff]
      %v406 = vld [vmem:[%s242 + $0x10] sm:$0xff]
      %v407 = vld [vmem:[%s242 + $0x18] sm:$0xff]
      %v408 = vld [vmem:[%s242 + $0x20] sm:$0xff]
      %v409 = vld [vmem:[%s242 + $0x28] sm:$0xff]
      %v410 = vld [vmem:[%s242 + $0x30] sm:$0xff]
      %v411 = vld [vmem:[%s242 + $0x38] sm:$0xff]
      %v412 = vld [vmem:[%s242 + $0x40] sm:$0xff]
      %v413 = vld [vmem:[%s242 + $0x48] sm:$0xff]
      %v414 = vld [vmem:[%s242 + $0x50] sm:$0xff]
      %v415 = vld [vmem:[%s242 + $0x58] sm:$0xff]
      %v416 = vld [vmem:[%s242 + $0x60] sm:$0xff]
      %v417 = vld [vmem:[%s242 + $0x68] sm:$0xff]
      %v418 = vld [vmem:[%s242 + $0x70] sm:$0xff]
      %v419 = vld [vmem:[%s242 + $0x78] sm:$0xff]
      %v420 = vld [vmem:[%s242 + $0x80] sm:$0xff]
      %v421 = vld [vmem:[%s242 + $0x88] sm:$0xff]
      %v422 = vld [vmem:[%s242 + $0x90] sm:$0xff]
      %v423 = vld [vmem:[%s242 + $0x98] sm:$0xff]
      %v424 = vld [vmem:[%s242 + $0xa0] sm:$0xff]
      %v425 = vld [vmem:[%s242 + $0xa8] sm:$0xff]
      %v426 = vld [vmem:[%s242 + $0xb0] sm:$0xff]
      %v427 = vld [vmem:[%s242 + $0xb8] sm:$0xff]
      %v428 = vld [vmem:[%s242 + $0xc0] sm:$0xff]
      %v429 = vld [vmem:[%s242 + $0xc8] sm:$0xff]
      %v430 = vld [vmem:[%s242 + $0xd0] sm:$0xff]
      %v431 = vld [vmem:[%s242 + $0xd8] sm:$0xff]
      %v432 = vld [vmem:[%s242 + $0xe0] sm:$0xff]
      %v433 = vld [vmem:[%s242 + $0xe8] sm:$0xff]
      %v434 = vld [vmem:[%s242 + $0xf0] sm:$0xff]
      %v435 = vld [vmem:[%s242 + $0xf8] sm:$0xff]
      %v436 = vld [vmem:[%s242 + $0x100] sm:$0xff]
      %v437 = vld [vmem:[%s242 + $0x108] sm:$0xff]
      %v438 = vld [vmem:[%s242 + $0x110] sm:$0xff]
      %v439 = vld [vmem:[%s242 + $0x118] sm:$0xff]
      %v440 = vld [vmem:[%s242 + $0x120] sm:$0xff]
      %v441 = vld [vmem:[%s242 + $0x128] sm:$0xff]
      %v442 = vld [vmem:[%s242 + $0x130] sm:$0xff]
      %v443 = vld [vmem:[%s242 + $0x138] sm:$0xff]
      %v444 = vld [vmem:[%s242 + $0x140] sm:$0xff]
      %v445 = vld [vmem:[%s242 + $0x148] sm:$0xff]
      %v446 = vld [vmem:[%s242 + $0x150] sm:$0xff]
      %v447 = vld [vmem:[%s242 + $0x158] sm:$0xff]
      %v448 = vld [vmem:[%s242 + $0x160] sm:$0xff]
      %v449 = vld [vmem:[%s242 + $0x168] sm:$0xff]
      %v450 = vld [vmem:[%s242 + $0x170] sm:$0xff]
      %v451 = vld [vmem:[%s242 + $0x178] sm:$0xff]
      %v452 = vld [vmem:[%s242 + $0x180] sm:$0xff]
      %v453 = vld [vmem:[%s242 + $0x188] sm:$0xff]
      %v454 = vld [vmem:[%s242 + $0x190] sm:$0xff]
      %v455 = vld [vmem:[%s242 + $0x198] sm:$0xff]
      %v456 = vld [vmem:[%s242 + $0x1a0] sm:$0xff]
      %v457 = vld [vmem:[%s242 + $0x1a8] sm:$0xff]
      %v458 = vld [vmem:[%s242 + $0x1b0] sm:$0xff]
      %v459 = vld [vmem:[%s242 + $0x1b8] sm:$0xff]
      %v460 = vld [vmem:[%s242 + $0x1c0] sm:$0xff]
      %v461 = vld [vmem:[%s242 + $0x1c8] sm:$0xff]
      %v462 = vld [vmem:[%s242 + $0x1d0] sm:$0xff]
      %v463 = vld [vmem:[%s242 + $0x1d8] sm:$0xff]
      %v464 = vld [vmem:[%s242 + $0x1e0] sm:$0xff]
      %v465 = vld [vmem:[%s242 + $0x1e8] sm:$0xff]
      %v466 = vld [vmem:[%s242 + $0x1f0] sm:$0xff]
      %v467 = vld [vmem:[%s242 + $0x1f8] sm:$0xff]
      %v468 = vld [vmem:[%s256] sm:$0xf]
      %v469 = vld [vmem:[%s256 + $0x4] sm:$0xf]
      %v470 = vld [vmem:[%s256 + $0x8] sm:$0xf]
      %v471 = vld [vmem:[%s256 + $0xc] sm:$0xf]
      %v472 = vld [vmem:[%s256 + $0x10] sm:$0xf]
      %v473 = vld [vmem:[%s256 + $0x14] sm:$0xf]
      %v474 = vld [vmem:[%s256 + $0x18] sm:$0xf]
      %v475 = vld [vmem:[%s256 + $0x1c] sm:$0xf]
      %v476 = vld [vmem:[%s256 + $0x20] sm:$0xf]
      %v477 = vld [vmem:[%s256 + $0x24] sm:$0xf]
      %v478 = vld [vmem:[%s256 + $0x28] sm:$0xf]
      %v479 = vld [vmem:[%s256 + $0x2c] sm:$0xf]
      %v480 = vld [vmem:[%s256 + $0x30] sm:$0xf]
      %v481 = vld [vmem:[%s256 + $0x34] sm:$0xf]
      %v482 = vld [vmem:[%s256 + $0x38] sm:$0xf]
      %v483 = vld [vmem:[%s256 + $0x3c] sm:$0xf]
      %v484 = vld [vmem:[%s256 + $0x40] sm:$0xf]
      %v485 = vld [vmem:[%s256 + $0x44] sm:$0xf]
      %v486 = vld [vmem:[%s256 + $0x48] sm:$0xf]
      %v487 = vld [vmem:[%s256 + $0x4c] sm:$0xf]
      %v488 = vld [vmem:[%s256 + $0x50] sm:$0xf]
      %v489 = vld [vmem:[%s256 + $0x54] sm:$0xf]
      %v490 = vld [vmem:[%s256 + $0x58] sm:$0xf]
      %v491 = vld [vmem:[%s256 + $0x5c] sm:$0xf]
      %v492 = vld [vmem:[%s256 + $0x60] sm:$0xf]
      %v493 = vld [vmem:[%s256 + $0x64] sm:$0xf]
      %v494 = vld [vmem:[%s256 + $0x68] sm:$0xf]
      %v495 = vld [vmem:[%s256 + $0x6c] sm:$0xf]
      %v496 = vld [vmem:[%s256 + $0x70] sm:$0xf]
      %v497 = vld [vmem:[%s256 + $0x74] sm:$0xf]
      %v498 = vld [vmem:[%s256 + $0x78] sm:$0xf]
      %v499 = vld [vmem:[%s256 + $0x7c] sm:$0xf]
      %v564 = vunpack.c.l.b16 %v404
      %v565 = vunpack.c.h.b16 %v404
      %v566 = vunpack.c.l.b16 %v405
      %v567 = vunpack.c.h.b16 %v405
      %v568 = vunpack.c.l.b16 %v406
      %v569 = vunpack.c.h.b16 %v406
      %v570 = vunpack.c.l.b16 %v407
      %v571 = vunpack.c.h.b16 %v407
      %v572 = vunpack.c.l.b16 %v408
      %v573 = vunpack.c.h.b16 %v408
      %v574 = vunpack.c.l.b16 %v409
      %v575 = vunpack.c.h.b16 %v409
      %v576 = vunpack.c.l.b16 %v410
      %v577 = vunpack.c.h.b16 %v410
      %v578 = vunpack.c.l.b16 %v411
      %v579 = vunpack.c.h.b16 %v411
      %v580 = vunpack.c.l.b16 %v412
      %v581 = vunpack.c.h.b16 %v412
      %v582 = vunpack.c.l.b16 %v413
      %v583 = vunpack.c.h.b16 %v413
      %v584 = vunpack.c.l.b16 %v414
      %v585 = vunpack.c.h.b16 %v414
      %v586 = vunpack.c.l.b16 %v415
      %v587 = vunpack.c.h.b16 %v415
      %v588 = vunpack.c.l.b16 %v416
      %v589 = vunpack.c.h.b16 %v416
      %v590 = vunpack.c.l.b16 %v417
      %v591 = vunpack.c.h.b16 %v417
      %v592 = vunpack.c.l.b16 %v418
      %v593 = vunpack.c.h.b16 %v418
      %v594 = vunpack.c.l.b16 %v419
      %v595 = vunpack.c.h.b16 %v419
      %v596 = vunpack.c.l.b16 %v420
      %v597 = vunpack.c.h.b16 %v420
      %v598 = vunpack.c.l.b16 %v421
      %v599 = vunpack.c.h.b16 %v421
      %v600 = vunpack.c.l.b16 %v422
      %v601 = vunpack.c.h.b16 %v422
      %v602 = vunpack.c.l.b16 %v423
      %v603 = vunpack.c.h.b16 %v423
      %v604 = vunpack.c.l.b16 %v424
      %v605 = vunpack.c.h.b16 %v424
      %v606 = vunpack.c.l.b16 %v425
      %v607 = vunpack.c.h.b16 %v425
      %v608 = vunpack.c.l.b16 %v426
      %v609 = vunpack.c.h.b16 %v426
      %v610 = vunpack.c.l.b16 %v427
      %v611 = vunpack.c.h.b16 %v427
      %v612 = vunpack.c.l.b16 %v428
      %v613 = vunpack.c.h.b16 %v428
      %v614 = vunpack.c.l.b16 %v429
      %v615 = vunpack.c.h.b16 %v429
      %v616 = vunpack.c.l.b16 %v430
      %v617 = vunpack.c.h.b16 %v430
      %v618 = vunpack.c.l.b16 %v431
      %v619 = vunpack.c.h.b16 %v431
      %v620 = vunpack.c.l.b16 %v432
      %v621 = vunpack.c.h.b16 %v432
      %v622 = vunpack.c.l.b16 %v433
      %v623 = vunpack.c.h.b16 %v433
      %v624 = vunpack.c.l.b16 %v434
      %v625 = vunpack.c.h.b16 %v434
      %v626 = vunpack.c.l.b16 %v435
      %v627 = vunpack.c.h.b16 %v435
      %v628 = vunpack.c.l.b16 %v436
      %v629 = vunpack.c.h.b16 %v436
      %v630 = vunpack.c.l.b16 %v437
      %v631 = vunpack.c.h.b16 %v437
      %v632 = vunpack.c.l.b16 %v438
      %v633 = vunpack.c.h.b16 %v438
      %v634 = vunpack.c.l.b16 %v439
      %v635 = vunpack.c.h.b16 %v439
      %v636 = vunpack.c.l.b16 %v440
      %v637 = vunpack.c.h.b16 %v440
      %v638 = vunpack.c.l.b16 %v441
      %v639 = vunpack.c.h.b16 %v441
      %v640 = vunpack.c.l.b16 %v442
      %v641 = vunpack.c.h.b16 %v442
      %v642 = vunpack.c.l.b16 %v443
      %v643 = vunpack.c.h.b16 %v443
      %v644 = vunpack.c.l.b16 %v444
      %v645 = vunpack.c.h.b16 %v444
      %v646 = vunpack.c.l.b16 %v445
      %v647 = vunpack.c.h.b16 %v445
      %v648 = vunpack.c.l.b16 %v446
      %v649 = vunpack.c.h.b16 %v446
      %v650 = vunpack.c.l.b16 %v447
      %v651 = vunpack.c.h.b16 %v447
      %v652 = vunpack.c.l.b16 %v448
      %v653 = vunpack.c.h.b16 %v448
      %v654 = vunpack.c.l.b16 %v449
      %v655 = vunpack.c.h.b16 %v449
      %v656 = vunpack.c.l.b16 %v450
      %v657 = vunpack.c.h.b16 %v450
      %v658 = vunpack.c.l.b16 %v451
      %v659 = vunpack.c.h.b16 %v451
      %v660 = vunpack.c.l.b16 %v452
      %v661 = vunpack.c.h.b16 %v452
      %v662 = vunpack.c.l.b16 %v453
      %v663 = vunpack.c.h.b16 %v453
      %v664 = vunpack.c.l.b16 %v454
      %v665 = vunpack.c.h.b16 %v454
      %v666 = vunpack.c.l.b16 %v455
      %v667 = vunpack.c.h.b16 %v455
      %v668 = vunpack.c.l.b16 %v456
      %v669 = vunpack.c.h.b16 %v456
      %v670 = vunpack.c.l.b16 %v457
      %v671 = vunpack.c.h.b16 %v457
      %v672 = vunpack.c.l.b16 %v458
      %v673 = vunpack.c.h.b16 %v458
      %v674 = vunpack.c.l.b16 %v459
      %v675 = vunpack.c.h.b16 %v459
      %v676 = vunpack.c.l.b16 %v460
      %v677 = vunpack.c.h.b16 %v460
      %v678 = vunpack.c.l.b16 %v461
      %v679 = vunpack.c.h.b16 %v461
      %v680 = vunpack.c.l.b16 %v462
      %v681 = vunpack.c.h.b16 %v462
      %v682 = vunpack.c.l.b16 %v463
      %v683 = vunpack.c.h.b16 %v463
      %v684 = vunpack.c.l.b16 %v464
      %v685 = vunpack.c.h.b16 %v464
      %v686 = vunpack.c.l.b16 %v465
      %v687 = vunpack.c.h.b16 %v465
      %v688 = vunpack.c.l.b16 %v466
      %v689 = vunpack.c.h.b16 %v466
      %v690 = vunpack.c.l.b16 %v467
      %v691 = vunpack.c.h.b16 %v467
      %v692 = vpack.c.b16 %v566, %v564
      %v693 = vpack.c.b16 %v567, %v565
      %v694 = vpack.c.b16 %v570, %v568
      %v695 = vpack.c.b16 %v571, %v569
      %v696 = vpack.c.b16 %v574, %v572
      %v697 = vpack.c.b16 %v575, %v573
      %v698 = vpack.c.b16 %v578, %v576
      %v699 = vpack.c.b16 %v579, %v577
      %v700 = vpack.c.b16 %v582, %v580
      %v701 = vpack.c.b16 %v583, %v581
      %v702 = vpack.c.b16 %v586, %v584
      %v703 = vpack.c.b16 %v587, %v585
      %v704 = vpack.c.b16 %v590, %v588
      %v705 = vpack.c.b16 %v591, %v589
      %v706 = vpack.c.b16 %v594, %v592
      %v707 = vpack.c.b16 %v595, %v593
      %v708 = vpack.c.b16 %v598, %v596
      %v709 = vpack.c.b16 %v599, %v597
      %v710 = vpack.c.b16 %v602, %v600
      %v711 = vpack.c.b16 %v603, %v601
      %v712 = vpack.c.b16 %v606, %v604
      %v713 = vpack.c.b16 %v607, %v605
      %v714 = vpack.c.b16 %v610, %v608
      %v715 = vpack.c.b16 %v611, %v609
      %v716 = vpack.c.b16 %v614, %v612
      %v717 = vpack.c.b16 %v615, %v613
      %v718 = vpack.c.b16 %v618, %v616
      %v719 = vpack.c.b16 %v619, %v617
      %v720 = vpack.c.b16 %v622, %v620
      %v721 = vpack.c.b16 %v623, %v621
      %v722 = vpack.c.b16 %v626, %v624
      %v723 = vpack.c.b16 %v627, %v625
      %v724 = vpack.c.b16 %v630, %v628
      %v725 = vpack.c.b16 %v631, %v629
      %v726 = vpack.c.b16 %v634, %v632
      %v727 = vpack.c.b16 %v635, %v633
      %v728 = vpack.c.b16 %v638, %v636
      %v729 = vpack.c.b16 %v639, %v637
      %v730 = vpack.c.b16 %v642, %v640
      %v731 = vpack.c.b16 %v643, %v641
      %v732 = vpack.c.b16 %v646, %v644
      %v733 = vpack.c.b16 %v647, %v645
      %v734 = vpack.c.b16 %v650, %v648
      %v735 = vpack.c.b16 %v651, %v649
      %v736 = vpack.c.b16 %v654, %v652
      %v737 = vpack.c.b16 %v655, %v653
      %v738 = vpack.c.b16 %v658, %v656
      %v739 = vpack.c.b16 %v659, %v657
      %v740 = vpack.c.b16 %v662, %v660
      %v741 = vpack.c.b16 %v663, %v661
      %v742 = vpack.c.b16 %v666, %v664
      %v743 = vpack.c.b16 %v667, %v665
      %v744 = vpack.c.b16 %v670, %v668
      %v745 = vpack.c.b16 %v671, %v669
      %v746 = vpack.c.b16 %v674, %v672
      %v747 = vpack.c.b16 %v675, %v673
      %v748 = vpack.c.b16 %v678, %v676
      %v749 = vpack.c.b16 %v679, %v677
      %v750 = vpack.c.b16 %v682, %v680
      %v751 = vpack.c.b16 %v683, %v681
      %v752 = vpack.c.b16 %v686, %v684
      %v753 = vpack.c.b16 %v687, %v685
      %v754 = vpack.c.b16 %v690, %v688
      %v755 = vpack.c.b16 %v691, %v689
      %v852 = vunpack.c.l.b16 %v468
      %v853 = vunpack.c.l.b16 %v469
      %v854 = vunpack.c.l.b16 %v470
      %v855 = vunpack.c.l.b16 %v471
      %v856 = vunpack.c.l.b16 %v472
      %v857 = vunpack.c.l.b16 %v473
      %v858 = vunpack.c.l.b16 %v474
      %v859 = vunpack.c.l.b16 %v475
      %v860 = vunpack.c.l.b16 %v476
      %v861 = vunpack.c.l.b16 %v477
      %v862 = vunpack.c.l.b16 %v478
      %v863 = vunpack.c.l.b16 %v479
      %v864 = vunpack.c.l.b16 %v480
      %v865 = vunpack.c.l.b16 %v481
      %v866 = vunpack.c.l.b16 %v482
      %v867 = vunpack.c.l.b16 %v483
      %v868 = vunpack.c.l.b16 %v484
      %v869 = vunpack.c.l.b16 %v485
      %v870 = vunpack.c.l.b16 %v486
      %v871 = vunpack.c.l.b16 %v487
      %v872 = vunpack.c.l.b16 %v488
      %v873 = vunpack.c.l.b16 %v489
      %v874 = vunpack.c.l.b16 %v490
      %v875 = vunpack.c.l.b16 %v491
      %v876 = vunpack.c.l.b16 %v492
      %v877 = vunpack.c.l.b16 %v493
      %v878 = vunpack.c.l.b16 %v494
      %v879 = vunpack.c.l.b16 %v495
      %v880 = vunpack.c.l.b16 %v496
      %v881 = vunpack.c.l.b16 %v497
      %v882 = vunpack.c.l.b16 %v498
      %v883 = vunpack.c.l.b16 %v499
      %v884 = vpack.c.b16 %v853, %v852
      %v885 = vpack.c.b16 %v855, %v854
      %v886 = vpack.c.b16 %v857, %v856
      %v887 = vpack.c.b16 %v859, %v858
      %v888 = vpack.c.b16 %v861, %v860
      %v889 = vpack.c.b16 %v863, %v862
      %v890 = vpack.c.b16 %v865, %v864
      %v891 = vpack.c.b16 %v867, %v866
      %v892 = vpack.c.b16 %v869, %v868
      %v893 = vpack.c.b16 %v871, %v870
      %v894 = vpack.c.b16 %v873, %v872
      %v895 = vpack.c.b16 %v875, %v874
      %v896 = vpack.c.b16 %v877, %v876
      %v897 = vpack.c.b16 %v879, %v878
      %v898 = vpack.c.b16 %v881, %v880
      %v899 = vpack.c.b16 %v883, %v882
      %916 = vmatprep.subr.bf16.mxu0 0
      %917 = vmatpush1.bf16.msra.mxu0 %v884
      %918 = vmatprep.subr.bf16.mxu0 0
      %919 = vmatpush1.bf16.msra.mxu0 %v885
      %920 = vmatprep.subr.bf16.mxu0 0
      %921 = vmatpush1.bf16.msra.mxu0 %v886
      %922 = vmatprep.subr.bf16.mxu0 0
      %923 = vmatpush1.bf16.msra.mxu0 %v887
      %924 = vmatprep.subr.bf16.mxu0 0
      %925 = vmatpush1.bf16.msra.mxu0 %v888
      %926 = vmatprep.subr.bf16.mxu0 0
      %927 = vmatpush1.bf16.msra.mxu0 %v889
      %928 = vmatprep.subr.bf16.mxu0 0
      %929 = vmatpush1.bf16.msra.mxu0 %v890
      %930 = vmatprep.subr.bf16.mxu0 0
      %931 = vmatpush1.bf16.msra.mxu0 %v891
      %932 = vmatprep.subr.bf16.mxu0 0
      %933 = vmatpush1.bf16.msra.mxu0 %v892
      %934 = vmatprep.subr.bf16.mxu0 0
      %935 = vmatpush1.bf16.msra.mxu0 %v893
      %936 = vmatprep.subr.bf16.mxu0 0
      %937 = vmatpush1.bf16.msra.mxu0 %v894
      %938 = vmatprep.subr.bf16.mxu0 0
      %939 = vmatpush1.bf16.msra.mxu0 %v895
      %940 = vmatprep.subr.bf16.mxu0 0
      %941 = vmatpush1.bf16.msra.mxu0 %v896
      %942 = vmatprep.subr.bf16.mxu0 0
      %943 = vmatpush1.bf16.msra.mxu0 %v897
      %944 = vmatprep.subr.bf16.mxu0 0
      %945 = vmatpush1.bf16.msra.mxu0 %v898
      %946 = vmatprep.subr.bf16.mxu0 0
      %947 = vmatpush1.bf16.msra.mxu0 %v899
      %948 = vmatprep.mubr.bf16.mxu0 %v693
      %949 = vmatmul.mubr.bf16.gmra.mrb[0].mxu0 %v692
      %v950 = vpop.f32.mrb[0].mxu0
      %v951 = vadd.f32 0.0, %v950
      %v952 = vpop.f32.mrb[0].mxu0
      %v953 = vpop.f32.mrb[0].mxu0
      %v954 = vadd.f32 0.0, %v953
      %v955 = vpop.f32.mrb[0].mxu0
      %956 = vmatprep.mubr.bf16.mxu0 %v695
      %957 = vmatmul.mubr.bf16.gmra.mrb[0].mxu0 %v694
      %v958 = vpop.f32.mrb[0].mxu0
      %v959 = vadd.f32 0.0, %v958
      %v960 = vpop.f32.mrb[0].mxu0
      %v961 = vpop.f32.mrb[0].mxu0
      %v962 = vadd.f32 0.0, %v961
      %v963 = vpop.f32.mrb[0].mxu0
      %964 = vmatprep.mubr.bf16.mxu0 %v697
      %965 = vmatmul.mubr.bf16.gmra.mrb[0].mxu0 %v696
      %v966 = vpop.f32.mrb[0].mxu0
      %v967 = vadd.f32 0.0, %v966
      %v968 = vpop.f32.mrb[0].mxu0
      %v969 = vpop.f32.mrb[0].mxu0
      %v970 = vadd.f32 0.0, %v969
      %v971 = vpop.f32.mrb[0].mxu0
      %972 = vmatprep.mubr.bf16.mxu0 %v699
      %973 = vmatmul.mubr.bf16.gmra.mrb[0].mxu0 %v698
      %v974 = vpop.f32.mrb[0].mxu0
      %v975 = vadd.f32 0.0, %v974
      %v976 = vpop.f32.mrb[0].mxu0
      %v977 = vpop.f32.mrb[0].mxu0
      %v978 = vadd.f32 0.0, %v977
      %v979 = vpop.f32.mrb[0].mxu0
      %980 = vmatprep.mubr.bf16.mxu0 %v701
      %981 = vmatmul.mubr.bf16.gmra.mrb[0].mxu0 %v700
      %v982 = vpop.f32.mrb[0].mxu0
      %v983 = vadd.f32 0.0, %v982
      %v984 = vpop.f32.mrb[0].mxu0
      %v985 = vpop.f32.mrb[0].mxu0
      %v986 = vadd.f32 0.0, %v985
      %v987 = vpop.f32.mrb[0].mxu0
      %988 = vmatprep.mubr.bf16.mxu0 %v703
      %989 = vmatmul.mubr.bf16.gmra.mrb[0].mxu0 %v702
      %v990 = vpop.f32.mrb[0].mxu0
      %v991 = vadd.f32 0.0, %v990
      %v992 = vpop.f32.mrb[0].mxu0
      %v993 = vpop.f32.mrb[0].mxu0
      %v994 = vadd.f32 0.0, %v993
      %v995 = vpop.f32.mrb[0].mxu0
      %996 = vmatprep.mubr.bf16.mxu0 %v705
      %997 = vmatmul.mubr.bf16.gmra.mrb[0].mxu0 %v704
      %v998 = vpop.f32.mrb[0].mxu0
      %v999 = vadd.f32 0.0, %v998
      %v1000 = vpop.f32.mrb[0].mxu0
      %v1001 = vpop.f32.mrb[0].mxu0
      %v1002 = vadd.f32 0.0, %v1001
      %v1003 = vpop.f32.mrb[0].mxu0
      %1004 = vmatprep.mubr.bf16.mxu0 %v707
      %1005 = vmatmul.mubr.bf16.gmra.mrb[0].mxu0 %v706
      %v1006 = vpop.f32.mrb[0].mxu0
      %v1007 = vadd.f32 0.0, %v1006
      %v1008 = vpop.f32.mrb[0].mxu0
      %v1009 = vpop.f32.mrb[0].mxu0
      %v1010 = vadd.f32 0.0, %v1009
      %v1011 = vpop.f32.mrb[0].mxu0
      %1012 = vmatprep.mubr.bf16.mxu0 %v709
      %1013 = vmatmul.mubr.bf16.gmra.mrb[0].mxu0 %v708
      %v1014 = vpop.f32.mrb[0].mxu0
      %v1015 = vadd.f32 0.0, %v1014
      %v1016 = vpop.f32.mrb[0].mxu0
      %v1017 = vpop.f32.mrb[0].mxu0
      %v1018 = vadd.f32 0.0, %v1017
      %v1019 = vpop.f32.mrb[0].mxu0
      %1020 = vmatprep.mubr.bf16.mxu0 %v711
      %1021 = vmatmul.mubr.bf16.gmra.mrb[0].mxu0 %v710
      %v1022 = vpop.f32.mrb[0].mxu0
      %v1023 = vadd.f32 0.0, %v1022
      %v1024 = vpop.f32.mrb[0].mxu0
      %v1025 = vpop.f32.mrb[0].mxu0
      %v1026 = vadd.f32 0.0, %v1025
      %v1027 = vpop.f32.mrb[0].mxu0
      %1028 = vmatprep.mubr.bf16.mxu0 %v713
      %1029 = vmatmul.mubr.bf16.gmra.mrb[0].mxu0 %v712
      %v1030 = vpop.f32.mrb[0].mxu0
      %v1031 = vadd.f32 0.0, %v1030
      %v1032 = vpop.f32.mrb[0].mxu0
      %v1033 = vpop.f32.mrb[0].mxu0
      %v1034 = vadd.f32 0.0, %v1033
      %v1035 = vpop.f32.mrb[0].mxu0
      %1036 = vmatprep.mubr.bf16.mxu0 %v715
      %1037 = vmatmul.mubr.bf16.gmra.mrb[0].mxu0 %v714
      %v1038 = vpop.f32.mrb[0].mxu0
      %v1039 = vadd.f32 0.0, %v1038
      %v1040 = vpop.f32.mrb[0].mxu0
      %v1041 = vpop.f32.mrb[0].mxu0
      %v1042 = vadd.f32 0.0, %v1041
      %v1043 = vpop.f32.mrb[0].mxu0
      %1044 = vmatprep.mubr.bf16.mxu0 %v717
      %1045 = vmatmul.mubr.bf16.gmra.mrb[0].mxu0 %v716
      %v1046 = vpop.f32.mrb[0].mxu0
      %v1047 = vadd.f32 0.0, %v1046
      %v1048 = vpop.f32.mrb[0].mxu0
      %v1049 = vpop.f32.mrb[0].mxu0
      %v1050 = vadd.f32 0.0, %v1049
      %v1051 = vpop.f32.mrb[0].mxu0
      %1052 = vmatprep.mubr.bf16.mxu0 %v719
      %1053 = vmatmul.mubr.bf16.gmra.mrb[0].mxu0 %v718
      %v1054 = vpop.f32.mrb[0].mxu0
      %v1055 = vadd.f32 0.0, %v1054
      %v1056 = vpop.f32.mrb[0].mxu0
      %v1057 = vpop.f32.mrb[0].mxu0
      %v1058 = vadd.f32 0.0, %v1057
      %v1059 = vpop.f32.mrb[0].mxu0
      %1060 = vmatprep.mubr.bf16.mxu0 %v721
      %1061 = vmatmul.mubr.bf16.gmra.mrb[0].mxu0 %v720
      %v1062 = vpop.f32.mrb[0].mxu0
      %v1063 = vadd.f32 0.0, %v1062
      %v1064 = vpop.f32.mrb[0].mxu0
      %v1065 = vpop.f32.mrb[0].mxu0
      %v1066 = vadd.f32 0.0, %v1065
      %v1067 = vpop.f32.mrb[0].mxu0
      %1068 = vmatprep.mubr.bf16.mxu0 %v723
      %1069 = vmatmul.mubr.bf16.gmra.mrb[0].mxu0 %v722
      %v1070 = vpop.f32.mrb[0].mxu0
      %v1071 = vadd.f32 0.0, %v1070
      %v1072 = vpop.f32.mrb[0].mxu0
      %v1073 = vpop.f32.mrb[0].mxu0
      %v1074 = vadd.f32 0.0, %v1073
      %v1075 = vpop.f32.mrb[0].mxu0
      %1076 = vmatprep.mubr.bf16.mxu0 %v725
      %1077 = vmatmul.mubr.bf16.gmra.mrb[0].mxu0 %v724
      %v1078 = vpop.f32.mrb[0].mxu0
      %v1079 = vadd.f32 0.0, %v1078
      %v1080 = vpop.f32.mrb[0].mxu0
      %v1081 = vpop.f32.mrb[0].mxu0
      %v1082 = vadd.f32 0.0, %v1081
      %v1083 = vpop.f32.mrb[0].mxu0
      %1084 = vmatprep.mubr.bf16.mxu0 %v727
      %1085 = vmatmul.mubr.bf16.gmra.mrb[0].mxu0 %v726
      %v1086 = vpop.f32.mrb[0].mxu0
      %v1087 = vadd.f32 0.0, %v1086
      %v1088 = vpop.f32.mrb[0].mxu0
      %v1089 = vpop.f32.mrb[0].mxu0
      %v1090 = vadd.f32 0.0, %v1089
      %v1091 = vpop.f32.mrb[0].mxu0
      %1092 = vmatprep.mubr.bf16.mxu0 %v729
      %1093 = vmatmul.mubr.bf16.gmra.mrb[0].mxu0 %v728
      %v1094 = vpop.f32.mrb[0].mxu0
      %v1095 = vadd.f32 0.0, %v1094
      %v1096 = vpop.f32.mrb[0].mxu0
      %v1097 = vpop.f32.mrb[0].mxu0
      %v1098 = vadd.f32 0.0, %v1097
      %v1099 = vpop.f32.mrb[0].mxu0
      %1100 = vmatprep.mubr.bf16.mxu0 %v731
      %1101 = vmatmul.mubr.bf16.gmra.mrb[0].mxu0 %v730
      %v1102 = vpop.f32.mrb[0].mxu0
      %v1103 = vadd.f32 0.0, %v1102
      %v1104 = vpop.f32.mrb[0].mxu0
      %v1105 = vpop.f32.mrb[0].mxu0
      %v1106 = vadd.f32 0.0, %v1105
      %v1107 = vpop.f32.mrb[0].mxu0
      %1108 = vmatprep.mubr.bf16.mxu0 %v733
      %1109 = vmatmul.mubr.bf16.gmra.mrb[0].mxu0 %v732
      %v1110 = vpop.f32.mrb[0].mxu0
      %v1111 = vadd.f32 0.0, %v1110
      %v1112 = vpop.f32.mrb[0].mxu0
      %v1113 = vpop.f32.mrb[0].mxu0
      %v1114 = vadd.f32 0.0, %v1113
      %v1115 = vpop.f32.mrb[0].mxu0
      %1116 = vmatprep.mubr.bf16.mxu0 %v735
      %1117 = vmatmul.mubr.bf16.gmra.mrb[0].mxu0 %v734
      %v1118 = vpop.f32.mrb[0].mxu0
      %v1119 = vadd.f32 0.0, %v1118
      %v1120 = vpop.f32.mrb[0].mxu0
      %v1121 = vpop.f32.mrb[0].mxu0
      %v1122 = vadd.f32 0.0, %v1121
      %v1123 = vpop.f32.mrb[0].mxu0
      %1124 = vmatprep.mubr.bf16.mxu0 %v737
      %1125 = vmatmul.mubr.bf16.gmra.mrb[0].mxu0 %v736
      %v1126 = vpop.f32.mrb[0].mxu0
      %v1127 = vadd.f32 0.0, %v1126
      %v1128 = vpop.f32.mrb[0].mxu0
      %v1129 = vpop.f32.mrb[0].mxu0
      %v1130 = vadd.f32 0.0, %v1129
      %v1131 = vpop.f32.mrb[0].mxu0
      %1132 = vmatprep.mubr.bf16.mxu0 %v739
      %1133 = vmatmul.mubr.bf16.gmra.mrb[0].mxu0 %v738
      %v1134 = vpop.f32.mrb[0].mxu0
      %v1135 = vadd.f32 0.0, %v1134
      %v1136 = vpop.f32.mrb[0].mxu0
      %v1137 = vpop.f32.mrb[0].mxu0
      %v1138 = vadd.f32 0.0, %v1137
      %v1139 = vpop.f32.mrb[0].mxu0
      %1140 = vmatprep.mubr.bf16.mxu0 %v741
      %1141 = vmatmul.mubr.bf16.gmra.mrb[0].mxu0 %v740
      %v1142 = vpop.f32.mrb[0].mxu0
      %v1143 = vadd.f32 0.0, %v1142
      %v1144 = vpop.f32.mrb[0].mxu0
      %v1145 = vpop.f32.mrb[0].mxu0
      %v1146 = vadd.f32 0.0, %v1145
      %v1147 = vpop.f32.mrb[0].mxu0
      %1148 = vmatprep.mubr.bf16.mxu0 %v743
      %1149 = vmatmul.mubr.bf16.gmra.mrb[0].mxu0 %v742
      %v1150 = vpop.f32.mrb[0].mxu0
      %v1151 = vadd.f32 0.0, %v1150
      %v1152 = vpop.f32.mrb[0].mxu0
      %v1153 = vpop.f32.mrb[0].mxu0
      %v1154 = vadd.f32 0.0, %v1153
      %v1155 = vpop.f32.mrb[0].mxu0
      %1156 = vmatprep.mubr.bf16.mxu0 %v745
      %1157 = vmatmul.mubr.bf16.gmra.mrb[0].mxu0 %v744
      %v1158 = vpop.f32.mrb[0].mxu0
      %v1159 = vadd.f32 0.0, %v1158
      %v1160 = vpop.f32.mrb[0].mxu0
      %v1161 = vpop.f32.mrb[0].mxu0
      %v1162 = vadd.f32 0.0, %v1161
      %v1163 = vpop.f32.mrb[0].mxu0
      %1164 = vmatprep.mubr.bf16.mxu0 %v747
      %1165 = vmatmul.mubr.bf16.gmra.mrb[0].mxu0 %v746
      %v1166 = vpop.f32.mrb[0].mxu0
      %v1167 = vadd.f32 0.0, %v1166
      %v1168 = vpop.f32.mrb[0].mxu0
      %v1169 = vpop.f32.mrb[0].mxu0
      %v1170 = vadd.f32 0.0, %v1169
      %v1171 = vpop.f32.mrb[0].mxu0
      %1172 = vmatprep.mubr.bf16.mxu0 %v749
      %1173 = vmatmul.mubr.bf16.gmra.mrb[0].mxu0 %v748
      %v1174 = vpop.f32.mrb[0].mxu0
      %v1175 = vadd.f32 0.0, %v1174
      %v1176 = vpop.f32.mrb[0].mxu0
      %v1177 = vpop.f32.mrb[0].mxu0
      %v1178 = vadd.f32 0.0, %v1177
      %v1179 = vpop.f32.mrb[0].mxu0
      %1180 = vmatprep.mubr.bf16.mxu0 %v751
      %1181 = vmatmul.mubr.bf16.gmra.mrb[0].mxu0 %v750
      %v1182 = vpop.f32.mrb[0].mxu0
      %v1183 = vadd.f32 0.0, %v1182
      %v1184 = vpop.f32.mrb[0].mxu0
      %v1185 = vpop.f32.mrb[0].mxu0
      %v1186 = vadd.f32 0.0, %v1185
      %v1187 = vpop.f32.mrb[0].mxu0
      %1188 = vmatprep.mubr.bf16.mxu0 %v753
      %1189 = vmatmul.mubr.bf16.gmra.mrb[0].mxu0 %v752
      %v1190 = vpop.f32.mrb[0].mxu0
      %v1191 = vadd.f32 0.0, %v1190
      %v1192 = vpop.f32.mrb[0].mxu0
      %v1193 = vpop.f32.mrb[0].mxu0
      %v1194 = vadd.f32 0.0, %v1193
      %v1195 = vpop.f32.mrb[0].mxu0
      %1196 = vmatprep.mubr.bf16.mxu0 %v755
      %1197 = vmatmul.mubr.bf16.gmra.mrb[0].mxu0 %v754
      %v1198 = vpop.f32.mrb[0].mxu0
      %v1199 = vadd.f32 0.0, %v1198
      %v1200 = vpop.f32.mrb[0].mxu0
      %v1201 = vpop.f32.mrb[0].mxu0
      %v1202 = vadd.f32 0.0, %v1201
      %v1203 = vpop.f32.mrb[0].mxu0
      %1204 = vdwg.mxu0
      %v1205 = vadd.f32 %v340, %v951
      %v1206 = vadd.f32 %v341, %v954
      %v1207 = vadd.f32 %v342, %v959
      %v1208 = vadd.f32 %v343, %v962
      %v1209 = vadd.f32 %v344, %v967
      %v1210 = vadd.f32 %v345, %v970
      %v1211 = vadd.f32 %v346, %v975
      %v1212 = vadd.f32 %v347, %v978
      %v1213 = vadd.f32 %v348, %v983
      %v1214 = vadd.f32 %v349, %v986
      %v1215 = vadd.f32 %v350, %v991
      %v1216 = vadd.f32 %v351, %v994
      %v1217 = vadd.f32 %v352, %v999
      %v1218 = vadd.f32 %v353, %v1002
      %v1219 = vadd.f32 %v354, %v1007
      %v1220 = vadd.f32 %v355, %v1010
      %v1221 = vadd.f32 %v356, %v1015
      %v1222 = vadd.f32 %v357, %v1018
      %v1223 = vadd.f32 %v358, %v1023
      %v1224 = vadd.f32 %v359, %v1026
      %v1225 = vadd.f32 %v360, %v1031
      %v1226 = vadd.f32 %v361, %v1034
      %v1227 = vadd.f32 %v362, %v1039
      %v1228 = vadd.f32 %v363, %v1042
      %v1229 = vadd.f32 %v364, %v1047
      %v1230 = vadd.f32 %v365, %v1050
      %v1231 = vadd.f32 %v366, %v1055
      %v1232 = vadd.f32 %v367, %v1058
      %v1233 = vadd.f32 %v368, %v1063
      %v1234 = vadd.f32 %v369, %v1066
      %v1235 = vadd.f32 %v370, %v1071
      %v1236 = vadd.f32 %v371, %v1074
      %v1237 = vadd.f32 %v372, %v1079
      %v1238 = vadd.f32 %v373, %v1082
      %v1239 = vadd.f32 %v374, %v1087
      %v1240 = vadd.f32 %v375, %v1090
      %v1241 = vadd.f32 %v376, %v1095
      %v1242 = vadd.f32 %v377, %v1098
      %v1243 = vadd.f32 %v378, %v1103
      %v1244 = vadd.f32 %v379, %v1106
      %v1245 = vadd.f32 %v380, %v1111
      %v1246 = vadd.f32 %v381, %v1114
      %v1247 = vadd.f32 %v382, %v1119
      %v1248 = vadd.f32 %v383, %v1122
      %v1249 = vadd.f32 %v384, %v1127
      %v1250 = vadd.f32 %v385, %v1130
      %v1251 = vadd.f32 %v386, %v1135
      %v1252 = vadd.f32 %v387, %v1138
      %v1253 = vadd.f32 %v388, %v1143
      %v1254 = vadd.f32 %v389, %v1146
      %v1255 = vadd.f32 %v390, %v1151
      %v1256 = vadd.f32 %v391, %v1154
      %v1257 = vadd.f32 %v392, %v1159
      %v1258 = vadd.f32 %v393, %v1162
      %v1259 = vadd.f32 %v394, %v1167
      %v1260 = vadd.f32 %v395, %v1170
      %v1261 = vadd.f32 %v396, %v1175
      %v1262 = vadd.f32 %v397, %v1178
      %v1263 = vadd.f32 %v398, %v1183
      %v1264 = vadd.f32 %v399, %v1186
      %v1265 = vadd.f32 %v400, %v1191
      %v1266 = vadd.f32 %v401, %v1194
      %v1267 = vadd.f32 %v402, %v1199
      %v1268 = vadd.f32 %v403, %v1202
      %1269 = vst [vmem:[#allocation2] sm:$0xff] %v1205
      %1270 = vst [vmem:[#allocation2 + $0x8] sm:$0xff] %v1206
      %1271 = vst [vmem:[#allocation2 + $0x10] sm:$0xff] %v1207
      %1272 = vst [vmem:[#allocation2 + $0x18] sm:$0xff] %v1208
      %1273 = vst [vmem:[#allocation2 + $0x20] sm:$0xff] %v1209
      %1274 = vst [vmem:[#allocation2 + $0x28] sm:$0xff] %v1210
      %1275 = vst [vmem:[#allocation2 + $0x30] sm:$0xff] %v1211
      %1276 = vst [vmem:[#allocation2 + $0x38] sm:$0xff] %v1212
      %1277 = vst [vmem:[#allocation2 + $0x40] sm:$0xff] %v1213
      %1278 = vst [vmem:[#allocation2 + $0x48] sm:$0xff] %v1214
      %1279 = vst [vmem:[#allocation2 + $0x50] sm:$0xff] %v1215
      %1280 = vst [vmem:[#allocation2 + $0x58] sm:$0xff] %v1216
      %1281 = vst [vmem:[#allocation2 + $0x60] sm:$0xff] %v1217
      %1282 = vst [vmem:[#allocation2 + $0x68] sm:$0xff] %v1218
      %1283 = vst [vmem:[#allocation2 + $0x70] sm:$0xff] %v1219
      %1284 = vst [vmem:[#allocation2 + $0x78] sm:$0xff] %v1220
      %1285 = vst [vmem:[#allocation2 + $0x80] sm:$0xff] %v1221
      %1286 = vst [vmem:[#allocation2 + $0x88] sm:$0xff] %v1222
      %1287 = vst [vmem:[#allocation2 + $0x90] sm:$0xff] %v1223
      %1288 = vst [vmem:[#allocation2 + $0x98] sm:$0xff] %v1224
      %1289 = vst [vmem:[#allocation2 + $0xa0] sm:$0xff] %v1225
      %1290 = vst [vmem:[#allocation2 + $0xa8] sm:$0xff] %v1226
      %1291 = vst [vmem:[#allocation2 + $0xb0] sm:$0xff] %v1227
      %1292 = vst [vmem:[#allocation2 + $0xb8] sm:$0xff] %v1228
      %1293 = vst [vmem:[#allocation2 + $0xc0] sm:$0xff] %v1229
      %1294 = vst [vmem:[#allocation2 + $0xc8] sm:$0xff] %v1230
      %1295 = vst [vmem:[#allocation2 + $0xd0] sm:$0xff] %v1231
      %1296 = vst [vmem:[#allocation2 + $0xd8] sm:$0xff] %v1232
      %1297 = vst [vmem:[#allocation2 + $0xe0] sm:$0xff] %v1233
      %1298 = vst [vmem:[#allocation2 + $0xe8] sm:$0xff] %v1234
      %1299 = vst [vmem:[#allocation2 + $0xf0] sm:$0xff] %v1235
      %1300 = vst [vmem:[#allocation2 + $0xf8] sm:$0xff] %v1236
      %1301 = vst [vmem:[#allocation2 + $0x100] sm:$0xff] %v1237
      %1302 = vst [vmem:[#allocation2 + $0x108] sm:$0xff] %v1238
      %1303 = vst [vmem:[#allocation2 + $0x110] sm:$0xff] %v1239
      %1304 = vst [vmem:[#allocation2 + $0x118] sm:$0xff] %v1240
      %1305 = vst [vmem:[#allocation2 + $0x120] sm:$0xff] %v1241
      %1306 = vst [vmem:[#allocation2 + $0x128] sm:$0xff] %v1242
      %1307 = vst [vmem:[#allocation2 + $0x130] sm:$0xff] %v1243
      %1308 = vst [vmem:[#allocation2 + $0x138] sm:$0xff] %v1244
      %1309 = vst [vmem:[#allocation2 + $0x140] sm:$0xff] %v1245
      %1310 = vst [vmem:[#allocation2 + $0x148] sm:$0xff] %v1246
      %1311 = vst [vmem:[#allocation2 + $0x150] sm:$0xff] %v1247
      %1312 = vst [vmem:[#allocation2 + $0x158] sm:$0xff] %v1248
      %1313 = vst [vmem:[#allocation2 + $0x160] sm:$0xff] %v1249
      %1314 = vst [vmem:[#allocation2 + $0x168] sm:$0xff] %v1250
      %1315 = vst [vmem:[#allocation2 + $0x170] sm:$0xff] %v1251
      %1316 = vst [vmem:[#allocation2 + $0x178] sm:$0xff] %v1252
      %1317 = vst [vmem:[#allocation2 + $0x180] sm:$0xff] %v1253
      %1318 = vst [vmem:[#allocation2 + $0x188] sm:$0xff] %v1254
      %1319 = vst [vmem:[#allocation2 + $0x190] sm:$0xff] %v1255
      %1320 = vst [vmem:[#allocation2 + $0x198] sm:$0xff] %v1256
      %1321 = vst [vmem:[#allocation2 + $0x1a0] sm:$0xff] %v1257
      %1322 = vst [vmem:[#allocation2 + $0x1a8] sm:$0xff] %v1258
      %1323 = vst [vmem:[#allocation2 + $0x1b0] sm:$0xff] %v1259
      %1324 = vst [vmem:[#allocation2 + $0x1b8] sm:$0xff] %v1260
      %1325 = vst [vmem:[#allocation2 + $0x1c0] sm:$0xff] %v1261
      %1326 = vst [vmem:[#allocation2 + $0x1c8] sm:$0xff] %v1262
      %1327 = vst [vmem:[#allocation2 + $0x1d0] sm:$0xff] %v1263
      %1328 = vst [vmem:[#allocation2 + $0x1d8] sm:$0xff] %v1264
      %1329 = vst [vmem:[#allocation2 + $0x1e0] sm:$0xff] %v1265
      %1330 = vst [vmem:[#allocation2 + $0x1e8] sm:$0xff] %v1266
      %1331 = vst [vmem:[#allocation2 + $0x1f0] sm:$0xff] %v1267
      %1332 = vst [vmem:[#allocation2 + $0x1f8] sm:$0xff] %v1268
      // Predicated region
      $region33: #{generator_forward.17} parent=27 // pred_check
        %p1333 = pneg %p272
      $region34: #{generator_forward.17} parent=27 // pred_check_branch
        %1335 = sbr.rel (%p1333) target = $region36
      $region35: #{generator_forward.17} parent=27 // pred_region
        %v1336 = vld [vmem:[#allocation2] sm:$0xff]
        %v1337 = vld [vmem:[#allocation2 + $0x8] sm:$0xff]
        %v1338 = vld [vmem:[#allocation2 + $0x10] sm:$0xff]
        %v1339 = vld [vmem:[#allocation2 + $0x18] sm:$0xff]
        %v1340 = vld [vmem:[#allocation2 + $0x20] sm:$0xff]
        %v1341 = vld [vmem:[#allocation2 + $0x28] sm:$0xff]
        %v1342 = vld [vmem:[#allocation2 + $0x30] sm:$0xff]
        %v1343 = vld [vmem:[#allocation2 + $0x38] sm:$0xff]
        %v1344 = vld [vmem:[#allocation2 + $0x40] sm:$0xff]
        %v1345 = vld [vmem:[#allocation2 + $0x48] sm:$0xff]
        %v1346 = vld [vmem:[#allocation2 + $0x50] sm:$0xff]
        %v1347 = vld [vmem:[#allocation2 + $0x58] sm:$0xff]
        %v1348 = vld [vmem:[#allocation2 + $0x60] sm:$0xff]
        %v1349 = vld [vmem:[#allocation2 + $0x68] sm:$0xff]
        %v1350 = vld [vmem:[#allocation2 + $0x70] sm:$0xff]
        %v1351 = vld [vmem:[#allocation2 + $0x78] sm:$0xff]
        %v1352 = vld [vmem:[#allocation2 + $0x80] sm:$0xff]
        %v1353 = vld [vmem:[#allocation2 + $0x88] sm:$0xff]
        %v1354 = vld [vmem:[#allocation2 + $0x90] sm:$0xff]
        %v1355 = vld [vmem:[#allocation2 + $0x98] sm:$0xff]
        %v1356 = vld [vmem:[#allocation2 + $0xa0] sm:$0xff]
        %v1357 = vld [vmem:[#allocation2 + $0xa8] sm:$0xff]
        %v1358 = vld [vmem:[#allocation2 + $0xb0] sm:$0xff]
        %v1359 = vld [vmem:[#allocation2 + $0xb8] sm:$0xff]
        %v1360 = vld [vmem:[#allocation2 + $0xc0] sm:$0xff]
        %v1361 = vld [vmem:[#allocation2 + $0xc8] sm:$0xff]
        %v1362 = vld [vmem:[#allocation2 + $0xd0] sm:$0xff]
        %v1363 = vld [vmem:[#allocation2 + $0xd8] sm:$0xff]
        %v1364 = vld [vmem:[#allocation2 + $0xe0] sm:$0xff]
        %v1365 = vld [vmem:[#allocation2 + $0xe8] sm:$0xff]
        %v1366 = vld [vmem:[#allocation2 + $0xf0] sm:$0xff]
        %v1367 = vld [vmem:[#allocation2 + $0xf8] sm:$0xff]
        %v1368 = vld [vmem:[#allocation2 + $0x100] sm:$0xff]
        %v1369 = vld [vmem:[#allocation2 + $0x108] sm:$0xff]
        %v1370 = vld [vmem:[#allocation2 + $0x110] sm:$0xff]
        %v1371 = vld [vmem:[#allocation2 + $0x118] sm:$0xff]
        %v1372 = vld [vmem:[#allocation2 + $0x120] sm:$0xff]
        %v1373 = vld [vmem:[#allocation2 + $0x128] sm:$0xff]
        %v1374 = vld [vmem:[#allocation2 + $0x130] sm:$0xff]
        %v1375 = vld [vmem:[#allocation2 + $0x138] sm:$0xff]
        %v1376 = vld [vmem:[#allocation2 + $0x140] sm:$0xff]
        %v1377 = vld [vmem:[#allocation2 + $0x148] sm:$0xff]
        %v1378 = vld [vmem:[#allocation2 + $0x150] sm:$0xff]
        %v1379 = vld [vmem:[#allocation2 + $0x158] sm:$0xff]
        %v1380 = vld [vmem:[#allocation2 + $0x160] sm:$0xff]
        %v1381 = vld [vmem:[#allocation2 + $0x168] sm:$0xff]
        %v1382 = vld [vmem:[#allocation2 + $0x170] sm:$0xff]
        %v1383 = vld [vmem:[#allocation2 + $0x178] sm:$0xff]
        %v1384 = vld [vmem:[#allocation2 + $0x180] sm:$0xff]
        %v1385 = vld [vmem:[#allocation2 + $0x188] sm:$0xff]
        %v1386 = vld [vmem:[#allocation2 + $0x190] sm:$0xff]
        %v1387 = vld [vmem:[#allocation2 + $0x198] sm:$0xff]
        %v1388 = vld [vmem:[#allocation2 + $0x1a0] sm:$0xff]
        %v1389 = vld [vmem:[#allocation2 + $0x1a8] sm:$0xff]
        %v1390 = vld [vmem:[#allocation2 + $0x1b0] sm:$0xff]
        %v1391 = vld [vmem:[#allocation2 + $0x1b8] sm:$0xff]
        %v1392 = vld [vmem:[#allocation2 + $0x1c0] sm:$0xff]
        %v1393 = vld [vmem:[#allocation2 + $0x1c8] sm:$0xff]
        %v1394 = vld [vmem:[#allocation2 + $0x1d0] sm:$0xff]
        %v1395 = vld [vmem:[#allocation2 + $0x1d8] sm:$0xff]
        %v1396 = vld [vmem:[#allocation2 + $0x1e0] sm:$0xff]
        %v1397 = vld [vmem:[#allocation2 + $0x1e8] sm:$0xff]
        %v1398 = vld [vmem:[#allocation2 + $0x1f0] sm:$0xff]
        %v1399 = vld [vmem:[#allocation2 + $0x1f8] sm:$0xff]
        %v1400 = vtanh.pop %v1336
        %v1401 = vtanh.pop %v1337
        %v1402 = vtanh.pop %v1338
        %v1403 = vtanh.pop %v1339
        %v1404 = vtanh.pop %v1340
        %v1405 = vtanh.pop %v1341
        %v1406 = vtanh.pop %v1342
        %v1407 = vtanh.pop %v1343
        %v1408 = vtanh.pop %v1344
        %v1409 = vtanh.pop %v1345
        %v1410 = vtanh.pop %v1346
        %v1411 = vtanh.pop %v1347
        %v1412 = vtanh.pop %v1348
        %v1413 = vtanh.pop %v1349
        %v1414 = vtanh.pop %v1350
        %v1415 = vtanh.pop %v1351
        %v1416 = vtanh.pop %v1352
        %v1417 = vtanh.pop %v1353
        %v1418 = vtanh.pop %v1354
        %v1419 = vtanh.pop %v1355
        %v1420 = vtanh.pop %v1356
        %v1421 = vtanh.pop %v1357
        %v1422 = vtanh.pop %v1358
        %v1423 = vtanh.pop %v1359
        %v1424 = vtanh.pop %v1360
        %v1425 = vtanh.pop %v1361
        %v1426 = vtanh.pop %v1362
        %v1427 = vtanh.pop %v1363
        %v1428 = vtanh.pop %v1364
        %v1429 = vtanh.pop %v1365
        %v1430 = vtanh.pop %v1366
        %v1431 = vtanh.pop %v1367
        %v1432 = vtanh.pop %v1368
        %v1433 = vtanh.pop %v1369
        %v1434 = vtanh.pop %v1370
        %v1435 = vtanh.pop %v1371
        %v1436 = vtanh.pop %v1372
        %v1437 = vtanh.pop %v1373
        %v1438 = vtanh.pop %v1374
        %v1439 = vtanh.pop %v1375
        %v1440 = vtanh.pop %v1376
        %v1441 = vtanh.pop %v1377
        %v1442 = vtanh.pop %v1378
        %v1443 = vtanh.pop %v1379
        %v1444 = vtanh.pop %v1380
        %v1445 = vtanh.pop %v1381
        %v1446 = vtanh.pop %v1382
        %v1447 = vtanh.pop %v1383
        %v1448 = vtanh.pop %v1384
        %v1449 = vtanh.pop %v1385
        %v1450 = vtanh.pop %v1386
        %v1451 = vtanh.pop %v1387
        %v1452 = vtanh.pop %v1388
        %v1453 = vtanh.pop %v1389
        %v1454 = vtanh.pop %v1390
        %v1455 = vtanh.pop %v1391
        %v1456 = vtanh.pop %v1392
        %v1457 = vtanh.pop %v1393
        %v1458 = vtanh.pop %v1394
        %v1459 = vtanh.pop %v1395
        %v1460 = vtanh.pop %v1396
        %v1461 = vtanh.pop %v1397
        %v1462 = vtanh.pop %v1398
        %v1463 = vtanh.pop %v1399
        %1464 = vst [vmem:[%s269] sm:$0xff] %v1400
        %1465 = vst [vmem:[%s269 + $0x8] sm:$0xff] %v1401
        %1466 = vst [vmem:[%s269 + $0x10] sm:$0xff] %v1402
        %1467 = vst [vmem:[%s269 + $0x18] sm:$0xff] %v1403
        %1468 = vst [vmem:[%s269 + $0x20] sm:$0xff] %v1404
        %1469 = vst [vmem:[%s269 + $0x28] sm:$0xff] %v1405
        %1470 = vst [vmem:[%s269 + $0x30] sm:$0xff] %v1406
        %1471 = vst [vmem:[%s269 + $0x38] sm:$0xff] %v1407
        %1472 = vst [vmem:[%s269 + $0x40] sm:$0xff] %v1408
        %1473 = vst [vmem:[%s269 + $0x48] sm:$0xff] %v1409
        %1474 = vst [vmem:[%s269 + $0x50] sm:$0xff] %v1410
        %1475 = vst [vmem:[%s269 + $0x58] sm:$0xff] %v1411
        %1476 = vst [vmem:[%s269 + $0x60] sm:$0xff] %v1412
        %1477 = vst [vmem:[%s269 + $0x68] sm:$0xff] %v1413
        %1478 = vst [vmem:[%s269 + $0x70] sm:$0xff] %v1414
        %1479 = vst [vmem:[%s269 + $0x78] sm:$0xff] %v1415
        %1480 = vst [vmem:[%s269 + $0x80] sm:$0xff] %v1416
        %1481 = vst [vmem:[%s269 + $0x88] sm:$0xff] %v1417
        %1482 = vst [vmem:[%s269 + $0x90] sm:$0xff] %v1418
        %1483 = vst [vmem:[%s269 + $0x98] sm:$0xff] %v1419
        %1484 = vst [vmem:[%s269 + $0xa0] sm:$0xff] %v1420
        %1485 = vst [vmem:[%s269 + $0xa8] sm:$0xff] %v1421
        %1486 = vst [vmem:[%s269 + $0xb0] sm:$0xff] %v1422
        %1487 = vst [vmem:[%s269 + $0xb8] sm:$0xff] %v1423
        %1488 = vst [vmem:[%s269 + $0xc0] sm:$0xff] %v1424
        %1489 = vst [vmem:[%s269 + $0xc8] sm:$0xff] %v1425
        %1490 = vst [vmem:[%s269 + $0xd0] sm:$0xff] %v1426
        %1491 = vst [vmem:[%s269 + $0xd8] sm:$0xff] %v1427
        %1492 = vst [vmem:[%s269 + $0xe0] sm:$0xff] %v1428
        %1493 = vst [vmem:[%s269 + $0xe8] sm:$0xff] %v1429
        %1494 = vst [vmem:[%s269 + $0xf0] sm:$0xff] %v1430
        %1495 = vst [vmem:[%s269 + $0xf8] sm:$0xff] %v1431
        %1496 = vst [vmem:[%s269 + $0x100] sm:$0xff] %v1432
        %1497 = vst [vmem:[%s269 + $0x108] sm:$0xff] %v1433
        %1498 = vst [vmem:[%s269 + $0x110] sm:$0xff] %v1434
        %1499 = vst [vmem:[%s269 + $0x118] sm:$0xff] %v1435
        %1500 = vst [vmem:[%s269 + $0x120] sm:$0xff] %v1436
        %1501 = vst [vmem:[%s269 + $0x128] sm:$0xff] %v1437
        %1502 = vst [vmem:[%s269 + $0x130] sm:$0xff] %v1438
        %1503 = vst [vmem:[%s269 + $0x138] sm:$0xff] %v1439
        %1504 = vst [vmem:[%s269 + $0x140] sm:$0xff] %v1440
        %1505 = vst [vmem:[%s269 + $0x148] sm:$0xff] %v1441
        %1506 = vst [vmem:[%s269 + $0x150] sm:$0xff] %v1442
        %1507 = vst [vmem:[%s269 + $0x158] sm:$0xff] %v1443
        %1508 = vst [vmem:[%s269 + $0x160] sm:$0xff] %v1444
        %1509 = vst [vmem:[%s269 + $0x168] sm:$0xff] %v1445
        %1510 = vst [vmem:[%s269 + $0x170] sm:$0xff] %v1446
        %1511 = vst [vmem:[%s269 + $0x178] sm:$0xff] %v1447
        %1512 = vst [vmem:[%s269 + $0x180] sm:$0xff] %v1448
        %1513 = vst [vmem:[%s269 + $0x188] sm:$0xff] %v1449
        %1514 = vst [vmem:[%s269 + $0x190] sm:$0xff] %v1450
        %1515 = vst [vmem:[%s269 + $0x198] sm:$0xff] %v1451
        %1516 = vst [vmem:[%s269 + $0x1a0] sm:$0xff] %v1452
        %1517 = vst [vmem:[%s269 + $0x1a8] sm:$0xff] %v1453
        %1518 = vst [vmem:[%s269 + $0x1b0] sm:$0xff] %v1454
        %1519 = vst [vmem:[%s269 + $0x1b8] sm:$0xff] %v1455
        %1520 = vst [vmem:[%s269 + $0x1c0] sm:$0xff] %v1456
        %1521 = vst [vmem:[%s269 + $0x1c8] sm:$0xff] %v1457
        %1522 = vst [vmem:[%s269 + $0x1d0] sm:$0xff] %v1458
        %1523 = vst [vmem:[%s269 + $0x1d8] sm:$0xff] %v1459
        %1524 = vst [vmem:[%s269 + $0x1e0] sm:$0xff] %v1460
        %1525 = vst [vmem:[%s269 + $0x1e8] sm:$0xff] %v1461
        %1526 = vst [vmem:[%s269 + $0x1f0] sm:$0xff] %v1462
        %1527 = vst [vmem:[%s269 + $0x1f8] sm:$0xff] %v1463
      $region36: #{generator_forward.17} parent=27 // pred_fallthru
        _
      %s1528 = smul.u32 64, %s20
      %p1529 = scmp.lt.s32.totalorder %s19, 3
      %s1530 = scalar_select %p1529, %s19, 3
      %p1531 = scmp.lt.s32.totalorder %s1528, 255
      %s1532 = scalar_select %p1531, %s1528, 255
      %p1533 = scmp.lt.s32.totalorder %s21, 0
      %s1534 = scalar_select %p1533, %s21, 0
      %s1535 = sadd.s32 %s1534, %s1532
      %s1536 = smul.addr %s1530, 256
      %s1537 = sadd.s32 %s1535, %s1536
      %s1538 = smul.addr %s1537, 8
      %s1539 = scalar_lea.vmem %s2, %s1538
      // Predicated region
      $region37: #{generator_forward.17} parent=27 // pred_check
        %p1540 = pneg %p121
      $region38: #{generator_forward.17} parent=27 // pred_check_branch
        %1542 = sbr.rel (%p1540) target = $region40
      $region39: #{generator_forward.17} parent=27 // pred_region
        %s1543 = smul.u32 64, %s20
      $region40: #{generator_forward.17} parent=27 // pred_fallthru
        _
    $region28: #{generator_forward.17} parent=5 // pred_fallthru
      _
    %p1544 = scmp.le.s32.totalorder 2, %s8
    // Predicated region
    $region41: #{generator_forward.17} parent=5 // pred_check
      %p1545 = pneg %p1544
    $region42: #{generator_forward.17} parent=5 // pred_check_branch
      %1547 = sbr.rel (%p1545) target = $region44
    $region43: #{generator_forward.17} parent=5 // pred_region
      %s1548 = ssub.s32 %s8, 2
      // Predicated region
      $region45: #{generator_forward.17} parent=43 // pred_check
        %p1549 = pneg %p127
      $region46: #{generator_forward.17} parent=43 // pred_check_branch
        %1551 = sbr.rel (%p1549) target = $region48
      $region47: #{generator_forward.17} parent=43 // pred_region
        %s1552 = smul.u32 64, %s24
        %p1553 = scmp.lt.s32.totalorder %s23, 3
        %s1554 = scalar_select %p1553, %s23, 3
        %p1555 = scmp.lt.s32.totalorder %s1552, 255
        %s1556 = scalar_select %p1555, %s1552, 255
        %p1557 = scmp.lt.s32.totalorder %s25, 0
        %s1558 = scalar_select %p1557, %s25, 0
        %s1559 = sadd.s32 %s1558, %s1556
        %s1560 = smul.addr %s1554, 256
        %s1561 = sadd.s32 %s1559, %s1560
        %s1562 = smul.addr %s1561, 8
        %s1563 = scalar_lea.vmem %s2, %s1562
      $region48: #{generator_forward.17} parent=43 // pred_fallthru
        _
    $region44: #{generator_forward.17} parent=5 // pred_fallthru
      _
  $region6: #{generator_forward.17} parent=0 // loop_footer
    %s12 = sadd.s32 1, %s8
  $region7: #{generator_forward.17} parent=0 // loop_footer_branch
    %7 = sbr.rel target = $region3
  $region8: #{generator_forward.17} parent=0 // loop_exit
    _

</llo_original>
